<compile_context>
chip_gen: v7x
topology: tpu7x:2x2x1
jax: 0.10.0
libtpu: 0.0.40
codegen_flags: <defaults>
</compile_context>

<pallas_src>
import jax
import jax.numpy as jnp
from jax.experimental import pallas as pl
from jax.experimental.pallas import tpu as pltpu

_EPS = 1e-5


# ============================================================= Bottleneck + SE kernel

def _bottleneck_kernel(x_ref, w1_ref, g1_ref, b1_ref,
                       w2_ref, g2_ref, b2_ref,
                       w3_ref, g3_ref, b3_ref,
                       wse1_ref, wse2_ref,
                       out_ref, pad_ref, patch_ref):
    N, H, W, Cin = x_ref.shape               # Cin already padded to a lane multiple
    Cm = w1_ref.shape[1]                     # padded bottleneck width
    Cout = w3_ref.shape[1]                   # padded output channels (== Cin)
    d = (pad_ref.shape[1] - H) // 2          # dilation == padding (stride == 1)
    NHW = N * H * W
    inv_n = 1.0 / NHW

    def bn(y, g_ref, b_ref):
        # Single-pass training-mode BatchNorm, folded into per-channel scale/shift.
        s1 = jnp.sum(y, axis=0, keepdims=True)
        s2 = jnp.sum(y * y, axis=0, keepdims=True)
        mu = s1 * inv_n
        var = jnp.maximum(s2 * inv_n - mu * mu, 0.0)
        scale = g_ref[...] * jax.lax.rsqrt(var + _EPS)
        shift = b_ref[...] - mu * scale
        return y * scale + shift

    # ---- conv1 (1x1) + bn1 + relu  (bf16 operands on MXU, f32 accumulate) ----
    y = jnp.dot(x_ref[...].reshape(NHW, Cin).astype(jnp.bfloat16), w1_ref[...],
                preferred_element_type=jnp.float32)
    y = jnp.maximum(bn(y, g1_ref, b1_ref), 0.0)

    # ---- conv2 (3x3, stride=1, padding=d, dilation=d) via im2col + 1 matmul ----
    Hp = H + 2 * d
    Wp = W + 2 * d
    # Zero only the halo; the interior is overwritten immediately below.
    zeros_h = jnp.zeros((N, d, Wp, Cm), jnp.bfloat16)
    zeros_w = jnp.zeros((N, H, d, Cm), jnp.bfloat16)
    pad_ref[:, 0:d, :, :] = zeros_h
    pad_ref[:, H + d:Hp, :, :] = zeros_h
    pad_ref[:, d:H + d, 0:d, :] = zeros_w
    pad_ref[:, d:H + d, W + d:Wp, :] = zeros_w
    pad_ref[:, d:H + d, d:W + d, :] = y.reshape(N, H, W, Cm).astype(jnp.bfloat16)

    for t in range(9):                       # fill (NHW, 9*Cm) patch slab, tap-major
        ky, kx = divmod(t, 3)
        patch_ref[:, t * Cm:(t + 1) * Cm] = (
            pad_ref[:, ky * d:ky * d + H, kx * d:kx * d + W, :].reshape(NHW, Cm))

    y = jnp.dot(patch_ref[...], w2_ref[...], preferred_element_type=jnp.float32)
    y = jnp.maximum(bn(y, g2_ref, b2_ref), 0.0)

    # ---- conv3 (1x1) + bn3 + residual add + relu ----
    y = jnp.dot(y.astype(jnp.bfloat16), w3_ref[...],
                preferred_element_type=jnp.float32)
    y = bn(y, g3_ref, b3_ref)
    # downsample is None -> identity = x (re-read the VMEM-resident input ref).
    y = jnp.maximum(y + x_ref[...].reshape(NHW, Cout), 0.0)

    # ---- Squeeze-and-Excitation ----
    y3 = y.reshape(N, H * W, Cout)
    pooled = jnp.mean(y3, axis=1)                                   # (N, Cout)
    h = jnp.maximum(jnp.dot(pooled.astype(jnp.bfloat16), wse1_ref[...],
                            preferred_element_type=jnp.float32), 0.0)
    z = jnp.dot(h.astype(jnp.bfloat16), wse2_ref[...],
                preferred_element_type=jnp.float32)
    s = jax.nn.sigmoid(z)                                           # (N, Cout)
    out_ref[...] = (y3 * s[:, None, :]).astype(out_ref.dtype)


# ======================================================================== ASPP kernel

def _aspp_kernel(x_ref, w1_ref, w3_ref, w5_ref, w7_ref, wg_ref, wc_ref, g_ref, b_ref,
                 out_ref, pad_ref, patch_ref, cat_ref):
    N, H, W, Cin = x_ref.shape               # Cin already padded to a lane multiple
    Co = w1_ref.shape[1]                     # padded branch output channels
    dmax = (pad_ref.shape[1] - H) // 2       # max dilation == 7
    NHW = N * H * W
    HW = H * W
    inv_n = 1.0 / NHW
    bf = jnp.bfloat16

    x2 = x_ref[...].reshape(NHW, Cin)
    xb = x2.astype(bf)

    # ---- branch 1: 1x1 conv ----
    cat_ref[:, 0:Co] = jnp.dot(xb, w1_ref[...],
                               preferred_element_type=jnp.float32).astype(bf)

    # ---- shared max-halo padded input for all dilated 3x3 branches ----
    Hp = H + 2 * dmax
    Wp = W + 2 * dmax
    zeros_h = jnp.zeros((N, dmax, Wp, Cin), bf)
    zeros_w = jnp.zeros((N, H, dmax, Cin), bf)
    pad_ref[:, 0:dmax, :, :] = zeros_h
    pad_ref[:, H + dmax:Hp, :, :] = zeros_h
    pad_ref[:, dmax:H + dmax, 0:dmax, :] = zeros_w
    pad_ref[:, dmax:H + dmax, W + dmax:Wp, :] = zeros_w
    pad_ref[:, dmax:H + dmax, dmax:W + dmax, :] = xb.reshape(N, H, W, Cin)

    # ---- branches d = 3, 5, 7: im2col (one reused scratch) + one matmul each ----
    for idx, (d, w_ref) in enumerate(((3, w3_ref), (5, w5_ref), (7, w7_ref)), start=1):
        off = dmax - d                                    # re-base the d-halo in the dmax-halo
        for t in range(9):                                # tap-major fill of (NHW, 9*Cin)
            ky, kx = divmod(t, 3)
            patch_ref[:, t * Cin:(t + 1) * Cin] = (
                pad_ref[:, off + ky * d:off + ky * d + H,
                        off + kx * d:off + kx * d + W, :].reshape(NHW, Cin))
        cat_ref[:, idx * Co:(idx + 1) * Co] = jnp.dot(
            patch_ref[...], w_ref[...], preferred_element_type=jnp.float32).astype(bf)

    # ---- global branch: avg-pool -> 1x1 conv -> bilinear upsample of a 1x1 map ----
    # (upsampling a 1x1 map is a per-batch constant broadcast)
    pooled = jnp.mean(x2.reshape(N, HW, Cin), axis=1)               # (N, Cin)
    gvec = jnp.dot(pooled.astype(bf), wg_ref[...],
                   preferred_element_type=jnp.float32)              # (N, Co)
    gb = (jnp.ones((N, HW, 1), jnp.float32) * gvec[:, None, :]).reshape(NHW, Co)
    cat_ref[:, 4 * Co:5 * Co] = gb.astype(bf)

    # ---- fuse conv (1x1 over the 5*Co concat) + BN (batch stats) + ReLU ----
    y = jnp.dot(cat_ref[...], wc_ref[...], preferred_element_type=jnp.float32)
    s1 = jnp.sum(y, axis=0, keepdims=True)
    s2 = jnp.sum(y * y, axis=0, keepdims=True)
    mu = s1 * inv_n
    var = jnp.maximum(s2 * inv_n - mu * mu, 0.0)
    scale = g_ref[...] * jax.lax.rsqrt(var + _EPS)
    shift = b_ref[...] - mu * scale
    y = jnp.maximum(y * scale + shift, 0.0)
    out_ref[...] = y.reshape(N, HW, Co).astype(out_ref.dtype)


# ----------------------------------------------------------------------------- helpers

def _round_up(n, m):
    return ((n + m - 1) // m) * m


def _pad_axis(a, axis, target):
    pad = target - a.shape[axis]
    if pad == 0:
        return a
    widths = [(0, 0)] * a.ndim
    widths[axis] = (0, pad)
    return jnp.pad(a, widths)


def init_params(key, in_planes, planes, reduction=16):
    """Deterministic synthetic parameters matching the PyTorch Bottleneck's shapes."""
    width = planes
    cout = planes * 4                    # expansion = 4
    hidden = cout // reduction
    ks = jax.random.split(key, 11)

    def nrm(k, shape, scale):
        return (scale * jax.random.normal(k, shape)).astype(jnp.float32)

    return dict(
        # 1x1 conv weights stored as (C_in, C_out); 3x3 conv as (9, C_in, C_out),
        # tap-major (t = ky*3 + kx).
        w1=nrm(ks[0], (in_planes, width), 0.2),
        g1=(1.0 + 0.1 * jax.random.normal(ks[1], (1, width))).astype(jnp.float32),
        b1=nrm(ks[2], (1, width), 0.1),
        w2=nrm(ks[3], (9, width, width), 0.2),
        g2=(1.0 + 0.1 * jax.random.normal(ks[4], (1, width))).astype(jnp.float32),
        b2=nrm(ks[5], (1, width), 0.1),
        w3=nrm(ks[6], (width, cout), 0.2),
        g3=(1.0 + 0.1 * jax.random.normal(ks[7], (1, cout))).astype(jnp.float32),
        b3=nrm(ks[8], (1, cout), 0.1),
        # SE: Linear(cout, hidden, bias=False), Linear(hidden, cout, bias=False),
        # stored pre-transposed so the kernel computes y @ W.
        wse1=nrm(ks[9], (cout, hidden), 0.3),
        wse2=nrm(ks[10], (hidden, cout), 0.3),
    )


def aspp_init_params(key, in_channels, out_channels):
    """Deterministic synthetic parameters matching the PyTorch ASPP's shapes."""
    ks = jax.random.split(key, 8)

    def nrm(k, shape, scale):
        return (scale * jax.random.normal(k, shape)).astype(jnp.float32)

    return dict(
        w1=nrm(ks[0], (in_channels, out_channels), 0.2),
        w3=nrm(ks[1], (9, in_channels, out_channels), 0.1),
        w5=nrm(ks[2], (9, in_channels, out_channels), 0.1),
        w7=nrm(ks[3], (9, in_channels, out_channels), 0.1),
        wg=nrm(ks[4], (in_channels, out_channels), 0.2),
        # conv1 over the concat, block order [1x1, d3, d5, d7, global] (== torch.cat).
        wc=nrm(ks[5], (5 * out_channels, out_channels), 0.1),
        g=(1.0 + 0.1 * jax.random.normal(ks[6], (1, out_channels))).astype(jnp.float32),
        b=nrm(ks[7], (1, out_channels), 0.1),
    )


# ----------------------------------------------------------------------------- wrappers

def bottleneck_forward(x_nchw, params, dilation=1):
    N, Cin, H, W = x_nchw.shape
    width = params["w1"].shape[1]
    Cout = params["w3"].shape[1]
    assert Cin == Cout, "downsample=None requires in_planes == planes * expansion"
    d = int(dilation)

    Cp = _round_up(Cin, 128)      # padded in/out channels (lane-dense)
    Cm = _round_up(width, 128)    # padded bottleneck width

    # NCHW -> NHWC, zero-pad channels to the 128-lane width (exact: padded weight
    # rows/cols and gamma/beta are zero, so padded channels stay identically zero).
    x = jnp.transpose(x_nchw, (0, 2, 3, 1)).astype(jnp.float32)
    x = _pad_axis(x, 3, Cp)

    bf = jnp.bfloat16
    w1 = _pad_axis(_pad_axis(params["w1"], 0, Cp), 1, Cm).astype(bf)
    w2 = _pad_axis(_pad_axis(params["w2"], 1, Cm), 2, Cm).reshape(9 * Cm, Cm).astype(bf)
    w3 = _pad_axis(_pad_axis(params["w3"], 0, Cm), 1, Cp).astype(bf)
    g1 = _pad_axis(params["g1"], 1, Cm)
    b1 = _pad_axis(params["b1"], 1, Cm)
    g2 = _pad_axis(params["g2"], 1, Cm)
    b2 = _pad_axis(params["b2"], 1, Cm)
    g3 = _pad_axis(params["g3"], 1, Cp)
    b3 = _pad_axis(params["b3"], 1, Cp)
    wse1 = _pad_axis(params["wse1"], 0, Cp).astype(bf)
    wse2 = _pad_axis(params["wse2"], 1, Cp).astype(bf)

    args = (x, w1, g1, b1, w2, g2, b2, w3, g3, b3, wse1, wse2)
    vmem = pl.BlockSpec(memory_space=pltpu.MemorySpace.VMEM)

    out = pl.pallas_call(
        _bottleneck_kernel,
        out_shape=jax.ShapeDtypeStruct((N, H * W, Cp), jnp.float32),
        in_specs=[vmem] * len(args),
        out_specs=vmem,
        scratch_shapes=[
            pltpu.VMEM((N, H + 2 * d, W + 2 * d, Cm), jnp.bfloat16),   # padded halo
            pltpu.VMEM((N * H * W, 9 * Cm), jnp.bfloat16),             # im2col slab
        ],
        compiler_params=pltpu.CompilerParams(vmem_limit_bytes=64 * 1024 * 1024),
    )(*args)

    out = out[:, :, :Cout].reshape(N, H, W, Cout)
    return jnp.transpose(out, (0, 3, 1, 2))           # back to PyTorch NCHW


def aspp_forward(x_nchw, params):
    N, Cin, H, W = x_nchw.shape
    Co = params["w1"].shape[1]
    Cinp = _round_up(Cin, 128)
    Cop = _round_up(Co, 128)
    dmax = 7

    x = jnp.transpose(x_nchw, (0, 2, 3, 1)).astype(jnp.float32)
    x = _pad_axis(x, 3, Cinp)

    bf = jnp.bfloat16
    w1 = _pad_axis(_pad_axis(params["w1"], 0, Cinp), 1, Cop).astype(bf)

    def pad_w3(w):
        w = _pad_axis(_pad_axis(w, 1, Cinp), 2, Cop)
        return w.reshape(9 * Cinp, Cop).astype(bf)

    w3 = pad_w3(params["w3"])
    w5 = pad_w3(params["w5"])
    w7 = pad_w3(params["w7"])
    wg = _pad_axis(_pad_axis(params["wg"], 0, Cinp), 1, Cop).astype(bf)
    wc = params["wc"].reshape(5, Co, Co)
    wc = _pad_axis(_pad_axis(wc, 1, Cop), 2, Cop).reshape(5 * Cop, Cop).astype(bf)
    g = _pad_axis(params["g"], 1, Cop)
    b = _pad_axis(params["b"], 1, Cop)

    args = (x, w1, w3, w5, w7, wg, wc, g, b)
    vmem = pl.BlockSpec(memory_space=pltpu.MemorySpace.VMEM)

    out = pl.pallas_call(
        _aspp_kernel,
        out_shape=jax.ShapeDtypeStruct((N, H * W, Cop), jnp.float32),
        in_specs=[vmem] * len(args),
        out_specs=vmem,
        scratch_shapes=[
            pltpu.VMEM((N, H + 2 * dmax, W + 2 * dmax, Cinp), jnp.bfloat16),  # max-halo
            pltpu.VMEM((N * H * W, 9 * Cinp), jnp.bfloat16),                  # im2col slab
            pltpu.VMEM((N * H * W, 5 * Cop), jnp.bfloat16),                   # concat slab
        ],
        compiler_params=pltpu.CompilerParams(vmem_limit_bytes=64 * 1024 * 1024),
    )(*args)

    out = out[:, :, :Co].reshape(N, H, W, Co)
    return jnp.transpose(out, (0, 3, 1, 2))           # back to PyTorch NCHW


# ----------------------------------------------------------------------------- references

def _reference_forward(x, params, dilation):
    """Pure-JAX f32 reference of the PyTorch Bottleneck+SE forward (NCHW)."""
    def bn(y, g, b):
        mu = y.mean(axis=(0, 2, 3), keepdims=True)
        var = ((y - mu) ** 2).mean(axis=(0, 2, 3), keepdims=True)
        return ((y - mu) * jax.lax.rsqrt(var + _EPS)
                * g.reshape(1, -1, 1, 1) + b.reshape(1, -1, 1, 1))

    def conv1x1(y, w):       # w: (Cin, Cout)
        return jnp.einsum("nchw,cd->ndhw", y, w)

    relu = lambda t: jnp.maximum(t, 0.0)
    d = int(dilation)

    y = relu(bn(conv1x1(x, params["w1"]), params["g1"], params["b1"]))
    w2 = params["w2"]
    w2_hwio = w2.reshape(3, 3, w2.shape[1], w2.shape[2])
    y = jax.lax.conv_general_dilated(
        y, w2_hwio, window_strides=(1, 1), padding=[(d, d), (d, d)],
        rhs_dilation=(d, d), dimension_numbers=("NCHW", "HWIO", "NCHW"))
    y = relu(bn(y, params["g2"], params["b2"]))
    y = bn(conv1x1(y, params["w3"]), params["g3"], params["b3"])
    y = relu(y + x)
    pooled = y.mean(axis=(2, 3))
    h = relu(pooled @ params["wse1"])
    s = jax.nn.sigmoid(h @ params["wse2"])
    return y * s[:, :, None, None]


def _aspp_reference(x, params):
    """Pure-JAX f32 reference of the PyTorch ASPP forward (NCHW)."""
    def conv1x1(y, w):
        return jnp.einsum("nchw,cd->ndhw", y, w)

    def conv3x3(y, w, d):
        w_hwio = w.reshape(3, 3, w.shape[1], w.shape[2])
        return jax.lax.conv_general_dilated(
            y, w_hwio, window_strides=(1, 1), padding=[(d, d), (d, d)],
            rhs_dilation=(d, d), dimension_numbers=("NCHW", "HWIO", "NCHW"))

    out1 = conv1x1(x, params["w1"])
    out3 = conv3x3(x, params["w3"], 3)
    out5 = conv3x3(x, params["w5"], 5)
    out7 = conv3x3(x, params["w7"], 7)
    pooled = x.mean(axis=(2, 3))                               # (N, Cin)
    og = (pooled @ params["wg"])[:, :, None, None]             # (N, Co, 1, 1)
    og = jnp.broadcast_to(og, out1.shape)                      # bilinear of a 1x1 map
    cat = jnp.concatenate([out1, out3, out5, out7, og], axis=1)
    y = conv1x1(cat, params["wc"])
    mu = y.mean(axis=(0, 2, 3), keepdims=True)
    var = ((y - mu) ** 2).mean(axis=(0, 2, 3), keepdims=True)
    y = ((y - mu) * jax.lax.rsqrt(var + _EPS)
         * params["g"].reshape(1, -1, 1, 1) + params["b"].reshape(1, -1, 1, 1))
    return jnp.maximum(y, 0.0)


if __name__ == "__main__":
    key = jax.random.PRNGKey(0)
    k1, k2, k3, k4 = jax.random.split(key, 4)

    # ---- Bottleneck+SE block: layer1-style (dilation=1) and dilated layer3/4-style (d=2)
    planes = 16
    in_planes = planes * 4      # downsample=None requires in_planes == planes*expansion
    N, H, W = 2, 16, 16
    x_b = jax.random.normal(k1, (N, in_planes, H, W), dtype=jnp.float32)
    bparams = init_params(k2, in_planes, planes, reduction=16)
    out1 = bottleneck_forward(x_b, bparams, dilation=1)
    out2 = bottleneck_forward(x_b, bparams, dilation=2)

    # ---- ASPP head: 1x1 / d=3 / d=5 / d=7 / global branches + fuse conv + BN + ReLU
    aspp_in, aspp_out = 64, 32
    x_a = jax.random.normal(k3, (N, aspp_in, H, W), dtype=jnp.float32)
    aparams = aspp_init_params(k4, aspp_in, aspp_out)
    out_a = aspp_forward(x_a, aparams)

    jax.block_until_ready((out1, out2, out_a))

    assert out1.shape == (N, planes * 4, H, W) and out2.shape == out1.shape
    assert out_a.shape == (N, aspp_out, H, W)
    assert bool(jnp.all(jnp.isfinite(out1)))
    assert bool(jnp.all(jnp.isfinite(out2)))
    assert bool(jnp.all(jnp.isfinite(out_a)))

    # Loose checks vs pure-JAX f32 references (bf16 MXU operands cause small drift).
    for out, dil in ((out1, 1), (out2, 2)):
        ref = _reference_forward(x_b, bparams, dil)
        rel = float(jnp.linalg.norm(out - ref) / (jnp.linalg.norm(ref) + 1e-12))
        assert rel < 0.08, f"bottleneck relative error too large (dilation={dil}): {rel}"

    ref_a = _aspp_reference(x_a, aparams)
    rel_a = float(jnp.linalg.norm(out_a - ref_a) / (jnp.linalg.norm(ref_a) + 1e-12))
    assert rel_a < 0.08, f"ASPP relative error too large: {rel_a}"

    print("KERNEL_OK")
</pallas_src>

<mosaic_0001>
module attributes {stable_mosaic.version = 11 : i64} {
  func.func @_bottleneck_kernel(%arg0: memref<2x16x16x128xf32, #tpu.memory_space<vmem>>, %arg1: memref<128x128xbf16, #tpu.memory_space<vmem>>, %arg2: memref<1x128xf32, #tpu.memory_space<vmem>>, %arg3: memref<1x128xf32, #tpu.memory_space<vmem>>, %arg4: memref<1152x128xbf16, #tpu.memory_space<vmem>>, %arg5: memref<1x128xf32, #tpu.memory_space<vmem>>, %arg6: memref<1x128xf32, #tpu.memory_space<vmem>>, %arg7: memref<128x128xbf16, #tpu.memory_space<vmem>>, %arg8: memref<1x128xf32, #tpu.memory_space<vmem>>, %arg9: memref<1x128xf32, #tpu.memory_space<vmem>>, %arg10: memref<128x4xbf16, #tpu.memory_space<vmem>>, %arg11: memref<4x128xbf16, #tpu.memory_space<vmem>>, %arg12: memref<2x256x128xf32, #tpu.memory_space<vmem>>, %arg13: memref<2x18x18x128xbf16, #tpu.memory_space<vmem>>, %arg14: memref<512x1152xbf16, #tpu.memory_space<vmem>>) attributes {dimension_semantics = [], scalar_prefetch = 0 : i64, scratch_operands = 2 : i64, tpu.core_type = #tpu.core_type<tc>} {
    %c0 = arith.constant 0 : index
    %c0_0 = arith.constant 0 : index
    %c0_1 = arith.constant 0 : index
    %c0_2 = arith.constant 0 : index
    %0 = vector.load %arg0[%c0, %c0_0, %c0_1, %c0_2] : memref<2x16x16x128xf32, #tpu.memory_space<vmem>>, vector<2x16x16x128xf32>
    %1 = vector.shape_cast %0 : vector<2x16x16x128xf32> to vector<512x128xf32>
    %2 = arith.truncf %1 : vector<512x128xf32> to vector<512x128xbf16>
    %c0_3 = arith.constant 0 : index
    %c0_4 = arith.constant 0 : index
    %3 = vector.load %arg1[%c0_3, %c0_4] : memref<128x128xbf16, #tpu.memory_space<vmem>>, vector<128x128xbf16>
    %cst = arith.constant dense<0.000000e+00> : vector<512x128xf32>
    %4 = tpu.matmul %2, %3, %cst {dimension_numbers = #tpu.dot_dimension_numbers<[1], [0], [0], [1], [0, 0, 1, 1], [], []>} : vector<512x128xbf16>, vector<128x128xbf16>, vector<512x128xf32> -> vector<512x128xf32>
    %cst_5 = arith.constant dense<0.000000e+00> : vector<128xf32>
    %5 = vector.multi_reduction <add>, %4, %cst_5 [0] : vector<512x128xf32> to vector<128xf32>
    %6 = vector.shape_cast %5 : vector<128xf32> to vector<1x128xf32>
    %7 = arith.mulf %4, %4 : vector<512x128xf32>
    %cst_6 = arith.constant dense<0.000000e+00> : vector<128xf32>
    %8 = vector.multi_reduction <add>, %7, %cst_6 [0] : vector<512x128xf32> to vector<128xf32>
    %9 = vector.shape_cast %8 : vector<128xf32> to vector<1x128xf32>
    %cst_7 = arith.constant 0.001953125 : f32
    %10 = vector.broadcast %cst_7 : f32 to vector<1x128xf32>
    %11 = arith.mulf %6, %10 : vector<1x128xf32>
    %cst_8 = arith.constant 0.001953125 : f32
    %12 = vector.broadcast %cst_8 : f32 to vector<1x128xf32>
    %13 = arith.mulf %9, %12 : vector<1x128xf32>
    %14 = arith.mulf %11, %11 : vector<1x128xf32>
    %15 = arith.subf %13, %14 : vector<1x128xf32>
    %cst_9 = arith.constant 0.000000e+00 : f32
    %16 = vector.broadcast %cst_9 : f32 to vector<1x128xf32>
    %17 = arith.maximumf %15, %16 : vector<1x128xf32>
    %c0_10 = arith.constant 0 : index
    %c0_11 = arith.constant 0 : index
    %18 = vector.load %arg2[%c0_10, %c0_11] : memref<1x128xf32, #tpu.memory_space<vmem>>, vector<1x128xf32>
    %cst_12 = arith.constant 9.99999974E-6 : f32
    %19 = vector.broadcast %cst_12 : f32 to vector<1x128xf32>
    %20 = arith.addf %17, %19 : vector<1x128xf32>
    %21 = math.rsqrt %20 : vector<1x128xf32>
    %22 = arith.mulf %18, %21 : vector<1x128xf32>
    %c0_13 = arith.constant 0 : index
    %c0_14 = arith.constant 0 : index
    %23 = vector.load %arg3[%c0_13, %c0_14] : memref<1x128xf32, #tpu.memory_space<vmem>>, vector<1x128xf32>
    %24 = arith.mulf %11, %22 : vector<1x128xf32>
    %25 = arith.subf %23, %24 : vector<1x128xf32>
    %26 = vector.broadcast %22 : vector<1x128xf32> to vector<512x128xf32>
    %27 = arith.mulf %4, %26 : vector<512x128xf32>
    %28 = vector.broadcast %25 : vector<1x128xf32> to vector<512x128xf32>
    %29 = arith.addf %27, %28 : vector<512x128xf32>
    %cst_15 = arith.constant 0.000000e+00 : f32
    %30 = vector.broadcast %cst_15 : f32 to vector<512x128xf32>
    %31 = arith.maximumf %29, %30 : vector<512x128xf32>
    %cst_16 = arith.constant 0.000000e+00 : bf16
    %32 = vector.broadcast %cst_16 : bf16 to vector<2x1x18x128xbf16>
    %cst_17 = arith.constant 0.000000e+00 : bf16
    %33 = vector.broadcast %cst_17 : bf16 to vector<2x16x1x128xbf16>
    %c0_18 = arith.constant 0 : index
    %c0_19 = arith.constant 0 : index
    %c0_20 = arith.constant 0 : index
    %c0_21 = arith.constant 0 : index
    %34 = vector.load %arg13[%c0_18, %c0_19, %c0_20, %c0_21] : memref<2x18x18x128xbf16, #tpu.memory_space<vmem>>, vector<2x1x18x128xbf16>
    tpu.vector_store %arg13[%c0_18, %c0_19, %c0_20, %c0_21], %32 {strides = array<i32>} : memref<2x18x18x128xbf16, #tpu.memory_space<vmem>>, vector<2x1x18x128xbf16>,
    %c0_22 = arith.constant 0 : index
    %c17 = arith.constant 17 : index
    %c0_23 = arith.constant 0 : index
    %c0_24 = arith.constant 0 : index
    %35 = vector.load %arg13[%c0_22, %c17, %c0_23, %c0_24] : memref<2x18x18x128xbf16, #tpu.memory_space<vmem>>, vector<2x1x18x128xbf16>
    tpu.vector_store %arg13[%c0_22, %c17, %c0_23, %c0_24], %32 {strides = array<i32>} : memref<2x18x18x128xbf16, #tpu.memory_space<vmem>>, vector<2x1x18x128xbf16>,
    %c0_25 = arith.constant 0 : index
    %c1 = arith.constant 1 : index
    %c0_26 = arith.constant 0 : index
    %c0_27 = arith.constant 0 : index
    %36 = vector.load %arg13[%c0_25, %c1, %c0_26, %c0_27] : memref<2x18x18x128xbf16, #tpu.memory_space<vmem>>, vector<2x16x1x128xbf16>
    tpu.vector_store %arg13[%c0_25, %c1, %c0_26, %c0_27], %33 {strides = array<i32>} : memref<2x18x18x128xbf16, #tpu.memory_space<vmem>>, vector<2x16x1x128xbf16>,
    %c0_28 = arith.constant 0 : index
    %c1_29 = arith.constant 1 : index
    %c17_30 = arith.constant 17 : index
    %c0_31 = arith.constant 0 : index
    %37 = vector.load %arg13[%c0_28, %c1_29, %c17_30, %c0_31] : memref<2x18x18x128xbf16, #tpu.memory_space<vmem>>, vector<2x16x1x128xbf16>
    tpu.vector_store %arg13[%c0_28, %c1_29, %c17_30, %c0_31], %33 {strides = array<i32>} : memref<2x18x18x128xbf16, #tpu.memory_space<vmem>>, vector<2x16x1x128xbf16>,
    %38 = vector.shape_cast %31 : vector<512x128xf32> to vector<2x16x16x128xf32>
    %39 = arith.truncf %38 : vector<2x16x16x128xf32> to vector<2x16x16x128xbf16>
    %c0_32 = arith.constant 0 : index
    %c1_33 = arith.constant 1 : index
    %c1_34 = arith.constant 1 : index
    %c0_35 = arith.constant 0 : index
    %40 = vector.load %arg13[%c0_32, %c1_33, %c1_34, %c0_35] : memref<2x18x18x128xbf16, #tpu.memory_space<vmem>>, vector<2x16x16x128xbf16>
    tpu.vector_store %arg13[%c0_32, %c1_33, %c1_34, %c0_35], %39 {strides = array<i32>} : memref<2x18x18x128xbf16, #tpu.memory_space<vmem>>, vector<2x16x16x128xbf16>,
    %c0_36 = arith.constant 0 : index
    %c0_37 = arith.constant 0 : index
    %c0_38 = arith.constant 0 : index
    %c0_39 = arith.constant 0 : index
    %41 = vector.load %arg13[%c0_36, %c0_37, %c0_38, %c0_39] : memref<2x18x18x128xbf16, #tpu.memory_space<vmem>>, vector<2x16x16x128xbf16>
    %42 = vector.shape_cast %41 : vector<2x16x16x128xbf16> to vector<512x128xbf16>
    %c0_40 = arith.constant 0 : index
    %c0_41 = arith.constant 0 : index
    %43 = vector.load %arg14[%c0_40, %c0_41] : memref<512x1152xbf16, #tpu.memory_space<vmem>>, vector<512x128xbf16>
    tpu.vector_store %arg14[%c0_40, %c0_41], %42 {strides = array<i32>} : memref<512x1152xbf16, #tpu.memory_space<vmem>>, vector<512x128xbf16>,
    %c0_42 = arith.constant 0 : index
    %c0_43 = arith.constant 0 : index
    %c1_44 = arith.constant 1 : index
    %c0_45 = arith.constant 0 : index
    %44 = vector.load %arg13[%c0_42, %c0_43, %c1_44, %c0_45] : memref<2x18x18x128xbf16, #tpu.memory_space<vmem>>, vector<2x16x16x128xbf16>
    %45 = vector.shape_cast %44 : vector<2x16x16x128xbf16> to vector<512x128xbf16>
    %c0_46 = arith.constant 0 : index
    %c128 = arith.constant 128 : index
    %46 = vector.load %arg14[%c0_46, %c128] : memref<512x1152xbf16, #tpu.memory_space<vmem>>, vector<512x128xbf16>
    tpu.vector_store %arg14[%c0_46, %c128], %45 {strides = array<i32>} : memref<512x1152xbf16, #tpu.memory_space<vmem>>, vector<512x128xbf16>,
    %c0_47 = arith.constant 0 : index
    %c0_48 = arith.constant 0 : index
    %c2 = arith.constant 2 : index
    %c0_49 = arith.constant 0 : index
    %47 = vector.load %arg13[%c0_47, %c0_48, %c2, %c0_49] : memref<2x18x18x128xbf16, #tpu.memory_space<vmem>>, vector<2x16x16x128xbf16>
    %48 = vector.shape_cast %47 : vector<2x16x16x128xbf16> to vector<512x128xbf16>
    %c0_50 = arith.constant 0 : index
    %c256 = arith.constant 256 : index
    %49 = vector.load %arg14[%c0_50, %c256] : memref<512x1152xbf16, #tpu.memory_space<vmem>>, vector<512x128xbf16>
    tpu.vector_store %arg14[%c0_50, %c256], %48 {strides = array<i32>} : memref<512x1152xbf16, #tpu.memory_space<vmem>>, vector<512x128xbf16>,
    %c0_51 = arith.constant 0 : index
    %c1_52 = arith.constant 1 : index
    %c0_53 = arith.constant 0 : index
    %c0_54 = arith.constant 0 : index
    %50 = vector.load %arg13[%c0_51, %c1_52, %c0_53, %c0_54] : memref<2x18x18x128xbf16, #tpu.memory_space<vmem>>, vector<2x16x16x128xbf16>
    %51 = vector.shape_cast %50 : vector<2x16x16x128xbf16> to vector<512x128xbf16>
    %c0_55 = arith.constant 0 : index
    %c384 = arith.constant 384 : index
    %52 = vector.load %arg14[%c0_55, %c384] : memref<512x1152xbf16, #tpu.memory_space<vmem>>, vector<512x128xbf16>
    tpu.vector_store %arg14[%c0_55, %c384], %51 {strides = array<i32>} : memref<512x1152xbf16, #tpu.memory_space<vmem>>, vector<512x128xbf16>,
    %c0_56 = arith.constant 0 : index
    %c1_57 = arith.constant 1 : index
    %c1_58 = arith.constant 1 : index
    %c0_59 = arith.constant 0 : index
    %53 = vector.load %arg13[%c0_56, %c1_57, %c1_58, %c0_59] : memref<2x18x18x128xbf16, #tpu.memory_space<vmem>>, vector<2x16x16x128xbf16>
    %54 = vector.shape_cast %53 : vector<2x16x16x128xbf16> to vector<512x128xbf16>
    %c0_60 = arith.constant 0 : index
    %c512 = arith.constant 512 : index
    %55 = vector.load %arg14[%c0_60, %c512] : memref<512x1152xbf16, #tpu.memory_space<vmem>>, vector<512x128xbf16>
    tpu.vector_store %arg14[%c0_60, %c512], %54 {strides = array<i32>} : memref<512x1152xbf16, #tpu.memory_space<vmem>>, vector<512x128xbf16>,
    %c0_61 = arith.constant 0 : index
    %c1_62 = arith.constant 1 : index
    %c2_63 = arith.constant 2 : index
    %c0_64 = arith.constant 0 : index
    %56 = vector.load %arg13[%c0_61, %c1_62, %c2_63, %c0_64] : memref<2x18x18x128xbf16, #tpu.memory_space<vmem>>, vector<2x16x16x128xbf16>
    %57 = vector.shape_cast %56 : vector<2x16x16x128xbf16> to vector<512x128xbf16>
    %c0_65 = arith.constant 0 : index
    %c640 = arith.constant 640 : index
    %58 = vector.load %arg14[%c0_65, %c640] : memref<512x1152xbf16, #tpu.memory_space<vmem>>, vector<512x128xbf16>
    tpu.vector_store %arg14[%c0_65, %c640], %57 {strides = array<i32>} : memref<512x1152xbf16, #tpu.memory_space<vmem>>, vector<512x128xbf16>,
    %c0_66 = arith.constant 0 : index
    %c2_67 = arith.constant 2 : index
    %c0_68 = arith.constant 0 : index
    %c0_69 = arith.constant 0 : index
    %59 = vector.load %arg13[%c0_66, %c2_67, %c0_68, %c0_69] : memref<2x18x18x128xbf16, #tpu.memory_space<vmem>>, vector<2x16x16x128xbf16>
    %60 = vector.shape_cast %59 : vector<2x16x16x128xbf16> to vector<512x128xbf16>
    %c0_70 = arith.constant 0 : index
    %c768 = arith.constant 768 : index
    %61 = vector.load %arg14[%c0_70, %c768] : memref<512x1152xbf16, #tpu.memory_space<vmem>>, vector<512x128xbf16>
    tpu.vector_store %arg14[%c0_70, %c768], %60 {strides = array<i32>} : memref<512x1152xbf16, #tpu.memory_space<vmem>>, vector<512x128xbf16>,
    %c0_71 = arith.constant 0 : index
    %c2_72 = arith.constant 2 : index
    %c1_73 = arith.constant 1 : index
    %c0_74 = arith.constant 0 : index
    %62 = vector.load %arg13[%c0_71, %c2_72, %c1_73, %c0_74] : memref<2x18x18x128xbf16, #tpu.memory_space<vmem>>, vector<2x16x16x128xbf16>
    %63 = vector.shape_cast %62 : vector<2x16x16x128xbf16> to vector<512x128xbf16>
    %c0_75 = arith.constant 0 : index
    %c896 = arith.constant 896 : index
    %64 = vector.load %arg14[%c0_75, %c896] : memref<512x1152xbf16, #tpu.memory_space<vmem>>, vector<512x128xbf16>
    tpu.vector_store %arg14[%c0_75, %c896], %63 {strides = array<i32>} : memref<512x1152xbf16, #tpu.memory_space<vmem>>, vector<512x128xbf16>,
    %c0_76 = arith.constant 0 : index
    %c2_77 = arith.constant 2 : index
    %c2_78 = arith.constant 2 : index
    %c0_79 = arith.constant 0 : index
    %65 = vector.load %arg13[%c0_76, %c2_77, %c2_78, %c0_79] : memref<2x18x18x128xbf16, #tpu.memory_space<vmem>>, vector<2x16x16x128xbf16>
    %66 = vector.shape_cast %65 : vector<2x16x16x128xbf16> to vector<512x128xbf16>
    %c0_80 = arith.constant 0 : index
    %c1024 = arith.constant 1024 : index
    %67 = vector.load %arg14[%c0_80, %c1024] : memref<512x1152xbf16, #tpu.memory_space<vmem>>, vector<512x128xbf16>
    tpu.vector_store %arg14[%c0_80, %c1024], %66 {strides = array<i32>} : memref<512x1152xbf16, #tpu.memory_space<vmem>>, vector<512x128xbf16>,
    %c0_81 = arith.constant 0 : index
    %c0_82 = arith.constant 0 : index
    %68 = vector.load %arg14[%c0_81, %c0_82] : memref<512x1152xbf16, #tpu.memory_space<vmem>>, vector<512x1152xbf16>
    %c0_83 = arith.constant 0 : index
    %c0_84 = arith.constant 0 : index
    %69 = vector.load %arg4[%c0_83, %c0_84] : memref<1152x128xbf16, #tpu.memory_space<vmem>>, vector<1152x128xbf16>
    %cst_85 = arith.constant dense<0.000000e+00> : vector<512x128xf32>
    %70 = tpu.matmul %68, %69, %cst_85 {dimension_numbers = #tpu.dot_dimension_numbers<[1], [0], [0], [1], [0, 0, 1, 1], [], []>} : vector<512x1152xbf16>, vector<1152x128xbf16>, vector<512x128xf32> -> vector<512x128xf32>
    %cst_86 = arith.constant dense<0.000000e+00> : vector<128xf32>
    %71 = vector.multi_reduction <add>, %70, %cst_86 [0] : vector<512x128xf32> to vector<128xf32>
    %72 = vector.shape_cast %71 : vector<128xf32> to vector<1x128xf32>
    %73 = arith.mulf %70, %70 : vector<512x128xf32>
    %cst_87 = arith.constant dense<0.000000e+00> : vector<128xf32>
    %74 = vector.multi_reduction <add>, %73, %cst_87 [0] : vector<512x128xf32> to vector<128xf32>
    %75 = vector.shape_cast %74 : vector<128xf32> to vector<1x128xf32>
    %cst_88 = arith.constant 0.001953125 : f32
    %76 = vector.broadcast %cst_88 : f32 to vector<1x128xf32>
    %77 = arith.mulf %72, %76 : vector<1x128xf32>
    %cst_89 = arith.constant 0.001953125 : f32
    %78 = vector.broadcast %cst_89 : f32 to vector<1x128xf32>
    %79 = arith.mulf %75, %78 : vector<1x128xf32>
    %80 = arith.mulf %77, %77 : vector<1x128xf32>
    %81 = arith.subf %79, %80 : vector<1x128xf32>
    %cst_90 = arith.constant 0.000000e+00 : f32
    %82 = vector.broadcast %cst_90 : f32 to vector<1x128xf32>
    %83 = arith.maximumf %81, %82 : vector<1x128xf32>
    %c0_91 = arith.constant 0 : index
    %c0_92 = arith.constant 0 : index
    %84 = vector.load %arg5[%c0_91, %c0_92] : memref<1x128xf32, #tpu.memory_space<vmem>>, vector<1x128xf32>
    %cst_93 = arith.constant 9.99999974E-6 : f32
    %85 = vector.broadcast %cst_93 : f32 to vector<1x128xf32>
    %86 = arith.addf %83, %85 : vector<1x128xf32>
    %87 = math.rsqrt %86 : vector<1x128xf32>
    %88 = arith.mulf %84, %87 : vector<1x128xf32>
    %c0_94 = arith.constant 0 : index
    %c0_95 = arith.constant 0 : index
    %89 = vector.load %arg6[%c0_94, %c0_95] : memref<1x128xf32, #tpu.memory_space<vmem>>, vector<1x128xf32>
    %90 = arith.mulf %77, %88 : vector<1x128xf32>
    %91 = arith.subf %89, %90 : vector<1x128xf32>
    %92 = vector.broadcast %88 : vector<1x128xf32> to vector<512x128xf32>
    %93 = arith.mulf %70, %92 : vector<512x128xf32>
    %94 = vector.broadcast %91 : vector<1x128xf32> to vector<512x128xf32>
    %95 = arith.addf %93, %94 : vector<512x128xf32>
    %cst_96 = arith.constant 0.000000e+00 : f32
    %96 = vector.broadcast %cst_96 : f32 to vector<512x128xf32>
    %97 = arith.maximumf %95, %96 : vector<512x128xf32>
    %98 = arith.truncf %97 : vector<512x128xf32> to vector<512x128xbf16>
    %c0_97 = arith.constant 0 : index
    %c0_98 = arith.constant 0 : index
    %99 = vector.load %arg7[%c0_97, %c0_98] : memref<128x128xbf16, #tpu.memory_space<vmem>>, vector<128x128xbf16>
    %cst_99 = arith.constant dense<0.000000e+00> : vector<512x128xf32>
    %100 = tpu.matmul %98, %99, %cst_99 {dimension_numbers = #tpu.dot_dimension_numbers<[1], [0], [0], [1], [0, 0, 1, 1], [], []>} : vector<512x128xbf16>, vector<128x128xbf16>, vector<512x128xf32> -> vector<512x128xf32>
    %cst_100 = arith.constant dense<0.000000e+00> : vector<128xf32>
    %101 = vector.multi_reduction <add>, %100, %cst_100 [0] : vector<512x128xf32> to vector<128xf32>
    %102 = vector.shape_cast %101 : vector<128xf32> to vector<1x128xf32>
    %103 = arith.mulf %100, %100 : vector<512x128xf32>
    %cst_101 = arith.constant dense<0.000000e+00> : vector<128xf32>
    %104 = vector.multi_reduction <add>, %103, %cst_101 [0] : vector<512x128xf32> to vector<128xf32>
    %105 = vector.shape_cast %104 : vector<128xf32> to vector<1x128xf32>
    %cst_102 = arith.constant 0.001953125 : f32
    %106 = vector.broadcast %cst_102 : f32 to vector<1x128xf32>
    %107 = arith.mulf %102, %106 : vector<1x128xf32>
    %cst_103 = arith.constant 0.001953125 : f32
    %108 = vector.broadcast %cst_103 : f32 to vector<1x128xf32>
    %109 = arith.mulf %105, %108 : vector<1x128xf32>
    %110 = arith.mulf %107, %107 : vector<1x128xf32>
    %111 = arith.subf %109, %110 : vector<1x128xf32>
    %cst_104 = arith.constant 0.000000e+00 : f32
    %112 = vector.broadcast %cst_104 : f32 to vector<1x128xf32>
    %113 = arith.maximumf %111, %112 : vector<1x128xf32>
    %c0_105 = arith.constant 0 : index
    %c0_106 = arith.constant 0 : index
    %114 = vector.load %arg8[%c0_105, %c0_106] : memref<1x128xf32, #tpu.memory_space<vmem>>, vector<1x128xf32>
    %cst_107 = arith.constant 9.99999974E-6 : f32
    %115 = vector.broadcast %cst_107 : f32 to vector<1x128xf32>
    %116 = arith.addf %113, %115 : vector<1x128xf32>
    %117 = math.rsqrt %116 : vector<1x128xf32>
    %118 = arith.mulf %114, %117 : vector<1x128xf32>
    %c0_108 = arith.constant 0 : index
    %c0_109 = arith.constant 0 : index
    %119 = vector.load %arg9[%c0_108, %c0_109] : memref<1x128xf32, #tpu.memory_space<vmem>>, vector<1x128xf32>
    %120 = arith.mulf %107, %118 : vector<1x128xf32>
    %121 = arith.subf %119, %120 : vector<1x128xf32>
    %122 = vector.broadcast %118 : vector<1x128xf32> to vector<512x128xf32>
    %123 = arith.mulf %100, %122 : vector<512x128xf32>
    %124 = vector.broadcast %121 : vector<1x128xf32> to vector<512x128xf32>
    %125 = arith.addf %123, %124 : vector<512x128xf32>
    %c0_110 = arith.constant 0 : index
    %c0_111 = arith.constant 0 : index
    %c0_112 = arith.constant 0 : index
    %c0_113 = arith.constant 0 : index
    %126 = vector.load %arg0[%c0_110, %c0_111, %c0_112, %c0_113] : memref<2x16x16x128xf32, #tpu.memory_space<vmem>>, vector<2x16x16x128xf32>
    %127 = vector.shape_cast %126 : vector<2x16x16x128xf32> to vector<512x128xf32>
    %128 = arith.addf %125, %127 : vector<512x128xf32>
    %cst_114 = arith.constant 0.000000e+00 : f32
    %129 = vector.broadcast %cst_114 : f32 to vector<512x128xf32>
    %130 = arith.maximumf %128, %129 : vector<512x128xf32>
    %131 = vector.shape_cast %130 : vector<512x128xf32> to vector<2x256x128xf32>
    %cst_115 = arith.constant dense<0.000000e+00> : vector<2x128xf32>
    %132 = vector.multi_reduction <add>, %131, %cst_115 [1] : vector<2x256x128xf32> to vector<2x128xf32>
    %cst_116 = arith.constant 2.560000e+02 : f32
    %133 = vector.broadcast %cst_116 : f32 to vector<2x128xf32>
    %134 = arith.divf %132, %133 : vector<2x128xf32>
    %135 = arith.truncf %134 : vector<2x128xf32> to vector<2x128xbf16>
    %c0_117 = arith.constant 0 : index
    %c0_118 = arith.constant 0 : index
    %136 = vector.load %arg10[%c0_117, %c0_118] : memref<128x4xbf16, #tpu.memory_space<vmem>>, vector<128x4xbf16>
    %cst_119 = arith.constant dense<0.000000e+00> : vector<2x4xf32>
    %137 = tpu.matmul %135, %136, %cst_119 {dimension_numbers = #tpu.dot_dimension_numbers<[1], [0], [0], [1], [0, 0, 1, 1], [], []>} : vector<2x128xbf16>, vector<128x4xbf16>, vector<2x4xf32> -> vector<2x4xf32>
    %cst_120 = arith.constant 0.000000e+00 : f32
    %138 = vector.broadcast %cst_120 : f32 to vector<2x4xf32>
    %139 = arith.maximumf %137, %138 : vector<2x4xf32>
    %140 = arith.truncf %139 : vector<2x4xf32> to vector<2x4xbf16>
    %c0_121 = arith.constant 0 : index
    %c0_122 = arith.constant 0 : index
    %141 = vector.load %arg11[%c0_121, %c0_122] : memref<4x128xbf16, #tpu.memory_space<vmem>>, vector<4x128xbf16>
    %cst_123 = arith.constant dense<0.000000e+00> : vector<2x128xf32>
    %142 = tpu.matmul %140, %141, %cst_123 {dimension_numbers = #tpu.dot_dimension_numbers<[1], [0], [0], [1], [0, 0, 1, 1], [], []>} : vector<2x4xbf16>, vector<4x128xbf16>, vector<2x128xf32> -> vector<2x128xf32>
    %143 = arith.negf %142 : vector<2x128xf32>
    %144 = math.exp %143 : vector<2x128xf32>
    %cst_124 = arith.constant 1.000000e+00 : f32
    %145 = vector.broadcast %cst_124 : f32 to vector<2x128xf32>
    %146 = arith.addf %145, %144 : vector<2x128xf32>
    %147 = arith.divf %145, %146 : vector<2x128xf32>
    %148 = vector.shape_cast %147 : vector<2x128xf32> to vector<2x1x128xf32>
    %149 = vector.broadcast %148 : vector<2x1x128xf32> to vector<2x256x128xf32>
    %150 = arith.mulf %131, %149 : vector<2x256x128xf32>
    %c0_125 = arith.constant 0 : index
    %c0_126 = arith.constant 0 : index
    %c0_127 = arith.constant 0 : index
    %151 = vector.load %arg12[%c0_125, %c0_126, %c0_127] : memref<2x256x128xf32, #tpu.memory_space<vmem>>, vector<2x256x128xf32>
    tpu.vector_store %arg12[%c0_125, %c0_126, %c0_127], %150 {strides = array<i32>} : memref<2x256x128xf32, #tpu.memory_space<vmem>>, vector<2x256x128xf32>,
    return
  }
}

</mosaic_0001>

<llo_original>
// kernel: tpu_custom_call.1
$region0: #{tpu_custom_call.1}
  #allocation0 [shape = 'u32[]', space=smem, size = 0x4, offset = 0x4, fixed_abs, tag = 'smem constant byte address 0x4 - core index']
  #allocation1 [shape = 'u32[144,128]{1,0:T(1,128)}', space=vmem, size = 0x12000, scoped, tag = 'internal scratch']
  #allocation2 [shape = 'bf16[2,18,18,128]{3,2,1,0:T(8,128)(2,1)}', space=vmem, size = 0x36000, scoped, tag = 'scratch operand']
  #allocation3 [shape = 'bf16[512,1152]{1,0:T(16,128)(2,1)}', space=vmem, size = 0x120000, scoped, tag = 'scratch operand']
  %s0 = inlined_call_operand.hbm [shape: f32[2,16,16,128], index: 0, kind: input, shape index: {}]
  %s1 = inlined_call_operand.hbm [shape: bf16[128,128], index: 1, kind: input, shape index: {}]
  %s2 = inlined_call_operand.hbm [shape: f32[1,128], index: 2, kind: input, shape index: {}]
  %s3 = inlined_call_operand.hbm [shape: f32[1,128], index: 3, kind: input, shape index: {}]
  %s4 = inlined_call_operand.hbm [shape: bf16[1152,128], index: 4, kind: input, shape index: {}]
  %s5 = inlined_call_operand.hbm [shape: f32[1,128], index: 5, kind: input, shape index: {}]
  %s6 = inlined_call_operand.hbm [shape: f32[1,128], index: 6, kind: input, shape index: {}]
  %s7 = inlined_call_operand.hbm [shape: bf16[128,128], index: 7, kind: input, shape index: {}]
  %s8 = inlined_call_operand.hbm [shape: f32[1,128], index: 8, kind: input, shape index: {}]
  %s9 = inlined_call_operand.hbm [shape: f32[1,128], index: 9, kind: input, shape index: {}]
  %s10 = inlined_call_operand.hbm [shape: bf16[128,4], index: 10, kind: input, shape index: {}]
  %s11 = inlined_call_operand.hbm [shape: bf16[4,128], index: 11, kind: input, shape index: {}]
  %s12 = inlined_call_operand.hbm [shape: f32[2,256,128], index: 12, kind: output, shape index: {}]
  %s13 = sld [smem:[#allocation0]]
  $region106: #{tpu_custom_call.1} parent=0
    _
  %s15 = ssub.s32 1, %s13
  %s16 = scalar_select 0, %s15, %s13
  $region1: #{tpu_custom_call.1} parent=0
    #allocation4 [shape = 'u8[262144]{0}', space=vmem, size = 0x40000, scoped, tag = 'input window, operand 0, single buffered']
    #allocation5 [shape = 's32[1]{0}', space=sflag, size = 0x4, scoped, tag = 'scoped memory for tpu_custom_call.1']
    #allocation6 [shape = 's32[1]{0}', space=sflag, size = 0x4, scoped, tag = 'scoped memory for tpu_custom_call.1']
    #allocation7 [shape = 'u8[32768]{0}', space=vmem, size = 0x8000, scoped, tag = 'input window, operand 1, single buffered']
    #allocation8 [shape = 's32[1]{0}', space=sflag, size = 0x4, scoped, tag = 'scoped memory for tpu_custom_call.1']
    #allocation9 [shape = 'u8[512]{0}', space=vmem, size = 0x400, scoped, tag = 'input window, operand 2, single buffered']
    #allocation10 [shape = 'u8[512]{0}', space=vmem, size = 0x400, scoped, tag = 'input window, operand 3, single buffered']
    #allocation11 [shape = 's32[1]{0}', space=sflag, size = 0x4, scoped, tag = 'scoped memory for tpu_custom_call.1']
    #allocation12 [shape = 'u8[294912]{0}', space=vmem, size = 0x48000, scoped, tag = 'input window, operand 4, single buffered']
    #allocation13 [shape = 'u8[512]{0}', space=vmem, size = 0x400, scoped, tag = 'input window, operand 5, single buffered']
    #allocation14 [shape = 's32[1]{0}', space=sflag, size = 0x4, scoped, tag = 'scoped memory for tpu_custom_call.1']
    #allocation15 [shape = 'u8[512]{0}', space=vmem, size = 0x400, scoped, tag = 'input window, operand 6, single buffered']
    #allocation16 [shape = 'u8[32768]{0}', space=vmem, size = 0x8000, scoped, tag = 'input window, operand 7, single buffered']
    #allocation17 [shape = 's32[1]{0}', space=sflag, size = 0x4, scoped, tag = 'scoped memory for tpu_custom_call.1']
    #allocation18 [shape = 'u8[512]{0}', space=vmem, size = 0x400, scoped, tag = 'input window, operand 8, single buffered']
    #allocation19 [shape = 'u8[512]{0}', space=vmem, size = 0x400, scoped, tag = 'input window, operand 9, single buffered']
    #allocation20 [shape = 's32[1]{0}', space=sflag, size = 0x4, scoped, tag = 'scoped memory for tpu_custom_call.1']
    #allocation21 [shape = 'u8[32768]{0}', space=vmem, size = 0x8000, scoped, tag = 'input window, operand 10, single buffered']
    #allocation22 [shape = 'u8[1024]{0}', space=vmem, size = 0x400, scoped, tag = 'input window, operand 11, single buffered']
    #allocation23 [shape = 's32[1]{0}', space=sflag, size = 0x4, scoped, tag = 'scoped memory for tpu_custom_call.1']
    #allocation24 [shape = 'u8[262144]{0}', space=vmem, size = 0x40000, scoped, tag = 'output window, operand 0, single buffered']
    %17 = vsyncpa [#allocation5], 0
    %18 = vsyncpa [#allocation8], 0
    %19 = vsyncpa [#allocation11], 0
    %20 = vsyncpa [#allocation14], 0
    %21 = vsyncpa [#allocation17], 0
    %22 = vsyncpa [#allocation20], 0
    %23 = vsyncpa [#allocation23], 0
    %24 = vsyncpa [#allocation6], 0
    // Predicated region
    $region2: #{tpu_custom_call.1} parent=1 // pred_check
      _
    $region3: #{tpu_custom_call.1} parent=1 // pred_check_branch
      %26 = sbr.rel (0) target = $region5
    $region4: #{tpu_custom_call.1} parent=1 // pred_region
      %s28 = ssub.s32 8192, 8192
      %29 = vsyncadd [#allocation5], %s28
      %s30 = sshll.u32 [#allocation4], 4
      %s31 = int_to_ptr.vmem [resolvable:$true] %s30
      %36 = dma.hbm_to_vmem [thread:$0]  %s0, 8192, %s31, [#allocation5], 128, 128, 8
    $region5: #{tpu_custom_call.1} parent=1 // pred_fallthru
      _
    // Predicated region
    $region6: #{tpu_custom_call.1} parent=1 // pred_check
      _
    $region7: #{tpu_custom_call.1} parent=1 // pred_check_branch
      %38 = sbr.rel (0) target = $region9
    $region8: #{tpu_custom_call.1} parent=1 // pred_region
      %s40 = ssub.s32 1024, 1024
      %41 = vsyncadd [#allocation8], %s40
      %s42 = sshll.u32 [#allocation7], 4
      %s43 = int_to_ptr.vmem [resolvable:$true] %s42
      %48 = dma.hbm_to_vmem [thread:$0]  %s1, 1024, %s43, [#allocation8], 64, 64, 4
    $region9: #{tpu_custom_call.1} parent=1 // pred_fallthru
      _
    // Predicated region
    $region10: #{tpu_custom_call.1} parent=1 // pred_check
      _
    $region11: #{tpu_custom_call.1} parent=1 // pred_check_branch
      %50 = sbr.rel (0) target = $region13
    $region12: #{tpu_custom_call.1} parent=1 // pred_region
      %s52 = ssub.s32 16, 16
      %53 = vsyncadd [#allocation8], %s52
      %s55 = sshll.u32 [#allocation9], 4
      %s56 = int_to_ptr.vmem [resolvable:$true] %s55
      %58 = dma.hbm_to_vmem [thread:$0]  %s2, 16, %s56, [#allocation8]
    $region13: #{tpu_custom_call.1} parent=1 // pred_fallthru
      _
    // Predicated region
    $region14: #{tpu_custom_call.1} parent=1 // pred_check
      _
    $region15: #{tpu_custom_call.1} parent=1 // pred_check_branch
      %60 = sbr.rel (0) target = $region17
    $region16: #{tpu_custom_call.1} parent=1 // pred_region
      %s62 = ssub.s32 16, 16
      %63 = vsyncadd [#allocation11], %s62
      %s65 = sshll.u32 [#allocation10], 4
      %s66 = int_to_ptr.vmem [resolvable:$true] %s65
      %68 = dma.hbm_to_vmem [thread:$0]  %s3, 16, %s66, [#allocation11]
    $region17: #{tpu_custom_call.1} parent=1 // pred_fallthru
      _
    // Predicated region
    $region18: #{tpu_custom_call.1} parent=1 // pred_check
      _
    $region19: #{tpu_custom_call.1} parent=1 // pred_check_branch
      %70 = sbr.rel (0) target = $region21
    $region20: #{tpu_custom_call.1} parent=1 // pred_region
      %s72 = ssub.s32 9216, 9216
      %73 = vsyncadd [#allocation11], %s72
      %s74 = sshll.u32 [#allocation12], 4
      %s75 = int_to_ptr.vmem [resolvable:$true] %s74
      %80 = dma.hbm_to_vmem [thread:$0]  %s4, 9216, %s75, [#allocation11], 64, 64, 4
    $region21: #{tpu_custom_call.1} parent=1 // pred_fallthru
      _
    // Predicated region
    $region22: #{tpu_custom_call.1} parent=1 // pred_check
      _
    $region23: #{tpu_custom_call.1} parent=1 // pred_check_branch
      %82 = sbr.rel (0) target = $region25
    $region24: #{tpu_custom_call.1} parent=1 // pred_region
      %s84 = ssub.s32 16, 16
      %85 = vsyncadd [#allocation14], %s84
      %s87 = sshll.u32 [#allocation13], 4
      %s88 = int_to_ptr.vmem [resolvable:$true] %s87
      %90 = dma.hbm_to_vmem [thread:$0]  %s5, 16, %s88, [#allocation14]
    $region25: #{tpu_custom_call.1} parent=1 // pred_fallthru
      _
    // Predicated region
    $region26: #{tpu_custom_call.1} parent=1 // pred_check
      _
    $region27: #{tpu_custom_call.1} parent=1 // pred_check_branch
      %92 = sbr.rel (0) target = $region29
    $region28: #{tpu_custom_call.1} parent=1 // pred_region
      %s94 = ssub.s32 16, 16
      %95 = vsyncadd [#allocation14], %s94
      %s97 = sshll.u32 [#allocation15], 4
      %s98 = int_to_ptr.vmem [resolvable:$true] %s97
      %100 = dma.hbm_to_vmem [thread:$0]  %s6, 16, %s98, [#allocation14]
    $region29: #{tpu_custom_call.1} parent=1 // pred_fallthru
      _
    // Predicated region
    $region30: #{tpu_custom_call.1} parent=1 // pred_check
      _
    $region31: #{tpu_custom_call.1} parent=1 // pred_check_branch
      %102 = sbr.rel (0) target = $region33
    $region32: #{tpu_custom_call.1} parent=1 // pred_region
      %s104 = ssub.s32 1024, 1024
      %105 = vsyncadd [#allocation17], %s104
      %s106 = sshll.u32 [#allocation16], 4
      %s107 = int_to_ptr.vmem [resolvable:$true] %s106
      %112 = dma.hbm_to_vmem [thread:$0]  %s7, 1024, %s107, [#allocation17], 64, 64, 4
    $region33: #{tpu_custom_call.1} parent=1 // pred_fallthru
      _
    // Predicated region
    $region34: #{tpu_custom_call.1} parent=1 // pred_check
      _
    $region35: #{tpu_custom_call.1} parent=1 // pred_check_branch
      %114 = sbr.rel (0) target = $region37
    $region36: #{tpu_custom_call.1} parent=1 // pred_region
      %s116 = ssub.s32 16, 16
      %117 = vsyncadd [#allocation17], %s116
      %s119 = sshll.u32 [#allocation18], 4
      %s120 = int_to_ptr.vmem [resolvable:$true] %s119
      %122 = dma.hbm_to_vmem [thread:$0]  %s8, 16, %s120, [#allocation17]
    $region37: #{tpu_custom_call.1} parent=1 // pred_fallthru
      _
    // Predicated region
    $region38: #{tpu_custom_call.1} parent=1 // pred_check
      _
    $region39: #{tpu_custom_call.1} parent=1 // pred_check_branch
      %124 = sbr.rel (0) target = $region41
    $region40: #{tpu_custom_call.1} parent=1 // pred_region
      %s126 = ssub.s32 16, 16
      %127 = vsyncadd [#allocation20], %s126
      %s129 = sshll.u32 [#allocation19], 4
      %s130 = int_to_ptr.vmem [resolvable:$true] %s129
      %132 = dma.hbm_to_vmem [thread:$0]  %s9, 16, %s130, [#allocation20]
    $region41: #{tpu_custom_call.1} parent=1 // pred_fallthru
      _
    // Predicated region
    $region42: #{tpu_custom_call.1} parent=1 // pred_check
      _
    $region43: #{tpu_custom_call.1} parent=1 // pred_check_branch
      %134 = sbr.rel (0) target = $region45
    $region44: #{tpu_custom_call.1} parent=1 // pred_region
      %s136 = ssub.s32 1024, 1024
      %137 = vsyncadd [#allocation20], %s136
      %s138 = sshll.u32 [#allocation21], 4
      %s139 = int_to_ptr.vmem [resolvable:$true] %s138
      %144 = dma.hbm_to_vmem [thread:$0]  %s10, 1024, %s139, [#allocation20], 64, 64, 4
    $region45: #{tpu_custom_call.1} parent=1 // pred_fallthru
      _
    // Predicated region
    $region46: #{tpu_custom_call.1} parent=1 // pred_check
      _
    $region47: #{tpu_custom_call.1} parent=1 // pred_check_branch
      %146 = sbr.rel (0) target = $region49
    $region48: #{tpu_custom_call.1} parent=1 // pred_region
      %s148 = ssub.s32 32, 32
      %149 = vsyncadd [#allocation23], %s148
      %s151 = sshll.u32 [#allocation22], 4
      %s152 = int_to_ptr.vmem [resolvable:$true] %s151
      %154 = dma.hbm_to_vmem [thread:$0]  %s11, 32, %s152, [#allocation23]
    $region49: #{tpu_custom_call.1} parent=1 // pred_fallthru
      _
    // Predicated region
    $region50: #{tpu_custom_call.1} parent=1 // pred_check
      _
    $region51: #{tpu_custom_call.1} parent=1 // pred_check_branch
      %156 = sbr.rel (0) target = $region53
    $region52: #{tpu_custom_call.1} parent=1 // pred_region
      %157 = dma.done [#allocation5], 8192
    $region53: #{tpu_custom_call.1} parent=1 // pred_fallthru
      _
    // Predicated region
    $region54: #{tpu_custom_call.1} parent=1 // pred_check
      _
    $region55: #{tpu_custom_call.1} parent=1 // pred_check_branch
      %159 = sbr.rel (0) target = $region57
    $region56: #{tpu_custom_call.1} parent=1 // pred_region
      %160 = dma.done [#allocation8], 1024
    $region57: #{tpu_custom_call.1} parent=1 // pred_fallthru
      _
    // Predicated region
    $region58: #{tpu_custom_call.1} parent=1 // pred_check
      _
    $region59: #{tpu_custom_call.1} parent=1 // pred_check_branch
      %162 = sbr.rel (0) target = $region61
    $region60: #{tpu_custom_call.1} parent=1 // pred_region
      %163 = dma.done [#allocation8], 16
    $region61: #{tpu_custom_call.1} parent=1 // pred_fallthru
      _
    // Predicated region
    $region62: #{tpu_custom_call.1} parent=1 // pred_check
      _
    $region63: #{tpu_custom_call.1} parent=1 // pred_check_branch
      %165 = sbr.rel (0) target = $region65
    $region64: #{tpu_custom_call.1} parent=1 // pred_region
      %166 = dma.done [#allocation11], 16
    $region65: #{tpu_custom_call.1} parent=1 // pred_fallthru
      _
    // Predicated region
    $region66: #{tpu_custom_call.1} parent=1 // pred_check
      _
    $region67: #{tpu_custom_call.1} parent=1 // pred_check_branch
      %168 = sbr.rel (0) target = $region69
    $region68: #{tpu_custom_call.1} parent=1 // pred_region
      %169 = dma.done [#allocation11], 9216
    $region69: #{tpu_custom_call.1} parent=1 // pred_fallthru
      _
    // Predicated region
    $region70: #{tpu_custom_call.1} parent=1 // pred_check
      _
    $region71: #{tpu_custom_call.1} parent=1 // pred_check_branch
      %171 = sbr.rel (0) target = $region73
    $region72: #{tpu_custom_call.1} parent=1 // pred_region
      %172 = dma.done [#allocation14], 16
    $region73: #{tpu_custom_call.1} parent=1 // pred_fallthru
      _
    // Predicated region
    $region74: #{tpu_custom_call.1} parent=1 // pred_check
      _
    $region75: #{tpu_custom_call.1} parent=1 // pred_check_branch
      %174 = sbr.rel (0) target = $region77
    $region76: #{tpu_custom_call.1} parent=1 // pred_region
      %175 = dma.done [#allocation14], 16
    $region77: #{tpu_custom_call.1} parent=1 // pred_fallthru
      _
    // Predicated region
    $region78: #{tpu_custom_call.1} parent=1 // pred_check
      _
    $region79: #{tpu_custom_call.1} parent=1 // pred_check_branch
      %177 = sbr.rel (0) target = $region81
    $region80: #{tpu_custom_call.1} parent=1 // pred_region
      %178 = dma.done [#allocation17], 1024
    $region81: #{tpu_custom_call.1} parent=1 // pred_fallthru
      _
    // Predicated region
    $region82: #{tpu_custom_call.1} parent=1 // pred_check
      _
    $region83: #{tpu_custom_call.1} parent=1 // pred_check_branch
      %180 = sbr.rel (0) target = $region85
    $region84: #{tpu_custom_call.1} parent=1 // pred_region
      %181 = dma.done [#allocation17], 16
    $region85: #{tpu_custom_call.1} parent=1 // pred_fallthru
      _
    // Predicated region
    $region86: #{tpu_custom_call.1} parent=1 // pred_check
      _
    $region87: #{tpu_custom_call.1} parent=1 // pred_check_branch
      %183 = sbr.rel (0) target = $region89
    $region88: #{tpu_custom_call.1} parent=1 // pred_region
      %184 = dma.done [#allocation20], 16
    $region89: #{tpu_custom_call.1} parent=1 // pred_fallthru
      _
    // Predicated region
    $region90: #{tpu_custom_call.1} parent=1 // pred_check
      _
    $region91: #{tpu_custom_call.1} parent=1 // pred_check_branch
      %186 = sbr.rel (0) target = $region93
    $region92: #{tpu_custom_call.1} parent=1 // pred_region
      %187 = dma.done [#allocation20], 1024
    $region93: #{tpu_custom_call.1} parent=1 // pred_fallthru
      _
    // Predicated region
    $region94: #{tpu_custom_call.1} parent=1 // pred_check
      _
    $region95: #{tpu_custom_call.1} parent=1 // pred_check_branch
      %189 = sbr.rel (0) target = $region97
    $region96: #{tpu_custom_call.1} parent=1 // pred_region
      %190 = dma.done [#allocation23], 32
    $region97: #{tpu_custom_call.1} parent=1 // pred_fallthru
      _
    %v192 = vld [vmem:[#allocation4] sm:$0xff]
    %v193 = vld [vmem:[#allocation4 + $0x8] sm:$0xff]
    %v194 = vld [vmem:[#allocation4 + $0x10] sm:$0xff]
    %v195 = vld [vmem:[#allocation4 + $0x18] sm:$0xff]
    %v196 = vld [vmem:[#allocation4 + $0x20] sm:$0xff]
    %v197 = vld [vmem:[#allocation4 + $0x28] sm:$0xff]
    %v198 = vld [vmem:[#allocation4 + $0x30] sm:$0xff]
    %v199 = vld [vmem:[#allocation4 + $0x38] sm:$0xff]
    %v200 = vld [vmem:[#allocation4 + $0x40] sm:$0xff]
    %v201 = vld [vmem:[#allocation4 + $0x48] sm:$0xff]
    %v202 = vld [vmem:[#allocation4 + $0x50] sm:$0xff]
    %v203 = vld [vmem:[#allocation4 + $0x58] sm:$0xff]
    %v204 = vld [vmem:[#allocation4 + $0x60] sm:$0xff]
    %v205 = vld [vmem:[#allocation4 + $0x68] sm:$0xff]
    %v206 = vld [vmem:[#allocation4 + $0x70] sm:$0xff]
    %v207 = vld [vmem:[#allocation4 + $0x78] sm:$0xff]
    %v208 = vld [vmem:[#allocation4 + $0x80] sm:$0xff]
    %v209 = vld [vmem:[#allocation4 + $0x88] sm:$0xff]
    %v210 = vld [vmem:[#allocation4 + $0x90] sm:$0xff]
    %v211 = vld [vmem:[#allocation4 + $0x98] sm:$0xff]
    %v212 = vld [vmem:[#allocation4 + $0xa0] sm:$0xff]
    %v213 = vld [vmem:[#allocation4 + $0xa8] sm:$0xff]
    %v214 = vld [vmem:[#allocation4 + $0xb0] sm:$0xff]
    %v215 = vld [vmem:[#allocation4 + $0xb8] sm:$0xff]
    %v216 = vld [vmem:[#allocation4 + $0xc0] sm:$0xff]
    %v217 = vld [vmem:[#allocation4 + $0xc8] sm:$0xff]
    %v218 = vld [vmem:[#allocation4 + $0xd0] sm:$0xff]
    %v219 = vld [vmem:[#allocation4 + $0xd8] sm:$0xff]
    %v220 = vld [vmem:[#allocation4 + $0xe0] sm:$0xff]
    %v221 = vld [vmem:[#allocation4 + $0xe8] sm:$0xff]
    %v222 = vld [vmem:[#allocation4 + $0xf0] sm:$0xff]
    %v223 = vld [vmem:[#allocation4 + $0xf8] sm:$0xff]
    %v224 = vld [vmem:[#allocation4 + $0x100] sm:$0xff]
    %v225 = vld [vmem:[#allocation4 + $0x108] sm:$0xff]
    %v226 = vld [vmem:[#allocation4 + $0x110] sm:$0xff]
    %v227 = vld [vmem:[#allocation4 + $0x118] sm:$0xff]
    %v228 = vld [vmem:[#allocation4 + $0x120] sm:$0xff]
    %v229 = vld [vmem:[#allocation4 + $0x128] sm:$0xff]
    %v230 = vld [vmem:[#allocation4 + $0x130] sm:$0xff]
    %v231 = vld [vmem:[#allocation4 + $0x138] sm:$0xff]
    %v232 = vld [vmem:[#allocation4 + $0x140] sm:$0xff]
    %v233 = vld [vmem:[#allocation4 + $0x148] sm:$0xff]
    %v234 = vld [vmem:[#allocation4 + $0x150] sm:$0xff]
    %v235 = vld [vmem:[#allocation4 + $0x158] sm:$0xff]
    %v236 = vld [vmem:[#allocation4 + $0x160] sm:$0xff]
    %v237 = vld [vmem:[#allocation4 + $0x168] sm:$0xff]
    %v238 = vld [vmem:[#allocation4 + $0x170] sm:$0xff]
    %v239 = vld [vmem:[#allocation4 + $0x178] sm:$0xff]
    %v240 = vld [vmem:[#allocation4 + $0x180] sm:$0xff]
    %v241 = vld [vmem:[#allocation4 + $0x188] sm:$0xff]
    %v242 = vld [vmem:[#allocation4 + $0x190] sm:$0xff]
    %v243 = vld [vmem:[#allocation4 + $0x198] sm:$0xff]
    %v244 = vld [vmem:[#allocation4 + $0x1a0] sm:$0xff]
    %v245 = vld [vmem:[#allocation4 + $0x1a8] sm:$0xff]
    %v246 = vld [vmem:[#allocation4 + $0x1b0] sm:$0xff]
    %v247 = vld [vmem:[#allocation4 + $0x1b8] sm:$0xff]
    %v248 = vld [vmem:[#allocation4 + $0x1c0] sm:$0xff]
    %v249 = vld [vmem:[#allocation4 + $0x1c8] sm:$0xff]
    %v250 = vld [vmem:[#allocation4 + $0x1d0] sm:$0xff]
    %v251 = vld [vmem:[#allocation4 + $0x1d8] sm:$0xff]
    %v252 = vld [vmem:[#allocation4 + $0x1e0] sm:$0xff]
    %v253 = vld [vmem:[#allocation4 + $0x1e8] sm:$0xff]
    %v254 = vld [vmem:[#allocation4 + $0x1f0] sm:$0xff]
    %v255 = vld [vmem:[#allocation4 + $0x1f8] sm:$0xff]
    %v256 = vpack.c.bf16 %v193, %v192
    %v257 = vpack.c.bf16 %v195, %v194
    %v258 = vpack.c.bf16 %v197, %v196
    %v259 = vpack.c.bf16 %v199, %v198
    %v260 = vpack.c.bf16 %v201, %v200
    %v261 = vpack.c.bf16 %v203, %v202
    %v262 = vpack.c.bf16 %v205, %v204
    %v263 = vpack.c.bf16 %v207, %v206
    %v264 = vpack.c.bf16 %v209, %v208
    %v265 = vpack.c.bf16 %v211, %v210
    %v266 = vpack.c.bf16 %v213, %v212
    %v267 = vpack.c.bf16 %v215, %v214
    %v268 = vpack.c.bf16 %v217, %v216
    %v269 = vpack.c.bf16 %v219, %v218
    %v270 = vpack.c.bf16 %v221, %v220
    %v271 = vpack.c.bf16 %v223, %v222
    %v272 = vpack.c.bf16 %v225, %v224
    %v273 = vpack.c.bf16 %v227, %v226
    %v274 = vpack.c.bf16 %v229, %v228
    %v275 = vpack.c.bf16 %v231, %v230
    %v276 = vpack.c.bf16 %v233, %v232
    %v277 = vpack.c.bf16 %v235, %v234
    %v278 = vpack.c.bf16 %v237, %v236
    %v279 = vpack.c.bf16 %v239, %v238
    %v280 = vpack.c.bf16 %v241, %v240
    %v281 = vpack.c.bf16 %v243, %v242
    %v282 = vpack.c.bf16 %v245, %v244
    %v283 = vpack.c.bf16 %v247, %v246
    %v284 = vpack.c.bf16 %v249, %v248
    %v285 = vpack.c.bf16 %v251, %v250
    %v286 = vpack.c.bf16 %v253, %v252
    %v287 = vpack.c.bf16 %v255, %v254
    %v288 = vld [vmem:[#allocation7] sm:$0xf]
    %v289 = vld [vmem:[#allocation7 + $0x4] sm:$0xf]
    %v290 = vld [vmem:[#allocation7 + $0x8] sm:$0xf]
    %v291 = vld [vmem:[#allocation7 + $0xc] sm:$0xf]
    %v292 = vld [vmem:[#allocation7 + $0x10] sm:$0xf]
    %v293 = vld [vmem:[#allocation7 + $0x14] sm:$0xf]
    %v294 = vld [vmem:[#allocation7 + $0x18] sm:$0xf]
    %v295 = vld [vmem:[#allocation7 + $0x1c] sm:$0xf]
    %v296 = vld [vmem:[#allocation7 + $0x20] sm:$0xf]
    %v297 = vld [vmem:[#allocation7 + $0x24] sm:$0xf]
    %v298 = vld [vmem:[#allocation7 + $0x28] sm:$0xf]
    %v299 = vld [vmem:[#allocation7 + $0x2c] sm:$0xf]
    %v300 = vld [vmem:[#allocation7 + $0x30] sm:$0xf]
    %v301 = vld [vmem:[#allocation7 + $0x34] sm:$0xf]
    %v302 = vld [vmem:[#allocation7 + $0x38] sm:$0xf]
    %v303 = vld [vmem:[#allocation7 + $0x3c] sm:$0xf]
    %v320 = vunpack.c.l.b16 %v288
    %v321 = vunpack.c.l.b16 %v289
    %v322 = vunpack.c.l.b16 %v290
    %v323 = vunpack.c.l.b16 %v291
    %v324 = vunpack.c.l.b16 %v292
    %v325 = vunpack.c.l.b16 %v293
    %v326 = vunpack.c.l.b16 %v294
    %v327 = vunpack.c.l.b16 %v295
    %v328 = vunpack.c.l.b16 %v296
    %v329 = vunpack.c.l.b16 %v297
    %v330 = vunpack.c.l.b16 %v298
    %v331 = vunpack.c.l.b16 %v299
    %v332 = vunpack.c.l.b16 %v300
    %v333 = vunpack.c.l.b16 %v301
    %v334 = vunpack.c.l.b16 %v302
    %v335 = vunpack.c.l.b16 %v303
    %v336 = vpack.c.b16 %v321, %v320
    %v337 = vpack.c.b16 %v323, %v322
    %v338 = vpack.c.b16 %v325, %v324
    %v339 = vpack.c.b16 %v327, %v326
    %v340 = vpack.c.b16 %v329, %v328
    %v341 = vpack.c.b16 %v331, %v330
    %v342 = vpack.c.b16 %v333, %v332
    %v343 = vpack.c.b16 %v335, %v334
    %352 = vmatprep.subr.bf16.mxu0 0
    %353 = vmatpush1.bf16.msra.mxu0 %v336
    %354 = vmatprep.subr.bf16.mxu0 0
    %355 = vmatpush1.bf16.msra.mxu0 %v337
    %356 = vmatprep.subr.bf16.mxu0 0
    %357 = vmatpush1.bf16.msra.mxu0 %v338
    %358 = vmatprep.subr.bf16.mxu0 0
    %359 = vmatpush1.bf16.msra.mxu0 %v339
    %360 = vmatprep.subr.bf16.mxu0 0
    %361 = vmatpush1.bf16.msra.mxu0 %v340
    %362 = vmatprep.subr.bf16.mxu0 0
    %363 = vmatpush1.bf16.msra.mxu0 %v341
    %364 = vmatprep.subr.bf16.mxu0 0
    %365 = vmatpush1.bf16.msra.mxu0 %v342
    %366 = vmatprep.subr.bf16.mxu0 0
    %367 = vmatpush1.bf16.msra.mxu0 %v343
    %368 = vmatprep.subr.bf16.mxu0 0
    %369 = vmatpush1.bf16.msra.mxu0 0
    %370 = vmatprep.subr.bf16.mxu0 0
    %371 = vmatpush1.bf16.msra.mxu0 0
    %372 = vmatprep.subr.bf16.mxu0 0
    %373 = vmatpush1.bf16.msra.mxu0 0
    %374 = vmatprep.subr.bf16.mxu0 0
    %375 = vmatpush1.bf16.msra.mxu0 0
    %376 = vmatprep.subr.bf16.mxu0 0
    %377 = vmatpush1.bf16.msra.mxu0 0
    %378 = vmatprep.subr.bf16.mxu0 0
    %379 = vmatpush1.bf16.msra.mxu0 0
    %380 = vmatprep.subr.bf16.mxu0 0
    %381 = vmatpush1.bf16.msra.mxu0 0
    %382 = vmatprep.subr.bf16.mxu0 0
    %383 = vmatpush1.bf16.msra.mxu0 0
    %384 = vmatprep.mubr.bf16.mxu0 0
    %385 = vmatmul.mubr.bf16.gmra.mrb[0].mxu0 %v256
    %v386 = vpop.f32.mrb[0].mxu0
    %v387 = vadd.f32 0.0, %v386
    %v388 = vpop.f32.mrb[0].mxu0
    %v389 = vpop.f32.mrb[0].mxu0
    %v390 = vadd.f32 0.0, %v389
    %v391 = vpop.f32.mrb[0].mxu0
    %392 = vmatprep.mubr.bf16.mxu0 0
    %393 = vmatmul.mubr.bf16.gmra.mrb[0].mxu0 %v257
    %v394 = vpop.f32.mrb[0].mxu0
    %v395 = vadd.f32 0.0, %v394
    %v396 = vpop.f32.mrb[0].mxu0
    %v397 = vpop.f32.mrb[0].mxu0
    %v398 = vadd.f32 0.0, %v397
    %v399 = vpop.f32.mrb[0].mxu0
    %400 = vmatprep.mubr.bf16.mxu0 0
    %401 = vmatmul.mubr.bf16.gmra.mrb[0].mxu0 %v258
    %v402 = vpop.f32.mrb[0].mxu0
    %v403 = vadd.f32 0.0, %v402
    %v404 = vpop.f32.mrb[0].mxu0
    %v405 = vpop.f32.mrb[0].mxu0
    %v406 = vadd.f32 0.0, %v405
    %v407 = vpop.f32.mrb[0].mxu0
    %408 = vmatprep.mubr.bf16.mxu0 0
    %409 = vmatmul.mubr.bf16.gmra.mrb[0].mxu0 %v259
    %v410 = vpop.f32.mrb[0].mxu0
    %v411 = vadd.f32 0.0, %v410
    %v412 = vpop.f32.mrb[0].mxu0
    %v413 = vpop.f32.mrb[0].mxu0
    %v414 = vadd.f32 0.0, %v413
    %v415 = vpop.f32.mrb[0].mxu0
    %416 = vmatprep.mubr.bf16.mxu0 0
    %417 = vmatmul.mubr.bf16.gmra.mrb[0].mxu0 %v260
    %v418 = vpop.f32.mrb[0].mxu0
    %v419 = vadd.f32 0.0, %v418
    %v420 = vpop.f32.mrb[0].mxu0
    %v421 = vpop.f32.mrb[0].mxu0
    %v422 = vadd.f32 0.0, %v421
    %v423 = vpop.f32.mrb[0].mxu0
    %424 = vmatprep.mubr.bf16.mxu0 0
    %425 = vmatmul.mubr.bf16.gmra.mrb[0].mxu0 %v261
    %v426 = vpop.f32.mrb[0].mxu0
    %v427 = vadd.f32 0.0, %v426
    %v428 = vpop.f32.mrb[0].mxu0
    %v429 = vpop.f32.mrb[0].mxu0
    %v430 = vadd.f32 0.0, %v429
    %v431 = vpop.f32.mrb[0].mxu0
    %432 = vmatprep.mubr.bf16.mxu0 0
    %433 = vmatmul.mubr.bf16.gmra.mrb[0].mxu0 %v262
    %v434 = vpop.f32.mrb[0].mxu0
    %v435 = vadd.f32 0.0, %v434
    %v436 = vpop.f32.mrb[0].mxu0
    %v437 = vpop.f32.mrb[0].mxu0
    %v438 = vadd.f32 0.0, %v437
    %v439 = vpop.f32.mrb[0].mxu0
    %440 = vmatprep.mubr.bf16.mxu0 0
    %441 = vmatmul.mubr.bf16.gmra.mrb[0].mxu0 %v263
    %v442 = vpop.f32.mrb[0].mxu0
    %v443 = vadd.f32 0.0, %v442
    %v444 = vpop.f32.mrb[0].mxu0
    %v445 = vpop.f32.mrb[0].mxu0
    %v446 = vadd.f32 0.0, %v445
    %v447 = vpop.f32.mrb[0].mxu0
    %448 = vmatprep.mubr.bf16.mxu0 0
    %449 = vmatmul.mubr.bf16.gmra.mrb[0].mxu0 %v264
    %v450 = vpop.f32.mrb[0].mxu0
    %v451 = vadd.f32 0.0, %v450
    %v452 = vpop.f32.mrb[0].mxu0
    %v453 = vpop.f32.mrb[0].mxu0
    %v454 = vadd.f32 0.0, %v453
    %v455 = vpop.f32.mrb[0].mxu0
    %456 = vmatprep.mubr.bf16.mxu0 0
    %457 = vmatmul.mubr.bf16.gmra.mrb[0].mxu0 %v265
    %v458 = vpop.f32.mrb[0].mxu0
    %v459 = vadd.f32 0.0, %v458
    %v460 = vpop.f32.mrb[0].mxu0
    %v461 = vpop.f32.mrb[0].mxu0
    %v462 = vadd.f32 0.0, %v461
    %v463 = vpop.f32.mrb[0].mxu0
    %464 = vmatprep.mubr.bf16.mxu0 0
    %465 = vmatmul.mubr.bf16.gmra.mrb[0].mxu0 %v266
    %v466 = vpop.f32.mrb[0].mxu0
    %v467 = vadd.f32 0.0, %v466
    %v468 = vpop.f32.mrb[0].mxu0
    %v469 = vpop.f32.mrb[0].mxu0
    %v470 = vadd.f32 0.0, %v469
    %v471 = vpop.f32.mrb[0].mxu0
    %472 = vmatprep.mubr.bf16.mxu0 0
    %473 = vmatmul.mubr.bf16.gmra.mrb[0].mxu0 %v267
    %v474 = vpop.f32.mrb[0].mxu0
    %v475 = vadd.f32 0.0, %v474
    %v476 = vpop.f32.mrb[0].mxu0
    %v477 = vpop.f32.mrb[0].mxu0
    %v478 = vadd.f32 0.0, %v477
    %v479 = vpop.f32.mrb[0].mxu0
    %480 = vmatprep.mubr.bf16.mxu0 0
    %481 = vmatmul.mubr.bf16.gmra.mrb[0].mxu0 %v268
    %v482 = vpop.f32.mrb[0].mxu0
    %v483 = vadd.f32 0.0, %v482
    %v484 = vpop.f32.mrb[0].mxu0
    %v485 = vpop.f32.mrb[0].mxu0
    %v486 = vadd.f32 0.0, %v485
    %v487 = vpop.f32.mrb[0].mxu0
    %488 = vmatprep.mubr.bf16.mxu0 0
    %489 = vmatmul.mubr.bf16.gmra.mrb[0].mxu0 %v269
    %v490 = vpop.f32.mrb[0].mxu0
    %v491 = vadd.f32 0.0, %v490
    %v492 = vpop.f32.mrb[0].mxu0
    %v493 = vpop.f32.mrb[0].mxu0
    %v494 = vadd.f32 0.0, %v493
    %v495 = vpop.f32.mrb[0].mxu0
    %496 = vmatprep.mubr.bf16.mxu0 0
    %497 = vmatmul.mubr.bf16.gmra.mrb[0].mxu0 %v270
    %v498 = vpop.f32.mrb[0].mxu0
    %v499 = vadd.f32 0.0, %v498
    %v500 = vpop.f32.mrb[0].mxu0
    %v501 = vpop.f32.mrb[0].mxu0
    %v502 = vadd.f32 0.0, %v501
    %v503 = vpop.f32.mrb[0].mxu0
    %504 = vmatprep.mubr.bf16.mxu0 0
    %505 = vmatmul.mubr.bf16.gmra.mrb[0].mxu0 %v271
    %v506 = vpop.f32.mrb[0].mxu0
    %v507 = vadd.f32 0.0, %v506
    %v508 = vpop.f32.mrb[0].mxu0
    %v509 = vpop.f32.mrb[0].mxu0
    %v510 = vadd.f32 0.0, %v509
    %v511 = vpop.f32.mrb[0].mxu0
    %512 = vmatprep.mubr.bf16.mxu0 0
    %513 = vmatmul.mubr.bf16.gmra.mrb[0].mxu0 %v272
    %v514 = vpop.f32.mrb[0].mxu0
    %v515 = vadd.f32 0.0, %v514
    %v516 = vpop.f32.mrb[0].mxu0
    %v517 = vpop.f32.mrb[0].mxu0
    %v518 = vadd.f32 0.0, %v517
    %v519 = vpop.f32.mrb[0].mxu0
    %520 = vmatprep.mubr.bf16.mxu0 0
    %521 = vmatmul.mubr.bf16.gmra.mrb[0].mxu0 %v273
    %v522 = vpop.f32.mrb[0].mxu0
    %v523 = vadd.f32 0.0, %v522
    %v524 = vpop.f32.mrb[0].mxu0
    %v525 = vpop.f32.mrb[0].mxu0
    %v526 = vadd.f32 0.0, %v525
    %v527 = vpop.f32.mrb[0].mxu0
    %528 = vmatprep.mubr.bf16.mxu0 0
    %529 = vmatmul.mubr.bf16.gmra.mrb[0].mxu0 %v274
    %v530 = vpop.f32.mrb[0].mxu0
    %v531 = vadd.f32 0.0, %v530
    %v532 = vpop.f32.mrb[0].mxu0
    %v533 = vpop.f32.mrb[0].mxu0
    %v534 = vadd.f32 0.0, %v533
    %v535 = vpop.f32.mrb[0].mxu0
    %536 = vmatprep.mubr.bf16.mxu0 0
    %537 = vmatmul.mubr.bf16.gmra.mrb[0].mxu0 %v275
    %v538 = vpop.f32.mrb[0].mxu0
    %v539 = vadd.f32 0.0, %v538
    %v540 = vpop.f32.mrb[0].mxu0
    %v541 = vpop.f32.mrb[0].mxu0
    %v542 = vadd.f32 0.0, %v541
    %v543 = vpop.f32.mrb[0].mxu0
    %544 = vmatprep.mubr.bf16.mxu0 0
    %545 = vmatmul.mubr.bf16.gmra.mrb[0].mxu0 %v276
    %v546 = vpop.f32.mrb[0].mxu0
    %v547 = vadd.f32 0.0, %v546
    %v548 = vpop.f32.mrb[0].mxu0
    %v549 = vpop.f32.mrb[0].mxu0
    %v550 = vadd.f32 0.0, %v549
    %v551 = vpop.f32.mrb[0].mxu0
    %552 = vmatprep.mubr.bf16.mxu0 0
    %553 = vmatmul.mubr.bf16.gmra.mrb[0].mxu0 %v277
    %v554 = vpop.f32.mrb[0].mxu0
    %v555 = vadd.f32 0.0, %v554
    %v556 = vpop.f32.mrb[0].mxu0
    %v557 = vpop.f32.mrb[0].mxu0
    %v558 = vadd.f32 0.0, %v557
    %v559 = vpop.f32.mrb[0].mxu0
    %560 = vmatprep.mubr.bf16.mxu0 0
    %561 = vmatmul.mubr.bf16.gmra.mrb[0].mxu0 %v278
    %v562 = vpop.f32.mrb[0].mxu0
    %v563 = vadd.f32 0.0, %v562
    %v564 = vpop.f32.mrb[0].mxu0
    %v565 = vpop.f32.mrb[0].mxu0
    %v566 = vadd.f32 0.0, %v565
    %v567 = vpop.f32.mrb[0].mxu0
    %568 = vmatprep.mubr.bf16.mxu0 0
    %569 = vmatmul.mubr.bf16.gmra.mrb[0].mxu0 %v279
    %v570 = vpop.f32.mrb[0].mxu0
    %v571 = vadd.f32 0.0, %v570
    %v572 = vpop.f32.mrb[0].mxu0
    %v573 = vpop.f32.mrb[0].mxu0
    %v574 = vadd.f32 0.0, %v573
    %v575 = vpop.f32.mrb[0].mxu0
    %576 = vmatprep.mubr.bf16.mxu0 0
    %577 = vmatmul.mubr.bf16.gmra.mrb[0].mxu0 %v280
    %v578 = vpop.f32.mrb[0].mxu0
    %v579 = vadd.f32 0.0, %v578
    %v580 = vpop.f32.mrb[0].mxu0
    %v581 = vpop.f32.mrb[0].mxu0
    %v582 = vadd.f32 0.0, %v581
    %v583 = vpop.f32.mrb[0].mxu0
    %584 = vmatprep.mubr.bf16.mxu0 0
    %585 = vmatmul.mubr.bf16.gmra.mrb[0].mxu0 %v281
    %v586 = vpop.f32.mrb[0].mxu0
    %v587 = vadd.f32 0.0, %v586
    %v588 = vpop.f32.mrb[0].mxu0
    %v589 = vpop.f32.mrb[0].mxu0
    %v590 = vadd.f32 0.0, %v589
    %v591 = vpop.f32.mrb[0].mxu0
    %592 = vmatprep.mubr.bf16.mxu0 0
    %593 = vmatmul.mubr.bf16.gmra.mrb[0].mxu0 %v282
    %v594 = vpop.f32.mrb[0].mxu0
    %v595 = vadd.f32 0.0, %v594
    %v596 = vpop.f32.mrb[0].mxu0
    %v597 = vpop.f32.mrb[0].mxu0
    %v598 = vadd.f32 0.0, %v597
    %v599 = vpop.f32.mrb[0].mxu0
    %600 = vmatprep.mubr.bf16.mxu0 0
    %601 = vmatmul.mubr.bf16.gmra.mrb[0].mxu0 %v283
    %v602 = vpop.f32.mrb[0].mxu0
    %v603 = vadd.f32 0.0, %v602
    %v604 = vpop.f32.mrb[0].mxu0
    %v605 = vpop.f32.mrb[0].mxu0
    %v606 = vadd.f32 0.0, %v605
    %v607 = vpop.f32.mrb[0].mxu0
    %608 = vmatprep.mubr.bf16.mxu0 0
    %609 = vmatmul.mubr.bf16.gmra.mrb[0].mxu0 %v284
    %v610 = vpop.f32.mrb[0].mxu0
    %v611 = vadd.f32 0.0, %v610
    %v612 = vpop.f32.mrb[0].mxu0
    %v613 = vpop.f32.mrb[0].mxu0
    %v614 = vadd.f32 0.0, %v613
    %v615 = vpop.f32.mrb[0].mxu0
    %616 = vmatprep.mubr.bf16.mxu0 0
    %617 = vmatmul.mubr.bf16.gmra.mrb[0].mxu0 %v285
    %v618 = vpop.f32.mrb[0].mxu0
    %v619 = vadd.f32 0.0, %v618
    %v620 = vpop.f32.mrb[0].mxu0
    %v621 = vpop.f32.mrb[0].mxu0
    %v622 = vadd.f32 0.0, %v621
    %v623 = vpop.f32.mrb[0].mxu0
    %624 = vmatprep.mubr.bf16.mxu0 0
    %625 = vmatmul.mubr.bf16.gmra.mrb[0].mxu0 %v286
    %v626 = vpop.f32.mrb[0].mxu0
    %v627 = vadd.f32 0.0, %v626
    %v628 = vpop.f32.mrb[0].mxu0
    %v629 = vpop.f32.mrb[0].mxu0
    %v630 = vadd.f32 0.0, %v629
    %v631 = vpop.f32.mrb[0].mxu0
    %632 = vmatprep.mubr.bf16.mxu0 0
    %633 = vmatmul.mubr.bf16.gmra.mrb[0].mxu0 %v287
    %v634 = vpop.f32.mrb[0].mxu0
    %v635 = vadd.f32 0.0, %v634
    %v636 = vpop.f32.mrb[0].mxu0
    %v637 = vpop.f32.mrb[0].mxu0
    %v638 = vadd.f32 0.0, %v637
    %v639 = vpop.f32.mrb[0].mxu0
    %640 = vdwg.mxu0
    %v641 = vadd.f32 %v387, %v390
    %v642 = vadd.f32 %v641, %v395
    %v643 = vadd.f32 %v642, %v398
    %v644 = vadd.f32 %v643, %v403
    %v645 = vadd.f32 %v644, %v406
    %v646 = vadd.f32 %v645, %v411
    %v647 = vadd.f32 %v646, %v414
    %v648 = vadd.f32 %v647, %v419
    %v649 = vadd.f32 %v648, %v422
    %v650 = vadd.f32 %v649, %v427
    %v651 = vadd.f32 %v650, %v430
    %v652 = vadd.f32 %v651, %v435
    %v653 = vadd.f32 %v652, %v438
    %v654 = vadd.f32 %v653, %v443
    %v655 = vadd.f32 %v654, %v446
    %v656 = vadd.f32 %v655, %v451
    %v657 = vadd.f32 %v656, %v454
    %v658 = vadd.f32 %v657, %v459
    %v659 = vadd.f32 %v658, %v462
    %v660 = vadd.f32 %v659, %v467
    %v661 = vadd.f32 %v660, %v470
    %v662 = vadd.f32 %v661, %v475
    %v663 = vadd.f32 %v662, %v478
    %v664 = vadd.f32 %v663, %v483
    %v665 = vadd.f32 %v664, %v486
    %v666 = vadd.f32 %v665, %v491
    %v667 = vadd.f32 %v666, %v494
    %v668 = vadd.f32 %v667, %v499
    %v669 = vadd.f32 %v668, %v502
    %v670 = vadd.f32 %v669, %v507
    %v671 = vadd.f32 %v670, %v510
    %v672 = vadd.f32 %v671, %v515
    %v673 = vadd.f32 %v672, %v518
    %v674 = vadd.f32 %v673, %v523
    %v675 = vadd.f32 %v674, %v526
    %v676 = vadd.f32 %v675, %v531
    %v677 = vadd.f32 %v676, %v534
    %v678 = vadd.f32 %v677, %v539
    %v679 = vadd.f32 %v678, %v542
    %v680 = vadd.f32 %v679, %v547
    %v681 = vadd.f32 %v680, %v550
    %v682 = vadd.f32 %v681, %v555
    %v683 = vadd.f32 %v682, %v558
    %v684 = vadd.f32 %v683, %v563
    %v685 = vadd.f32 %v684, %v566
    %v686 = vadd.f32 %v685, %v571
    %v687 = vadd.f32 %v686, %v574
    %v688 = vadd.f32 %v687, %v579
    %v689 = vadd.f32 %v688, %v582
    %v690 = vadd.f32 %v689, %v587
    %v691 = vadd.f32 %v690, %v590
    %v692 = vadd.f32 %v691, %v595
    %v693 = vadd.f32 %v692, %v598
    %v694 = vadd.f32 %v693, %v603
    %v695 = vadd.f32 %v694, %v606
    %v696 = vadd.f32 %v695, %v611
    %v697 = vadd.f32 %v696, %v614
    %v698 = vadd.f32 %v697, %v619
    %v699 = vadd.f32 %v698, %v622
    %v700 = vadd.f32 %v699, %v627
    %v701 = vadd.f32 %v700, %v630
    %v702 = vadd.f32 %v701, %v635
    %v703 = vadd.f32 %v702, %v638
    %v704 = vrot.slane %v703, 4
    %v705 = vadd.f32 %v703, %v704
    %v706 = vrot.slane %v705, 2
    %v707 = vadd.f32 %v705, %v706
    %v708 = vrot.slane %v707, 1
    %v709 = vadd.f32 %v707, %v708
    %v710 = vmul.f32 %v387, %v387
    %v711 = vmul.f32 %v390, %v390
    %v712 = vmul.f32 %v395, %v395
    %v713 = vmul.f32 %v398, %v398
    %v714 = vmul.f32 %v403, %v403
    %v715 = vmul.f32 %v406, %v406
    %v716 = vmul.f32 %v411, %v411
    %v717 = vmul.f32 %v414, %v414
    %v718 = vmul.f32 %v419, %v419
    %v719 = vmul.f32 %v422, %v422
    %v720 = vmul.f32 %v427, %v427
    %v721 = vmul.f32 %v430, %v430
    %v722 = vmul.f32 %v435, %v435
    %v723 = vmul.f32 %v438, %v438
    %v724 = vmul.f32 %v443, %v443
    %v725 = vmul.f32 %v446, %v446
    %v726 = vmul.f32 %v451, %v451
    %v727 = vmul.f32 %v454, %v454
    %v728 = vmul.f32 %v459, %v459
    %v729 = vmul.f32 %v462, %v462
    %v730 = vmul.f32 %v467, %v467
    %v731 = vmul.f32 %v470, %v470
    %v732 = vmul.f32 %v475, %v475
    %v733 = vmul.f32 %v478, %v478
    %v734 = vmul.f32 %v483, %v483
    %v735 = vmul.f32 %v486, %v486
    %v736 = vmul.f32 %v491, %v491
    %v737 = vmul.f32 %v494, %v494
    %v738 = vmul.f32 %v499, %v499
    %v739 = vmul.f32 %v502, %v502
    %v740 = vmul.f32 %v507, %v507
    %v741 = vmul.f32 %v510, %v510
    %v742 = vmul.f32 %v515, %v515
    %v743 = vmul.f32 %v518, %v518
    %v744 = vmul.f32 %v523, %v523
    %v745 = vmul.f32 %v526, %v526
    %v746 = vmul.f32 %v531, %v531
    %v747 = vmul.f32 %v534, %v534
    %v748 = vmul.f32 %v539, %v539
    %v749 = vmul.f32 %v542, %v542
    %v750 = vmul.f32 %v547, %v547
    %v751 = vmul.f32 %v550, %v550
    %v752 = vmul.f32 %v555, %v555
    %v753 = vmul.f32 %v558, %v558
    %v754 = vmul.f32 %v563, %v563
    %v755 = vmul.f32 %v566, %v566
    %v756 = vmul.f32 %v571, %v571
    %v757 = vmul.f32 %v574, %v574
    %v758 = vmul.f32 %v579, %v579
    %v759 = vmul.f32 %v582, %v582
    %v760 = vmul.f32 %v587, %v587
    %v761 = vmul.f32 %v590, %v590
    %v762 = vmul.f32 %v595, %v595
    %v763 = vmul.f32 %v598, %v598
    %v764 = vmul.f32 %v603, %v603
    %v765 = vmul.f32 %v606, %v606
    %v766 = vmul.f32 %v611, %v611
    %v767 = vmul.f32 %v614, %v614
    %v768 = vmul.f32 %v619, %v619
    %v769 = vmul.f32 %v622, %v622
    %v770 = vmul.f32 %v627, %v627
    %v771 = vmul.f32 %v630, %v630
    %v772 = vmul.f32 %v635, %v635
    %v773 = vmul.f32 %v638, %v638
    %v774 = vadd.f32 %v710, %v711
    %v775 = vadd.f32 %v774, %v712
    %v776 = vadd.f32 %v775, %v713
    %v777 = vadd.f32 %v776, %v714
    %v778 = vadd.f32 %v777, %v715
    %v779 = vadd.f32 %v778, %v716
    %v780 = vadd.f32 %v779, %v717
    %v781 = vadd.f32 %v780, %v718
    %v782 = vadd.f32 %v781, %v719
    %v783 = vadd.f32 %v782, %v720
    %v784 = vadd.f32 %v783, %v721
    %v785 = vadd.f32 %v784, %v722
    %v786 = vadd.f32 %v785, %v723
    %v787 = vadd.f32 %v786, %v724
    %v788 = vadd.f32 %v787, %v725
    %v789 = vadd.f32 %v788, %v726
    %v790 = vadd.f32 %v789, %v727
    %v791 = vadd.f32 %v790, %v728
    %v792 = vadd.f32 %v791, %v729
    %v793 = vadd.f32 %v792, %v730
    %v794 = vadd.f32 %v793, %v731
    %v795 = vadd.f32 %v794, %v732
    %v796 = vadd.f32 %v795, %v733
    %v797 = vadd.f32 %v796, %v734
    %v798 = vadd.f32 %v797, %v735
    %v799 = vadd.f32 %v798, %v736
    %v800 = vadd.f32 %v799, %v737
    %v801 = vadd.f32 %v800, %v738
    %v802 = vadd.f32 %v801, %v739
    %v803 = vadd.f32 %v802, %v740
    %v804 = vadd.f32 %v803, %v741
    %v805 = vadd.f32 %v804, %v742
    %v806 = vadd.f32 %v805, %v743
    %v807 = vadd.f32 %v806, %v744
    %v808 = vadd.f32 %v807, %v745
    %v809 = vadd.f32 %v808, %v746
    %v810 = vadd.f32 %v809, %v747
    %v811 = vadd.f32 %v810, %v748
    %v812 = vadd.f32 %v811, %v749
    %v813 = vadd.f32 %v812, %v750
    %v814 = vadd.f32 %v813, %v751
    %v815 = vadd.f32 %v814, %v752
    %v816 = vadd.f32 %v815, %v753
    %v817 = vadd.f32 %v816, %v754
    %v818 = vadd.f32 %v817, %v755
    %v819 = vadd.f32 %v818, %v756
    %v820 = vadd.f32 %v819, %v757
    %v821 = vadd.f32 %v820, %v758
    %v822 = vadd.f32 %v821, %v759
    %v823 = vadd.f32 %v822, %v760
    %v824 = vadd.f32 %v823, %v761
    %v825 = vadd.f32 %v824, %v762
    %v826 = vadd.f32 %v825, %v763
    %v827 = vadd.f32 %v826, %v764
    %v828 = vadd.f32 %v827, %v765
    %v829 = vadd.f32 %v828, %v766
    %v830 = vadd.f32 %v829, %v767
    %v831 = vadd.f32 %v830, %v768
    %v832 = vadd.f32 %v831, %v769
    %v833 = vadd.f32 %v832, %v770
    %v834 = vadd.f32 %v833, %v771
    %v835 = vadd.f32 %v834, %v772
    %v836 = vadd.f32 %v835, %v773
    %v837 = vrot.slane %v836, 4
    %v838 = vadd.f32 %v836, %v837
    %v839 = vrot.slane %v838, 2
    %v840 = vadd.f32 %v838, %v839
    %v841 = vrot.slane %v840, 1
    %v842 = vadd.f32 %v840, %v841
    %v843 = vmul.f32 %v709, 0.001953125
    %v844 = vmul.f32 %v842, 0.001953125
    %v845 = vmul.f32 %v843, %v843
    %v846 = vsub.f32 %v844, %v845
    %v847 = vmax.f32 %v846, 0.0
    %v848 = vld [vmem:[#allocation9] sm:$0x1]
    %v849 = vadd.f32 %v847, 1e-05
    %v850 = vrsqrt.pop %v849
    %v851 = vmul.f32 %v848, %v850
    %v852 = vld [vmem:[#allocation10] sm:$0x1]
    %v853 = vmul.f32 %v843, %v851
    %v854 = vsub.f32 %v852, %v853
    %v856 = vlaneseq
    %v857 = vshrl.u32 %v856, 7
    %v858 = vsub.s32 0, %v857
    %v859 = vrot.slane %v851, %v858
    %v861 = vmul.f32 %v387, %v859
    %v862 = vmul.f32 %v390, %v859
    %v863 = vmul.f32 %v395, %v859
    %v864 = vmul.f32 %v398, %v859
    %v865 = vmul.f32 %v403, %v859
    %v866 = vmul.f32 %v406, %v859
    %v867 = vmul.f32 %v411, %v859
    %v868 = vmul.f32 %v414, %v859
    %v869 = vmul.f32 %v419, %v859
    %v870 = vmul.f32 %v422, %v859
    %v871 = vmul.f32 %v427, %v859
    %v872 = vmul.f32 %v430, %v859
    %v873 = vmul.f32 %v435, %v859
    %v874 = vmul.f32 %v438, %v859
    %v875 = vmul.f32 %v443, %v859
    %v876 = vmul.f32 %v446, %v859
    %v877 = vmul.f32 %v451, %v859
    %v878 = vmul.f32 %v454, %v859
    %v879 = vmul.f32 %v459, %v859
    %v880 = vmul.f32 %v462, %v859
    %v881 = vmul.f32 %v467, %v859
    %v882 = vmul.f32 %v470, %v859
    %v883 = vmul.f32 %v475, %v859
    %v884 = vmul.f32 %v478, %v859
    %v885 = vmul.f32 %v483, %v859
    %v886 = vmul.f32 %v486, %v859
    %v887 = vmul.f32 %v491, %v859
    %v888 = vmul.f32 %v494, %v859
    %v889 = vmul.f32 %v499, %v859
    %v890 = vmul.f32 %v502, %v859
    %v891 = vmul.f32 %v507, %v859
    %v892 = vmul.f32 %v510, %v859
    %v893 = vmul.f32 %v515, %v859
    %v894 = vmul.f32 %v518, %v859
    %v895 = vmul.f32 %v523, %v859
    %v896 = vmul.f32 %v526, %v859
    %v897 = vmul.f32 %v531, %v859
    %v898 = vmul.f32 %v534, %v859
    %v899 = vmul.f32 %v539, %v859
    %v900 = vmul.f32 %v542, %v859
    %v901 = vmul.f32 %v547, %v859
    %v902 = vmul.f32 %v550, %v859
    %v903 = vmul.f32 %v555, %v859
    %v904 = vmul.f32 %v558, %v859
    %v905 = vmul.f32 %v563, %v859
    %v906 = vmul.f32 %v566, %v859
    %v907 = vmul.f32 %v571, %v859
    %v908 = vmul.f32 %v574, %v859
    %v909 = vmul.f32 %v579, %v859
    %v910 = vmul.f32 %v582, %v859
    %v911 = vmul.f32 %v587, %v859
    %v912 = vmul.f32 %v590, %v859
    %v913 = vmul.f32 %v595, %v859
    %v914 = vmul.f32 %v598, %v859
    %v915 = vmul.f32 %v603, %v859
    %v916 = vmul.f32 %v606, %v859
    %v917 = vmul.f32 %v611, %v859
    %v918 = vmul.f32 %v614, %v859
    %v919 = vmul.f32 %v619, %v859
    %v920 = vmul.f32 %v622, %v859
    %v921 = vmul.f32 %v627, %v859
    %v922 = vmul.f32 %v630, %v859
    %v923 = vmul.f32 %v635, %v859
    %v924 = vmul.f32 %v638, %v859
    %v926 = vlaneseq
    %v927 = vshrl.u32 %v926, 7
    %v928 = vsub.s32 0, %v927
    %v929 = vrot.slane %v854, %v928
    %v931 = vadd.f32 %v861, %v929
    %v932 = vadd.f32 %v862, %v929
    %v933 = vadd.f32 %v863, %v929
    %v934 = vadd.f32 %v864, %v929
    %v935 = vadd.f32 %v865, %v929
    %v936 = vadd.f32 %v866, %v929
    %v937 = vadd.f32 %v867, %v929
    %v938 = vadd.f32 %v868, %v929
    %v939 = vadd.f32 %v869, %v929
    %v940 = vadd.f32 %v870, %v929
    %v941 = vadd.f32 %v871, %v929
    %v942 = vadd.f32 %v872, %v929
    %v943 = vadd.f32 %v873, %v929
    %v944 = vadd.f32 %v874, %v929
    %v945 = vadd.f32 %v875, %v929
    %v946 = vadd.f32 %v876, %v929
    %v947 = vadd.f32 %v877, %v929
    %v948 = vadd.f32 %v878, %v929
    %v949 = vadd.f32 %v879, %v929
    %v950 = vadd.f32 %v880, %v929
    %v951 = vadd.f32 %v881, %v929
    %v952 = vadd.f32 %v882, %v929
    %v953 = vadd.f32 %v883, %v929
    %v954 = vadd.f32 %v884, %v929
    %v955 = vadd.f32 %v885, %v929
    %v956 = vadd.f32 %v886, %v929
    %v957 = vadd.f32 %v887, %v929
    %v958 = vadd.f32 %v888, %v929
    %v959 = vadd.f32 %v889, %v929
    %v960 = vadd.f32 %v890, %v929
    %v961 = vadd.f32 %v891, %v929
    %v962 = vadd.f32 %v892, %v929
    %v963 = vadd.f32 %v893, %v929
    %v964 = vadd.f32 %v894, %v929
    %v965 = vadd.f32 %v895, %v929
    %v966 = vadd.f32 %v896, %v929
    %v967 = vadd.f32 %v897, %v929
    %v968 = vadd.f32 %v898, %v929
    %v969 = vadd.f32 %v899, %v929
    %v970 = vadd.f32 %v900, %v929
    %v971 = vadd.f32 %v901, %v929
    %v972 = vadd.f32 %v902, %v929
    %v973 = vadd.f32 %v903, %v929
    %v974 = vadd.f32 %v904, %v929
    %v975 = vadd.f32 %v905, %v929
    %v976 = vadd.f32 %v906, %v929
    %v977 = vadd.f32 %v907, %v929
    %v978 = vadd.f32 %v908, %v929
    %v979 = vadd.f32 %v909, %v929
    %v980 = vadd.f32 %v910, %v929
    %v981 = vadd.f32 %v911, %v929
    %v982 = vadd.f32 %v912, %v929
    %v983 = vadd.f32 %v913, %v929
    %v984 = vadd.f32 %v914, %v929
    %v985 = vadd.f32 %v915, %v929
    %v986 = vadd.f32 %v916, %v929
    %v987 = vadd.f32 %v917, %v929
    %v988 = vadd.f32 %v918, %v929
    %v989 = vadd.f32 %v919, %v929
    %v990 = vadd.f32 %v920, %v929
    %v991 = vadd.f32 %v921, %v929
    %v992 = vadd.f32 %v922, %v929
    %v993 = vadd.f32 %v923, %v929
    %v994 = vadd.f32 %v924, %v929
    %v995 = vmax.f32 %v931, 0.0
    %v996 = vmax.f32 %v932, 0.0
    %v997 = vmax.f32 %v933, 0.0
    %v998 = vmax.f32 %v934, 0.0
    %v999 = vmax.f32 %v935, 0.0
    %v1000 = vmax.f32 %v936, 0.0
    %v1001 = vmax.f32 %v937, 0.0
    %v1002 = vmax.f32 %v938, 0.0
    %v1003 = vmax.f32 %v939, 0.0
    %v1004 = vmax.f32 %v940, 0.0
    %v1005 = vmax.f32 %v941, 0.0
    %v1006 = vmax.f32 %v942, 0.0
    %v1007 = vmax.f32 %v943, 0.0
    %v1008 = vmax.f32 %v944, 0.0
    %v1009 = vmax.f32 %v945, 0.0
    %v1010 = vmax.f32 %v946, 0.0
    %v1011 = vmax.f32 %v947, 0.0
    %v1012 = vmax.f32 %v948, 0.0
    %v1013 = vmax.f32 %v949, 0.0
    %v1014 = vmax.f32 %v950, 0.0
    %v1015 = vmax.f32 %v951, 0.0
    %v1016 = vmax.f32 %v952, 0.0
    %v1017 = vmax.f32 %v953, 0.0
    %v1018 = vmax.f32 %v954, 0.0
    %v1019 = vmax.f32 %v955, 0.0
    %v1020 = vmax.f32 %v956, 0.0
    %v1021 = vmax.f32 %v957, 0.0
    %v1022 = vmax.f32 %v958, 0.0
    %v1023 = vmax.f32 %v959, 0.0
    %v1024 = vmax.f32 %v960, 0.0
    %v1025 = vmax.f32 %v961, 0.0
    %v1026 = vmax.f32 %v962, 0.0
    %v1027 = vmax.f32 %v963, 0.0
    %v1028 = vmax.f32 %v964, 0.0
    %v1029 = vmax.f32 %v965, 0.0
    %v1030 = vmax.f32 %v966, 0.0
    %v1031 = vmax.f32 %v967, 0.0
    %v1032 = vmax.f32 %v968, 0.0
    %v1033 = vmax.f32 %v969, 0.0
    %v1034 = vmax.f32 %v970, 0.0
    %v1035 = vmax.f32 %v971, 0.0
    %v1036 = vmax.f32 %v972, 0.0
    %v1037 = vmax.f32 %v973, 0.0
    %v1038 = vmax.f32 %v974, 0.0
    %v1039 = vmax.f32 %v975, 0.0
    %v1040 = vmax.f32 %v976, 0.0
    %v1041 = vmax.f32 %v977, 0.0
    %v1042 = vmax.f32 %v978, 0.0
    %v1043 = vmax.f32 %v979, 0.0
    %v1044 = vmax.f32 %v980, 0.0
    %v1045 = vmax.f32 %v981, 0.0
    %v1046 = vmax.f32 %v982, 0.0
    %v1047 = vmax.f32 %v983, 0.0
    %v1048 = vmax.f32 %v984, 0.0
    %v1049 = vmax.f32 %v985, 0.0
    %v1050 = vmax.f32 %v986, 0.0
    %v1051 = vmax.f32 %v987, 0.0
    %v1052 = vmax.f32 %v988, 0.0
    %v1053 = vmax.f32 %v989, 0.0
    %v1054 = vmax.f32 %v990, 0.0
    %v1055 = vmax.f32 %v991, 0.0
    %v1056 = vmax.f32 %v992, 0.0
    %v1057 = vmax.f32 %v993, 0.0
    %v1058 = vmax.f32 %v994, 0.0
    %1059 = vst [vmem:[#allocation2] sm:$0xf] 0
    %1060 = vst [vmem:[#allocation2 + $0x4] sm:$0xf] 0
    %1061 = vst [vmem:[#allocation2 + $0x8] sm:$0x1] 0
    %1062 = vst [vmem:[#allocation2 + $0xd8] sm:$0xf] 0
    %1063 = vst [vmem:[#allocation2 + $0xdc] sm:$0xf] 0
    %1064 = vst [vmem:[#allocation2 + $0xe0] sm:$0x1] 0
    %s1065 = scalar_lea.vmem [#allocation2], 204
    %1066 = vst [vmem:[%s1065] sm:$0xf] 0
    %1067 = vst [vmem:[%s1065 + $0x4] sm:$0xf] 0
    %1068 = vst [vmem:[%s1065 + $0x8] sm:$0x1] 0
    %1069 = vst [vmem:[%s1065 + $0xd8] sm:$0xf] 0
    %1070 = vst [vmem:[%s1065 + $0xdc] sm:$0xf] 0
    %1071 = vst [vmem:[%s1065 + $0xe0] sm:$0x1] 0
    %s1072 = scalar_lea.vmem [#allocation2], 12
    %vm1073 = vcmask 1040384
    %vm1074 = vsmask.f32 256
    %vm1075 = vmand %vm1073, %vm1074
    %v1076 = vld [vmem:[%s1072] sm:$0x1]
    %v1077 = vsel %vm1075, 0, %v1076
    %1078 = vst [vmem:[%s1072] sm:$0x1] %v1077
    %v1079 = vld [vmem:[%s1072 + $0xc] sm:$0x1]
    %v1080 = vsel %vm1075, 0, %v1079
    %1081 = vst [vmem:[%s1072 + $0xc] sm:$0x1] %v1080
    %v1082 = vld [vmem:[%s1072 + $0x18] sm:$0x1]
    %v1083 = vsel %vm1075, 0, %v1082
    %1084 = vst [vmem:[%s1072 + $0x18] sm:$0x1] %v1083
    %v1085 = vld [vmem:[%s1072 + $0x24] sm:$0x1]
    %v1086 = vsel %vm1075, 0, %v1085
    %1087 = vst [vmem:[%s1072 + $0x24] sm:$0x1] %v1086
    %v1088 = vld [vmem:[%s1072 + $0x30] sm:$0x1]
    %v1089 = vsel %vm1075, 0, %v1088
    %1090 = vst [vmem:[%s1072 + $0x30] sm:$0x1] %v1089
    %v1091 = vld [vmem:[%s1072 + $0x3c] sm:$0x1]
    %v1092 = vsel %vm1075, 0, %v1091
    %1093 = vst [vmem:[%s1072 + $0x3c] sm:$0x1] %v1092
    %v1094 = vld [vmem:[%s1072 + $0x48] sm:$0x1]
    %v1095 = vsel %vm1075, 0, %v1094
    %1096 = vst [vmem:[%s1072 + $0x48] sm:$0x1] %v1095
    %v1097 = vld [vmem:[%s1072 + $0x54] sm:$0x1]
    %v1098 = vsel %vm1075, 0, %v1097
    %1099 = vst [vmem:[%s1072 + $0x54] sm:$0x1] %v1098
    %v1100 = vld [vmem:[%s1072 + $0x60] sm:$0x1]
    %v1101 = vsel %vm1075, 0, %v1100
    %1102 = vst [vmem:[%s1072 + $0x60] sm:$0x1] %v1101
    %v1103 = vld [vmem:[%s1072 + $0x6c] sm:$0x1]
    %v1104 = vsel %vm1075, 0, %v1103
    %1105 = vst [vmem:[%s1072 + $0x6c] sm:$0x1] %v1104
    %v1106 = vld [vmem:[%s1072 + $0x78] sm:$0x1]
    %v1107 = vsel %vm1075, 0, %v1106
    %1108 = vst [vmem:[%s1072 + $0x78] sm:$0x1] %v1107
    %v1109 = vld [vmem:[%s1072 + $0x84] sm:$0x1]
    %v1110 = vsel %vm1075, 0, %v1109
    %1111 = vst [vmem:[%s1072 + $0x84] sm:$0x1] %v1110
    %v1112 = vld [vmem:[%s1072 + $0x90] sm:$0x1]
    %v1113 = vsel %vm1075, 0, %v1112
    %1114 = vst [vmem:[%s1072 + $0x90] sm:$0x1] %v1113
    %v1115 = vld [vmem:[%s1072 + $0x9c] sm:$0x1]
    %v1116 = vsel %vm1075, 0, %v1115
    %1117 = vst [vmem:[%s1072 + $0x9c] sm:$0x1] %v1116
    %v1118 = vld [vmem:[%s1072 + $0xa8] sm:$0x1]
    %v1119 = vsel %vm1075, 0, %v1118
    %1120 = vst [vmem:[%s1072 + $0xa8] sm:$0x1] %v1119
    %v1121 = vld [vmem:[%s1072 + $0xb4] sm:$0x1]
    %v1122 = vsel %vm1075, 0, %v1121
    %1123 = vst [vmem:[%s1072 + $0xb4] sm:$0x1] %v1122
    %v1124 = vld [vmem:[%s1072 + $0xd8] sm:$0x1]
    %v1125 = vsel %vm1075, 0, %v1124
    %1126 = vst [vmem:[%s1072 + $0xd8] sm:$0x1] %v1125
    %v1127 = vld [vmem:[%s1072 + $0xe4] sm:$0x1]
    %v1128 = vsel %vm1075, 0, %v1127
    %1129 = vst [vmem:[%s1072 + $0xe4] sm:$0x1] %v1128
    %v1130 = vld [vmem:[%s1072 + $0xf0] sm:$0x1]
    %v1131 = vsel %vm1075, 0, %v1130
    %1132 = vst [vmem:[%s1072 + $0xf0] sm:$0x1] %v1131
    %v1133 = vld [vmem:[%s1072 + $0xfc] sm:$0x1]
    %v1134 = vsel %vm1075, 0, %v1133
    %1135 = vst [vmem:[%s1072 + $0xfc] sm:$0x1] %v1134
    %v1136 = vld [vmem:[%s1072 + $0x108] sm:$0x1]
    %v1137 = vsel %vm1075, 0, %v1136
    %1138 = vst [vmem:[%s1072 + $0x108] sm:$0x1] %v1137
    %v1139 = vld [vmem:[%s1072 + $0x114] sm:$0x1]
    %v1140 = vsel %vm1075, 0, %v1139
    %1141 = vst [vmem:[%s1072 + $0x114] sm:$0x1] %v1140
    %v1142 = vld [vmem:[%s1072 + $0x120] sm:$0x1]
    %v1143 = vsel %vm1075, 0, %v1142
    %1144 = vst [vmem:[%s1072 + $0x120] sm:$0x1] %v1143
    %v1145 = vld [vmem:[%s1072 + $0x12c] sm:$0x1]
    %v1146 = vsel %vm1075, 0, %v1145
    %1147 = vst [vmem:[%s1072 + $0x12c] sm:$0x1] %v1146
    %v1148 = vld [vmem:[%s1072 + $0x138] sm:$0x1]
    %v1149 = vsel %vm1075, 0, %v1148
    %1150 = vst [vmem:[%s1072 + $0x138] sm:$0x1] %v1149
    %v1151 = vld [vmem:[%s1072 + $0x144] sm:$0x1]
    %v1152 = vsel %vm1075, 0, %v1151
    %1153 = vst [vmem:[%s1072 + $0x144] sm:$0x1] %v1152
    %v1154 = vld [vmem:[%s1072 + $0x150] sm:$0x1]
    %v1155 = vsel %vm1075, 0, %v1154
    %1156 = vst [vmem:[%s1072 + $0x150] sm:$0x1] %v1155
    %v1157 = vld [vmem:[%s1072 + $0x15c] sm:$0x1]
    %v1158 = vsel %vm1075, 0, %v1157
    %1159 = vst [vmem:[%s1072 + $0x15c] sm:$0x1] %v1158
    %v1160 = vld [vmem:[%s1072 + $0x168] sm:$0x1]
    %v1161 = vsel %vm1075, 0, %v1160
    %1162 = vst [vmem:[%s1072 + $0x168] sm:$0x1] %v1161
    %v1163 = vld [vmem:[%s1072 + $0x174] sm:$0x1]
    %v1164 = vsel %vm1075, 0, %v1163
    %1165 = vst [vmem:[%s1072 + $0x174] sm:$0x1] %v1164
    %v1166 = vld [vmem:[%s1072 + $0x180] sm:$0x1]
    %v1167 = vsel %vm1075, 0, %v1166
    %1168 = vst [vmem:[%s1072 + $0x180] sm:$0x1] %v1167
    %v1169 = vld [vmem:[%s1072 + $0x18c] sm:$0x1]
    %v1170 = vsel %vm1075, 0, %v1169
    %1171 = vst [vmem:[%s1072 + $0x18c] sm:$0x1] %v1170
    %vm1172 = vsmask.f32 7938
    %vm1173 = vmand %vm1073, %vm1172
    %v1174 = vld [vmem:[%s1072 + $0x8] sm:$0x1]
    %v1175 = vsel %vm1173, 0, %v1174
    %1176 = vst [vmem:[%s1072 + $0x8] sm:$0x1] %v1175
    %v1177 = vld [vmem:[%s1072 + $0x14] sm:$0x1]
    %v1178 = vsel %vm1173, 0, %v1177
    %1179 = vst [vmem:[%s1072 + $0x14] sm:$0x1] %v1178
    %v1180 = vld [vmem:[%s1072 + $0x20] sm:$0x1]
    %v1181 = vsel %vm1173, 0, %v1180
    %1182 = vst [vmem:[%s1072 + $0x20] sm:$0x1] %v1181
    %v1183 = vld [vmem:[%s1072 + $0x2c] sm:$0x1]
    %v1184 = vsel %vm1173, 0, %v1183
    %1185 = vst [vmem:[%s1072 + $0x2c] sm:$0x1] %v1184
    %v1186 = vld [vmem:[%s1072 + $0x38] sm:$0x1]
    %v1187 = vsel %vm1173, 0, %v1186
    %1188 = vst [vmem:[%s1072 + $0x38] sm:$0x1] %v1187
    %v1189 = vld [vmem:[%s1072 + $0x44] sm:$0x1]
    %v1190 = vsel %vm1173, 0, %v1189
    %1191 = vst [vmem:[%s1072 + $0x44] sm:$0x1] %v1190
    %v1192 = vld [vmem:[%s1072 + $0x50] sm:$0x1]
    %v1193 = vsel %vm1173, 0, %v1192
    %1194 = vst [vmem:[%s1072 + $0x50] sm:$0x1] %v1193
    %v1195 = vld [vmem:[%s1072 + $0x5c] sm:$0x1]
    %v1196 = vsel %vm1173, 0, %v1195
    %1197 = vst [vmem:[%s1072 + $0x5c] sm:$0x1] %v1196
    %v1198 = vld [vmem:[%s1072 + $0x68] sm:$0x1]
    %v1199 = vsel %vm1173, 0, %v1198
    %1200 = vst [vmem:[%s1072 + $0x68] sm:$0x1] %v1199
    %v1201 = vld [vmem:[%s1072 + $0x74] sm:$0x1]
    %v1202 = vsel %vm1173, 0, %v1201
    %1203 = vst [vmem:[%s1072 + $0x74] sm:$0x1] %v1202
    %v1204 = vld [vmem:[%s1072 + $0x80] sm:$0x1]
    %v1205 = vsel %vm1173, 0, %v1204
    %1206 = vst [vmem:[%s1072 + $0x80] sm:$0x1] %v1205
    %v1207 = vld [vmem:[%s1072 + $0x8c] sm:$0x1]
    %v1208 = vsel %vm1173, 0, %v1207
    %1209 = vst [vmem:[%s1072 + $0x8c] sm:$0x1] %v1208
    %v1210 = vld [vmem:[%s1072 + $0x98] sm:$0x1]
    %v1211 = vsel %vm1173, 0, %v1210
    %1212 = vst [vmem:[%s1072 + $0x98] sm:$0x1] %v1211
    %v1213 = vld [vmem:[%s1072 + $0xa4] sm:$0x1]
    %v1214 = vsel %vm1173, 0, %v1213
    %1215 = vst [vmem:[%s1072 + $0xa4] sm:$0x1] %v1214
    %v1216 = vld [vmem:[%s1072 + $0xb0] sm:$0x1]
    %v1217 = vsel %vm1173, 0, %v1216
    %1218 = vst [vmem:[%s1072 + $0xb0] sm:$0x1] %v1217
    %v1219 = vld [vmem:[%s1072 + $0xbc] sm:$0x1]
    %v1220 = vsel %vm1173, 0, %v1219
    %1221 = vst [vmem:[%s1072 + $0xbc] sm:$0x1] %v1220
    %v1222 = vld [vmem:[%s1072 + $0xe0] sm:$0x1]
    %v1223 = vsel %vm1173, 0, %v1222
    %1224 = vst [vmem:[%s1072 + $0xe0] sm:$0x1] %v1223
    %v1225 = vld [vmem:[%s1072 + $0xec] sm:$0x1]
    %v1226 = vsel %vm1173, 0, %v1225
    %1227 = vst [vmem:[%s1072 + $0xec] sm:$0x1] %v1226
    %v1228 = vld [vmem:[%s1072 + $0xf8] sm:$0x1]
    %v1229 = vsel %vm1173, 0, %v1228
    %1230 = vst [vmem:[%s1072 + $0xf8] sm:$0x1] %v1229
    %v1231 = vld [vmem:[%s1072 + $0x104] sm:$0x1]
    %v1232 = vsel %vm1173, 0, %v1231
    %1233 = vst [vmem:[%s1072 + $0x104] sm:$0x1] %v1232
    %v1234 = vld [vmem:[%s1072 + $0x110] sm:$0x1]
    %v1235 = vsel %vm1173, 0, %v1234
    %1236 = vst [vmem:[%s1072 + $0x110] sm:$0x1] %v1235
    %v1237 = vld [vmem:[%s1072 + $0x11c] sm:$0x1]
    %v1238 = vsel %vm1173, 0, %v1237
    %1239 = vst [vmem:[%s1072 + $0x11c] sm:$0x1] %v1238
    %v1240 = vld [vmem:[%s1072 + $0x128] sm:$0x1]
    %v1241 = vsel %vm1173, 0, %v1240
    %1242 = vst [vmem:[%s1072 + $0x128] sm:$0x1] %v1241
    %v1243 = vld [vmem:[%s1072 + $0x134] sm:$0x1]
    %v1244 = vsel %vm1173, 0, %v1243
    %1245 = vst [vmem:[%s1072 + $0x134] sm:$0x1] %v1244
    %v1246 = vld [vmem:[%s1072 + $0x140] sm:$0x1]
    %v1247 = vsel %vm1173, 0, %v1246
    %1248 = vst [vmem:[%s1072 + $0x140] sm:$0x1] %v1247
    %v1249 = vld [vmem:[%s1072 + $0x14c] sm:$0x1]
    %v1250 = vsel %vm1173, 0, %v1249
    %1251 = vst [vmem:[%s1072 + $0x14c] sm:$0x1] %v1250
    %v1252 = vld [vmem:[%s1072 + $0x158] sm:$0x1]
    %v1253 = vsel %vm1173, 0, %v1252
    %1254 = vst [vmem:[%s1072 + $0x158] sm:$0x1] %v1253
    %v1255 = vld [vmem:[%s1072 + $0x164] sm:$0x1]
    %v1256 = vsel %vm1173, 0, %v1255
    %1257 = vst [vmem:[%s1072 + $0x164] sm:$0x1] %v1256
    %v1258 = vld [vmem:[%s1072 + $0x170] sm:$0x1]
    %v1259 = vsel %vm1173, 0, %v1258
    %1260 = vst [vmem:[%s1072 + $0x170] sm:$0x1] %v1259
    %v1261 = vld [vmem:[%s1072 + $0x17c] sm:$0x1]
    %v1262 = vsel %vm1173, 0, %v1261
    %1263 = vst [vmem:[%s1072 + $0x17c] sm:$0x1] %v1262
    %v1264 = vld [vmem:[%s1072 + $0x188] sm:$0x1]
    %v1265 = vsel %vm1173, 0, %v1264
    %1266 = vst [vmem:[%s1072 + $0x188] sm:$0x1] %v1265
    %v1267 = vld [vmem:[%s1072 + $0x194] sm:$0x1]
    %v1268 = vsel %vm1173, 0, %v1267
    %1269 = vst [vmem:[%s1072 + $0x194] sm:$0x1] %v1268
    %v1270 = vpack.c.bf16 %v996, %v995
    %v1271 = vpack.c.bf16 %v998, %v997
    %v1272 = vpack.c.bf16 %v1000, %v999
    %v1273 = vpack.c.bf16 %v1002, %v1001
    %v1274 = vpack.c.bf16 %v1004, %v1003
    %v1275 = vpack.c.bf16 %v1006, %v1005
    %v1276 = vpack.c.bf16 %v1008, %v1007
    %v1277 = vpack.c.bf16 %v1010, %v1009
    %v1278 = vpack.c.bf16 %v1012, %v1011
    %v1279 = vpack.c.bf16 %v1014, %v1013
    %v1280 = vpack.c.bf16 %v1016, %v1015
    %v1281 = vpack.c.bf16 %v1018, %v1017
    %v1282 = vpack.c.bf16 %v1020, %v1019
    %v1283 = vpack.c.bf16 %v1022, %v1021
    %v1284 = vpack.c.bf16 %v1024, %v1023
    %v1285 = vpack.c.bf16 %v1026, %v1025
    %v1286 = vpack.c.bf16 %v1028, %v1027
    %v1287 = vpack.c.bf16 %v1030, %v1029
    %v1288 = vpack.c.bf16 %v1032, %v1031
    %v1289 = vpack.c.bf16 %v1034, %v1033
    %v1290 = vpack.c.bf16 %v1036, %v1035
    %v1291 = vpack.c.bf16 %v1038, %v1037
    %v1292 = vpack.c.bf16 %v1040, %v1039
    %v1293 = vpack.c.bf16 %v1042, %v1041
    %v1294 = vpack.c.bf16 %v1044, %v1043
    %v1295 = vpack.c.bf16 %v1046, %v1045
    %v1296 = vpack.c.bf16 %v1048, %v1047
    %v1297 = vpack.c.bf16 %v1050, %v1049
    %v1298 = vpack.c.bf16 %v1052, %v1051
    %v1299 = vpack.c.bf16 %v1054, %v1053
    %v1300 = vpack.c.bf16 %v1056, %v1055
    %v1301 = vpack.c.bf16 %v1058, %v1057
    %v1334 = vunpack.c.l.b16 %v1270
    %v1335 = vunpack.c.h.b16 %v1270
    %v1336 = vunpack.c.l.b16 %v1271
    %v1337 = vunpack.c.h.b16 %v1271
    %v1338 = vunpack.c.l.b16 %v1272
    %v1339 = vunpack.c.h.b16 %v1272
    %v1340 = vunpack.c.l.b16 %v1273
    %v1341 = vunpack.c.h.b16 %v1273
    %v1342 = vunpack.c.l.b16 %v1274
    %v1343 = vunpack.c.h.b16 %v1274
    %v1344 = vunpack.c.l.b16 %v1275
    %v1345 = vunpack.c.h.b16 %v1275
    %v1346 = vunpack.c.l.b16 %v1276
    %v1347 = vunpack.c.h.b16 %v1276
    %v1348 = vunpack.c.l.b16 %v1277
    %v1349 = vunpack.c.h.b16 %v1277
    %v1350 = vunpack.c.l.b16 %v1278
    %v1351 = vunpack.c.h.b16 %v1278
    %v1352 = vunpack.c.l.b16 %v1279
    %v1353 = vunpack.c.h.b16 %v1279
    %v1354 = vunpack.c.l.b16 %v1280
    %v1355 = vunpack.c.h.b16 %v1280
    %v1356 = vunpack.c.l.b16 %v1281
    %v1357 = vunpack.c.h.b16 %v1281
    %v1358 = vunpack.c.l.b16 %v1282
    %v1359 = vunpack.c.h.b16 %v1282
    %v1360 = vunpack.c.l.b16 %v1283
    %v1361 = vunpack.c.h.b16 %v1283
    %v1362 = vunpack.c.l.b16 %v1284
    %v1363 = vunpack.c.h.b16 %v1284
    %v1364 = vunpack.c.l.b16 %v1285
    %v1365 = vunpack.c.h.b16 %v1285
    %v1366 = vunpack.c.l.b16 %v1286
    %v1367 = vunpack.c.h.b16 %v1286
    %v1368 = vunpack.c.l.b16 %v1287
    %v1369 = vunpack.c.h.b16 %v1287
    %v1370 = vunpack.c.l.b16 %v1288
    %v1371 = vunpack.c.h.b16 %v1288
    %v1372 = vunpack.c.l.b16 %v1289
    %v1373 = vunpack.c.h.b16 %v1289
    %v1374 = vunpack.c.l.b16 %v1290
    %v1375 = vunpack.c.h.b16 %v1290
    %v1376 = vunpack.c.l.b16 %v1291
    %v1377 = vunpack.c.h.b16 %v1291
    %v1378 = vunpack.c.l.b16 %v1292
    %v1379 = vunpack.c.h.b16 %v1292
    %v1380 = vunpack.c.l.b16 %v1293
    %v1381 = vunpack.c.h.b16 %v1293
    %v1382 = vunpack.c.l.b16 %v1294
    %v1383 = vunpack.c.h.b16 %v1294
    %v1384 = vunpack.c.l.b16 %v1295
    %v1385 = vunpack.c.h.b16 %v1295
    %v1386 = vunpack.c.l.b16 %v1296
    %v1387 = vunpack.c.h.b16 %v1296
    %v1388 = vunpack.c.l.b16 %v1297
    %v1389 = vunpack.c.h.b16 %v1297
    %v1390 = vunpack.c.l.b16 %v1298
    %v1391 = vunpack.c.h.b16 %v1298
    %v1392 = vunpack.c.l.b16 %v1299
    %v1393 = vunpack.c.h.b16 %v1299
    %v1394 = vunpack.c.l.b16 %v1300
    %v1395 = vunpack.c.h.b16 %v1300
    %v1396 = vunpack.c.l.b16 %v1301
    %v1397 = vunpack.c.h.b16 %v1301
    %v1398 = vpack.c.b16 %v1334, %v1334
    %v1399 = vpack.c.b16 %v1335, %v1335
    %v1400 = vpack.c.b16 %v1336, %v1336
    %v1401 = vpack.c.b16 %v1337, %v1337
    %v1402 = vpack.c.b16 %v1338, %v1338
    %v1403 = vpack.c.b16 %v1339, %v1339
    %v1404 = vpack.c.b16 %v1340, %v1340
    %v1405 = vpack.c.b16 %v1341, %v1341
    %v1406 = vpack.c.b16 %v1342, %v1342
    %v1407 = vpack.c.b16 %v1343, %v1343
    %v1408 = vpack.c.b16 %v1344, %v1344
    %v1409 = vpack.c.b16 %v1345, %v1345
    %v1410 = vpack.c.b16 %v1346, %v1346
    %v1411 = vpack.c.b16 %v1347, %v1347
    %v1412 = vpack.c.b16 %v1348, %v1348
    %v1413 = vpack.c.b16 %v1349, %v1349
    %v1414 = vpack.c.b16 %v1350, %v1350
    %v1415 = vpack.c.b16 %v1351, %v1351
    %v1416 = vpack.c.b16 %v1352, %v1352
    %v1417 = vpack.c.b16 %v1353, %v1353
    %v1418 = vpack.c.b16 %v1354, %v1354
    %v1419 = vpack.c.b16 %v1355, %v1355
    %v1420 = vpack.c.b16 %v1356, %v1356
    %v1421 = vpack.c.b16 %v1357, %v1357
    %v1422 = vpack.c.b16 %v1358, %v1358
    %v1423 = vpack.c.b16 %v1359, %v1359
    %v1424 = vpack.c.b16 %v1360, %v1360
    %v1425 = vpack.c.b16 %v1361, %v1361
    %v1426 = vpack.c.b16 %v1362, %v1362
    %v1427 = vpack.c.b16 %v1363, %v1363
    %v1428 = vpack.c.b16 %v1364, %v1364
    %v1429 = vpack.c.b16 %v1365, %v1365
    %v1430 = vpack.c.b16 %v1366, %v1366
    %v1431 = vpack.c.b16 %v1367, %v1367
    %v1432 = vpack.c.b16 %v1368, %v1368
    %v1433 = vpack.c.b16 %v1369, %v1369
    %v1434 = vpack.c.b16 %v1370, %v1370
    %v1435 = vpack.c.b16 %v1371, %v1371
    %v1436 = vpack.c.b16 %v1372, %v1372
    %v1437 = vpack.c.b16 %v1373, %v1373
    %v1438 = vpack.c.b16 %v1374, %v1374
    %v1439 = vpack.c.b16 %v1375, %v1375
    %v1440 = vpack.c.b16 %v1376, %v1376
    %v1441 = vpack.c.b16 %v1377, %v1377
    %v1442 = vpack.c.b16 %v1378, %v1378
    %v1443 = vpack.c.b16 %v1379, %v1379
    %v1444 = vpack.c.b16 %v1380, %v1380
    %v1445 = vpack.c.b16 %v1381, %v1381
    %v1446 = vpack.c.b16 %v1382, %v1382
    %v1447 = vpack.c.b16 %v1383, %v1383
    %v1448 = vpack.c.b16 %v1384, %v1384
    %v1449 = vpack.c.b16 %v1385, %v1385
    %v1450 = vpack.c.b16 %v1386, %v1386
    %v1451 = vpack.c.b16 %v1387, %v1387
    %v1452 = vpack.c.b16 %v1388, %v1388
    %v1453 = vpack.c.b16 %v1389, %v1389
    %v1454 = vpack.c.b16 %v1390, %v1390
    %v1455 = vpack.c.b16 %v1391, %v1391
    %v1456 = vpack.c.b16 %v1392, %v1392
    %v1457 = vpack.c.b16 %v1393, %v1393
    %v1458 = vpack.c.b16 %v1394, %v1394
    %v1459 = vpack.c.b16 %v1395, %v1395
    %v1460 = vpack.c.b16 %v1396, %v1396
    %v1461 = vpack.c.b16 %v1397, %v1397
    %vm1462 = vsmask.f32 4368
    %vm1463 = vmor %vm1074, %vm1462
    %v1465 = vshrl.u32 %v1398, 16
    %v1467 = vrot.slane %v1465, 7
    %v1468 = vshll.u32 %v1398, 16
    %v1470 = vor.u32 %v1467, %v1468
    %v1471 = vrot.slane %v1467, 4
    %v1473 = vshrl.u32 %v1399, 16
    %v1475 = vrot.slane %v1473, 7
    %v1476 = vshll.u32 %v1399, 16
    %v1478 = vor.u32 %v1475, %v1476
    %v1479 = vsel %vm1463, %v1471, %v1478
    %v1480 = vrot.slane %v1475, 4
    %v1482 = vshrl.u32 %v1400, 16
    %v1484 = vrot.slane %v1482, 7
    %v1485 = vshll.u32 %v1400, 16
    %v1487 = vor.u32 %v1484, %v1485
    %v1488 = vrot.slane %v1484, 4
    %v1490 = vshrl.u32 %v1401, 16
    %v1492 = vrot.slane %v1490, 7
    %v1493 = vshll.u32 %v1401, 16
    %v1495 = vor.u32 %v1492, %v1493
    %v1496 = vsel %vm1463, %v1488, %v1495
    %v1497 = vrot.slane %v1492, 4
    %v1499 = vshrl.u32 %v1402, 16
    %v1501 = vrot.slane %v1499, 7
    %v1502 = vshll.u32 %v1402, 16
    %v1504 = vor.u32 %v1501, %v1502
    %v1505 = vrot.slane %v1501, 4
    %v1507 = vshrl.u32 %v1403, 16
    %v1509 = vrot.slane %v1507, 7
    %v1510 = vshll.u32 %v1403, 16
    %v1512 = vor.u32 %v1509, %v1510
    %v1513 = vsel %vm1463, %v1505, %v1512
    %v1514 = vrot.slane %v1509, 4
    %v1516 = vshrl.u32 %v1404, 16
    %v1518 = vrot.slane %v1516, 7
    %v1519 = vshll.u32 %v1404, 16
    %v1521 = vor.u32 %v1518, %v1519
    %v1522 = vrot.slane %v1518, 4
    %v1524 = vshrl.u32 %v1405, 16
    %v1526 = vrot.slane %v1524, 7
    %v1527 = vshll.u32 %v1405, 16
    %v1529 = vor.u32 %v1526, %v1527
    %v1530 = vsel %vm1463, %v1522, %v1529
    %v1531 = vrot.slane %v1526, 4
    %v1533 = vshrl.u32 %v1406, 16
    %v1535 = vrot.slane %v1533, 7
    %v1536 = vshll.u32 %v1406, 16
    %v1538 = vor.u32 %v1535, %v1536
    %v1539 = vrot.slane %v1535, 4
    %v1541 = vshrl.u32 %v1407, 16
    %v1543 = vrot.slane %v1541, 7
    %v1544 = vshll.u32 %v1407, 16
    %v1546 = vor.u32 %v1543, %v1544
    %v1547 = vsel %vm1463, %v1539, %v1546
    %v1548 = vrot.slane %v1543, 4
    %v1550 = vshrl.u32 %v1408, 16
    %v1552 = vrot.slane %v1550, 7
    %v1553 = vshll.u32 %v1408, 16
    %v1555 = vor.u32 %v1552, %v1553
    %v1556 = vrot.slane %v1552, 4
    %v1558 = vshrl.u32 %v1409, 16
    %v1560 = vrot.slane %v1558, 7
    %v1561 = vshll.u32 %v1409, 16
    %v1563 = vor.u32 %v1560, %v1561
    %v1564 = vsel %vm1463, %v1556, %v1563
    %v1565 = vrot.slane %v1560, 4
    %v1567 = vshrl.u32 %v1410, 16
    %v1569 = vrot.slane %v1567, 7
    %v1570 = vshll.u32 %v1410, 16
    %v1572 = vor.u32 %v1569, %v1570
    %v1573 = vrot.slane %v1569, 4
    %v1575 = vshrl.u32 %v1411, 16
    %v1577 = vrot.slane %v1575, 7
    %v1578 = vshll.u32 %v1411, 16
    %v1580 = vor.u32 %v1577, %v1578
    %v1581 = vsel %vm1463, %v1573, %v1580
    %v1582 = vrot.slane %v1577, 4
    %v1584 = vshrl.u32 %v1412, 16
    %v1586 = vrot.slane %v1584, 7
    %v1587 = vshll.u32 %v1412, 16
    %v1589 = vor.u32 %v1586, %v1587
    %v1590 = vrot.slane %v1586, 4
    %v1592 = vshrl.u32 %v1413, 16
    %v1594 = vrot.slane %v1592, 7
    %v1595 = vshll.u32 %v1413, 16
    %v1597 = vor.u32 %v1594, %v1595
    %v1598 = vsel %vm1463, %v1590, %v1597
    %v1599 = vrot.slane %v1594, 4
    %v1601 = vshrl.u32 %v1414, 16
    %v1603 = vrot.slane %v1601, 7
    %v1604 = vshll.u32 %v1414, 16
    %v1606 = vor.u32 %v1603, %v1604
    %v1607 = vrot.slane %v1603, 4
    %v1609 = vshrl.u32 %v1415, 16
    %v1611 = vrot.slane %v1609, 7
    %v1612 = vshll.u32 %v1415, 16
    %v1614 = vor.u32 %v1611, %v1612
    %v1615 = vsel %vm1463, %v1607, %v1614
    %v1616 = vrot.slane %v1611, 4
    %v1618 = vshrl.u32 %v1416, 16
    %v1620 = vrot.slane %v1618, 7
    %v1621 = vshll.u32 %v1416, 16
    %v1623 = vor.u32 %v1620, %v1621
    %v1624 = vrot.slane %v1620, 4
    %v1626 = vshrl.u32 %v1417, 16
    %v1628 = vrot.slane %v1626, 7
    %v1629 = vshll.u32 %v1417, 16
    %v1631 = vor.u32 %v1628, %v1629
    %v1632 = vsel %vm1463, %v1624, %v1631
    %v1633 = vrot.slane %v1628, 4
    %v1635 = vshrl.u32 %v1418, 16
    %v1637 = vrot.slane %v1635, 7
    %v1638 = vshll.u32 %v1418, 16
    %v1640 = vor.u32 %v1637, %v1638
    %v1641 = vrot.slane %v1637, 4
    %v1643 = vshrl.u32 %v1419, 16
    %v1645 = vrot.slane %v1643, 7
    %v1646 = vshll.u32 %v1419, 16
    %v1648 = vor.u32 %v1645, %v1646
    %v1649 = vsel %vm1463, %v1641, %v1648
    %v1650 = vrot.slane %v1645, 4
    %v1652 = vshrl.u32 %v1420, 16
    %v1654 = vrot.slane %v1652, 7
    %v1655 = vshll.u32 %v1420, 16
    %v1657 = vor.u32 %v1654, %v1655
    %v1658 = vrot.slane %v1654, 4
    %v1660 = vshrl.u32 %v1421, 16
    %v1662 = vrot.slane %v1660, 7
    %v1663 = vshll.u32 %v1421, 16
    %v1665 = vor.u32 %v1662, %v1663
    %v1666 = vsel %vm1463, %v1658, %v1665
    %v1667 = vrot.slane %v1662, 4
    %v1669 = vshrl.u32 %v1422, 16
    %v1671 = vrot.slane %v1669, 7
    %v1672 = vshll.u32 %v1422, 16
    %v1674 = vor.u32 %v1671, %v1672
    %v1675 = vrot.slane %v1671, 4
    %v1677 = vshrl.u32 %v1423, 16
    %v1679 = vrot.slane %v1677, 7
    %v1680 = vshll.u32 %v1423, 16
    %v1682 = vor.u32 %v1679, %v1680
    %v1683 = vsel %vm1463, %v1675, %v1682
    %v1684 = vrot.slane %v1679, 4
    %v1686 = vshrl.u32 %v1424, 16
    %v1688 = vrot.slane %v1686, 7
    %v1689 = vshll.u32 %v1424, 16
    %v1691 = vor.u32 %v1688, %v1689
    %v1692 = vrot.slane %v1688, 4
    %v1694 = vshrl.u32 %v1425, 16
    %v1696 = vrot.slane %v1694, 7
    %v1697 = vshll.u32 %v1425, 16
    %v1699 = vor.u32 %v1696, %v1697
    %v1700 = vsel %vm1463, %v1692, %v1699
    %v1701 = vrot.slane %v1696, 4
    %v1703 = vshrl.u32 %v1426, 16
    %v1705 = vrot.slane %v1703, 7
    %v1706 = vshll.u32 %v1426, 16
    %v1708 = vor.u32 %v1705, %v1706
    %v1709 = vrot.slane %v1705, 4
    %v1711 = vshrl.u32 %v1427, 16
    %v1713 = vrot.slane %v1711, 7
    %v1714 = vshll.u32 %v1427, 16
    %v1716 = vor.u32 %v1713, %v1714
    %v1717 = vsel %vm1463, %v1709, %v1716
    %v1718 = vrot.slane %v1713, 4
    %v1720 = vshrl.u32 %v1428, 16
    %v1722 = vrot.slane %v1720, 7
    %v1723 = vshll.u32 %v1428, 16
    %v1725 = vor.u32 %v1722, %v1723
    %v1726 = vrot.slane %v1722, 4
    %v1728 = vshrl.u32 %v1429, 16
    %v1730 = vrot.slane %v1728, 7
    %v1731 = vshll.u32 %v1429, 16
    %v1733 = vor.u32 %v1730, %v1731
    %v1734 = vsel %vm1463, %v1726, %v1733
    %v1735 = vrot.slane %v1730, 4
    %v1737 = vshrl.u32 %v1430, 16
    %v1739 = vrot.slane %v1737, 7
    %v1740 = vshll.u32 %v1430, 16
    %v1742 = vor.u32 %v1739, %v1740
    %v1743 = vrot.slane %v1739, 4
    %v1745 = vshrl.u32 %v1431, 16
    %v1747 = vrot.slane %v1745, 7
    %v1748 = vshll.u32 %v1431, 16
    %v1750 = vor.u32 %v1747, %v1748
    %v1751 = vsel %vm1463, %v1743, %v1750
    %v1752 = vrot.slane %v1747, 4
    %v1754 = vshrl.u32 %v1432, 16
    %v1756 = vrot.slane %v1754, 7
    %v1757 = vshll.u32 %v1432, 16
    %v1759 = vor.u32 %v1756, %v1757
    %v1760 = vrot.slane %v1756, 4
    %v1762 = vshrl.u32 %v1433, 16
    %v1764 = vrot.slane %v1762, 7
    %v1765 = vshll.u32 %v1433, 16
    %v1767 = vor.u32 %v1764, %v1765
    %v1768 = vsel %vm1463, %v1760, %v1767
    %v1769 = vrot.slane %v1764, 4
    %v1771 = vshrl.u32 %v1434, 16
    %v1773 = vrot.slane %v1771, 7
    %v1774 = vshll.u32 %v1434, 16
    %v1776 = vor.u32 %v1773, %v1774
    %v1777 = vrot.slane %v1773, 4
    %v1779 = vshrl.u32 %v1435, 16
    %v1781 = vrot.slane %v1779, 7
    %v1782 = vshll.u32 %v1435, 16
    %v1784 = vor.u32 %v1781, %v1782
    %v1785 = vsel %vm1463, %v1777, %v1784
    %v1786 = vrot.slane %v1781, 4
    %v1788 = vshrl.u32 %v1436, 16
    %v1790 = vrot.slane %v1788, 7
    %v1791 = vshll.u32 %v1436, 16
    %v1793 = vor.u32 %v1790, %v1791
    %v1794 = vrot.slane %v1790, 4
    %v1796 = vshrl.u32 %v1437, 16
    %v1798 = vrot.slane %v1796, 7
    %v1799 = vshll.u32 %v1437, 16
    %v1801 = vor.u32 %v1798, %v1799
    %v1802 = vsel %vm1463, %v1794, %v1801
    %v1803 = vrot.slane %v1798, 4
    %v1805 = vshrl.u32 %v1438, 16
    %v1807 = vrot.slane %v1805, 7
    %v1808 = vshll.u32 %v1438, 16
    %v1810 = vor.u32 %v1807, %v1808
    %v1811 = vrot.slane %v1807, 4
    %v1813 = vshrl.u32 %v1439, 16
    %v1815 = vrot.slane %v1813, 7
    %v1816 = vshll.u32 %v1439, 16
    %v1818 = vor.u32 %v1815, %v1816
    %v1819 = vsel %vm1463, %v1811, %v1818
    %v1820 = vrot.slane %v1815, 4
    %v1822 = vshrl.u32 %v1440, 16
    %v1824 = vrot.slane %v1822, 7
    %v1825 = vshll.u32 %v1440, 16
    %v1827 = vor.u32 %v1824, %v1825
    %v1828 = vrot.slane %v1824, 4
    %v1830 = vshrl.u32 %v1441, 16
    %v1832 = vrot.slane %v1830, 7
    %v1833 = vshll.u32 %v1441, 16
    %v1835 = vor.u32 %v1832, %v1833
    %v1836 = vsel %vm1463, %v1828, %v1835
    %v1837 = vrot.slane %v1832, 4
    %v1839 = vshrl.u32 %v1442, 16
    %v1841 = vrot.slane %v1839, 7
    %v1842 = vshll.u32 %v1442, 16
    %v1844 = vor.u32 %v1841, %v1842
    %v1845 = vrot.slane %v1841, 4
    %v1847 = vshrl.u32 %v1443, 16
    %v1849 = vrot.slane %v1847, 7
    %v1850 = vshll.u32 %v1443, 16
    %v1852 = vor.u32 %v1849, %v1850
    %v1853 = vsel %vm1463, %v1845, %v1852
    %v1854 = vrot.slane %v1849, 4
    %v1856 = vshrl.u32 %v1444, 16
    %v1858 = vrot.slane %v1856, 7
    %v1859 = vshll.u32 %v1444, 16
    %v1861 = vor.u32 %v1858, %v1859
    %v1862 = vrot.slane %v1858, 4
    %v1864 = vshrl.u32 %v1445, 16
    %v1866 = vrot.slane %v1864, 7
    %v1867 = vshll.u32 %v1445, 16
    %v1869 = vor.u32 %v1866, %v1867
    %v1870 = vsel %vm1463, %v1862, %v1869
    %v1871 = vrot.slane %v1866, 4
    %v1873 = vshrl.u32 %v1446, 16
    %v1875 = vrot.slane %v1873, 7
    %v1876 = vshll.u32 %v1446, 16
    %v1878 = vor.u32 %v1875, %v1876
    %v1879 = vrot.slane %v1875, 4
    %v1881 = vshrl.u32 %v1447, 16
    %v1883 = vrot.slane %v1881, 7
    %v1884 = vshll.u32 %v1447, 16
    %v1886 = vor.u32 %v1883, %v1884
    %v1887 = vsel %vm1463, %v1879, %v1886
    %v1888 = vrot.slane %v1883, 4
    %v1890 = vshrl.u32 %v1448, 16
    %v1892 = vrot.slane %v1890, 7
    %v1893 = vshll.u32 %v1448, 16
    %v1895 = vor.u32 %v1892, %v1893
    %v1896 = vrot.slane %v1892, 4
    %v1898 = vshrl.u32 %v1449, 16
    %v1900 = vrot.slane %v1898, 7
    %v1901 = vshll.u32 %v1449, 16
    %v1903 = vor.u32 %v1900, %v1901
    %v1904 = vsel %vm1463, %v1896, %v1903
    %v1905 = vrot.slane %v1900, 4
    %v1907 = vshrl.u32 %v1450, 16
    %v1909 = vrot.slane %v1907, 7
    %v1910 = vshll.u32 %v1450, 16
    %v1912 = vor.u32 %v1909, %v1910
    %v1913 = vrot.slane %v1909, 4
    %v1915 = vshrl.u32 %v1451, 16
    %v1917 = vrot.slane %v1915, 7
    %v1918 = vshll.u32 %v1451, 16
    %v1920 = vor.u32 %v1917, %v1918
    %v1921 = vsel %vm1463, %v1913, %v1920
    %v1922 = vrot.slane %v1917, 4
    %v1924 = vshrl.u32 %v1452, 16
    %v1926 = vrot.slane %v1924, 7
    %v1927 = vshll.u32 %v1452, 16
    %v1929 = vor.u32 %v1926, %v1927
    %v1930 = vrot.slane %v1926, 4
    %v1932 = vshrl.u32 %v1453, 16
    %v1934 = vrot.slane %v1932, 7
    %v1935 = vshll.u32 %v1453, 16
    %v1937 = vor.u32 %v1934, %v1935
    %v1938 = vsel %vm1463, %v1930, %v1937
    %v1939 = vrot.slane %v1934, 4
    %v1941 = vshrl.u32 %v1454, 16
    %v1943 = vrot.slane %v1941, 7
    %v1944 = vshll.u32 %v1454, 16
    %v1946 = vor.u32 %v1943, %v1944
    %v1947 = vrot.slane %v1943, 4
    %v1949 = vshrl.u32 %v1455, 16
    %v1951 = vrot.slane %v1949, 7
    %v1952 = vshll.u32 %v1455, 16
    %v1954 = vor.u32 %v1951, %v1952
    %v1955 = vsel %vm1463, %v1947, %v1954
    %v1956 = vrot.slane %v1951, 4
    %v1958 = vshrl.u32 %v1456, 16
    %v1960 = vrot.slane %v1958, 7
    %v1961 = vshll.u32 %v1456, 16
    %v1963 = vor.u32 %v1960, %v1961
    %v1964 = vrot.slane %v1960, 4
    %v1966 = vshrl.u32 %v1457, 16
    %v1968 = vrot.slane %v1966, 7
    %v1969 = vshll.u32 %v1457, 16
    %v1971 = vor.u32 %v1968, %v1969
    %v1972 = vsel %vm1463, %v1964, %v1971
    %v1973 = vrot.slane %v1968, 4
    %v1975 = vshrl.u32 %v1458, 16
    %v1977 = vrot.slane %v1975, 7
    %v1978 = vshll.u32 %v1458, 16
    %v1980 = vor.u32 %v1977, %v1978
    %v1981 = vrot.slane %v1977, 4
    %v1983 = vshrl.u32 %v1459, 16
    %v1985 = vrot.slane %v1983, 7
    %v1986 = vshll.u32 %v1459, 16
    %v1988 = vor.u32 %v1985, %v1986
    %v1989 = vsel %vm1463, %v1981, %v1988
    %v1990 = vrot.slane %v1985, 4
    %v1992 = vshrl.u32 %v1460, 16
    %v1994 = vrot.slane %v1992, 7
    %v1995 = vshll.u32 %v1460, 16
    %v1997 = vor.u32 %v1994, %v1995
    %v1998 = vrot.slane %v1994, 4
    %v2000 = vshrl.u32 %v1461, 16
    %v2002 = vrot.slane %v2000, 7
    %v2003 = vshll.u32 %v1461, 16
    %v2005 = vor.u32 %v2002, %v2003
    %v2006 = vsel %vm1463, %v1998, %v2005
    %v2007 = vrot.slane %v2002, 4
    %vm2104 = vcmask 1043456
    %vm2105 = vmand %vm2104, %vm1172
    %v2106 = vld [vmem:[%s1072] sm:$0xf]
    %v2107 = vsel %vm2105, %v1470, %v2106
    %2108 = vst [vmem:[%s1072] sm:$0xf] %v2107
    %2109 = vst [vmem:[%s1072 + $0x4] sm:$0xf] %v1479
    %v2110 = vld [vmem:[%s1072 + $0x8] sm:$0x1]
    %v2111 = vsel %vm1075, %v1480, %v2110
    %2112 = vst [vmem:[%s1072 + $0x8] sm:$0x1] %v2111
    %v2113 = vld [vmem:[%s1072 + $0xc] sm:$0xf]
    %v2114 = vsel %vm2105, %v1487, %v2113
    %2115 = vst [vmem:[%s1072 + $0xc] sm:$0xf] %v2114
    %2116 = vst [vmem:[%s1072 + $0x10] sm:$0xf] %v1496
    %v2117 = vld [vmem:[%s1072 + $0x14] sm:$0x1]
    %v2118 = vsel %vm1075, %v1497, %v2117
    %2119 = vst [vmem:[%s1072 + $0x14] sm:$0x1] %v2118
    %v2120 = vld [vmem:[%s1072 + $0x18] sm:$0xf]
    %v2121 = vsel %vm2105, %v1504, %v2120
    %2122 = vst [vmem:[%s1072 + $0x18] sm:$0xf] %v2121
    %2123 = vst [vmem:[%s1072 + $0x1c] sm:$0xf] %v1513
    %v2124 = vld [vmem:[%s1072 + $0x20] sm:$0x1]
    %v2125 = vsel %vm1075, %v1514, %v2124
    %2126 = vst [vmem:[%s1072 + $0x20] sm:$0x1] %v2125
    %v2127 = vld [vmem:[%s1072 + $0x24] sm:$0xf]
    %v2128 = vsel %vm2105, %v1521, %v2127
    %2129 = vst [vmem:[%s1072 + $0x24] sm:$0xf] %v2128
    %2130 = vst [vmem:[%s1072 + $0x28] sm:$0xf] %v1530
    %v2131 = vld [vmem:[%s1072 + $0x2c] sm:$0x1]
    %v2132 = vsel %vm1075, %v1531, %v2131
    %2133 = vst [vmem:[%s1072 + $0x2c] sm:$0x1] %v2132
    %v2134 = vld [vmem:[%s1072 + $0x30] sm:$0xf]
    %v2135 = vsel %vm2105, %v1538, %v2134
    %2136 = vst [vmem:[%s1072 + $0x30] sm:$0xf] %v2135
    %2137 = vst [vmem:[%s1072 + $0x34] sm:$0xf] %v1547
    %v2138 = vld [vmem:[%s1072 + $0x38] sm:$0x1]
    %v2139 = vsel %vm1075, %v1548, %v2138
    %2140 = vst [vmem:[%s1072 + $0x38] sm:$0x1] %v2139
    %v2141 = vld [vmem:[%s1072 + $0x3c] sm:$0xf]
    %v2142 = vsel %vm2105, %v1555, %v2141
    %2143 = vst [vmem:[%s1072 + $0x3c] sm:$0xf] %v2142
    %2144 = vst [vmem:[%s1072 + $0x40] sm:$0xf] %v1564
    %v2145 = vld [vmem:[%s1072 + $0x44] sm:$0x1]
    %v2146 = vsel %vm1075, %v1565, %v2145
    %2147 = vst [vmem:[%s1072 + $0x44] sm:$0x1] %v2146
    %v2148 = vld [vmem:[%s1072 + $0x48] sm:$0xf]
    %v2149 = vsel %vm2105, %v1572, %v2148
    %2150 = vst [vmem:[%s1072 + $0x48] sm:$0xf] %v2149
    %2151 = vst [vmem:[%s1072 + $0x4c] sm:$0xf] %v1581
    %v2152 = vld [vmem:[%s1072 + $0x50] sm:$0x1]
    %v2153 = vsel %vm1075, %v1582, %v2152
    %2154 = vst [vmem:[%s1072 + $0x50] sm:$0x1] %v2153
    %v2155 = vld [vmem:[%s1072 + $0x54] sm:$0xf]
    %v2156 = vsel %vm2105, %v1589, %v2155
    %2157 = vst [vmem:[%s1072 + $0x54] sm:$0xf] %v2156
    %2158 = vst [vmem:[%s1072 + $0x58] sm:$0xf] %v1598
    %v2159 = vld [vmem:[%s1072 + $0x5c] sm:$0x1]
    %v2160 = vsel %vm1075, %v1599, %v2159
    %2161 = vst [vmem:[%s1072 + $0x5c] sm:$0x1] %v2160
    %v2162 = vld [vmem:[%s1072 + $0x60] sm:$0xf]
    %v2163 = vsel %vm2105, %v1606, %v2162
    %2164 = vst [vmem:[%s1072 + $0x60] sm:$0xf] %v2163
    %2165 = vst [vmem:[%s1072 + $0x64] sm:$0xf] %v1615
    %v2166 = vld [vmem:[%s1072 + $0x68] sm:$0x1]
    %v2167 = vsel %vm1075, %v1616, %v2166
    %2168 = vst [vmem:[%s1072 + $0x68] sm:$0x1] %v2167
    %v2169 = vld [vmem:[%s1072 + $0x6c] sm:$0xf]
    %v2170 = vsel %vm2105, %v1623, %v2169
    %2171 = vst [vmem:[%s1072 + $0x6c] sm:$0xf] %v2170
    %2172 = vst [vmem:[%s1072 + $0x70] sm:$0xf] %v1632
    %v2173 = vld [vmem:[%s1072 + $0x74] sm:$0x1]
    %v2174 = vsel %vm1075, %v1633, %v2173
    %2175 = vst [vmem:[%s1072 + $0x74] sm:$0x1] %v2174
    %v2176 = vld [vmem:[%s1072 + $0x78] sm:$0xf]
    %v2177 = vsel %vm2105, %v1640, %v2176
    %2178 = vst [vmem:[%s1072 + $0x78] sm:$0xf] %v2177
    %2179 = vst [vmem:[%s1072 + $0x7c] sm:$0xf] %v1649
    %v2180 = vld [vmem:[%s1072 + $0x80] sm:$0x1]
    %v2181 = vsel %vm1075, %v1650, %v2180
    %2182 = vst [vmem:[%s1072 + $0x80] sm:$0x1] %v2181
    %v2183 = vld [vmem:[%s1072 + $0x84] sm:$0xf]
    %v2184 = vsel %vm2105, %v1657, %v2183
    %2185 = vst [vmem:[%s1072 + $0x84] sm:$0xf] %v2184
    %2186 = vst [vmem:[%s1072 + $0x88] sm:$0xf] %v1666
    %v2187 = vld [vmem:[%s1072 + $0x8c] sm:$0x1]
    %v2188 = vsel %vm1075, %v1667, %v2187
    %2189 = vst [vmem:[%s1072 + $0x8c] sm:$0x1] %v2188
    %v2190 = vld [vmem:[%s1072 + $0x90] sm:$0xf]
    %v2191 = vsel %vm2105, %v1674, %v2190
    %2192 = vst [vmem:[%s1072 + $0x90] sm:$0xf] %v2191
    %2193 = vst [vmem:[%s1072 + $0x94] sm:$0xf] %v1683
    %v2194 = vld [vmem:[%s1072 + $0x98] sm:$0x1]
    %v2195 = vsel %vm1075, %v1684, %v2194
    %2196 = vst [vmem:[%s1072 + $0x98] sm:$0x1] %v2195
    %v2197 = vld [vmem:[%s1072 + $0x9c] sm:$0xf]
    %v2198 = vsel %vm2105, %v1691, %v2197
    %2199 = vst [vmem:[%s1072 + $0x9c] sm:$0xf] %v2198
    %2200 = vst [vmem:[%s1072 + $0xa0] sm:$0xf] %v1700
    %v2201 = vld [vmem:[%s1072 + $0xa4] sm:$0x1]
    %v2202 = vsel %vm1075, %v1701, %v2201
    %2203 = vst [vmem:[%s1072 + $0xa4] sm:$0x1] %v2202
    %v2204 = vld [vmem:[%s1072 + $0xa8] sm:$0xf]
    %v2205 = vsel %vm2105, %v1708, %v2204
    %2206 = vst [vmem:[%s1072 + $0xa8] sm:$0xf] %v2205
    %2207 = vst [vmem:[%s1072 + $0xac] sm:$0xf] %v1717
    %v2208 = vld [vmem:[%s1072 + $0xb0] sm:$0x1]
    %v2209 = vsel %vm1075, %v1718, %v2208
    %2210 = vst [vmem:[%s1072 + $0xb0] sm:$0x1] %v2209
    %v2211 = vld [vmem:[%s1072 + $0xb4] sm:$0xf]
    %v2212 = vsel %vm2105, %v1725, %v2211
    %2213 = vst [vmem:[%s1072 + $0xb4] sm:$0xf] %v2212
    %2214 = vst [vmem:[%s1072 + $0xb8] sm:$0xf] %v1734
    %v2215 = vld [vmem:[%s1072 + $0xbc] sm:$0x1]
    %v2216 = vsel %vm1075, %v1735, %v2215
    %2217 = vst [vmem:[%s1072 + $0xbc] sm:$0x1] %v2216
    %v2218 = vld [vmem:[%s1072 + $0xd8] sm:$0xf]
    %v2219 = vsel %vm2105, %v1742, %v2218
    %2220 = vst [vmem:[%s1072 + $0xd8] sm:$0xf] %v2219
    %2221 = vst [vmem:[%s1072 + $0xdc] sm:$0xf] %v1751
    %v2222 = vld [vmem:[%s1072 + $0xe0] sm:$0x1]
    %v2223 = vsel %vm1075, %v1752, %v2222
    %2224 = vst [vmem:[%s1072 + $0xe0] sm:$0x1] %v2223
    %v2225 = vld [vmem:[%s1072 + $0xe4] sm:$0xf]
    %v2226 = vsel %vm2105, %v1759, %v2225
    %2227 = vst [vmem:[%s1072 + $0xe4] sm:$0xf] %v2226
    %2228 = vst [vmem:[%s1072 + $0xe8] sm:$0xf] %v1768
    %v2229 = vld [vmem:[%s1072 + $0xec] sm:$0x1]
    %v2230 = vsel %vm1075, %v1769, %v2229
    %2231 = vst [vmem:[%s1072 + $0xec] sm:$0x1] %v2230
    %v2232 = vld [vmem:[%s1072 + $0xf0] sm:$0xf]
    %v2233 = vsel %vm2105, %v1776, %v2232
    %2234 = vst [vmem:[%s1072 + $0xf0] sm:$0xf] %v2233
    %2235 = vst [vmem:[%s1072 + $0xf4] sm:$0xf] %v1785
    %v2236 = vld [vmem:[%s1072 + $0xf8] sm:$0x1]
    %v2237 = vsel %vm1075, %v1786, %v2236
    %2238 = vst [vmem:[%s1072 + $0xf8] sm:$0x1] %v2237
    %v2239 = vld [vmem:[%s1072 + $0xfc] sm:$0xf]
    %v2240 = vsel %vm2105, %v1793, %v2239
    %2241 = vst [vmem:[%s1072 + $0xfc] sm:$0xf] %v2240
    %2242 = vst [vmem:[%s1072 + $0x100] sm:$0xf] %v1802
    %v2243 = vld [vmem:[%s1072 + $0x104] sm:$0x1]
    %v2244 = vsel %vm1075, %v1803, %v2243
    %2245 = vst [vmem:[%s1072 + $0x104] sm:$0x1] %v2244
    %v2246 = vld [vmem:[%s1072 + $0x108] sm:$0xf]
    %v2247 = vsel %vm2105, %v1810, %v2246
    %2248 = vst [vmem:[%s1072 + $0x108] sm:$0xf] %v2247
    %2249 = vst [vmem:[%s1072 + $0x10c] sm:$0xf] %v1819
    %v2250 = vld [vmem:[%s1072 + $0x110] sm:$0x1]
    %v2251 = vsel %vm1075, %v1820, %v2250
    %2252 = vst [vmem:[%s1072 + $0x110] sm:$0x1] %v2251
    %v2253 = vld [vmem:[%s1072 + $0x114] sm:$0xf]
    %v2254 = vsel %vm2105, %v1827, %v2253
    %2255 = vst [vmem:[%s1072 + $0x114] sm:$0xf] %v2254
    %2256 = vst [vmem:[%s1072 + $0x118] sm:$0xf] %v1836
    %v2257 = vld [vmem:[%s1072 + $0x11c] sm:$0x1]
    %v2258 = vsel %vm1075, %v1837, %v2257
    %2259 = vst [vmem:[%s1072 + $0x11c] sm:$0x1] %v2258
    %v2260 = vld [vmem:[%s1072 + $0x120] sm:$0xf]
    %v2261 = vsel %vm2105, %v1844, %v2260
    %2262 = vst [vmem:[%s1072 + $0x120] sm:$0xf] %v2261
    %2263 = vst [vmem:[%s1072 + $0x124] sm:$0xf] %v1853
    %v2264 = vld [vmem:[%s1072 + $0x128] sm:$0x1]
    %v2265 = vsel %vm1075, %v1854, %v2264
    %2266 = vst [vmem:[%s1072 + $0x128] sm:$0x1] %v2265
    %v2267 = vld [vmem:[%s1072 + $0x12c] sm:$0xf]
    %v2268 = vsel %vm2105, %v1861, %v2267
    %2269 = vst [vmem:[%s1072 + $0x12c] sm:$0xf] %v2268
    %2270 = vst [vmem:[%s1072 + $0x130] sm:$0xf] %v1870
    %v2271 = vld [vmem:[%s1072 + $0x134] sm:$0x1]
    %v2272 = vsel %vm1075, %v1871, %v2271
    %2273 = vst [vmem:[%s1072 + $0x134] sm:$0x1] %v2272
    %v2274 = vld [vmem:[%s1072 + $0x138] sm:$0xf]
    %v2275 = vsel %vm2105, %v1878, %v2274
    %2276 = vst [vmem:[%s1072 + $0x138] sm:$0xf] %v2275
    %2277 = vst [vmem:[%s1072 + $0x13c] sm:$0xf] %v1887
    %v2278 = vld [vmem:[%s1072 + $0x140] sm:$0x1]
    %v2279 = vsel %vm1075, %v1888, %v2278
    %2280 = vst [vmem:[%s1072 + $0x140] sm:$0x1] %v2279
    %v2281 = vld [vmem:[%s1072 + $0x144] sm:$0xf]
    %v2282 = vsel %vm2105, %v1895, %v2281
    %2283 = vst [vmem:[%s1072 + $0x144] sm:$0xf] %v2282
    %2284 = vst [vmem:[%s1072 + $0x148] sm:$0xf] %v1904
    %v2285 = vld [vmem:[%s1072 + $0x14c] sm:$0x1]
    %v2286 = vsel %vm1075, %v1905, %v2285
    %2287 = vst [vmem:[%s1072 + $0x14c] sm:$0x1] %v2286
    %v2288 = vld [vmem:[%s1072 + $0x150] sm:$0xf]
    %v2289 = vsel %vm2105, %v1912, %v2288
    %2290 = vst [vmem:[%s1072 + $0x150] sm:$0xf] %v2289
    %2291 = vst [vmem:[%s1072 + $0x154] sm:$0xf] %v1921
    %v2292 = vld [vmem:[%s1072 + $0x158] sm:$0x1]
    %v2293 = vsel %vm1075, %v1922, %v2292
    %2294 = vst [vmem:[%s1072 + $0x158] sm:$0x1] %v2293
    %v2295 = vld [vmem:[%s1072 + $0x15c] sm:$0xf]
    %v2296 = vsel %vm2105, %v1929, %v2295
    %2297 = vst [vmem:[%s1072 + $0x15c] sm:$0xf] %v2296
    %2298 = vst [vmem:[%s1072 + $0x160] sm:$0xf] %v1938
    %v2299 = vld [vmem:[%s1072 + $0x164] sm:$0x1]
    %v2300 = vsel %vm1075, %v1939, %v2299
    %2301 = vst [vmem:[%s1072 + $0x164] sm:$0x1] %v2300
    %v2302 = vld [vmem:[%s1072 + $0x168] sm:$0xf]
    %v2303 = vsel %vm2105, %v1946, %v2302
    %2304 = vst [vmem:[%s1072 + $0x168] sm:$0xf] %v2303
    %2305 = vst [vmem:[%s1072 + $0x16c] sm:$0xf] %v1955
    %v2306 = vld [vmem:[%s1072 + $0x170] sm:$0x1]
    %v2307 = vsel %vm1075, %v1956, %v2306
    %2308 = vst [vmem:[%s1072 + $0x170] sm:$0x1] %v2307
    %v2309 = vld [vmem:[%s1072 + $0x174] sm:$0xf]
    %v2310 = vsel %vm2105, %v1963, %v2309
    %2311 = vst [vmem:[%s1072 + $0x174] sm:$0xf] %v2310
    %2312 = vst [vmem:[%s1072 + $0x178] sm:$0xf] %v1972
    %v2313 = vld [vmem:[%s1072 + $0x17c] sm:$0x1]
    %v2314 = vsel %vm1075, %v1973, %v2313
    %2315 = vst [vmem:[%s1072 + $0x17c] sm:$0x1] %v2314
    %v2316 = vld [vmem:[%s1072 + $0x180] sm:$0xf]
    %v2317 = vsel %vm2105, %v1980, %v2316
    %2318 = vst [vmem:[%s1072 + $0x180] sm:$0xf] %v2317
    %2319 = vst [vmem:[%s1072 + $0x184] sm:$0xf] %v1989
    %v2320 = vld [vmem:[%s1072 + $0x188] sm:$0x1]
    %v2321 = vsel %vm1075, %v1990, %v2320
    %2322 = vst [vmem:[%s1072 + $0x188] sm:$0x1] %v2321
    %v2323 = vld [vmem:[%s1072 + $0x18c] sm:$0xf]
    %v2324 = vsel %vm2105, %v1997, %v2323
    %2325 = vst [vmem:[%s1072 + $0x18c] sm:$0xf] %v2324
    %2326 = vst [vmem:[%s1072 + $0x190] sm:$0xf] %v2006
    %v2327 = vld [vmem:[%s1072 + $0x194] sm:$0x1]
    %v2328 = vsel %vm1075, %v2007, %v2327
    %2329 = vst [vmem:[%s1072 + $0x194] sm:$0x1] %v2328
    %v2330 = vld [vmem:[#allocation2] sm:$0xf]
    %v2331 = vld [vmem:[#allocation2 + $0x4] sm:$0xf]
    %v2332 = vld [vmem:[#allocation2 + $0xc] sm:$0xf]
    %v2333 = vld [vmem:[#allocation2 + $0x10] sm:$0xf]
    %v2334 = vld [vmem:[#allocation2 + $0x18] sm:$0xf]
    %v2335 = vld [vmem:[#allocation2 + $0x1c] sm:$0xf]
    %v2336 = vld [vmem:[#allocation2 + $0x24] sm:$0xf]
    %v2337 = vld [vmem:[#allocation2 + $0x28] sm:$0xf]
    %v2338 = vld [vmem:[#allocation2 + $0x30] sm:$0xf]
    %v2339 = vld [vmem:[#allocation2 + $0x34] sm:$0xf]
    %v2340 = vld [vmem:[#allocation2 + $0x3c] sm:$0xf]
    %v2341 = vld [vmem:[#allocation2 + $0x40] sm:$0xf]
    %v2342 = vld [vmem:[#allocation2 + $0x48] sm:$0xf]
    %v2343 = vld [vmem:[#allocation2 + $0x4c] sm:$0xf]
    %v2344 = vld [vmem:[#allocation2 + $0x54] sm:$0xf]
    %v2345 = vld [vmem:[#allocation2 + $0x58] sm:$0xf]
    %v2346 = vld [vmem:[#allocation2 + $0x60] sm:$0xf]
    %v2347 = vld [vmem:[#allocation2 + $0x64] sm:$0xf]
    %v2348 = vld [vmem:[#allocation2 + $0x6c] sm:$0xf]
    %v2349 = vld [vmem:[#allocation2 + $0x70] sm:$0xf]
    %v2350 = vld [vmem:[#allocation2 + $0x78] sm:$0xf]
    %v2351 = vld [vmem:[#allocation2 + $0x7c] sm:$0xf]
    %v2352 = vld [vmem:[#allocation2 + $0x84] sm:$0xf]
    %v2353 = vld [vmem:[#allocation2 + $0x88] sm:$0xf]
    %v2354 = vld [vmem:[#allocation2 + $0x90] sm:$0xf]
    %v2355 = vld [vmem:[#allocation2 + $0x94] sm:$0xf]
    %v2356 = vld [vmem:[#allocation2 + $0x9c] sm:$0xf]
    %v2357 = vld [vmem:[#allocation2 + $0xa0] sm:$0xf]
    %v2358 = vld [vmem:[#allocation2 + $0xa8] sm:$0xf]
    %v2359 = vld [vmem:[#allocation2 + $0xac] sm:$0xf]
    %v2360 = vld [vmem:[#allocation2 + $0xb4] sm:$0xf]
    %v2361 = vld [vmem:[#allocation2 + $0xb8] sm:$0xf]
    %v2362 = vld [vmem:[#allocation2 + $0xd8] sm:$0xf]
    %v2363 = vld [vmem:[#allocation2 + $0xdc] sm:$0xf]
    %v2364 = vld [vmem:[#allocation2 + $0xe4] sm:$0xf]
    %v2365 = vld [vmem:[#allocation2 + $0xe8] sm:$0xf]
    %v2366 = vld [vmem:[#allocation2 + $0xf0] sm:$0xf]
    %v2367 = vld [vmem:[#allocation2 + $0xf4] sm:$0xf]
    %v2368 = vld [vmem:[#allocation2 + $0xfc] sm:$0xf]
    %v2369 = vld [vmem:[#allocation2 + $0x100] sm:$0xf]
    %v2370 = vld [vmem:[#allocation2 + $0x108] sm:$0xf]
    %v2371 = vld [vmem:[#allocation2 + $0x10c] sm:$0xf]
    %v2372 = vld [vmem:[#allocation2 + $0x114] sm:$0xf]
    %v2373 = vld [vmem:[#allocation2 + $0x118] sm:$0xf]
    %v2374 = vld [vmem:[#allocation2 + $0x120] sm:$0xf]
    %v2375 = vld [vmem:[#allocation2 + $0x124] sm:$0xf]
    %v2376 = vld [vmem:[#allocation2 + $0x12c] sm:$0xf]
    %v2377 = vld [vmem:[#allocation2 + $0x130] sm:$0xf]
    %v2378 = vld [vmem:[#allocation2 + $0x138] sm:$0xf]
    %v2379 = vld [vmem:[#allocation2 + $0x13c] sm:$0xf]
    %v2380 = vld [vmem:[#allocation2 + $0x144] sm:$0xf]
    %v2381 = vld [vmem:[#allocation2 + $0x148] sm:$0xf]
    %v2382 = vld [vmem:[#allocation2 + $0x150] sm:$0xf]
    %v2383 = vld [vmem:[#allocation2 + $0x154] sm:$0xf]
    %v2384 = vld [vmem:[#allocation2 + $0x15c] sm:$0xf]
    %v2385 = vld [vmem:[#allocation2 + $0x160] sm:$0xf]
    %v2386 = vld [vmem:[#allocation2 + $0x168] sm:$0xf]
    %v2387 = vld [vmem:[#allocation2 + $0x16c] sm:$0xf]
    %v2388 = vld [vmem:[#allocation2 + $0x174] sm:$0xf]
    %v2389 = vld [vmem:[#allocation2 + $0x178] sm:$0xf]
    %v2390 = vld [vmem:[#allocation2 + $0x180] sm:$0xf]
    %v2391 = vld [vmem:[#allocation2 + $0x184] sm:$0xf]
    %v2392 = vld [vmem:[#allocation2 + $0x18c] sm:$0xf]
    %v2393 = vld [vmem:[#allocation2 + $0x190] sm:$0xf]
    %v2458 = vunpack.c.l.b16 %v2330
    %v2459 = vunpack.c.l.b16 %v2331
    %v2460 = vunpack.c.l.b16 %v2332
    %v2461 = vunpack.c.l.b16 %v2333
    %v2462 = vunpack.c.l.b16 %v2334
    %v2463 = vunpack.c.l.b16 %v2335
    %v2464 = vunpack.c.l.b16 %v2336
    %v2465 = vunpack.c.l.b16 %v2337
    %v2466 = vunpack.c.l.b16 %v2338
    %v2467 = vunpack.c.l.b16 %v2339
    %v2468 = vunpack.c.l.b16 %v2340
    %v2469 = vunpack.c.l.b16 %v2341
    %v2470 = vunpack.c.l.b16 %v2342
    %v2471 = vunpack.c.l.b16 %v2343
    %v2472 = vunpack.c.l.b16 %v2344
    %v2473 = vunpack.c.l.b16 %v2345
    %v2474 = vunpack.c.l.b16 %v2346
    %v2475 = vunpack.c.l.b16 %v2347
    %v2476 = vunpack.c.l.b16 %v2348
    %v2477 = vunpack.c.l.b16 %v2349
    %v2478 = vunpack.c.l.b16 %v2350
    %v2479 = vunpack.c.l.b16 %v2351
    %v2480 = vunpack.c.l.b16 %v2352
    %v2481 = vunpack.c.l.b16 %v2353
    %v2482 = vunpack.c.l.b16 %v2354
    %v2483 = vunpack.c.l.b16 %v2355
    %v2484 = vunpack.c.l.b16 %v2356
    %v2485 = vunpack.c.l.b16 %v2357
    %v2486 = vunpack.c.l.b16 %v2358
    %v2487 = vunpack.c.l.b16 %v2359
    %v2488 = vunpack.c.l.b16 %v2360
    %v2489 = vunpack.c.l.b16 %v2361
    %v2490 = vunpack.c.l.b16 %v2362
    %v2491 = vunpack.c.l.b16 %v2363
    %v2492 = vunpack.c.l.b16 %v2364
    %v2493 = vunpack.c.l.b16 %v2365
    %v2494 = vunpack.c.l.b16 %v2366
    %v2495 = vunpack.c.l.b16 %v2367
    %v2496 = vunpack.c.l.b16 %v2368
    %v2497 = vunpack.c.l.b16 %v2369
    %v2498 = vunpack.c.l.b16 %v2370
    %v2499 = vunpack.c.l.b16 %v2371
    %v2500 = vunpack.c.l.b16 %v2372
    %v2501 = vunpack.c.l.b16 %v2373
    %v2502 = vunpack.c.l.b16 %v2374
    %v2503 = vunpack.c.l.b16 %v2375
    %v2504 = vunpack.c.l.b16 %v2376
    %v2505 = vunpack.c.l.b16 %v2377
    %v2506 = vunpack.c.l.b16 %v2378
    %v2507 = vunpack.c.l.b16 %v2379
    %v2508 = vunpack.c.l.b16 %v2380
    %v2509 = vunpack.c.l.b16 %v2381
    %v2510 = vunpack.c.l.b16 %v2382
    %v2511 = vunpack.c.l.b16 %v2383
    %v2512 = vunpack.c.l.b16 %v2384
    %v2513 = vunpack.c.l.b16 %v2385
    %v2514 = vunpack.c.l.b16 %v2386
    %v2515 = vunpack.c.l.b16 %v2387
    %v2516 = vunpack.c.l.b16 %v2388
    %v2517 = vunpack.c.l.b16 %v2389
    %v2518 = vunpack.c.l.b16 %v2390
    %v2519 = vunpack.c.l.b16 %v2391
    %v2520 = vunpack.c.l.b16 %v2392
    %v2521 = vunpack.c.l.b16 %v2393
    %v2522 = vpack.c.b16 %v2459, %v2458
    %v2523 = vpack.c.b16 %v2461, %v2460
    %v2524 = vpack.c.b16 %v2463, %v2462
    %v2525 = vpack.c.b16 %v2465, %v2464
    %v2526 = vpack.c.b16 %v2467, %v2466
    %v2527 = vpack.c.b16 %v2469, %v2468
    %v2528 = vpack.c.b16 %v2471, %v2470
    %v2529 = vpack.c.b16 %v2473, %v2472
    %v2530 = vpack.c.b16 %v2475, %v2474
    %v2531 = vpack.c.b16 %v2477, %v2476
    %v2532 = vpack.c.b16 %v2479, %v2478
    %v2533 = vpack.c.b16 %v2481, %v2480
    %v2534 = vpack.c.b16 %v2483, %v2482
    %v2535 = vpack.c.b16 %v2485, %v2484
    %v2536 = vpack.c.b16 %v2487, %v2486
    %v2537 = vpack.c.b16 %v2489, %v2488
    %v2538 = vpack.c.b16 %v2491, %v2490
    %v2539 = vpack.c.b16 %v2493, %v2492
    %v2540 = vpack.c.b16 %v2495, %v2494
    %v2541 = vpack.c.b16 %v2497, %v2496
    %v2542 = vpack.c.b16 %v2499, %v2498
    %v2543 = vpack.c.b16 %v2501, %v2500
    %v2544 = vpack.c.b16 %v2503, %v2502
    %v2545 = vpack.c.b16 %v2505, %v2504
    %v2546 = vpack.c.b16 %v2507, %v2506
    %v2547 = vpack.c.b16 %v2509, %v2508
    %v2548 = vpack.c.b16 %v2511, %v2510
    %v2549 = vpack.c.b16 %v2513, %v2512
    %v2550 = vpack.c.b16 %v2515, %v2514
    %v2551 = vpack.c.b16 %v2517, %v2516
    %v2552 = vpack.c.b16 %v2519, %v2518
    %v2553 = vpack.c.b16 %v2521, %v2520
    %2586 = vst [vmem:[#allocation3] sm:$0xff] %v2522
    %2587 = vst [vmem:[#allocation3 + $0x48] sm:$0xff] %v2523
    %2588 = vst [vmem:[#allocation3 + $0x90] sm:$0xff] %v2524
    %2589 = vst [vmem:[#allocation3 + $0xd8] sm:$0xff] %v2525
    %2590 = vst [vmem:[#allocation3 + $0x120] sm:$0xff] %v2526
    %2591 = vst [vmem:[#allocation3 + $0x168] sm:$0xff] %v2527
    %2592 = vst [vmem:[#allocation3 + $0x1b0] sm:$0xff] %v2528
    %2593 = vst [vmem:[#allocation3 + $0x1f8] sm:$0xff] %v2529
    %2594 = vst [vmem:[#allocation3 + $0x240] sm:$0xff] %v2530
    %2595 = vst [vmem:[#allocation3 + $0x288] sm:$0xff] %v2531
    %2596 = vst [vmem:[#allocation3 + $0x2d0] sm:$0xff] %v2532
    %2597 = vst [vmem:[#allocation3 + $0x318] sm:$0xff] %v2533
    %2598 = vst [vmem:[#allocation3 + $0x360] sm:$0xff] %v2534
    %2599 = vst [vmem:[#allocation3 + $0x3a8] sm:$0xff] %v2535
    %2600 = vst [vmem:[#allocation3 + $0x3f0] sm:$0xff] %v2536
    %2601 = vst [vmem:[#allocation3 + $0x438] sm:$0xff] %v2537
    %2602 = vst [vmem:[#allocation3 + $0x480] sm:$0xff] %v2538
    %2603 = vst [vmem:[#allocation3 + $0x4c8] sm:$0xff] %v2539
    %2604 = vst [vmem:[#allocation3 + $0x510] sm:$0xff] %v2540
    %2605 = vst [vmem:[#allocation3 + $0x558] sm:$0xff] %v2541
    %2606 = vst [vmem:[#allocation3 + $0x5a0] sm:$0xff] %v2542
    %2607 = vst [vmem:[#allocation3 + $0x5e8] sm:$0xff] %v2543
    %2608 = vst [vmem:[#allocation3 + $0x630] sm:$0xff] %v2544
    %2609 = vst [vmem:[#allocation3 + $0x678] sm:$0xff] %v2545
    %2610 = vst [vmem:[#allocation3 + $0x6c0] sm:$0xff] %v2546
    %2611 = vst [vmem:[#allocation3 + $0x708] sm:$0xff] %v2547
    %2612 = vst [vmem:[#allocation3 + $0x750] sm:$0xff] %v2548
    %2613 = vst [vmem:[#allocation3 + $0x798] sm:$0xff] %v2549
    %2614 = vst [vmem:[#allocation3 + $0x7e0] sm:$0xff] %v2550
    %2615 = vst [vmem:[#allocation3 + $0x828] sm:$0xff] %v2551
    %2616 = vst [vmem:[#allocation3 + $0x870] sm:$0xff] %v2552
    %2617 = vst [vmem:[#allocation3 + $0x8b8] sm:$0xff] %v2553
    %v2618 = vld [vmem:[#allocation2] sm:$0xf]
    %v2619 = vld [vmem:[#allocation2 + $0x4] sm:$0xf]
    %v2620 = vld [vmem:[#allocation2 + $0x8] sm:$0x1]
    %v2621 = vld [vmem:[#allocation2 + $0xc] sm:$0xf]
    %v2622 = vld [vmem:[#allocation2 + $0x10] sm:$0xf]
    %v2623 = vld [vmem:[#allocation2 + $0x14] sm:$0x1]
    %v2624 = vld [vmem:[#allocation2 + $0x18] sm:$0xf]
    %v2625 = vld [vmem:[#allocation2 + $0x1c] sm:$0xf]
    %v2626 = vld [vmem:[#allocation2 + $0x20] sm:$0x1]
    %v2627 = vld [vmem:[#allocation2 + $0x24] sm:$0xf]
    %v2628 = vld [vmem:[#allocation2 + $0x28] sm:$0xf]
    %v2629 = vld [vmem:[#allocation2 + $0x2c] sm:$0x1]
    %v2630 = vld [vmem:[#allocation2 + $0x30] sm:$0xf]
    %v2631 = vld [vmem:[#allocation2 + $0x34] sm:$0xf]
    %v2632 = vld [vmem:[#allocation2 + $0x38] sm:$0x1]
    %v2633 = vld [vmem:[#allocation2 + $0x3c] sm:$0xf]
    %v2634 = vld [vmem:[#allocation2 + $0x40] sm:$0xf]
    %v2635 = vld [vmem:[#allocation2 + $0x44] sm:$0x1]
    %v2636 = vld [vmem:[#allocation2 + $0x48] sm:$0xf]
    %v2637 = vld [vmem:[#allocation2 + $0x4c] sm:$0xf]
    %v2638 = vld [vmem:[#allocation2 + $0x50] sm:$0x1]
    %v2639 = vld [vmem:[#allocation2 + $0x54] sm:$0xf]
    %v2640 = vld [vmem:[#allocation2 + $0x58] sm:$0xf]
    %v2641 = vld [vmem:[#allocation2 + $0x5c] sm:$0x1]
    %v2642 = vld [vmem:[#allocation2 + $0x60] sm:$0xf]
    %v2643 = vld [vmem:[#allocation2 + $0x64] sm:$0xf]
    %v2644 = vld [vmem:[#allocation2 + $0x68] sm:$0x1]
    %v2645 = vld [vmem:[#allocation2 + $0x6c] sm:$0xf]
    %v2646 = vld [vmem:[#allocation2 + $0x70] sm:$0xf]
    %v2647 = vld [vmem:[#allocation2 + $0x74] sm:$0x1]
    %v2648 = vld [vmem:[#allocation2 + $0x78] sm:$0xf]
    %v2649 = vld [vmem:[#allocation2 + $0x7c] sm:$0xf]
    %v2650 = vld [vmem:[#allocation2 + $0x80] sm:$0x1]
    %v2651 = vld [vmem:[#allocation2 + $0x84] sm:$0xf]
    %v2652 = vld [vmem:[#allocation2 + $0x88] sm:$0xf]
    %v2653 = vld [vmem:[#allocation2 + $0x8c] sm:$0x1]
    %v2654 = vld [vmem:[#allocation2 + $0x90] sm:$0xf]
    %v2655 = vld [vmem:[#allocation2 + $0x94] sm:$0xf]
    %v2656 = vld [vmem:[#allocation2 + $0x98] sm:$0x1]
    %v2657 = vld [vmem:[#allocation2 + $0x9c] sm:$0xf]
    %v2658 = vld [vmem:[#allocation2 + $0xa0] sm:$0xf]
    %v2659 = vld [vmem:[#allocation2 + $0xa4] sm:$0x1]
    %v2660 = vld [vmem:[#allocation2 + $0xa8] sm:$0xf]
    %v2661 = vld [vmem:[#allocation2 + $0xac] sm:$0xf]
    %v2662 = vld [vmem:[#allocation2 + $0xb0] sm:$0x1]
    %v2663 = vld [vmem:[#allocation2 + $0xb4] sm:$0xf]
    %v2664 = vld [vmem:[#allocation2 + $0xb8] sm:$0xf]
    %v2665 = vld [vmem:[#allocation2 + $0xbc] sm:$0x1]
    %v2666 = vld [vmem:[#allocation2 + $0xd8] sm:$0xf]
    %v2667 = vld [vmem:[#allocation2 + $0xdc] sm:$0xf]
    %v2668 = vld [vmem:[#allocation2 + $0xe0] sm:$0x1]
    %v2669 = vld [vmem:[#allocation2 + $0xe4] sm:$0xf]
    %v2670 = vld [vmem:[#allocation2 + $0xe8] sm:$0xf]
    %v2671 = vld [vmem:[#allocation2 + $0xec] sm:$0x1]
    %v2672 = vld [vmem:[#allocation2 + $0xf0] sm:$0xf]
    %v2673 = vld [vmem:[#allocation2 + $0xf4] sm:$0xf]
    %v2674 = vld [vmem:[#allocation2 + $0xf8] sm:$0x1]
    %v2675 = vld [vmem:[#allocation2 + $0xfc] sm:$0xf]
    %v2676 = vld [vmem:[#allocation2 + $0x100] sm:$0xf]
    %v2677 = vld [vmem:[#allocation2 + $0x104] sm:$0x1]
    %v2678 = vld [vmem:[#allocation2 + $0x108] sm:$0xf]
    %v2679 = vld [vmem:[#allocation2 + $0x10c] sm:$0xf]
    %v2680 = vld [vmem:[#allocation2 + $0x110] sm:$0x1]
    %v2681 = vld [vmem:[#allocation2 + $0x114] sm:$0xf]
    %v2682 = vld [vmem:[#allocation2 + $0x118] sm:$0xf]
    %v2683 = vld [vmem:[#allocation2 + $0x11c] sm:$0x1]
    %v2684 = vld [vmem:[#allocation2 + $0x120] sm:$0xf]
    %v2685 = vld [vmem:[#allocation2 + $0x124] sm:$0xf]
    %v2686 = vld [vmem:[#allocation2 + $0x128] sm:$0x1]
    %v2687 = vld [vmem:[#allocation2 + $0x12c] sm:$0xf]
    %v2688 = vld [vmem:[#allocation2 + $0x130] sm:$0xf]
    %v2689 = vld [vmem:[#allocation2 + $0x134] sm:$0x1]
    %v2690 = vld [vmem:[#allocation2 + $0x138] sm:$0xf]
    %v2691 = vld [vmem:[#allocation2 + $0x13c] sm:$0xf]
    %v2692 = vld [vmem:[#allocation2 + $0x140] sm:$0x1]
    %v2693 = vld [vmem:[#allocation2 + $0x144] sm:$0xf]
    %v2694 = vld [vmem:[#allocation2 + $0x148] sm:$0xf]
    %v2695 = vld [vmem:[#allocation2 + $0x14c] sm:$0x1]
    %v2696 = vld [vmem:[#allocation2 + $0x150] sm:$0xf]
    %v2697 = vld [vmem:[#allocation2 + $0x154] sm:$0xf]
    %v2698 = vld [vmem:[#allocation2 + $0x158] sm:$0x1]
    %v2699 = vld [vmem:[#allocation2 + $0x15c] sm:$0xf]
    %v2700 = vld [vmem:[#allocation2 + $0x160] sm:$0xf]
    %v2701 = vld [vmem:[#allocation2 + $0x164] sm:$0x1]
    %v2702 = vld [vmem:[#allocation2 + $0x168] sm:$0xf]
    %v2703 = vld [vmem:[#allocation2 + $0x16c] sm:$0xf]
    %v2704 = vld [vmem:[#allocation2 + $0x170] sm:$0x1]
    %v2705 = vld [vmem:[#allocation2 + $0x174] sm:$0xf]
    %v2706 = vld [vmem:[#allocation2 + $0x178] sm:$0xf]
    %v2707 = vld [vmem:[#allocation2 + $0x17c] sm:$0x1]
    %v2708 = vld [vmem:[#allocation2 + $0x180] sm:$0xf]
    %v2709 = vld [vmem:[#allocation2 + $0x184] sm:$0xf]
    %v2710 = vld [vmem:[#allocation2 + $0x188] sm:$0x1]
    %v2711 = vld [vmem:[#allocation2 + $0x18c] sm:$0xf]
    %v2712 = vld [vmem:[#allocation2 + $0x190] sm:$0xf]
    %v2713 = vld [vmem:[#allocation2 + $0x194] sm:$0x1]
    %vm2714 = vsmask.f32 3328
    %vm2715 = vsmask.f32 7440
    %vm2716 = vmor %vm2714, %vm2715
    %v2718 = vshrl.u32 %v2618, 16
    %v2720 = vrot.slane %v2718, 4
    %v2721 = vshll.u32 %v2618, 16
    %v2723 = vrot.slane %v2721, 5
    %v2724 = vor.u32 %v2720, %v2723
    %v2725 = vrot.slane %v2724, 4
    %v2727 = vshll.u32 %v2619, 16
    %v2729 = vrot.slane %v2727, 5
    %v2730 = vsel %vm2716, %v2725, %v2729
    %v2731 = vshrl.u32 %v2619, 16
    %v2733 = vrot.slane %v2731, 4
    %v2734 = vor.u32 %v2733, %v2729
    %v2735 = vrot.slane %v2734, 4
    %v2737 = vshll.u32 %v2620, 16
    %v2739 = vrot.slane %v2737, 5
    %v2740 = vsel %vm2716, %v2735, %v2739
    %v2742 = vshrl.u32 %v2621, 16
    %v2744 = vrot.slane %v2742, 4
    %v2745 = vshll.u32 %v2621, 16
    %v2747 = vrot.slane %v2745, 5
    %v2748 = vor.u32 %v2744, %v2747
    %v2749 = vrot.slane %v2748, 4
    %v2751 = vshll.u32 %v2622, 16
    %v2753 = vrot.slane %v2751, 5
    %v2754 = vsel %vm2716, %v2749, %v2753
    %v2755 = vshrl.u32 %v2622, 16
    %v2757 = vrot.slane %v2755, 4
    %v2758 = vor.u32 %v2757, %v2753
    %v2759 = vrot.slane %v2758, 4
    %v2761 = vshll.u32 %v2623, 16
    %v2763 = vrot.slane %v2761, 5
    %v2764 = vsel %vm2716, %v2759, %v2763
    %v2766 = vshrl.u32 %v2624, 16
    %v2768 = vrot.slane %v2766, 4
    %v2769 = vshll.u32 %v2624, 16
    %v2771 = vrot.slane %v2769, 5
    %v2772 = vor.u32 %v2768, %v2771
    %v2773 = vrot.slane %v2772, 4
    %v2775 = vshll.u32 %v2625, 16
    %v2777 = vrot.slane %v2775, 5
    %v2778 = vsel %vm2716, %v2773, %v2777
    %v2779 = vshrl.u32 %v2625, 16
    %v2781 = vrot.slane %v2779, 4
    %v2782 = vor.u32 %v2781, %v2777
    %v2783 = vrot.slane %v2782, 4
    %v2785 = vshll.u32 %v2626, 16
    %v2787 = vrot.slane %v2785, 5
    %v2788 = vsel %vm2716, %v2783, %v2787
    %v2790 = vshrl.u32 %v2627, 16
    %v2792 = vrot.slane %v2790, 4
    %v2793 = vshll.u32 %v2627, 16
    %v2795 = vrot.slane %v2793, 5
    %v2796 = vor.u32 %v2792, %v2795
    %v2797 = vrot.slane %v2796, 4
    %v2799 = vshll.u32 %v2628, 16
    %v2801 = vrot.slane %v2799, 5
    %v2802 = vsel %vm2716, %v2797, %v2801
    %v2803 = vshrl.u32 %v2628, 16
    %v2805 = vrot.slane %v2803, 4
    %v2806 = vor.u32 %v2805, %v2801
    %v2807 = vrot.slane %v2806, 4
    %v2809 = vshll.u32 %v2629, 16
    %v2811 = vrot.slane %v2809, 5
    %v2812 = vsel %vm2716, %v2807, %v2811
    %v2814 = vshrl.u32 %v2630, 16
    %v2816 = vrot.slane %v2814, 4
    %v2817 = vshll.u32 %v2630, 16
    %v2819 = vrot.slane %v2817, 5
    %v2820 = vor.u32 %v2816, %v2819
    %v2821 = vrot.slane %v2820, 4
    %v2823 = vshll.u32 %v2631, 16
    %v2825 = vrot.slane %v2823, 5
    %v2826 = vsel %vm2716, %v2821, %v2825
    %v2827 = vshrl.u32 %v2631, 16
    %v2829 = vrot.slane %v2827, 4
    %v2830 = vor.u32 %v2829, %v2825
    %v2831 = vrot.slane %v2830, 4
    %v2833 = vshll.u32 %v2632, 16
    %v2835 = vrot.slane %v2833, 5
    %v2836 = vsel %vm2716, %v2831, %v2835
    %v2838 = vshrl.u32 %v2633, 16
    %v2840 = vrot.slane %v2838, 4
    %v2841 = vshll.u32 %v2633, 16
    %v2843 = vrot.slane %v2841, 5
    %v2844 = vor.u32 %v2840, %v2843
    %v2845 = vrot.slane %v2844, 4
    %v2847 = vshll.u32 %v2634, 16
    %v2849 = vrot.slane %v2847, 5
    %v2850 = vsel %vm2716, %v2845, %v2849
    %v2851 = vshrl.u32 %v2634, 16
    %v2853 = vrot.slane %v2851, 4
    %v2854 = vor.u32 %v2853, %v2849
    %v2855 = vrot.slane %v2854, 4
    %v2857 = vshll.u32 %v2635, 16
    %v2859 = vrot.slane %v2857, 5
    %v2860 = vsel %vm2716, %v2855, %v2859
    %v2862 = vshrl.u32 %v2636, 16
    %v2864 = vrot.slane %v2862, 4
    %v2865 = vshll.u32 %v2636, 16
    %v2867 = vrot.slane %v2865, 5
    %v2868 = vor.u32 %v2864, %v2867
    %v2869 = vrot.slane %v2868, 4
    %v2871 = vshll.u32 %v2637, 16
    %v2873 = vrot.slane %v2871, 5
    %v2874 = vsel %vm2716, %v2869, %v2873
    %v2875 = vshrl.u32 %v2637, 16
    %v2877 = vrot.slane %v2875, 4
    %v2878 = vor.u32 %v2877, %v2873
    %v2879 = vrot.slane %v2878, 4
    %v2881 = vshll.u32 %v2638, 16
    %v2883 = vrot.slane %v2881, 5
    %v2884 = vsel %vm2716, %v2879, %v2883
    %v2886 = vshrl.u32 %v2639, 16
    %v2888 = vrot.slane %v2886, 4
    %v2889 = vshll.u32 %v2639, 16
    %v2891 = vrot.slane %v2889, 5
    %v2892 = vor.u32 %v2888, %v2891
    %v2893 = vrot.slane %v2892, 4
    %v2895 = vshll.u32 %v2640, 16
    %v2897 = vrot.slane %v2895, 5
    %v2898 = vsel %vm2716, %v2893, %v2897
    %v2899 = vshrl.u32 %v2640, 16
    %v2901 = vrot.slane %v2899, 4
    %v2902 = vor.u32 %v2901, %v2897
    %v2903 = vrot.slane %v2902, 4
    %v2905 = vshll.u32 %v2641, 16
    %v2907 = vrot.slane %v2905, 5
    %v2908 = vsel %vm2716, %v2903, %v2907
    %v2910 = vshrl.u32 %v2642, 16
    %v2912 = vrot.slane %v2910, 4
    %v2913 = vshll.u32 %v2642, 16
    %v2915 = vrot.slane %v2913, 5
    %v2916 = vor.u32 %v2912, %v2915
    %v2917 = vrot.slane %v2916, 4
    %v2919 = vshll.u32 %v2643, 16
    %v2921 = vrot.slane %v2919, 5
    %v2922 = vsel %vm2716, %v2917, %v2921
    %v2923 = vshrl.u32 %v2643, 16
    %v2925 = vrot.slane %v2923, 4
    %v2926 = vor.u32 %v2925, %v2921
    %v2927 = vrot.slane %v2926, 4
    %v2929 = vshll.u32 %v2644, 16
    %v2931 = vrot.slane %v2929, 5
    %v2932 = vsel %vm2716, %v2927, %v2931
    %v2934 = vshrl.u32 %v2645, 16
    %v2936 = vrot.slane %v2934, 4
    %v2937 = vshll.u32 %v2645, 16
    %v2939 = vrot.slane %v2937, 5
    %v2940 = vor.u32 %v2936, %v2939
    %v2941 = vrot.slane %v2940, 4
    %v2943 = vshll.u32 %v2646, 16
    %v2945 = vrot.slane %v2943, 5
    %v2946 = vsel %vm2716, %v2941, %v2945
    %v2947 = vshrl.u32 %v2646, 16
    %v2949 = vrot.slane %v2947, 4
    %v2950 = vor.u32 %v2949, %v2945
    %v2951 = vrot.slane %v2950, 4
    %v2953 = vshll.u32 %v2647, 16
    %v2955 = vrot.slane %v2953, 5
    %v2956 = vsel %vm2716, %v2951, %v2955
    %v2958 = vshrl.u32 %v2648, 16
    %v2960 = vrot.slane %v2958, 4
    %v2961 = vshll.u32 %v2648, 16
    %v2963 = vrot.slane %v2961, 5
    %v2964 = vor.u32 %v2960, %v2963
    %v2965 = vrot.slane %v2964, 4
    %v2967 = vshll.u32 %v2649, 16
    %v2969 = vrot.slane %v2967, 5
    %v2970 = vsel %vm2716, %v2965, %v2969
    %v2971 = vshrl.u32 %v2649, 16
    %v2973 = vrot.slane %v2971, 4
    %v2974 = vor.u32 %v2973, %v2969
    %v2975 = vrot.slane %v2974, 4
    %v2977 = vshll.u32 %v2650, 16
    %v2979 = vrot.slane %v2977, 5
    %v2980 = vsel %vm2716, %v2975, %v2979
    %v2982 = vshrl.u32 %v2651, 16
    %v2984 = vrot.slane %v2982, 4
    %v2985 = vshll.u32 %v2651, 16
    %v2987 = vrot.slane %v2985, 5
    %v2988 = vor.u32 %v2984, %v2987
    %v2989 = vrot.slane %v2988, 4
    %v2991 = vshll.u32 %v2652, 16
    %v2993 = vrot.slane %v2991, 5
    %v2994 = vsel %vm2716, %v2989, %v2993
    %v2995 = vshrl.u32 %v2652, 16
    %v2997 = vrot.slane %v2995, 4
    %v2998 = vor.u32 %v2997, %v2993
    %v2999 = vrot.slane %v2998, 4
    %v3001 = vshll.u32 %v2653, 16
    %v3003 = vrot.slane %v3001, 5
    %v3004 = vsel %vm2716, %v2999, %v3003
    %v3006 = vshrl.u32 %v2654, 16
    %v3008 = vrot.slane %v3006, 4
    %v3009 = vshll.u32 %v2654, 16
    %v3011 = vrot.slane %v3009, 5
    %v3012 = vor.u32 %v3008, %v3011
    %v3013 = vrot.slane %v3012, 4
    %v3015 = vshll.u32 %v2655, 16
    %v3017 = vrot.slane %v3015, 5
    %v3018 = vsel %vm2716, %v3013, %v3017
    %v3019 = vshrl.u32 %v2655, 16
    %v3021 = vrot.slane %v3019, 4
    %v3022 = vor.u32 %v3021, %v3017
    %v3023 = vrot.slane %v3022, 4
    %v3025 = vshll.u32 %v2656, 16
    %v3027 = vrot.slane %v3025, 5
    %v3028 = vsel %vm2716, %v3023, %v3027
    %v3030 = vshrl.u32 %v2657, 16
    %v3032 = vrot.slane %v3030, 4
    %v3033 = vshll.u32 %v2657, 16
    %v3035 = vrot.slane %v3033, 5
    %v3036 = vor.u32 %v3032, %v3035
    %v3037 = vrot.slane %v3036, 4
    %v3039 = vshll.u32 %v2658, 16
    %v3041 = vrot.slane %v3039, 5
    %v3042 = vsel %vm2716, %v3037, %v3041
    %v3043 = vshrl.u32 %v2658, 16
    %v3045 = vrot.slane %v3043, 4
    %v3046 = vor.u32 %v3045, %v3041
    %v3047 = vrot.slane %v3046, 4
    %v3049 = vshll.u32 %v2659, 16
    %v3051 = vrot.slane %v3049, 5
    %v3052 = vsel %vm2716, %v3047, %v3051
    %v3054 = vshrl.u32 %v2660, 16
    %v3056 = vrot.slane %v3054, 4
    %v3057 = vshll.u32 %v2660, 16
    %v3059 = vrot.slane %v3057, 5
    %v3060 = vor.u32 %v3056, %v3059
    %v3061 = vrot.slane %v3060, 4
    %v3063 = vshll.u32 %v2661, 16
    %v3065 = vrot.slane %v3063, 5
    %v3066 = vsel %vm2716, %v3061, %v3065
    %v3067 = vshrl.u32 %v2661, 16
    %v3069 = vrot.slane %v3067, 4
    %v3070 = vor.u32 %v3069, %v3065
    %v3071 = vrot.slane %v3070, 4
    %v3073 = vshll.u32 %v2662, 16
    %v3075 = vrot.slane %v3073, 5
    %v3076 = vsel %vm2716, %v3071, %v3075
    %v3078 = vshrl.u32 %v2663, 16
    %v3080 = vrot.slane %v3078, 4
    %v3081 = vshll.u32 %v2663, 16
    %v3083 = vrot.slane %v3081, 5
    %v3084 = vor.u32 %v3080, %v3083
    %v3085 = vrot.slane %v3084, 4
    %v3087 = vshll.u32 %v2664, 16
    %v3089 = vrot.slane %v3087, 5
    %v3090 = vsel %vm2716, %v3085, %v3089
    %v3091 = vshrl.u32 %v2664, 16
    %v3093 = vrot.slane %v3091, 4
    %v3094 = vor.u32 %v3093, %v3089
    %v3095 = vrot.slane %v3094, 4
    %v3097 = vshll.u32 %v2665, 16
    %v3099 = vrot.slane %v3097, 5
    %v3100 = vsel %vm2716, %v3095, %v3099
    %v3102 = vshrl.u32 %v2666, 16
    %v3104 = vrot.slane %v3102, 4
    %v3105 = vshll.u32 %v2666, 16
    %v3107 = vrot.slane %v3105, 5
    %v3108 = vor.u32 %v3104, %v3107
    %v3109 = vrot.slane %v3108, 4
    %v3111 = vshll.u32 %v2667, 16
    %v3113 = vrot.slane %v3111, 5
    %v3114 = vsel %vm2716, %v3109, %v3113
    %v3115 = vshrl.u32 %v2667, 16
    %v3117 = vrot.slane %v3115, 4
    %v3118 = vor.u32 %v3117, %v3113
    %v3119 = vrot.slane %v3118, 4
    %v3121 = vshll.u32 %v2668, 16
    %v3123 = vrot.slane %v3121, 5
    %v3124 = vsel %vm2716, %v3119, %v3123
    %v3126 = vshrl.u32 %v2669, 16
    %v3128 = vrot.slane %v3126, 4
    %v3129 = vshll.u32 %v2669, 16
    %v3131 = vrot.slane %v3129, 5
    %v3132 = vor.u32 %v3128, %v3131
    %v3133 = vrot.slane %v3132, 4
    %v3135 = vshll.u32 %v2670, 16
    %v3137 = vrot.slane %v3135, 5
    %v3138 = vsel %vm2716, %v3133, %v3137
    %v3139 = vshrl.u32 %v2670, 16
    %v3141 = vrot.slane %v3139, 4
    %v3142 = vor.u32 %v3141, %v3137
    %v3143 = vrot.slane %v3142, 4
    %v3145 = vshll.u32 %v2671, 16
    %v3147 = vrot.slane %v3145, 5
    %v3148 = vsel %vm2716, %v3143, %v3147
    %v3150 = vshrl.u32 %v2672, 16
    %v3152 = vrot.slane %v3150, 4
    %v3153 = vshll.u32 %v2672, 16
    %v3155 = vrot.slane %v3153, 5
    %v3156 = vor.u32 %v3152, %v3155
    %v3157 = vrot.slane %v3156, 4
    %v3159 = vshll.u32 %v2673, 16
    %v3161 = vrot.slane %v3159, 5
    %v3162 = vsel %vm2716, %v3157, %v3161
    %v3163 = vshrl.u32 %v2673, 16
    %v3165 = vrot.slane %v3163, 4
    %v3166 = vor.u32 %v3165, %v3161
    %v3167 = vrot.slane %v3166, 4
    %v3169 = vshll.u32 %v2674, 16
    %v3171 = vrot.slane %v3169, 5
    %v3172 = vsel %vm2716, %v3167, %v3171
    %v3174 = vshrl.u32 %v2675, 16
    %v3176 = vrot.slane %v3174, 4
    %v3177 = vshll.u32 %v2675, 16
    %v3179 = vrot.slane %v3177, 5
    %v3180 = vor.u32 %v3176, %v3179
    %v3181 = vrot.slane %v3180, 4
    %v3183 = vshll.u32 %v2676, 16
    %v3185 = vrot.slane %v3183, 5
    %v3186 = vsel %vm2716, %v3181, %v3185
    %v3187 = vshrl.u32 %v2676, 16
    %v3189 = vrot.slane %v3187, 4
    %v3190 = vor.u32 %v3189, %v3185
    %v3191 = vrot.slane %v3190, 4
    %v3193 = vshll.u32 %v2677, 16
    %v3195 = vrot.slane %v3193, 5
    %v3196 = vsel %vm2716, %v3191, %v3195
    %v3198 = vshrl.u32 %v2678, 16
    %v3200 = vrot.slane %v3198, 4
    %v3201 = vshll.u32 %v2678, 16
    %v3203 = vrot.slane %v3201, 5
    %v3204 = vor.u32 %v3200, %v3203
    %v3205 = vrot.slane %v3204, 4
    %v3207 = vshll.u32 %v2679, 16
    %v3209 = vrot.slane %v3207, 5
    %v3210 = vsel %vm2716, %v3205, %v3209
    %v3211 = vshrl.u32 %v2679, 16
    %v3213 = vrot.slane %v3211, 4
    %v3214 = vor.u32 %v3213, %v3209
    %v3215 = vrot.slane %v3214, 4
    %v3217 = vshll.u32 %v2680, 16
    %v3219 = vrot.slane %v3217, 5
    %v3220 = vsel %vm2716, %v3215, %v3219
    %v3222 = vshrl.u32 %v2681, 16
    %v3224 = vrot.slane %v3222, 4
    %v3225 = vshll.u32 %v2681, 16
    %v3227 = vrot.slane %v3225, 5
    %v3228 = vor.u32 %v3224, %v3227
    %v3229 = vrot.slane %v3228, 4
    %v3231 = vshll.u32 %v2682, 16
    %v3233 = vrot.slane %v3231, 5
    %v3234 = vsel %vm2716, %v3229, %v3233
    %v3235 = vshrl.u32 %v2682, 16
    %v3237 = vrot.slane %v3235, 4
    %v3238 = vor.u32 %v3237, %v3233
    %v3239 = vrot.slane %v3238, 4
    %v3241 = vshll.u32 %v2683, 16
    %v3243 = vrot.slane %v3241, 5
    %v3244 = vsel %vm2716, %v3239, %v3243
    %v3246 = vshrl.u32 %v2684, 16
    %v3248 = vrot.slane %v3246, 4
    %v3249 = vshll.u32 %v2684, 16
    %v3251 = vrot.slane %v3249, 5
    %v3252 = vor.u32 %v3248, %v3251
    %v3253 = vrot.slane %v3252, 4
    %v3255 = vshll.u32 %v2685, 16
    %v3257 = vrot.slane %v3255, 5
    %v3258 = vsel %vm2716, %v3253, %v3257
    %v3259 = vshrl.u32 %v2685, 16
    %v3261 = vrot.slane %v3259, 4
    %v3262 = vor.u32 %v3261, %v3257
    %v3263 = vrot.slane %v3262, 4
    %v3265 = vshll.u32 %v2686, 16
    %v3267 = vrot.slane %v3265, 5
    %v3268 = vsel %vm2716, %v3263, %v3267
    %v3270 = vshrl.u32 %v2687, 16
    %v3272 = vrot.slane %v3270, 4
    %v3273 = vshll.u32 %v2687, 16
    %v3275 = vrot.slane %v3273, 5
    %v3276 = vor.u32 %v3272, %v3275
    %v3277 = vrot.slane %v3276, 4
    %v3279 = vshll.u32 %v2688, 16
    %v3281 = vrot.slane %v3279, 5
    %v3282 = vsel %vm2716, %v3277, %v3281
    %v3283 = vshrl.u32 %v2688, 16
    %v3285 = vrot.slane %v3283, 4
    %v3286 = vor.u32 %v3285, %v3281
    %v3287 = vrot.slane %v3286, 4
    %v3289 = vshll.u32 %v2689, 16
    %v3291 = vrot.slane %v3289, 5
    %v3292 = vsel %vm2716, %v3287, %v3291
    %v3294 = vshrl.u32 %v2690, 16
    %v3296 = vrot.slane %v3294, 4
    %v3297 = vshll.u32 %v2690, 16
    %v3299 = vrot.slane %v3297, 5
    %v3300 = vor.u32 %v3296, %v3299
    %v3301 = vrot.slane %v3300, 4
    %v3303 = vshll.u32 %v2691, 16
    %v3305 = vrot.slane %v3303, 5
    %v3306 = vsel %vm2716, %v3301, %v3305
    %v3307 = vshrl.u32 %v2691, 16
    %v3309 = vrot.slane %v3307, 4
    %v3310 = vor.u32 %v3309, %v3305
    %v3311 = vrot.slane %v3310, 4
    %v3313 = vshll.u32 %v2692, 16
    %v3315 = vrot.slane %v3313, 5
    %v3316 = vsel %vm2716, %v3311, %v3315
    %v3318 = vshrl.u32 %v2693, 16
    %v3320 = vrot.slane %v3318, 4
    %v3321 = vshll.u32 %v2693, 16
    %v3323 = vrot.slane %v3321, 5
    %v3324 = vor.u32 %v3320, %v3323
    %v3325 = vrot.slane %v3324, 4
    %v3327 = vshll.u32 %v2694, 16
    %v3329 = vrot.slane %v3327, 5
    %v3330 = vsel %vm2716, %v3325, %v3329
    %v3331 = vshrl.u32 %v2694, 16
    %v3333 = vrot.slane %v3331, 4
    %v3334 = vor.u32 %v3333, %v3329
    %v3335 = vrot.slane %v3334, 4
    %v3337 = vshll.u32 %v2695, 16
    %v3339 = vrot.slane %v3337, 5
    %v3340 = vsel %vm2716, %v3335, %v3339
    %v3342 = vshrl.u32 %v2696, 16
    %v3344 = vrot.slane %v3342, 4
    %v3345 = vshll.u32 %v2696, 16
    %v3347 = vrot.slane %v3345, 5
    %v3348 = vor.u32 %v3344, %v3347
    %v3349 = vrot.slane %v3348, 4
    %v3351 = vshll.u32 %v2697, 16
    %v3353 = vrot.slane %v3351, 5
    %v3354 = vsel %vm2716, %v3349, %v3353
    %v3355 = vshrl.u32 %v2697, 16
    %v3357 = vrot.slane %v3355, 4
    %v3358 = vor.u32 %v3357, %v3353
    %v3359 = vrot.slane %v3358, 4
    %v3361 = vshll.u32 %v2698, 16
    %v3363 = vrot.slane %v3361, 5
    %v3364 = vsel %vm2716, %v3359, %v3363
    %v3366 = vshrl.u32 %v2699, 16
    %v3368 = vrot.slane %v3366, 4
    %v3369 = vshll.u32 %v2699, 16
    %v3371 = vrot.slane %v3369, 5
    %v3372 = vor.u32 %v3368, %v3371
    %v3373 = vrot.slane %v3372, 4
    %v3375 = vshll.u32 %v2700, 16
    %v3377 = vrot.slane %v3375, 5
    %v3378 = vsel %vm2716, %v3373, %v3377
    %v3379 = vshrl.u32 %v2700, 16
    %v3381 = vrot.slane %v3379, 4
    %v3382 = vor.u32 %v3381, %v3377
    %v3383 = vrot.slane %v3382, 4
    %v3385 = vshll.u32 %v2701, 16
    %v3387 = vrot.slane %v3385, 5
    %v3388 = vsel %vm2716, %v3383, %v3387
    %v3390 = vshrl.u32 %v2702, 16
    %v3392 = vrot.slane %v3390, 4
    %v3393 = vshll.u32 %v2702, 16
    %v3395 = vrot.slane %v3393, 5
    %v3396 = vor.u32 %v3392, %v3395
    %v3397 = vrot.slane %v3396, 4
    %v3399 = vshll.u32 %v2703, 16
    %v3401 = vrot.slane %v3399, 5
    %v3402 = vsel %vm2716, %v3397, %v3401
    %v3403 = vshrl.u32 %v2703, 16
    %v3405 = vrot.slane %v3403, 4
    %v3406 = vor.u32 %v3405, %v3401
    %v3407 = vrot.slane %v3406, 4
    %v3409 = vshll.u32 %v2704, 16
    %v3411 = vrot.slane %v3409, 5
    %v3412 = vsel %vm2716, %v3407, %v3411
    %v3414 = vshrl.u32 %v2705, 16
    %v3416 = vrot.slane %v3414, 4
    %v3417 = vshll.u32 %v2705, 16
    %v3419 = vrot.slane %v3417, 5
    %v3420 = vor.u32 %v3416, %v3419
    %v3421 = vrot.slane %v3420, 4
    %v3423 = vshll.u32 %v2706, 16
    %v3425 = vrot.slane %v3423, 5
    %v3426 = vsel %vm2716, %v3421, %v3425
    %v3427 = vshrl.u32 %v2706, 16
    %v3429 = vrot.slane %v3427, 4
    %v3430 = vor.u32 %v3429, %v3425
    %v3431 = vrot.slane %v3430, 4
    %v3433 = vshll.u32 %v2707, 16
    %v3435 = vrot.slane %v3433, 5
    %v3436 = vsel %vm2716, %v3431, %v3435
    %v3438 = vshrl.u32 %v2708, 16
    %v3440 = vrot.slane %v3438, 4
    %v3441 = vshll.u32 %v2708, 16
    %v3443 = vrot.slane %v3441, 5
    %v3444 = vor.u32 %v3440, %v3443
    %v3445 = vrot.slane %v3444, 4
    %v3447 = vshll.u32 %v2709, 16
    %v3449 = vrot.slane %v3447, 5
    %v3450 = vsel %vm2716, %v3445, %v3449
    %v3451 = vshrl.u32 %v2709, 16
    %v3453 = vrot.slane %v3451, 4
    %v3454 = vor.u32 %v3453, %v3449
    %v3455 = vrot.slane %v3454, 4
    %v3457 = vshll.u32 %v2710, 16
    %v3459 = vrot.slane %v3457, 5
    %v3460 = vsel %vm2716, %v3455, %v3459
    %v3462 = vshrl.u32 %v2711, 16
    %v3464 = vrot.slane %v3462, 4
    %v3465 = vshll.u32 %v2711, 16
    %v3467 = vrot.slane %v3465, 5
    %v3468 = vor.u32 %v3464, %v3467
    %v3469 = vrot.slane %v3468, 4
    %v3471 = vshll.u32 %v2712, 16
    %v3473 = vrot.slane %v3471, 5
    %v3474 = vsel %vm2716, %v3469, %v3473
    %v3475 = vshrl.u32 %v2712, 16
    %v3477 = vrot.slane %v3475, 4
    %v3478 = vor.u32 %v3477, %v3473
    %v3479 = vrot.slane %v3478, 4
    %v3481 = vshll.u32 %v2713, 16
    %v3483 = vrot.slane %v3481, 5
    %v3484 = vsel %vm2716, %v3479, %v3483
    %v3485 = vunpack.c.l.b16 %v2730
    %v3486 = vunpack.c.l.b16 %v2740
    %v3487 = vunpack.c.l.b16 %v2754
    %v3488 = vunpack.c.l.b16 %v2764
    %v3489 = vunpack.c.l.b16 %v2778
    %v3490 = vunpack.c.l.b16 %v2788
    %v3491 = vunpack.c.l.b16 %v2802
    %v3492 = vunpack.c.l.b16 %v2812
    %v3493 = vunpack.c.l.b16 %v2826
    %v3494 = vunpack.c.l.b16 %v2836
    %v3495 = vunpack.c.l.b16 %v2850
    %v3496 = vunpack.c.l.b16 %v2860
    %v3497 = vunpack.c.l.b16 %v2874
    %v3498 = vunpack.c.l.b16 %v2884
    %v3499 = vunpack.c.l.b16 %v2898
    %v3500 = vunpack.c.l.b16 %v2908
    %v3501 = vunpack.c.l.b16 %v2922
    %v3502 = vunpack.c.l.b16 %v2932
    %v3503 = vunpack.c.l.b16 %v2946
    %v3504 = vunpack.c.l.b16 %v2956
    %v3505 = vunpack.c.l.b16 %v2970
    %v3506 = vunpack.c.l.b16 %v2980
    %v3507 = vunpack.c.l.b16 %v2994
    %v3508 = vunpack.c.l.b16 %v3004
    %v3509 = vunpack.c.l.b16 %v3018
    %v3510 = vunpack.c.l.b16 %v3028
    %v3511 = vunpack.c.l.b16 %v3042
    %v3512 = vunpack.c.l.b16 %v3052
    %v3513 = vunpack.c.l.b16 %v3066
    %v3514 = vunpack.c.l.b16 %v3076
    %v3515 = vunpack.c.l.b16 %v3090
    %v3516 = vunpack.c.l.b16 %v3100
    %v3517 = vunpack.c.l.b16 %v3114
    %v3518 = vunpack.c.l.b16 %v3124
    %v3519 = vunpack.c.l.b16 %v3138
    %v3520 = vunpack.c.l.b16 %v3148
    %v3521 = vunpack.c.l.b16 %v3162
    %v3522 = vunpack.c.l.b16 %v3172
    %v3523 = vunpack.c.l.b16 %v3186
    %v3524 = vunpack.c.l.b16 %v3196
    %v3525 = vunpack.c.l.b16 %v3210
    %v3526 = vunpack.c.l.b16 %v3220
    %v3527 = vunpack.c.l.b16 %v3234
    %v3528 = vunpack.c.l.b16 %v3244
    %v3529 = vunpack.c.l.b16 %v3258
    %v3530 = vunpack.c.l.b16 %v3268
    %v3531 = vunpack.c.l.b16 %v3282
    %v3532 = vunpack.c.l.b16 %v3292
    %v3533 = vunpack.c.l.b16 %v3306
    %v3534 = vunpack.c.l.b16 %v3316
    %v3535 = vunpack.c.l.b16 %v3330
    %v3536 = vunpack.c.l.b16 %v3340
    %v3537 = vunpack.c.l.b16 %v3354
    %v3538 = vunpack.c.l.b16 %v3364
    %v3539 = vunpack.c.l.b16 %v3378
    %v3540 = vunpack.c.l.b16 %v3388
    %v3541 = vunpack.c.l.b16 %v3402
    %v3542 = vunpack.c.l.b16 %v3412
    %v3543 = vunpack.c.l.b16 %v3426
    %v3544 = vunpack.c.l.b16 %v3436
    %v3545 = vunpack.c.l.b16 %v3450
    %v3546 = vunpack.c.l.b16 %v3460
    %v3547 = vunpack.c.l.b16 %v3474
    %v3548 = vunpack.c.l.b16 %v3484
    %v3549 = vpack.c.b16 %v3486, %v3485
    %v3550 = vpack.c.b16 %v3488, %v3487
    %v3551 = vpack.c.b16 %v3490, %v3489
    %v3552 = vpack.c.b16 %v3492, %v3491
    %v3553 = vpack.c.b16 %v3494, %v3493
    %v3554 = vpack.c.b16 %v3496, %v3495
    %v3555 = vpack.c.b16 %v3498, %v3497
    %v3556 = vpack.c.b16 %v3500, %v3499
    %v3557 = vpack.c.b16 %v3502, %v3501
    %v3558 = vpack.c.b16 %v3504, %v3503
    %v3559 = vpack.c.b16 %v3506, %v3505
    %v3560 = vpack.c.b16 %v3508, %v3507
    %v3561 = vpack.c.b16 %v3510, %v3509
    %v3562 = vpack.c.b16 %v3512, %v3511
    %v3563 = vpack.c.b16 %v3514, %v3513
    %v3564 = vpack.c.b16 %v3516, %v3515
    %v3565 = vpack.c.b16 %v3518, %v3517
    %v3566 = vpack.c.b16 %v3520, %v3519
    %v3567 = vpack.c.b16 %v3522, %v3521
    %v3568 = vpack.c.b16 %v3524, %v3523
    %v3569 = vpack.c.b16 %v3526, %v3525
    %v3570 = vpack.c.b16 %v3528, %v3527
    %v3571 = vpack.c.b16 %v3530, %v3529
    %v3572 = vpack.c.b16 %v3532, %v3531
    %v3573 = vpack.c.b16 %v3534, %v3533
    %v3574 = vpack.c.b16 %v3536, %v3535
    %v3575 = vpack.c.b16 %v3538, %v3537
    %v3576 = vpack.c.b16 %v3540, %v3539
    %v3577 = vpack.c.b16 %v3542, %v3541
    %v3578 = vpack.c.b16 %v3544, %v3543
    %v3579 = vpack.c.b16 %v3546, %v3545
    %v3580 = vpack.c.b16 %v3548, %v3547
    %3613 = vst [vmem:[#allocation3 + $0x8] sm:$0xff] %v3549
    %3614 = vst [vmem:[#allocation3 + $0x50] sm:$0xff] %v3550
    %3615 = vst [vmem:[#allocation3 + $0x98] sm:$0xff] %v3551
    %3616 = vst [vmem:[#allocation3 + $0xe0] sm:$0xff] %v3552
    %3617 = vst [vmem:[#allocation3 + $0x128] sm:$0xff] %v3553
    %3618 = vst [vmem:[#allocation3 + $0x170] sm:$0xff] %v3554
    %3619 = vst [vmem:[#allocation3 + $0x1b8] sm:$0xff] %v3555
    %3620 = vst [vmem:[#allocation3 + $0x200] sm:$0xff] %v3556
    %3621 = vst [vmem:[#allocation3 + $0x248] sm:$0xff] %v3557
    %3622 = vst [vmem:[#allocation3 + $0x290] sm:$0xff] %v3558
    %3623 = vst [vmem:[#allocation3 + $0x2d8] sm:$0xff] %v3559
    %3624 = vst [vmem:[#allocation3 + $0x320] sm:$0xff] %v3560
    %3625 = vst [vmem:[#allocation3 + $0x368] sm:$0xff] %v3561
    %3626 = vst [vmem:[#allocation3 + $0x3b0] sm:$0xff] %v3562
    %3627 = vst [vmem:[#allocation3 + $0x3f8] sm:$0xff] %v3563
    %3628 = vst [vmem:[#allocation3 + $0x440] sm:$0xff] %v3564
    %3629 = vst [vmem:[#allocation3 + $0x488] sm:$0xff] %v3565
    %3630 = vst [vmem:[#allocation3 + $0x4d0] sm:$0xff] %v3566
    %3631 = vst [vmem:[#allocation3 + $0x518] sm:$0xff] %v3567
    %3632 = vst [vmem:[#allocation3 + $0x560] sm:$0xff] %v3568
    %3633 = vst [vmem:[#allocation3 + $0x5a8] sm:$0xff] %v3569
    %3634 = vst [vmem:[#allocation3 + $0x5f0] sm:$0xff] %v3570
    %3635 = vst [vmem:[#allocation3 + $0x638] sm:$0xff] %v3571
    %3636 = vst [vmem:[#allocation3 + $0x680] sm:$0xff] %v3572
    %3637 = vst [vmem:[#allocation3 + $0x6c8] sm:$0xff] %v3573
    %3638 = vst [vmem:[#allocation3 + $0x710] sm:$0xff] %v3574
    %3639 = vst [vmem:[#allocation3 + $0x758] sm:$0xff] %v3575
    %3640 = vst [vmem:[#allocation3 + $0x7a0] sm:$0xff] %v3576
    %3641 = vst [vmem:[#allocation3 + $0x7e8] sm:$0xff] %v3577
    %3642 = vst [vmem:[#allocation3 + $0x830] sm:$0xff] %v3578
    %3643 = vst [vmem:[#allocation3 + $0x878] sm:$0xff] %v3579
    %3644 = vst [vmem:[#allocation3 + $0x8c0] sm:$0xff] %v3580
    %v3645 = vld [vmem:[#allocation2] sm:$0xe]
    %v3646 = vld [vmem:[#allocation2 + $0x4] sm:$0xf]
    %v3647 = vld [vmem:[#allocation2 + $0x8] sm:$0x1]
    %v3648 = vld [vmem:[#allocation2 + $0xc] sm:$0xe]
    %v3649 = vld [vmem:[#allocation2 + $0x10] sm:$0xf]
    %v3650 = vld [vmem:[#allocation2 + $0x14] sm:$0x1]
    %v3651 = vld [vmem:[#allocation2 + $0x18] sm:$0xe]
    %v3652 = vld [vmem:[#allocation2 + $0x1c] sm:$0xf]
    %v3653 = vld [vmem:[#allocation2 + $0x20] sm:$0x1]
    %v3654 = vld [vmem:[#allocation2 + $0x24] sm:$0xe]
    %v3655 = vld [vmem:[#allocation2 + $0x28] sm:$0xf]
    %v3656 = vld [vmem:[#allocation2 + $0x2c] sm:$0x1]
    %v3657 = vld [vmem:[#allocation2 + $0x30] sm:$0xe]
    %v3658 = vld [vmem:[#allocation2 + $0x34] sm:$0xf]
    %v3659 = vld [vmem:[#allocation2 + $0x38] sm:$0x1]
    %v3660 = vld [vmem:[#allocation2 + $0x3c] sm:$0xe]
    %v3661 = vld [vmem:[#allocation2 + $0x40] sm:$0xf]
    %v3662 = vld [vmem:[#allocation2 + $0x44] sm:$0x1]
    %v3663 = vld [vmem:[#allocation2 + $0x48] sm:$0xe]
    %v3664 = vld [vmem:[#allocation2 + $0x4c] sm:$0xf]
    %v3665 = vld [vmem:[#allocation2 + $0x50] sm:$0x1]
    %v3666 = vld [vmem:[#allocation2 + $0x54] sm:$0xe]
    %v3667 = vld [vmem:[#allocation2 + $0x58] sm:$0xf]
    %v3668 = vld [vmem:[#allocation2 + $0x5c] sm:$0x1]
    %v3669 = vld [vmem:[#allocation2 + $0x60] sm:$0xe]
    %v3670 = vld [vmem:[#allocation2 + $0x64] sm:$0xf]
    %v3671 = vld [vmem:[#allocation2 + $0x68] sm:$0x1]
    %v3672 = vld [vmem:[#allocation2 + $0x6c] sm:$0xe]
    %v3673 = vld [vmem:[#allocation2 + $0x70] sm:$0xf]
    %v3674 = vld [vmem:[#allocation2 + $0x74] sm:$0x1]
    %v3675 = vld [vmem:[#allocation2 + $0x78] sm:$0xe]
    %v3676 = vld [vmem:[#allocation2 + $0x7c] sm:$0xf]
    %v3677 = vld [vmem:[#allocation2 + $0x80] sm:$0x1]
    %v3678 = vld [vmem:[#allocation2 + $0x84] sm:$0xe]
    %v3679 = vld [vmem:[#allocation2 + $0x88] sm:$0xf]
    %v3680 = vld [vmem:[#allocation2 + $0x8c] sm:$0x1]
    %v3681 = vld [vmem:[#allocation2 + $0x90] sm:$0xe]
    %v3682 = vld [vmem:[#allocation2 + $0x94] sm:$0xf]
    %v3683 = vld [vmem:[#allocation2 + $0x98] sm:$0x1]
    %v3684 = vld [vmem:[#allocation2 + $0x9c] sm:$0xe]
    %v3685 = vld [vmem:[#allocation2 + $0xa0] sm:$0xf]
    %v3686 = vld [vmem:[#allocation2 + $0xa4] sm:$0x1]
    %v3687 = vld [vmem:[#allocation2 + $0xa8] sm:$0xe]
    %v3688 = vld [vmem:[#allocation2 + $0xac] sm:$0xf]
    %v3689 = vld [vmem:[#allocation2 + $0xb0] sm:$0x1]
    %v3690 = vld [vmem:[#allocation2 + $0xb4] sm:$0xe]
    %v3691 = vld [vmem:[#allocation2 + $0xb8] sm:$0xf]
    %v3692 = vld [vmem:[#allocation2 + $0xbc] sm:$0x1]
    %v3693 = vld [vmem:[#allocation2 + $0xd8] sm:$0xe]
    %v3694 = vld [vmem:[#allocation2 + $0xdc] sm:$0xf]
    %v3695 = vld [vmem:[#allocation2 + $0xe0] sm:$0x1]
    %v3696 = vld [vmem:[#allocation2 + $0xe4] sm:$0xe]
    %v3697 = vld [vmem:[#allocation2 + $0xe8] sm:$0xf]
    %v3698 = vld [vmem:[#allocation2 + $0xec] sm:$0x1]
    %v3699 = vld [vmem:[#allocation2 + $0xf0] sm:$0xe]
    %v3700 = vld [vmem:[#allocation2 + $0xf4] sm:$0xf]
    %v3701 = vld [vmem:[#allocation2 + $0xf8] sm:$0x1]
    %v3702 = vld [vmem:[#allocation2 + $0xfc] sm:$0xe]
    %v3703 = vld [vmem:[#allocation2 + $0x100] sm:$0xf]
    %v3704 = vld [vmem:[#allocation2 + $0x104] sm:$0x1]
    %v3705 = vld [vmem:[#allocation2 + $0x108] sm:$0xe]
    %v3706 = vld [vmem:[#allocation2 + $0x10c] sm:$0xf]
    %v3707 = vld [vmem:[#allocation2 + $0x110] sm:$0x1]
    %v3708 = vld [vmem:[#allocation2 + $0x114] sm:$0xe]
    %v3709 = vld [vmem:[#allocation2 + $0x118] sm:$0xf]
    %v3710 = vld [vmem:[#allocation2 + $0x11c] sm:$0x1]
    %v3711 = vld [vmem:[#allocation2 + $0x120] sm:$0xe]
    %v3712 = vld [vmem:[#allocation2 + $0x124] sm:$0xf]
    %v3713 = vld [vmem:[#allocation2 + $0x128] sm:$0x1]
    %v3714 = vld [vmem:[#allocation2 + $0x12c] sm:$0xe]
    %v3715 = vld [vmem:[#allocation2 + $0x130] sm:$0xf]
    %v3716 = vld [vmem:[#allocation2 + $0x134] sm:$0x1]
    %v3717 = vld [vmem:[#allocation2 + $0x138] sm:$0xe]
    %v3718 = vld [vmem:[#allocation2 + $0x13c] sm:$0xf]
    %v3719 = vld [vmem:[#allocation2 + $0x140] sm:$0x1]
    %v3720 = vld [vmem:[#allocation2 + $0x144] sm:$0xe]
    %v3721 = vld [vmem:[#allocation2 + $0x148] sm:$0xf]
    %v3722 = vld [vmem:[#allocation2 + $0x14c] sm:$0x1]
    %v3723 = vld [vmem:[#allocation2 + $0x150] sm:$0xe]
    %v3724 = vld [vmem:[#allocation2 + $0x154] sm:$0xf]
    %v3725 = vld [vmem:[#allocation2 + $0x158] sm:$0x1]
    %v3726 = vld [vmem:[#allocation2 + $0x15c] sm:$0xe]
    %v3727 = vld [vmem:[#allocation2 + $0x160] sm:$0xf]
    %v3728 = vld [vmem:[#allocation2 + $0x164] sm:$0x1]
    %v3729 = vld [vmem:[#allocation2 + $0x168] sm:$0xe]
    %v3730 = vld [vmem:[#allocation2 + $0x16c] sm:$0xf]
    %v3731 = vld [vmem:[#allocation2 + $0x170] sm:$0x1]
    %v3732 = vld [vmem:[#allocation2 + $0x174] sm:$0xe]
    %v3733 = vld [vmem:[#allocation2 + $0x178] sm:$0xf]
    %v3734 = vld [vmem:[#allocation2 + $0x17c] sm:$0x1]
    %v3735 = vld [vmem:[#allocation2 + $0x180] sm:$0xe]
    %v3736 = vld [vmem:[#allocation2 + $0x184] sm:$0xf]
    %v3737 = vld [vmem:[#allocation2 + $0x188] sm:$0x1]
    %v3738 = vld [vmem:[#allocation2 + $0x18c] sm:$0xe]
    %v3739 = vld [vmem:[#allocation2 + $0x190] sm:$0xf]
    %v3740 = vld [vmem:[#allocation2 + $0x194] sm:$0x1]
    %vm3837 = vcmask 1042432
    %vm3838 = vcmask 1046532
    %vm3839 = vmor %vm3837, %vm3838
    %v3840 = vrot.slane %v3645, 5
    %v3841 = vrot.slane %v3840, 4
    %v3842 = vrot.slane %v3646, 5
    %v3843 = vsel %vm3839, %v3841, %v3842
    %v3844 = vrot.slane %v3842, 4
    %v3845 = vrot.slane %v3647, 5
    %v3846 = vsel %vm3839, %v3844, %v3845
    %v3847 = vrot.slane %v3648, 5
    %v3848 = vrot.slane %v3847, 4
    %v3849 = vrot.slane %v3649, 5
    %v3850 = vsel %vm3839, %v3848, %v3849
    %v3851 = vrot.slane %v3849, 4
    %v3852 = vrot.slane %v3650, 5
    %v3853 = vsel %vm3839, %v3851, %v3852
    %v3854 = vrot.slane %v3651, 5
    %v3855 = vrot.slane %v3854, 4
    %v3856 = vrot.slane %v3652, 5
    %v3857 = vsel %vm3839, %v3855, %v3856
    %v3858 = vrot.slane %v3856, 4
    %v3859 = vrot.slane %v3653, 5
    %v3860 = vsel %vm3839, %v3858, %v3859
    %v3861 = vrot.slane %v3654, 5
    %v3862 = vrot.slane %v3861, 4
    %v3863 = vrot.slane %v3655, 5
    %v3864 = vsel %vm3839, %v3862, %v3863
    %v3865 = vrot.slane %v3863, 4
    %v3866 = vrot.slane %v3656, 5
    %v3867 = vsel %vm3839, %v3865, %v3866
    %v3868 = vrot.slane %v3657, 5
    %v3869 = vrot.slane %v3868, 4
    %v3870 = vrot.slane %v3658, 5
    %v3871 = vsel %vm3839, %v3869, %v3870
    %v3872 = vrot.slane %v3870, 4
    %v3873 = vrot.slane %v3659, 5
    %v3874 = vsel %vm3839, %v3872, %v3873
    %v3875 = vrot.slane %v3660, 5
    %v3876 = vrot.slane %v3875, 4
    %v3877 = vrot.slane %v3661, 5
    %v3878 = vsel %vm3839, %v3876, %v3877
    %v3879 = vrot.slane %v3877, 4
    %v3880 = vrot.slane %v3662, 5
    %v3881 = vsel %vm3839, %v3879, %v3880
    %v3882 = vrot.slane %v3663, 5
    %v3883 = vrot.slane %v3882, 4
    %v3884 = vrot.slane %v3664, 5
    %v3885 = vsel %vm3839, %v3883, %v3884
    %v3886 = vrot.slane %v3884, 4
    %v3887 = vrot.slane %v3665, 5
    %v3888 = vsel %vm3839, %v3886, %v3887
    %v3889 = vrot.slane %v3666, 5
    %v3890 = vrot.slane %v3889, 4
    %v3891 = vrot.slane %v3667, 5
    %v3892 = vsel %vm3839, %v3890, %v3891
    %v3893 = vrot.slane %v3891, 4
    %v3894 = vrot.slane %v3668, 5
    %v3895 = vsel %vm3839, %v3893, %v3894
    %v3896 = vrot.slane %v3669, 5
    %v3897 = vrot.slane %v3896, 4
    %v3898 = vrot.slane %v3670, 5
    %v3899 = vsel %vm3839, %v3897, %v3898
    %v3900 = vrot.slane %v3898, 4
    %v3901 = vrot.slane %v3671, 5
    %v3902 = vsel %vm3839, %v3900, %v3901
    %v3903 = vrot.slane %v3672, 5
    %v3904 = vrot.slane %v3903, 4
    %v3905 = vrot.slane %v3673, 5
    %v3906 = vsel %vm3839, %v3904, %v3905
    %v3907 = vrot.slane %v3905, 4
    %v3908 = vrot.slane %v3674, 5
    %v3909 = vsel %vm3839, %v3907, %v3908
    %v3910 = vrot.slane %v3675, 5
    %v3911 = vrot.slane %v3910, 4
    %v3912 = vrot.slane %v3676, 5
    %v3913 = vsel %vm3839, %v3911, %v3912
    %v3914 = vrot.slane %v3912, 4
    %v3915 = vrot.slane %v3677, 5
    %v3916 = vsel %vm3839, %v3914, %v3915
    %v3917 = vrot.slane %v3678, 5
    %v3918 = vrot.slane %v3917, 4
    %v3919 = vrot.slane %v3679, 5
    %v3920 = vsel %vm3839, %v3918, %v3919
    %v3921 = vrot.slane %v3919, 4
    %v3922 = vrot.slane %v3680, 5
    %v3923 = vsel %vm3839, %v3921, %v3922
    %v3924 = vrot.slane %v3681, 5
    %v3925 = vrot.slane %v3924, 4
    %v3926 = vrot.slane %v3682, 5
    %v3927 = vsel %vm3839, %v3925, %v3926
    %v3928 = vrot.slane %v3926, 4
    %v3929 = vrot.slane %v3683, 5
    %v3930 = vsel %vm3839, %v3928, %v3929
    %v3931 = vrot.slane %v3684, 5
    %v3932 = vrot.slane %v3931, 4
    %v3933 = vrot.slane %v3685, 5
    %v3934 = vsel %vm3839, %v3932, %v3933
    %v3935 = vrot.slane %v3933, 4
    %v3936 = vrot.slane %v3686, 5
    %v3937 = vsel %vm3839, %v3935, %v3936
    %v3938 = vrot.slane %v3687, 5
    %v3939 = vrot.slane %v3938, 4
    %v3940 = vrot.slane %v3688, 5
    %v3941 = vsel %vm3839, %v3939, %v3940
    %v3942 = vrot.slane %v3940, 4
    %v3943 = vrot.slane %v3689, 5
    %v3944 = vsel %vm3839, %v3942, %v3943
    %v3945 = vrot.slane %v3690, 5
    %v3946 = vrot.slane %v3945, 4
    %v3947 = vrot.slane %v3691, 5
    %v3948 = vsel %vm3839, %v3946, %v3947
    %v3949 = vrot.slane %v3947, 4
    %v3950 = vrot.slane %v3692, 5
    %v3951 = vsel %vm3839, %v3949, %v3950
    %v3952 = vrot.slane %v3693, 5
    %v3953 = vrot.slane %v3952, 4
    %v3954 = vrot.slane %v3694, 5
    %v3955 = vsel %vm3839, %v3953, %v3954
    %v3956 = vrot.slane %v3954, 4
    %v3957 = vrot.slane %v3695, 5
    %v3958 = vsel %vm3839, %v3956, %v3957
    %v3959 = vrot.slane %v3696, 5
    %v3960 = vrot.slane %v3959, 4
    %v3961 = vrot.slane %v3697, 5
    %v3962 = vsel %vm3839, %v3960, %v3961
    %v3963 = vrot.slane %v3961, 4
    %v3964 = vrot.slane %v3698, 5
    %v3965 = vsel %vm3839, %v3963, %v3964
    %v3966 = vrot.slane %v3699, 5
    %v3967 = vrot.slane %v3966, 4
    %v3968 = vrot.slane %v3700, 5
    %v3969 = vsel %vm3839, %v3967, %v3968
    %v3970 = vrot.slane %v3968, 4
    %v3971 = vrot.slane %v3701, 5
    %v3972 = vsel %vm3839, %v3970, %v3971
    %v3973 = vrot.slane %v3702, 5
    %v3974 = vrot.slane %v3973, 4
    %v3975 = vrot.slane %v3703, 5
    %v3976 = vsel %vm3839, %v3974, %v3975
    %v3977 = vrot.slane %v3975, 4
    %v3978 = vrot.slane %v3704, 5
    %v3979 = vsel %vm3839, %v3977, %v3978
    %v3980 = vrot.slane %v3705, 5
    %v3981 = vrot.slane %v3980, 4
    %v3982 = vrot.slane %v3706, 5
    %v3983 = vsel %vm3839, %v3981, %v3982
    %v3984 = vrot.slane %v3982, 4
    %v3985 = vrot.slane %v3707, 5
    %v3986 = vsel %vm3839, %v3984, %v3985
    %v3987 = vrot.slane %v3708, 5
    %v3988 = vrot.slane %v3987, 4
    %v3989 = vrot.slane %v3709, 5
    %v3990 = vsel %vm3839, %v3988, %v3989
    %v3991 = vrot.slane %v3989, 4
    %v3992 = vrot.slane %v3710, 5
    %v3993 = vsel %vm3839, %v3991, %v3992
    %v3994 = vrot.slane %v3711, 5
    %v3995 = vrot.slane %v3994, 4
    %v3996 = vrot.slane %v3712, 5
    %v3997 = vsel %vm3839, %v3995, %v3996
    %v3998 = vrot.slane %v3996, 4
    %v3999 = vrot.slane %v3713, 5
    %v4000 = vsel %vm3839, %v3998, %v3999
    %v4001 = vrot.slane %v3714, 5
    %v4002 = vrot.slane %v4001, 4
    %v4003 = vrot.slane %v3715, 5
    %v4004 = vsel %vm3839, %v4002, %v4003
    %v4005 = vrot.slane %v4003, 4
    %v4006 = vrot.slane %v3716, 5
    %v4007 = vsel %vm3839, %v4005, %v4006
    %v4008 = vrot.slane %v3717, 5
    %v4009 = vrot.slane %v4008, 4
    %v4010 = vrot.slane %v3718, 5
    %v4011 = vsel %vm3839, %v4009, %v4010
    %v4012 = vrot.slane %v4010, 4
    %v4013 = vrot.slane %v3719, 5
    %v4014 = vsel %vm3839, %v4012, %v4013
    %v4015 = vrot.slane %v3720, 5
    %v4016 = vrot.slane %v4015, 4
    %v4017 = vrot.slane %v3721, 5
    %v4018 = vsel %vm3839, %v4016, %v4017
    %v4019 = vrot.slane %v4017, 4
    %v4020 = vrot.slane %v3722, 5
    %v4021 = vsel %vm3839, %v4019, %v4020
    %v4022 = vrot.slane %v3723, 5
    %v4023 = vrot.slane %v4022, 4
    %v4024 = vrot.slane %v3724, 5
    %v4025 = vsel %vm3839, %v4023, %v4024
    %v4026 = vrot.slane %v4024, 4
    %v4027 = vrot.slane %v3725, 5
    %v4028 = vsel %vm3839, %v4026, %v4027
    %v4029 = vrot.slane %v3726, 5
    %v4030 = vrot.slane %v4029, 4
    %v4031 = vrot.slane %v3727, 5
    %v4032 = vsel %vm3839, %v4030, %v4031
    %v4033 = vrot.slane %v4031, 4
    %v4034 = vrot.slane %v3728, 5
    %v4035 = vsel %vm3839, %v4033, %v4034
    %v4036 = vrot.slane %v3729, 5
    %v4037 = vrot.slane %v4036, 4
    %v4038 = vrot.slane %v3730, 5
    %v4039 = vsel %vm3839, %v4037, %v4038
    %v4040 = vrot.slane %v4038, 4
    %v4041 = vrot.slane %v3731, 5
    %v4042 = vsel %vm3839, %v4040, %v4041
    %v4043 = vrot.slane %v3732, 5
    %v4044 = vrot.slane %v4043, 4
    %v4045 = vrot.slane %v3733, 5
    %v4046 = vsel %vm3839, %v4044, %v4045
    %v4047 = vrot.slane %v4045, 4
    %v4048 = vrot.slane %v3734, 5
    %v4049 = vsel %vm3839, %v4047, %v4048
    %v4050 = vrot.slane %v3735, 5
    %v4051 = vrot.slane %v4050, 4
    %v4052 = vrot.slane %v3736, 5
    %v4053 = vsel %vm3839, %v4051, %v4052
    %v4054 = vrot.slane %v4052, 4
    %v4055 = vrot.slane %v3737, 5
    %v4056 = vsel %vm3839, %v4054, %v4055
    %v4057 = vrot.slane %v3738, 5
    %v4058 = vrot.slane %v4057, 4
    %v4059 = vrot.slane %v3739, 5
    %v4060 = vsel %vm3839, %v4058, %v4059
    %v4061 = vrot.slane %v4059, 4
    %v4062 = vrot.slane %v3740, 5
    %v4063 = vsel %vm3839, %v4061, %v4062
    %v4064 = vunpack.c.l.b16 %v3843
    %v4065 = vunpack.c.l.b16 %v3846
    %v4066 = vunpack.c.l.b16 %v3850
    %v4067 = vunpack.c.l.b16 %v3853
    %v4068 = vunpack.c.l.b16 %v3857
    %v4069 = vunpack.c.l.b16 %v3860
    %v4070 = vunpack.c.l.b16 %v3864
    %v4071 = vunpack.c.l.b16 %v3867
    %v4072 = vunpack.c.l.b16 %v3871
    %v4073 = vunpack.c.l.b16 %v3874
    %v4074 = vunpack.c.l.b16 %v3878
    %v4075 = vunpack.c.l.b16 %v3881
    %v4076 = vunpack.c.l.b16 %v3885
    %v4077 = vunpack.c.l.b16 %v3888
    %v4078 = vunpack.c.l.b16 %v3892
    %v4079 = vunpack.c.l.b16 %v3895
    %v4080 = vunpack.c.l.b16 %v3899
    %v4081 = vunpack.c.l.b16 %v3902
    %v4082 = vunpack.c.l.b16 %v3906
    %v4083 = vunpack.c.l.b16 %v3909
    %v4084 = vunpack.c.l.b16 %v3913
    %v4085 = vunpack.c.l.b16 %v3916
    %v4086 = vunpack.c.l.b16 %v3920
    %v4087 = vunpack.c.l.b16 %v3923
    %v4088 = vunpack.c.l.b16 %v3927
    %v4089 = vunpack.c.l.b16 %v3930
    %v4090 = vunpack.c.l.b16 %v3934
    %v4091 = vunpack.c.l.b16 %v3937
    %v4092 = vunpack.c.l.b16 %v3941
    %v4093 = vunpack.c.l.b16 %v3944
    %v4094 = vunpack.c.l.b16 %v3948
    %v4095 = vunpack.c.l.b16 %v3951
    %v4096 = vunpack.c.l.b16 %v3955
    %v4097 = vunpack.c.l.b16 %v3958
    %v4098 = vunpack.c.l.b16 %v3962
    %v4099 = vunpack.c.l.b16 %v3965
    %v4100 = vunpack.c.l.b16 %v3969
    %v4101 = vunpack.c.l.b16 %v3972
    %v4102 = vunpack.c.l.b16 %v3976
    %v4103 = vunpack.c.l.b16 %v3979
    %v4104 = vunpack.c.l.b16 %v3983
    %v4105 = vunpack.c.l.b16 %v3986
    %v4106 = vunpack.c.l.b16 %v3990
    %v4107 = vunpack.c.l.b16 %v3993
    %v4108 = vunpack.c.l.b16 %v3997
    %v4109 = vunpack.c.l.b16 %v4000
    %v4110 = vunpack.c.l.b16 %v4004
    %v4111 = vunpack.c.l.b16 %v4007
    %v4112 = vunpack.c.l.b16 %v4011
    %v4113 = vunpack.c.l.b16 %v4014
    %v4114 = vunpack.c.l.b16 %v4018
    %v4115 = vunpack.c.l.b16 %v4021
    %v4116 = vunpack.c.l.b16 %v4025
    %v4117 = vunpack.c.l.b16 %v4028
    %v4118 = vunpack.c.l.b16 %v4032
    %v4119 = vunpack.c.l.b16 %v4035
    %v4120 = vunpack.c.l.b16 %v4039
    %v4121 = vunpack.c.l.b16 %v4042
    %v4122 = vunpack.c.l.b16 %v4046
    %v4123 = vunpack.c.l.b16 %v4049
    %v4124 = vunpack.c.l.b16 %v4053
    %v4125 = vunpack.c.l.b16 %v4056
    %v4126 = vunpack.c.l.b16 %v4060
    %v4127 = vunpack.c.l.b16 %v4063
    %v4128 = vpack.c.b16 %v4065, %v4064
    %v4129 = vpack.c.b16 %v4067, %v4066
    %v4130 = vpack.c.b16 %v4069, %v4068
    %v4131 = vpack.c.b16 %v4071, %v4070
    %v4132 = vpack.c.b16 %v4073, %v4072
    %v4133 = vpack.c.b16 %v4075, %v4074
    %v4134 = vpack.c.b16 %v4077, %v4076
    %v4135 = vpack.c.b16 %v4079, %v4078
    %v4136 = vpack.c.b16 %v4081, %v4080
    %v4137 = vpack.c.b16 %v4083, %v4082
    %v4138 = vpack.c.b16 %v4085, %v4084
    %v4139 = vpack.c.b16 %v4087, %v4086
    %v4140 = vpack.c.b16 %v4089, %v4088
    %v4141 = vpack.c.b16 %v4091, %v4090
    %v4142 = vpack.c.b16 %v4093, %v4092
    %v4143 = vpack.c.b16 %v4095, %v4094
    %v4144 = vpack.c.b16 %v4097, %v4096
    %v4145 = vpack.c.b16 %v4099, %v4098
    %v4146 = vpack.c.b16 %v4101, %v4100
    %v4147 = vpack.c.b16 %v4103, %v4102
    %v4148 = vpack.c.b16 %v4105, %v4104
    %v4149 = vpack.c.b16 %v4107, %v4106
    %v4150 = vpack.c.b16 %v4109, %v4108
    %v4151 = vpack.c.b16 %v4111, %v4110
    %v4152 = vpack.c.b16 %v4113, %v4112
    %v4153 = vpack.c.b16 %v4115, %v4114
    %v4154 = vpack.c.b16 %v4117, %v4116
    %v4155 = vpack.c.b16 %v4119, %v4118
    %v4156 = vpack.c.b16 %v4121, %v4120
    %v4157 = vpack.c.b16 %v4123, %v4122
    %v4158 = vpack.c.b16 %v4125, %v4124
    %v4159 = vpack.c.b16 %v4127, %v4126
    %4192 = vst [vmem:[#allocation3 + $0x10] sm:$0xff] %v4128
    %4193 = vst [vmem:[#allocation3 + $0x58] sm:$0xff] %v4129
    %4194 = vst [vmem:[#allocation3 + $0xa0] sm:$0xff] %v4130
    %4195 = vst [vmem:[#allocation3 + $0xe8] sm:$0xff] %v4131
    %4196 = vst [vmem:[#allocation3 + $0x130] sm:$0xff] %v4132
    %4197 = vst [vmem:[#allocation3 + $0x178] sm:$0xff] %v4133
    %4198 = vst [vmem:[#allocation3 + $0x1c0] sm:$0xff] %v4134
    %4199 = vst [vmem:[#allocation3 + $0x208] sm:$0xff] %v4135
    %4200 = vst [vmem:[#allocation3 + $0x250] sm:$0xff] %v4136
    %4201 = vst [vmem:[#allocation3 + $0x298] sm:$0xff] %v4137
    %4202 = vst [vmem:[#allocation3 + $0x2e0] sm:$0xff] %v4138
    %4203 = vst [vmem:[#allocation3 + $0x328] sm:$0xff] %v4139
    %4204 = vst [vmem:[#allocation3 + $0x370] sm:$0xff] %v4140
    %4205 = vst [vmem:[#allocation3 + $0x3b8] sm:$0xff] %v4141
    %4206 = vst [vmem:[#allocation3 + $0x400] sm:$0xff] %v4142
    %4207 = vst [vmem:[#allocation3 + $0x448] sm:$0xff] %v4143
    %4208 = vst [vmem:[#allocation3 + $0x490] sm:$0xff] %v4144
    %4209 = vst [vmem:[#allocation3 + $0x4d8] sm:$0xff] %v4145
    %4210 = vst [vmem:[#allocation3 + $0x520] sm:$0xff] %v4146
    %4211 = vst [vmem:[#allocation3 + $0x568] sm:$0xff] %v4147
    %4212 = vst [vmem:[#allocation3 + $0x5b0] sm:$0xff] %v4148
    %4213 = vst [vmem:[#allocation3 + $0x5f8] sm:$0xff] %v4149
    %4214 = vst [vmem:[#allocation3 + $0x640] sm:$0xff] %v4150
    %4215 = vst [vmem:[#allocation3 + $0x688] sm:$0xff] %v4151
    %4216 = vst [vmem:[#allocation3 + $0x6d0] sm:$0xff] %v4152
    %4217 = vst [vmem:[#allocation3 + $0x718] sm:$0xff] %v4153
    %4218 = vst [vmem:[#allocation3 + $0x760] sm:$0xff] %v4154
    %4219 = vst [vmem:[#allocation3 + $0x7a8] sm:$0xff] %v4155
    %4220 = vst [vmem:[#allocation3 + $0x7f0] sm:$0xff] %v4156
    %4221 = vst [vmem:[#allocation3 + $0x838] sm:$0xff] %v4157
    %4222 = vst [vmem:[#allocation3 + $0x880] sm:$0xff] %v4158
    %4223 = vst [vmem:[#allocation3 + $0x8c8] sm:$0xff] %v4159
    %v4224 = vld [vmem:[%s1072] sm:$0xf]
    %v4225 = vld [vmem:[%s1072 + $0x4] sm:$0xf]
    %v4226 = vld [vmem:[%s1072 + $0xc] sm:$0xf]
    %v4227 = vld [vmem:[%s1072 + $0x10] sm:$0xf]
    %v4228 = vld [vmem:[%s1072 + $0x18] sm:$0xf]
    %v4229 = vld [vmem:[%s1072 + $0x1c] sm:$0xf]
    %v4230 = vld [vmem:[%s1072 + $0x24] sm:$0xf]
    %v4231 = vld [vmem:[%s1072 + $0x28] sm:$0xf]
    %v4232 = vld [vmem:[%s1072 + $0x30] sm:$0xf]
    %v4233 = vld [vmem:[%s1072 + $0x34] sm:$0xf]
    %v4234 = vld [vmem:[%s1072 + $0x3c] sm:$0xf]
    %v4235 = vld [vmem:[%s1072 + $0x40] sm:$0xf]
    %v4236 = vld [vmem:[%s1072 + $0x48] sm:$0xf]
    %v4237 = vld [vmem:[%s1072 + $0x4c] sm:$0xf]
    %v4238 = vld [vmem:[%s1072 + $0x54] sm:$0xf]
    %v4239 = vld [vmem:[%s1072 + $0x58] sm:$0xf]
    %v4240 = vld [vmem:[%s1072 + $0x60] sm:$0xf]
    %v4241 = vld [vmem:[%s1072 + $0x64] sm:$0xf]
    %v4242 = vld [vmem:[%s1072 + $0x6c] sm:$0xf]
    %v4243 = vld [vmem:[%s1072 + $0x70] sm:$0xf]
    %v4244 = vld [vmem:[%s1072 + $0x78] sm:$0xf]
    %v4245 = vld [vmem:[%s1072 + $0x7c] sm:$0xf]
    %v4246 = vld [vmem:[%s1072 + $0x84] sm:$0xf]
    %v4247 = vld [vmem:[%s1072 + $0x88] sm:$0xf]
    %v4248 = vld [vmem:[%s1072 + $0x90] sm:$0xf]
    %v4249 = vld [vmem:[%s1072 + $0x94] sm:$0xf]
    %v4250 = vld [vmem:[%s1072 + $0x9c] sm:$0xf]
    %v4251 = vld [vmem:[%s1072 + $0xa0] sm:$0xf]
    %v4252 = vld [vmem:[%s1072 + $0xa8] sm:$0xf]
    %v4253 = vld [vmem:[%s1072 + $0xac] sm:$0xf]
    %v4254 = vld [vmem:[%s1072 + $0xb4] sm:$0xf]
    %v4255 = vld [vmem:[%s1072 + $0xb8] sm:$0xf]
    %v4256 = vld [vmem:[%s1072 + $0xd8] sm:$0xf]
    %v4257 = vld [vmem:[%s1072 + $0xdc] sm:$0xf]
    %v4258 = vld [vmem:[%s1072 + $0xe4] sm:$0xf]
    %v4259 = vld [vmem:[%s1072 + $0xe8] sm:$0xf]
    %v4260 = vld [vmem:[%s1072 + $0xf0] sm:$0xf]
    %v4261 = vld [vmem:[%s1072 + $0xf4] sm:$0xf]
    %v4262 = vld [vmem:[%s1072 + $0xfc] sm:$0xf]
    %v4263 = vld [vmem:[%s1072 + $0x100] sm:$0xf]
    %v4264 = vld [vmem:[%s1072 + $0x108] sm:$0xf]
    %v4265 = vld [vmem:[%s1072 + $0x10c] sm:$0xf]
    %v4266 = vld [vmem:[%s1072 + $0x114] sm:$0xf]
    %v4267 = vld [vmem:[%s1072 + $0x118] sm:$0xf]
    %v4268 = vld [vmem:[%s1072 + $0x120] sm:$0xf]
    %v4269 = vld [vmem:[%s1072 + $0x124] sm:$0xf]
    %v4270 = vld [vmem:[%s1072 + $0x12c] sm:$0xf]
    %v4271 = vld [vmem:[%s1072 + $0x130] sm:$0xf]
    %v4272 = vld [vmem:[%s1072 + $0x138] sm:$0xf]
    %v4273 = vld [vmem:[%s1072 + $0x13c] sm:$0xf]
    %v4274 = vld [vmem:[%s1072 + $0x144] sm:$0xf]
    %v4275 = vld [vmem:[%s1072 + $0x148] sm:$0xf]
    %v4276 = vld [vmem:[%s1072 + $0x150] sm:$0xf]
    %v4277 = vld [vmem:[%s1072 + $0x154] sm:$0xf]
    %v4278 = vld [vmem:[%s1072 + $0x15c] sm:$0xf]
    %v4279 = vld [vmem:[%s1072 + $0x160] sm:$0xf]
    %v4280 = vld [vmem:[%s1072 + $0x168] sm:$0xf]
    %v4281 = vld [vmem:[%s1072 + $0x16c] sm:$0xf]
    %v4282 = vld [vmem:[%s1072 + $0x174] sm:$0xf]
    %v4283 = vld [vmem:[%s1072 + $0x178] sm:$0xf]
    %v4284 = vld [vmem:[%s1072 + $0x180] sm:$0xf]
    %v4285 = vld [vmem:[%s1072 + $0x184] sm:$0xf]
    %v4286 = vld [vmem:[%s1072 + $0x18c] sm:$0xf]
    %v4287 = vld [vmem:[%s1072 + $0x190] sm:$0xf]
    %v4352 = vunpack.c.l.b16 %v4224
    %v4353 = vunpack.c.l.b16 %v4225
    %v4354 = vunpack.c.l.b16 %v4226
    %v4355 = vunpack.c.l.b16 %v4227
    %v4356 = vunpack.c.l.b16 %v4228
    %v4357 = vunpack.c.l.b16 %v4229
    %v4358 = vunpack.c.l.b16 %v4230
    %v4359 = vunpack.c.l.b16 %v4231
    %v4360 = vunpack.c.l.b16 %v4232
    %v4361 = vunpack.c.l.b16 %v4233
    %v4362 = vunpack.c.l.b16 %v4234
    %v4363 = vunpack.c.l.b16 %v4235
    %v4364 = vunpack.c.l.b16 %v4236
    %v4365 = vunpack.c.l.b16 %v4237
    %v4366 = vunpack.c.l.b16 %v4238
    %v4367 = vunpack.c.l.b16 %v4239
    %v4368 = vunpack.c.l.b16 %v4240
    %v4369 = vunpack.c.l.b16 %v4241
    %v4370 = vunpack.c.l.b16 %v4242
    %v4371 = vunpack.c.l.b16 %v4243
    %v4372 = vunpack.c.l.b16 %v4244
    %v4373 = vunpack.c.l.b16 %v4245
    %v4374 = vunpack.c.l.b16 %v4246
    %v4375 = vunpack.c.l.b16 %v4247
    %v4376 = vunpack.c.l.b16 %v4248
    %v4377 = vunpack.c.l.b16 %v4249
    %v4378 = vunpack.c.l.b16 %v4250
    %v4379 = vunpack.c.l.b16 %v4251
    %v4380 = vunpack.c.l.b16 %v4252
    %v4381 = vunpack.c.l.b16 %v4253
    %v4382 = vunpack.c.l.b16 %v4254
    %v4383 = vunpack.c.l.b16 %v4255
    %v4384 = vunpack.c.l.b16 %v4256
    %v4385 = vunpack.c.l.b16 %v4257
    %v4386 = vunpack.c.l.b16 %v4258
    %v4387 = vunpack.c.l.b16 %v4259
    %v4388 = vunpack.c.l.b16 %v4260
    %v4389 = vunpack.c.l.b16 %v4261
    %v4390 = vunpack.c.l.b16 %v4262
    %v4391 = vunpack.c.l.b16 %v4263
    %v4392 = vunpack.c.l.b16 %v4264
    %v4393 = vunpack.c.l.b16 %v4265
    %v4394 = vunpack.c.l.b16 %v4266
    %v4395 = vunpack.c.l.b16 %v4267
    %v4396 = vunpack.c.l.b16 %v4268
    %v4397 = vunpack.c.l.b16 %v4269
    %v4398 = vunpack.c.l.b16 %v4270
    %v4399 = vunpack.c.l.b16 %v4271
    %v4400 = vunpack.c.l.b16 %v4272
    %v4401 = vunpack.c.l.b16 %v4273
    %v4402 = vunpack.c.l.b16 %v4274
    %v4403 = vunpack.c.l.b16 %v4275
    %v4404 = vunpack.c.l.b16 %v4276
    %v4405 = vunpack.c.l.b16 %v4277
    %v4406 = vunpack.c.l.b16 %v4278
    %v4407 = vunpack.c.l.b16 %v4279
    %v4408 = vunpack.c.l.b16 %v4280
    %v4409 = vunpack.c.l.b16 %v4281
    %v4410 = vunpack.c.l.b16 %v4282
    %v4411 = vunpack.c.l.b16 %v4283
    %v4412 = vunpack.c.l.b16 %v4284
    %v4413 = vunpack.c.l.b16 %v4285
    %v4414 = vunpack.c.l.b16 %v4286
    %v4415 = vunpack.c.l.b16 %v4287
    %v4416 = vpack.c.b16 %v4353, %v4352
    %v4417 = vpack.c.b16 %v4355, %v4354
    %v4418 = vpack.c.b16 %v4357, %v4356
    %v4419 = vpack.c.b16 %v4359, %v4358
    %v4420 = vpack.c.b16 %v4361, %v4360
    %v4421 = vpack.c.b16 %v4363, %v4362
    %v4422 = vpack.c.b16 %v4365, %v4364
    %v4423 = vpack.c.b16 %v4367, %v4366
    %v4424 = vpack.c.b16 %v4369, %v4368
    %v4425 = vpack.c.b16 %v4371, %v4370
    %v4426 = vpack.c.b16 %v4373, %v4372
    %v4427 = vpack.c.b16 %v4375, %v4374
    %v4428 = vpack.c.b16 %v4377, %v4376
    %v4429 = vpack.c.b16 %v4379, %v4378
    %v4430 = vpack.c.b16 %v4381, %v4380
    %v4431 = vpack.c.b16 %v4383, %v4382
    %v4432 = vpack.c.b16 %v4385, %v4384
    %v4433 = vpack.c.b16 %v4387, %v4386
    %v4434 = vpack.c.b16 %v4389, %v4388
    %v4435 = vpack.c.b16 %v4391, %v4390
    %v4436 = vpack.c.b16 %v4393, %v4392
    %v4437 = vpack.c.b16 %v4395, %v4394
    %v4438 = vpack.c.b16 %v4397, %v4396
    %v4439 = vpack.c.b16 %v4399, %v4398
    %v4440 = vpack.c.b16 %v4401, %v4400
    %v4441 = vpack.c.b16 %v4403, %v4402
    %v4442 = vpack.c.b16 %v4405, %v4404
    %v4443 = vpack.c.b16 %v4407, %v4406
    %v4444 = vpack.c.b16 %v4409, %v4408
    %v4445 = vpack.c.b16 %v4411, %v4410
    %v4446 = vpack.c.b16 %v4413, %v4412
    %v4447 = vpack.c.b16 %v4415, %v4414
    %4480 = vst [vmem:[#allocation3 + $0x18] sm:$0xff] %v4416
    %4481 = vst [vmem:[#allocation3 + $0x60] sm:$0xff] %v4417
    %4482 = vst [vmem:[#allocation3 + $0xa8] sm:$0xff] %v4418
    %4483 = vst [vmem:[#allocation3 + $0xf0] sm:$0xff] %v4419
    %4484 = vst [vmem:[#allocation3 + $0x138] sm:$0xff] %v4420
    %4485 = vst [vmem:[#allocation3 + $0x180] sm:$0xff] %v4421
    %4486 = vst [vmem:[#allocation3 + $0x1c8] sm:$0xff] %v4422
    %4487 = vst [vmem:[#allocation3 + $0x210] sm:$0xff] %v4423
    %4488 = vst [vmem:[#allocation3 + $0x258] sm:$0xff] %v4424
    %4489 = vst [vmem:[#allocation3 + $0x2a0] sm:$0xff] %v4425
    %4490 = vst [vmem:[#allocation3 + $0x2e8] sm:$0xff] %v4426
    %4491 = vst [vmem:[#allocation3 + $0x330] sm:$0xff] %v4427
    %4492 = vst [vmem:[#allocation3 + $0x378] sm:$0xff] %v4428
    %4493 = vst [vmem:[#allocation3 + $0x3c0] sm:$0xff] %v4429
    %4494 = vst [vmem:[#allocation3 + $0x408] sm:$0xff] %v4430
    %4495 = vst [vmem:[#allocation3 + $0x450] sm:$0xff] %v4431
    %4496 = vst [vmem:[#allocation3 + $0x498] sm:$0xff] %v4432
    %4497 = vst [vmem:[#allocation3 + $0x4e0] sm:$0xff] %v4433
    %4498 = vst [vmem:[#allocation3 + $0x528] sm:$0xff] %v4434
    %4499 = vst [vmem:[#allocation3 + $0x570] sm:$0xff] %v4435
    %4500 = vst [vmem:[#allocation3 + $0x5b8] sm:$0xff] %v4436
    %4501 = vst [vmem:[#allocation3 + $0x600] sm:$0xff] %v4437
    %4502 = vst [vmem:[#allocation3 + $0x648] sm:$0xff] %v4438
    %4503 = vst [vmem:[#allocation3 + $0x690] sm:$0xff] %v4439
    %4504 = vst [vmem:[#allocation3 + $0x6d8] sm:$0xff] %v4440
    %4505 = vst [vmem:[#allocation3 + $0x720] sm:$0xff] %v4441
    %4506 = vst [vmem:[#allocation3 + $0x768] sm:$0xff] %v4442
    %4507 = vst [vmem:[#allocation3 + $0x7b0] sm:$0xff] %v4443
    %4508 = vst [vmem:[#allocation3 + $0x7f8] sm:$0xff] %v4444
    %4509 = vst [vmem:[#allocation3 + $0x840] sm:$0xff] %v4445
    %4510 = vst [vmem:[#allocation3 + $0x888] sm:$0xff] %v4446
    %4511 = vst [vmem:[#allocation3 + $0x8d0] sm:$0xff] %v4447
    %v4512 = vld [vmem:[%s1072] sm:$0xf]
    %v4513 = vld [vmem:[%s1072 + $0x4] sm:$0xf]
    %v4514 = vld [vmem:[%s1072 + $0x8] sm:$0x1]
    %v4515 = vld [vmem:[%s1072 + $0xc] sm:$0xf]
    %v4516 = vld [vmem:[%s1072 + $0x10] sm:$0xf]
    %v4517 = vld [vmem:[%s1072 + $0x14] sm:$0x1]
    %v4518 = vld [vmem:[%s1072 + $0x18] sm:$0xf]
    %v4519 = vld [vmem:[%s1072 + $0x1c] sm:$0xf]
    %v4520 = vld [vmem:[%s1072 + $0x20] sm:$0x1]
    %v4521 = vld [vmem:[%s1072 + $0x24] sm:$0xf]
    %v4522 = vld [vmem:[%s1072 + $0x28] sm:$0xf]
    %v4523 = vld [vmem:[%s1072 + $0x2c] sm:$0x1]
    %v4524 = vld [vmem:[%s1072 + $0x30] sm:$0xf]
    %v4525 = vld [vmem:[%s1072 + $0x34] sm:$0xf]
    %v4526 = vld [vmem:[%s1072 + $0x38] sm:$0x1]
    %v4527 = vld [vmem:[%s1072 + $0x3c] sm:$0xf]
    %v4528 = vld [vmem:[%s1072 + $0x40] sm:$0xf]
    %v4529 = vld [vmem:[%s1072 + $0x44] sm:$0x1]
    %v4530 = vld [vmem:[%s1072 + $0x48] sm:$0xf]
    %v4531 = vld [vmem:[%s1072 + $0x4c] sm:$0xf]
    %v4532 = vld [vmem:[%s1072 + $0x50] sm:$0x1]
    %v4533 = vld [vmem:[%s1072 + $0x54] sm:$0xf]
    %v4534 = vld [vmem:[%s1072 + $0x58] sm:$0xf]
    %v4535 = vld [vmem:[%s1072 + $0x5c] sm:$0x1]
    %v4536 = vld [vmem:[%s1072 + $0x60] sm:$0xf]
    %v4537 = vld [vmem:[%s1072 + $0x64] sm:$0xf]
    %v4538 = vld [vmem:[%s1072 + $0x68] sm:$0x1]
    %v4539 = vld [vmem:[%s1072 + $0x6c] sm:$0xf]
    %v4540 = vld [vmem:[%s1072 + $0x70] sm:$0xf]
    %v4541 = vld [vmem:[%s1072 + $0x74] sm:$0x1]
    %v4542 = vld [vmem:[%s1072 + $0x78] sm:$0xf]
    %v4543 = vld [vmem:[%s1072 + $0x7c] sm:$0xf]
    %v4544 = vld [vmem:[%s1072 + $0x80] sm:$0x1]
    %v4545 = vld [vmem:[%s1072 + $0x84] sm:$0xf]
    %v4546 = vld [vmem:[%s1072 + $0x88] sm:$0xf]
    %v4547 = vld [vmem:[%s1072 + $0x8c] sm:$0x1]
    %v4548 = vld [vmem:[%s1072 + $0x90] sm:$0xf]
    %v4549 = vld [vmem:[%s1072 + $0x94] sm:$0xf]
    %v4550 = vld [vmem:[%s1072 + $0x98] sm:$0x1]
    %v4551 = vld [vmem:[%s1072 + $0x9c] sm:$0xf]
    %v4552 = vld [vmem:[%s1072 + $0xa0] sm:$0xf]
    %v4553 = vld [vmem:[%s1072 + $0xa4] sm:$0x1]
    %v4554 = vld [vmem:[%s1072 + $0xa8] sm:$0xf]
    %v4555 = vld [vmem:[%s1072 + $0xac] sm:$0xf]
    %v4556 = vld [vmem:[%s1072 + $0xb0] sm:$0x1]
    %v4557 = vld [vmem:[%s1072 + $0xb4] sm:$0xf]
    %v4558 = vld [vmem:[%s1072 + $0xb8] sm:$0xf]
    %v4559 = vld [vmem:[%s1072 + $0xbc] sm:$0x1]
    %v4560 = vld [vmem:[%s1072 + $0xd8] sm:$0xf]
    %v4561 = vld [vmem:[%s1072 + $0xdc] sm:$0xf]
    %v4562 = vld [vmem:[%s1072 + $0xe0] sm:$0x1]
    %v4563 = vld [vmem:[%s1072 + $0xe4] sm:$0xf]
    %v4564 = vld [vmem:[%s1072 + $0xe8] sm:$0xf]
    %v4565 = vld [vmem:[%s1072 + $0xec] sm:$0x1]
    %v4566 = vld [vmem:[%s1072 + $0xf0] sm:$0xf]
    %v4567 = vld [vmem:[%s1072 + $0xf4] sm:$0xf]
    %v4568 = vld [vmem:[%s1072 + $0xf8] sm:$0x1]
    %v4569 = vld [vmem:[%s1072 + $0xfc] sm:$0xf]
    %v4570 = vld [vmem:[%s1072 + $0x100] sm:$0xf]
    %v4571 = vld [vmem:[%s1072 + $0x104] sm:$0x1]
    %v4572 = vld [vmem:[%s1072 + $0x108] sm:$0xf]
    %v4573 = vld [vmem:[%s1072 + $0x10c] sm:$0xf]
    %v4574 = vld [vmem:[%s1072 + $0x110] sm:$0x1]
    %v4575 = vld [vmem:[%s1072 + $0x114] sm:$0xf]
    %v4576 = vld [vmem:[%s1072 + $0x118] sm:$0xf]
    %v4577 = vld [vmem:[%s1072 + $0x11c] sm:$0x1]
    %v4578 = vld [vmem:[%s1072 + $0x120] sm:$0xf]
    %v4579 = vld [vmem:[%s1072 + $0x124] sm:$0xf]
    %v4580 = vld [vmem:[%s1072 + $0x128] sm:$0x1]
    %v4581 = vld [vmem:[%s1072 + $0x12c] sm:$0xf]
    %v4582 = vld [vmem:[%s1072 + $0x130] sm:$0xf]
    %v4583 = vld [vmem:[%s1072 + $0x134] sm:$0x1]
    %v4584 = vld [vmem:[%s1072 + $0x138] sm:$0xf]
    %v4585 = vld [vmem:[%s1072 + $0x13c] sm:$0xf]
    %v4586 = vld [vmem:[%s1072 + $0x140] sm:$0x1]
    %v4587 = vld [vmem:[%s1072 + $0x144] sm:$0xf]
    %v4588 = vld [vmem:[%s1072 + $0x148] sm:$0xf]
    %v4589 = vld [vmem:[%s1072 + $0x14c] sm:$0x1]
    %v4590 = vld [vmem:[%s1072 + $0x150] sm:$0xf]
    %v4591 = vld [vmem:[%s1072 + $0x154] sm:$0xf]
    %v4592 = vld [vmem:[%s1072 + $0x158] sm:$0x1]
    %v4593 = vld [vmem:[%s1072 + $0x15c] sm:$0xf]
    %v4594 = vld [vmem:[%s1072 + $0x160] sm:$0xf]
    %v4595 = vld [vmem:[%s1072 + $0x164] sm:$0x1]
    %v4596 = vld [vmem:[%s1072 + $0x168] sm:$0xf]
    %v4597 = vld [vmem:[%s1072 + $0x16c] sm:$0xf]
    %v4598 = vld [vmem:[%s1072 + $0x170] sm:$0x1]
    %v4599 = vld [vmem:[%s1072 + $0x174] sm:$0xf]
    %v4600 = vld [vmem:[%s1072 + $0x178] sm:$0xf]
    %v4601 = vld [vmem:[%s1072 + $0x17c] sm:$0x1]
    %v4602 = vld [vmem:[%s1072 + $0x180] sm:$0xf]
    %v4603 = vld [vmem:[%s1072 + $0x184] sm:$0xf]
    %v4604 = vld [vmem:[%s1072 + $0x188] sm:$0x1]
    %v4605 = vld [vmem:[%s1072 + $0x18c] sm:$0xf]
    %v4606 = vld [vmem:[%s1072 + $0x190] sm:$0xf]
    %v4607 = vld [vmem:[%s1072 + $0x194] sm:$0x1]
    %v4609 = vshrl.u32 %v4512, 16
    %v4611 = vrot.slane %v4609, 4
    %v4612 = vshll.u32 %v4512, 16
    %v4614 = vrot.slane %v4612, 5
    %v4615 = vor.u32 %v4611, %v4614
    %v4616 = vrot.slane %v4615, 4
    %v4618 = vshll.u32 %v4513, 16
    %v4620 = vrot.slane %v4618, 5
    %v4621 = vsel %vm2716, %v4616, %v4620
    %v4622 = vshrl.u32 %v4513, 16
    %v4624 = vrot.slane %v4622, 4
    %v4625 = vor.u32 %v4624, %v4620
    %v4626 = vrot.slane %v4625, 4
    %v4628 = vshll.u32 %v4514, 16
    %v4630 = vrot.slane %v4628, 5
    %v4631 = vsel %vm2716, %v4626, %v4630
    %v4633 = vshrl.u32 %v4515, 16
    %v4635 = vrot.slane %v4633, 4
    %v4636 = vshll.u32 %v4515, 16
    %v4638 = vrot.slane %v4636, 5
    %v4639 = vor.u32 %v4635, %v4638
    %v4640 = vrot.slane %v4639, 4
    %v4642 = vshll.u32 %v4516, 16
    %v4644 = vrot.slane %v4642, 5
    %v4645 = vsel %vm2716, %v4640, %v4644
    %v4646 = vshrl.u32 %v4516, 16
    %v4648 = vrot.slane %v4646, 4
    %v4649 = vor.u32 %v4648, %v4644
    %v4650 = vrot.slane %v4649, 4
    %v4652 = vshll.u32 %v4517, 16
    %v4654 = vrot.slane %v4652, 5
    %v4655 = vsel %vm2716, %v4650, %v4654
    %v4657 = vshrl.u32 %v4518, 16
    %v4659 = vrot.slane %v4657, 4
    %v4660 = vshll.u32 %v4518, 16
    %v4662 = vrot.slane %v4660, 5
    %v4663 = vor.u32 %v4659, %v4662
    %v4664 = vrot.slane %v4663, 4
    %v4666 = vshll.u32 %v4519, 16
    %v4668 = vrot.slane %v4666, 5
    %v4669 = vsel %vm2716, %v4664, %v4668
    %v4670 = vshrl.u32 %v4519, 16
    %v4672 = vrot.slane %v4670, 4
    %v4673 = vor.u32 %v4672, %v4668
    %v4674 = vrot.slane %v4673, 4
    %v4676 = vshll.u32 %v4520, 16
    %v4678 = vrot.slane %v4676, 5
    %v4679 = vsel %vm2716, %v4674, %v4678
    %v4681 = vshrl.u32 %v4521, 16
    %v4683 = vrot.slane %v4681, 4
    %v4684 = vshll.u32 %v4521, 16
    %v4686 = vrot.slane %v4684, 5
    %v4687 = vor.u32 %v4683, %v4686
    %v4688 = vrot.slane %v4687, 4
    %v4690 = vshll.u32 %v4522, 16
    %v4692 = vrot.slane %v4690, 5
    %v4693 = vsel %vm2716, %v4688, %v4692
    %v4694 = vshrl.u32 %v4522, 16
    %v4696 = vrot.slane %v4694, 4
    %v4697 = vor.u32 %v4696, %v4692
    %v4698 = vrot.slane %v4697, 4
    %v4700 = vshll.u32 %v4523, 16
    %v4702 = vrot.slane %v4700, 5
    %v4703 = vsel %vm2716, %v4698, %v4702
    %v4705 = vshrl.u32 %v4524, 16
    %v4707 = vrot.slane %v4705, 4
    %v4708 = vshll.u32 %v4524, 16
    %v4710 = vrot.slane %v4708, 5
    %v4711 = vor.u32 %v4707, %v4710
    %v4712 = vrot.slane %v4711, 4
    %v4714 = vshll.u32 %v4525, 16
    %v4716 = vrot.slane %v4714, 5
    %v4717 = vsel %vm2716, %v4712, %v4716
    %v4718 = vshrl.u32 %v4525, 16
    %v4720 = vrot.slane %v4718, 4
    %v4721 = vor.u32 %v4720, %v4716
    %v4722 = vrot.slane %v4721, 4
    %v4724 = vshll.u32 %v4526, 16
    %v4726 = vrot.slane %v4724, 5
    %v4727 = vsel %vm2716, %v4722, %v4726
    %v4729 = vshrl.u32 %v4527, 16
    %v4731 = vrot.slane %v4729, 4
    %v4732 = vshll.u32 %v4527, 16
    %v4734 = vrot.slane %v4732, 5
    %v4735 = vor.u32 %v4731, %v4734
    %v4736 = vrot.slane %v4735, 4
    %v4738 = vshll.u32 %v4528, 16
    %v4740 = vrot.slane %v4738, 5
    %v4741 = vsel %vm2716, %v4736, %v4740
    %v4742 = vshrl.u32 %v4528, 16
    %v4744 = vrot.slane %v4742, 4
    %v4745 = vor.u32 %v4744, %v4740
    %v4746 = vrot.slane %v4745, 4
    %v4748 = vshll.u32 %v4529, 16
    %v4750 = vrot.slane %v4748, 5
    %v4751 = vsel %vm2716, %v4746, %v4750
    %v4753 = vshrl.u32 %v4530, 16
    %v4755 = vrot.slane %v4753, 4
    %v4756 = vshll.u32 %v4530, 16
    %v4758 = vrot.slane %v4756, 5
    %v4759 = vor.u32 %v4755, %v4758
    %v4760 = vrot.slane %v4759, 4
    %v4762 = vshll.u32 %v4531, 16
    %v4764 = vrot.slane %v4762, 5
    %v4765 = vsel %vm2716, %v4760, %v4764
    %v4766 = vshrl.u32 %v4531, 16
    %v4768 = vrot.slane %v4766, 4
    %v4769 = vor.u32 %v4768, %v4764
    %v4770 = vrot.slane %v4769, 4
    %v4772 = vshll.u32 %v4532, 16
    %v4774 = vrot.slane %v4772, 5
    %v4775 = vsel %vm2716, %v4770, %v4774
    %v4777 = vshrl.u32 %v4533, 16
    %v4779 = vrot.slane %v4777, 4
    %v4780 = vshll.u32 %v4533, 16
    %v4782 = vrot.slane %v4780, 5
    %v4783 = vor.u32 %v4779, %v4782
    %v4784 = vrot.slane %v4783, 4
    %v4786 = vshll.u32 %v4534, 16
    %v4788 = vrot.slane %v4786, 5
    %v4789 = vsel %vm2716, %v4784, %v4788
    %v4790 = vshrl.u32 %v4534, 16
    %v4792 = vrot.slane %v4790, 4
    %v4793 = vor.u32 %v4792, %v4788
    %v4794 = vrot.slane %v4793, 4
    %v4796 = vshll.u32 %v4535, 16
    %v4798 = vrot.slane %v4796, 5
    %v4799 = vsel %vm2716, %v4794, %v4798
    %v4801 = vshrl.u32 %v4536, 16
    %v4803 = vrot.slane %v4801, 4
    %v4804 = vshll.u32 %v4536, 16
    %v4806 = vrot.slane %v4804, 5
    %v4807 = vor.u32 %v4803, %v4806
    %v4808 = vrot.slane %v4807, 4
    %v4810 = vshll.u32 %v4537, 16
    %v4812 = vrot.slane %v4810, 5
    %v4813 = vsel %vm2716, %v4808, %v4812
    %v4814 = vshrl.u32 %v4537, 16
    %v4816 = vrot.slane %v4814, 4
    %v4817 = vor.u32 %v4816, %v4812
    %v4818 = vrot.slane %v4817, 4
    %v4820 = vshll.u32 %v4538, 16
    %v4822 = vrot.slane %v4820, 5
    %v4823 = vsel %vm2716, %v4818, %v4822
    %v4825 = vshrl.u32 %v4539, 16
    %v4827 = vrot.slane %v4825, 4
    %v4828 = vshll.u32 %v4539, 16
    %v4830 = vrot.slane %v4828, 5
    %v4831 = vor.u32 %v4827, %v4830
    %v4832 = vrot.slane %v4831, 4
    %v4834 = vshll.u32 %v4540, 16
    %v4836 = vrot.slane %v4834, 5
    %v4837 = vsel %vm2716, %v4832, %v4836
    %v4838 = vshrl.u32 %v4540, 16
    %v4840 = vrot.slane %v4838, 4
    %v4841 = vor.u32 %v4840, %v4836
    %v4842 = vrot.slane %v4841, 4
    %v4844 = vshll.u32 %v4541, 16
    %v4846 = vrot.slane %v4844, 5
    %v4847 = vsel %vm2716, %v4842, %v4846
    %v4849 = vshrl.u32 %v4542, 16
    %v4851 = vrot.slane %v4849, 4
    %v4852 = vshll.u32 %v4542, 16
    %v4854 = vrot.slane %v4852, 5
    %v4855 = vor.u32 %v4851, %v4854
    %v4856 = vrot.slane %v4855, 4
    %v4858 = vshll.u32 %v4543, 16
    %v4860 = vrot.slane %v4858, 5
    %v4861 = vsel %vm2716, %v4856, %v4860
    %v4862 = vshrl.u32 %v4543, 16
    %v4864 = vrot.slane %v4862, 4
    %v4865 = vor.u32 %v4864, %v4860
    %v4866 = vrot.slane %v4865, 4
    %v4868 = vshll.u32 %v4544, 16
    %v4870 = vrot.slane %v4868, 5
    %v4871 = vsel %vm2716, %v4866, %v4870
    %v4873 = vshrl.u32 %v4545, 16
    %v4875 = vrot.slane %v4873, 4
    %v4876 = vshll.u32 %v4545, 16
    %v4878 = vrot.slane %v4876, 5
    %v4879 = vor.u32 %v4875, %v4878
    %v4880 = vrot.slane %v4879, 4
    %v4882 = vshll.u32 %v4546, 16
    %v4884 = vrot.slane %v4882, 5
    %v4885 = vsel %vm2716, %v4880, %v4884
    %v4886 = vshrl.u32 %v4546, 16
    %v4888 = vrot.slane %v4886, 4
    %v4889 = vor.u32 %v4888, %v4884
    %v4890 = vrot.slane %v4889, 4
    %v4892 = vshll.u32 %v4547, 16
    %v4894 = vrot.slane %v4892, 5
    %v4895 = vsel %vm2716, %v4890, %v4894
    %v4897 = vshrl.u32 %v4548, 16
    %v4899 = vrot.slane %v4897, 4
    %v4900 = vshll.u32 %v4548, 16
    %v4902 = vrot.slane %v4900, 5
    %v4903 = vor.u32 %v4899, %v4902
    %v4904 = vrot.slane %v4903, 4
    %v4906 = vshll.u32 %v4549, 16
    %v4908 = vrot.slane %v4906, 5
    %v4909 = vsel %vm2716, %v4904, %v4908
    %v4910 = vshrl.u32 %v4549, 16
    %v4912 = vrot.slane %v4910, 4
    %v4913 = vor.u32 %v4912, %v4908
    %v4914 = vrot.slane %v4913, 4
    %v4916 = vshll.u32 %v4550, 16
    %v4918 = vrot.slane %v4916, 5
    %v4919 = vsel %vm2716, %v4914, %v4918
    %v4921 = vshrl.u32 %v4551, 16
    %v4923 = vrot.slane %v4921, 4
    %v4924 = vshll.u32 %v4551, 16
    %v4926 = vrot.slane %v4924, 5
    %v4927 = vor.u32 %v4923, %v4926
    %v4928 = vrot.slane %v4927, 4
    %v4930 = vshll.u32 %v4552, 16
    %v4932 = vrot.slane %v4930, 5
    %v4933 = vsel %vm2716, %v4928, %v4932
    %v4934 = vshrl.u32 %v4552, 16
    %v4936 = vrot.slane %v4934, 4
    %v4937 = vor.u32 %v4936, %v4932
    %v4938 = vrot.slane %v4937, 4
    %v4940 = vshll.u32 %v4553, 16
    %v4942 = vrot.slane %v4940, 5
    %v4943 = vsel %vm2716, %v4938, %v4942
    %v4945 = vshrl.u32 %v4554, 16
    %v4947 = vrot.slane %v4945, 4
    %v4948 = vshll.u32 %v4554, 16
    %v4950 = vrot.slane %v4948, 5
    %v4951 = vor.u32 %v4947, %v4950
    %v4952 = vrot.slane %v4951, 4
    %v4954 = vshll.u32 %v4555, 16
    %v4956 = vrot.slane %v4954, 5
    %v4957 = vsel %vm2716, %v4952, %v4956
    %v4958 = vshrl.u32 %v4555, 16
    %v4960 = vrot.slane %v4958, 4
    %v4961 = vor.u32 %v4960, %v4956
    %v4962 = vrot.slane %v4961, 4
    %v4964 = vshll.u32 %v4556, 16
    %v4966 = vrot.slane %v4964, 5
    %v4967 = vsel %vm2716, %v4962, %v4966
    %v4969 = vshrl.u32 %v4557, 16
    %v4971 = vrot.slane %v4969, 4
    %v4972 = vshll.u32 %v4557, 16
    %v4974 = vrot.slane %v4972, 5
    %v4975 = vor.u32 %v4971, %v4974
    %v4976 = vrot.slane %v4975, 4
    %v4978 = vshll.u32 %v4558, 16
    %v4980 = vrot.slane %v4978, 5
    %v4981 = vsel %vm2716, %v4976, %v4980
    %v4982 = vshrl.u32 %v4558, 16
    %v4984 = vrot.slane %v4982, 4
    %v4985 = vor.u32 %v4984, %v4980
    %v4986 = vrot.slane %v4985, 4
    %v4988 = vshll.u32 %v4559, 16
    %v4990 = vrot.slane %v4988, 5
    %v4991 = vsel %vm2716, %v4986, %v4990
    %v4993 = vshrl.u32 %v4560, 16
    %v4995 = vrot.slane %v4993, 4
    %v4996 = vshll.u32 %v4560, 16
    %v4998 = vrot.slane %v4996, 5
    %v4999 = vor.u32 %v4995, %v4998
    %v5000 = vrot.slane %v4999, 4
    %v5002 = vshll.u32 %v4561, 16
    %v5004 = vrot.slane %v5002, 5
    %v5005 = vsel %vm2716, %v5000, %v5004
    %v5006 = vshrl.u32 %v4561, 16
    %v5008 = vrot.slane %v5006, 4
    %v5009 = vor.u32 %v5008, %v5004
    %v5010 = vrot.slane %v5009, 4
    %v5012 = vshll.u32 %v4562, 16
    %v5014 = vrot.slane %v5012, 5
    %v5015 = vsel %vm2716, %v5010, %v5014
    %v5017 = vshrl.u32 %v4563, 16
    %v5019 = vrot.slane %v5017, 4
    %v5020 = vshll.u32 %v4563, 16
    %v5022 = vrot.slane %v5020, 5
    %v5023 = vor.u32 %v5019, %v5022
    %v5024 = vrot.slane %v5023, 4
    %v5026 = vshll.u32 %v4564, 16
    %v5028 = vrot.slane %v5026, 5
    %v5029 = vsel %vm2716, %v5024, %v5028
    %v5030 = vshrl.u32 %v4564, 16
    %v5032 = vrot.slane %v5030, 4
    %v5033 = vor.u32 %v5032, %v5028
    %v5034 = vrot.slane %v5033, 4
    %v5036 = vshll.u32 %v4565, 16
    %v5038 = vrot.slane %v5036, 5
    %v5039 = vsel %vm2716, %v5034, %v5038
    %v5041 = vshrl.u32 %v4566, 16
    %v5043 = vrot.slane %v5041, 4
    %v5044 = vshll.u32 %v4566, 16
    %v5046 = vrot.slane %v5044, 5
    %v5047 = vor.u32 %v5043, %v5046
    %v5048 = vrot.slane %v5047, 4
    %v5050 = vshll.u32 %v4567, 16
    %v5052 = vrot.slane %v5050, 5
    %v5053 = vsel %vm2716, %v5048, %v5052
    %v5054 = vshrl.u32 %v4567, 16
    %v5056 = vrot.slane %v5054, 4
    %v5057 = vor.u32 %v5056, %v5052
    %v5058 = vrot.slane %v5057, 4
    %v5060 = vshll.u32 %v4568, 16
    %v5062 = vrot.slane %v5060, 5
    %v5063 = vsel %vm2716, %v5058, %v5062
    %v5065 = vshrl.u32 %v4569, 16
    %v5067 = vrot.slane %v5065, 4
    %v5068 = vshll.u32 %v4569, 16
    %v5070 = vrot.slane %v5068, 5
    %v5071 = vor.u32 %v5067, %v5070
    %v5072 = vrot.slane %v5071, 4
    %v5074 = vshll.u32 %v4570, 16
    %v5076 = vrot.slane %v5074, 5
    %v5077 = vsel %vm2716, %v5072, %v5076
    %v5078 = vshrl.u32 %v4570, 16
    %v5080 = vrot.slane %v5078, 4
    %v5081 = vor.u32 %v5080, %v5076
    %v5082 = vrot.slane %v5081, 4
    %v5084 = vshll.u32 %v4571, 16
    %v5086 = vrot.slane %v5084, 5
    %v5087 = vsel %vm2716, %v5082, %v5086
    %v5089 = vshrl.u32 %v4572, 16
    %v5091 = vrot.slane %v5089, 4
    %v5092 = vshll.u32 %v4572, 16
    %v5094 = vrot.slane %v5092, 5
    %v5095 = vor.u32 %v5091, %v5094
    %v5096 = vrot.slane %v5095, 4
    %v5098 = vshll.u32 %v4573, 16
    %v5100 = vrot.slane %v5098, 5
    %v5101 = vsel %vm2716, %v5096, %v5100
    %v5102 = vshrl.u32 %v4573, 16
    %v5104 = vrot.slane %v5102, 4
    %v5105 = vor.u32 %v5104, %v5100
    %v5106 = vrot.slane %v5105, 4
    %v5108 = vshll.u32 %v4574, 16
    %v5110 = vrot.slane %v5108, 5
    %v5111 = vsel %vm2716, %v5106, %v5110
    %v5113 = vshrl.u32 %v4575, 16
    %v5115 = vrot.slane %v5113, 4
    %v5116 = vshll.u32 %v4575, 16
    %v5118 = vrot.slane %v5116, 5
    %v5119 = vor.u32 %v5115, %v5118
    %v5120 = vrot.slane %v5119, 4
    %v5122 = vshll.u32 %v4576, 16
    %v5124 = vrot.slane %v5122, 5
    %v5125 = vsel %vm2716, %v5120, %v5124
    %v5126 = vshrl.u32 %v4576, 16
    %v5128 = vrot.slane %v5126, 4
    %v5129 = vor.u32 %v5128, %v5124
    %v5130 = vrot.slane %v5129, 4
    %v5132 = vshll.u32 %v4577, 16
    %v5134 = vrot.slane %v5132, 5
    %v5135 = vsel %vm2716, %v5130, %v5134
    %v5137 = vshrl.u32 %v4578, 16
    %v5139 = vrot.slane %v5137, 4
    %v5140 = vshll.u32 %v4578, 16
    %v5142 = vrot.slane %v5140, 5
    %v5143 = vor.u32 %v5139, %v5142
    %v5144 = vrot.slane %v5143, 4
    %v5146 = vshll.u32 %v4579, 16
    %v5148 = vrot.slane %v5146, 5
    %v5149 = vsel %vm2716, %v5144, %v5148
    %v5150 = vshrl.u32 %v4579, 16
    %v5152 = vrot.slane %v5150, 4
    %v5153 = vor.u32 %v5152, %v5148
    %v5154 = vrot.slane %v5153, 4
    %v5156 = vshll.u32 %v4580, 16
    %v5158 = vrot.slane %v5156, 5
    %v5159 = vsel %vm2716, %v5154, %v5158
    %v5161 = vshrl.u32 %v4581, 16
    %v5163 = vrot.slane %v5161, 4
    %v5164 = vshll.u32 %v4581, 16
    %v5166 = vrot.slane %v5164, 5
    %v5167 = vor.u32 %v5163, %v5166
    %v5168 = vrot.slane %v5167, 4
    %v5170 = vshll.u32 %v4582, 16
    %v5172 = vrot.slane %v5170, 5
    %v5173 = vsel %vm2716, %v5168, %v5172
    %v5174 = vshrl.u32 %v4582, 16
    %v5176 = vrot.slane %v5174, 4
    %v5177 = vor.u32 %v5176, %v5172
    %v5178 = vrot.slane %v5177, 4
    %v5180 = vshll.u32 %v4583, 16
    %v5182 = vrot.slane %v5180, 5
    %v5183 = vsel %vm2716, %v5178, %v5182
    %v5185 = vshrl.u32 %v4584, 16
    %v5187 = vrot.slane %v5185, 4
    %v5188 = vshll.u32 %v4584, 16
    %v5190 = vrot.slane %v5188, 5
    %v5191 = vor.u32 %v5187, %v5190
    %v5192 = vrot.slane %v5191, 4
    %v5194 = vshll.u32 %v4585, 16
    %v5196 = vrot.slane %v5194, 5
    %v5197 = vsel %vm2716, %v5192, %v5196
    %v5198 = vshrl.u32 %v4585, 16
    %v5200 = vrot.slane %v5198, 4
    %v5201 = vor.u32 %v5200, %v5196
    %v5202 = vrot.slane %v5201, 4
    %v5204 = vshll.u32 %v4586, 16
    %v5206 = vrot.slane %v5204, 5
    %v5207 = vsel %vm2716, %v5202, %v5206
    %v5209 = vshrl.u32 %v4587, 16
    %v5211 = vrot.slane %v5209, 4
    %v5212 = vshll.u32 %v4587, 16
    %v5214 = vrot.slane %v5212, 5
    %v5215 = vor.u32 %v5211, %v5214
    %v5216 = vrot.slane %v5215, 4
    %v5218 = vshll.u32 %v4588, 16
    %v5220 = vrot.slane %v5218, 5
    %v5221 = vsel %vm2716, %v5216, %v5220
    %v5222 = vshrl.u32 %v4588, 16
    %v5224 = vrot.slane %v5222, 4
    %v5225 = vor.u32 %v5224, %v5220
    %v5226 = vrot.slane %v5225, 4
    %v5228 = vshll.u32 %v4589, 16
    %v5230 = vrot.slane %v5228, 5
    %v5231 = vsel %vm2716, %v5226, %v5230
    %v5233 = vshrl.u32 %v4590, 16
    %v5235 = vrot.slane %v5233, 4
    %v5236 = vshll.u32 %v4590, 16
    %v5238 = vrot.slane %v5236, 5
    %v5239 = vor.u32 %v5235, %v5238
    %v5240 = vrot.slane %v5239, 4
    %v5242 = vshll.u32 %v4591, 16
    %v5244 = vrot.slane %v5242, 5
    %v5245 = vsel %vm2716, %v5240, %v5244
    %v5246 = vshrl.u32 %v4591, 16
    %v5248 = vrot.slane %v5246, 4
    %v5249 = vor.u32 %v5248, %v5244
    %v5250 = vrot.slane %v5249, 4
    %v5252 = vshll.u32 %v4592, 16
    %v5254 = vrot.slane %v5252, 5
    %v5255 = vsel %vm2716, %v5250, %v5254
    %v5257 = vshrl.u32 %v4593, 16
    %v5259 = vrot.slane %v5257, 4
    %v5260 = vshll.u32 %v4593, 16
    %v5262 = vrot.slane %v5260, 5
    %v5263 = vor.u32 %v5259, %v5262
    %v5264 = vrot.slane %v5263, 4
    %v5266 = vshll.u32 %v4594, 16
    %v5268 = vrot.slane %v5266, 5
    %v5269 = vsel %vm2716, %v5264, %v5268
    %v5270 = vshrl.u32 %v4594, 16
    %v5272 = vrot.slane %v5270, 4
    %v5273 = vor.u32 %v5272, %v5268
    %v5274 = vrot.slane %v5273, 4
    %v5276 = vshll.u32 %v4595, 16
    %v5278 = vrot.slane %v5276, 5
    %v5279 = vsel %vm2716, %v5274, %v5278
    %v5281 = vshrl.u32 %v4596, 16
    %v5283 = vrot.slane %v5281, 4
    %v5284 = vshll.u32 %v4596, 16
    %v5286 = vrot.slane %v5284, 5
    %v5287 = vor.u32 %v5283, %v5286
    %v5288 = vrot.slane %v5287, 4
    %v5290 = vshll.u32 %v4597, 16
    %v5292 = vrot.slane %v5290, 5
    %v5293 = vsel %vm2716, %v5288, %v5292
    %v5294 = vshrl.u32 %v4597, 16
    %v5296 = vrot.slane %v5294, 4
    %v5297 = vor.u32 %v5296, %v5292
    %v5298 = vrot.slane %v5297, 4
    %v5300 = vshll.u32 %v4598, 16
    %v5302 = vrot.slane %v5300, 5
    %v5303 = vsel %vm2716, %v5298, %v5302
    %v5305 = vshrl.u32 %v4599, 16
    %v5307 = vrot.slane %v5305, 4
    %v5308 = vshll.u32 %v4599, 16
    %v5310 = vrot.slane %v5308, 5
    %v5311 = vor.u32 %v5307, %v5310
    %v5312 = vrot.slane %v5311, 4
    %v5314 = vshll.u32 %v4600, 16
    %v5316 = vrot.slane %v5314, 5
    %v5317 = vsel %vm2716, %v5312, %v5316
    %v5318 = vshrl.u32 %v4600, 16
    %v5320 = vrot.slane %v5318, 4
    %v5321 = vor.u32 %v5320, %v5316
    %v5322 = vrot.slane %v5321, 4
    %v5324 = vshll.u32 %v4601, 16
    %v5326 = vrot.slane %v5324, 5
    %v5327 = vsel %vm2716, %v5322, %v5326
    %v5329 = vshrl.u32 %v4602, 16
    %v5331 = vrot.slane %v5329, 4
    %v5332 = vshll.u32 %v4602, 16
    %v5334 = vrot.slane %v5332, 5
    %v5335 = vor.u32 %v5331, %v5334
    %v5336 = vrot.slane %v5335, 4
    %v5338 = vshll.u32 %v4603, 16
    %v5340 = vrot.slane %v5338, 5
    %v5341 = vsel %vm2716, %v5336, %v5340
    %v5342 = vshrl.u32 %v4603, 16
    %v5344 = vrot.slane %v5342, 4
    %v5345 = vor.u32 %v5344, %v5340
    %v5346 = vrot.slane %v5345, 4
    %v5348 = vshll.u32 %v4604, 16
    %v5350 = vrot.slane %v5348, 5
    %v5351 = vsel %vm2716, %v5346, %v5350
    %v5353 = vshrl.u32 %v4605, 16
    %v5355 = vrot.slane %v5353, 4
    %v5356 = vshll.u32 %v4605, 16
    %v5358 = vrot.slane %v5356, 5
    %v5359 = vor.u32 %v5355, %v5358
    %v5360 = vrot.slane %v5359, 4
    %v5362 = vshll.u32 %v4606, 16
    %v5364 = vrot.slane %v5362, 5
    %v5365 = vsel %vm2716, %v5360, %v5364
    %v5366 = vshrl.u32 %v4606, 16
    %v5368 = vrot.slane %v5366, 4
    %v5369 = vor.u32 %v5368, %v5364
    %v5370 = vrot.slane %v5369, 4
    %v5372 = vshll.u32 %v4607, 16
    %v5374 = vrot.slane %v5372, 5
    %v5375 = vsel %vm2716, %v5370, %v5374
    %v5376 = vunpack.c.l.b16 %v4621
    %v5377 = vunpack.c.l.b16 %v4631
    %v5378 = vunpack.c.l.b16 %v4645
    %v5379 = vunpack.c.l.b16 %v4655
    %v5380 = vunpack.c.l.b16 %v4669
    %v5381 = vunpack.c.l.b16 %v4679
    %v5382 = vunpack.c.l.b16 %v4693
    %v5383 = vunpack.c.l.b16 %v4703
    %v5384 = vunpack.c.l.b16 %v4717
    %v5385 = vunpack.c.l.b16 %v4727
    %v5386 = vunpack.c.l.b16 %v4741
    %v5387 = vunpack.c.l.b16 %v4751
    %v5388 = vunpack.c.l.b16 %v4765
    %v5389 = vunpack.c.l.b16 %v4775
    %v5390 = vunpack.c.l.b16 %v4789
    %v5391 = vunpack.c.l.b16 %v4799
    %v5392 = vunpack.c.l.b16 %v4813
    %v5393 = vunpack.c.l.b16 %v4823
    %v5394 = vunpack.c.l.b16 %v4837
    %v5395 = vunpack.c.l.b16 %v4847
    %v5396 = vunpack.c.l.b16 %v4861
    %v5397 = vunpack.c.l.b16 %v4871
    %v5398 = vunpack.c.l.b16 %v4885
    %v5399 = vunpack.c.l.b16 %v4895
    %v5400 = vunpack.c.l.b16 %v4909
    %v5401 = vunpack.c.l.b16 %v4919
    %v5402 = vunpack.c.l.b16 %v4933
    %v5403 = vunpack.c.l.b16 %v4943
    %v5404 = vunpack.c.l.b16 %v4957
    %v5405 = vunpack.c.l.b16 %v4967
    %v5406 = vunpack.c.l.b16 %v4981
    %v5407 = vunpack.c.l.b16 %v4991
    %v5408 = vunpack.c.l.b16 %v5005
    %v5409 = vunpack.c.l.b16 %v5015
    %v5410 = vunpack.c.l.b16 %v5029
    %v5411 = vunpack.c.l.b16 %v5039
    %v5412 = vunpack.c.l.b16 %v5053
    %v5413 = vunpack.c.l.b16 %v5063
    %v5414 = vunpack.c.l.b16 %v5077
    %v5415 = vunpack.c.l.b16 %v5087
    %v5416 = vunpack.c.l.b16 %v5101
    %v5417 = vunpack.c.l.b16 %v5111
    %v5418 = vunpack.c.l.b16 %v5125
    %v5419 = vunpack.c.l.b16 %v5135
    %v5420 = vunpack.c.l.b16 %v5149
    %v5421 = vunpack.c.l.b16 %v5159
    %v5422 = vunpack.c.l.b16 %v5173
    %v5423 = vunpack.c.l.b16 %v5183
    %v5424 = vunpack.c.l.b16 %v5197
    %v5425 = vunpack.c.l.b16 %v5207
    %v5426 = vunpack.c.l.b16 %v5221
    %v5427 = vunpack.c.l.b16 %v5231
    %v5428 = vunpack.c.l.b16 %v5245
    %v5429 = vunpack.c.l.b16 %v5255
    %v5430 = vunpack.c.l.b16 %v5269
    %v5431 = vunpack.c.l.b16 %v5279
    %v5432 = vunpack.c.l.b16 %v5293
    %v5433 = vunpack.c.l.b16 %v5303
    %v5434 = vunpack.c.l.b16 %v5317
    %v5435 = vunpack.c.l.b16 %v5327
    %v5436 = vunpack.c.l.b16 %v5341
    %v5437 = vunpack.c.l.b16 %v5351
    %v5438 = vunpack.c.l.b16 %v5365
    %v5439 = vunpack.c.l.b16 %v5375
    %v5440 = vpack.c.b16 %v5377, %v5376
    %v5441 = vpack.c.b16 %v5379, %v5378
    %v5442 = vpack.c.b16 %v5381, %v5380
    %v5443 = vpack.c.b16 %v5383, %v5382
    %v5444 = vpack.c.b16 %v5385, %v5384
    %v5445 = vpack.c.b16 %v5387, %v5386
    %v5446 = vpack.c.b16 %v5389, %v5388
    %v5447 = vpack.c.b16 %v5391, %v5390
    %v5448 = vpack.c.b16 %v5393, %v5392
    %v5449 = vpack.c.b16 %v5395, %v5394
    %v5450 = vpack.c.b16 %v5397, %v5396
    %v5451 = vpack.c.b16 %v5399, %v5398
    %v5452 = vpack.c.b16 %v5401, %v5400
    %v5453 = vpack.c.b16 %v5403, %v5402
    %v5454 = vpack.c.b16 %v5405, %v5404
    %v5455 = vpack.c.b16 %v5407, %v5406
    %v5456 = vpack.c.b16 %v5409, %v5408
    %v5457 = vpack.c.b16 %v5411, %v5410
    %v5458 = vpack.c.b16 %v5413, %v5412
    %v5459 = vpack.c.b16 %v5415, %v5414
    %v5460 = vpack.c.b16 %v5417, %v5416
    %v5461 = vpack.c.b16 %v5419, %v5418
    %v5462 = vpack.c.b16 %v5421, %v5420
    %v5463 = vpack.c.b16 %v5423, %v5422
    %v5464 = vpack.c.b16 %v5425, %v5424
    %v5465 = vpack.c.b16 %v5427, %v5426
    %v5466 = vpack.c.b16 %v5429, %v5428
    %v5467 = vpack.c.b16 %v5431, %v5430
    %v5468 = vpack.c.b16 %v5433, %v5432
    %v5469 = vpack.c.b16 %v5435, %v5434
    %v5470 = vpack.c.b16 %v5437, %v5436
    %v5471 = vpack.c.b16 %v5439, %v5438
    %5504 = vst [vmem:[#allocation3 + $0x20] sm:$0xff] %v5440
    %5505 = vst [vmem:[#allocation3 + $0x68] sm:$0xff] %v5441
    %5506 = vst [vmem:[#allocation3 + $0xb0] sm:$0xff] %v5442
    %5507 = vst [vmem:[#allocation3 + $0xf8] sm:$0xff] %v5443
    %5508 = vst [vmem:[#allocation3 + $0x140] sm:$0xff] %v5444
    %5509 = vst [vmem:[#allocation3 + $0x188] sm:$0xff] %v5445
    %5510 = vst [vmem:[#allocation3 + $0x1d0] sm:$0xff] %v5446
    %5511 = vst [vmem:[#allocation3 + $0x218] sm:$0xff] %v5447
    %5512 = vst [vmem:[#allocation3 + $0x260] sm:$0xff] %v5448
    %5513 = vst [vmem:[#allocation3 + $0x2a8] sm:$0xff] %v5449
    %5514 = vst [vmem:[#allocation3 + $0x2f0] sm:$0xff] %v5450
    %5515 = vst [vmem:[#allocation3 + $0x338] sm:$0xff] %v5451
    %5516 = vst [vmem:[#allocation3 + $0x380] sm:$0xff] %v5452
    %5517 = vst [vmem:[#allocation3 + $0x3c8] sm:$0xff] %v5453
    %5518 = vst [vmem:[#allocation3 + $0x410] sm:$0xff] %v5454
    %5519 = vst [vmem:[#allocation3 + $0x458] sm:$0xff] %v5455
    %5520 = vst [vmem:[#allocation3 + $0x4a0] sm:$0xff] %v5456
    %5521 = vst [vmem:[#allocation3 + $0x4e8] sm:$0xff] %v5457
    %5522 = vst [vmem:[#allocation3 + $0x530] sm:$0xff] %v5458
    %5523 = vst [vmem:[#allocation3 + $0x578] sm:$0xff] %v5459
    %5524 = vst [vmem:[#allocation3 + $0x5c0] sm:$0xff] %v5460
    %5525 = vst [vmem:[#allocation3 + $0x608] sm:$0xff] %v5461
    %5526 = vst [vmem:[#allocation3 + $0x650] sm:$0xff] %v5462
    %5527 = vst [vmem:[#allocation3 + $0x698] sm:$0xff] %v5463
    %5528 = vst [vmem:[#allocation3 + $0x6e0] sm:$0xff] %v5464
    %5529 = vst [vmem:[#allocation3 + $0x728] sm:$0xff] %v5465
    %5530 = vst [vmem:[#allocation3 + $0x770] sm:$0xff] %v5466
    %5531 = vst [vmem:[#allocation3 + $0x7b8] sm:$0xff] %v5467
    %5532 = vst [vmem:[#allocation3 + $0x800] sm:$0xff] %v5468
    %5533 = vst [vmem:[#allocation3 + $0x848] sm:$0xff] %v5469
    %5534 = vst [vmem:[#allocation3 + $0x890] sm:$0xff] %v5470
    %5535 = vst [vmem:[#allocation3 + $0x8d8] sm:$0xff] %v5471
    %v5536 = vld [vmem:[%s1072] sm:$0xe]
    %v5537 = vld [vmem:[%s1072 + $0x4] sm:$0xf]
    %v5538 = vld [vmem:[%s1072 + $0x8] sm:$0x1]
    %v5539 = vld [vmem:[%s1072 + $0xc] sm:$0xe]
    %v5540 = vld [vmem:[%s1072 + $0x10] sm:$0xf]
    %v5541 = vld [vmem:[%s1072 + $0x14] sm:$0x1]
    %v5542 = vld [vmem:[%s1072 + $0x18] sm:$0xe]
    %v5543 = vld [vmem:[%s1072 + $0x1c] sm:$0xf]
    %v5544 = vld [vmem:[%s1072 + $0x20] sm:$0x1]
    %v5545 = vld [vmem:[%s1072 + $0x24] sm:$0xe]
    %v5546 = vld [vmem:[%s1072 + $0x28] sm:$0xf]
    %v5547 = vld [vmem:[%s1072 + $0x2c] sm:$0x1]
    %v5548 = vld [vmem:[%s1072 + $0x30] sm:$0xe]
    %v5549 = vld [vmem:[%s1072 + $0x34] sm:$0xf]
    %v5550 = vld [vmem:[%s1072 + $0x38] sm:$0x1]
    %v5551 = vld [vmem:[%s1072 + $0x3c] sm:$0xe]
    %v5552 = vld [vmem:[%s1072 + $0x40] sm:$0xf]
    %v5553 = vld [vmem:[%s1072 + $0x44] sm:$0x1]
    %v5554 = vld [vmem:[%s1072 + $0x48] sm:$0xe]
    %v5555 = vld [vmem:[%s1072 + $0x4c] sm:$0xf]
    %v5556 = vld [vmem:[%s1072 + $0x50] sm:$0x1]
    %v5557 = vld [vmem:[%s1072 + $0x54] sm:$0xe]
    %v5558 = vld [vmem:[%s1072 + $0x58] sm:$0xf]
    %v5559 = vld [vmem:[%s1072 + $0x5c] sm:$0x1]
    %v5560 = vld [vmem:[%s1072 + $0x60] sm:$0xe]
    %v5561 = vld [vmem:[%s1072 + $0x64] sm:$0xf]
    %v5562 = vld [vmem:[%s1072 + $0x68] sm:$0x1]
    %v5563 = vld [vmem:[%s1072 + $0x6c] sm:$0xe]
    %v5564 = vld [vmem:[%s1072 + $0x70] sm:$0xf]
    %v5565 = vld [vmem:[%s1072 + $0x74] sm:$0x1]
    %v5566 = vld [vmem:[%s1072 + $0x78] sm:$0xe]
    %v5567 = vld [vmem:[%s1072 + $0x7c] sm:$0xf]
    %v5568 = vld [vmem:[%s1072 + $0x80] sm:$0x1]
    %v5569 = vld [vmem:[%s1072 + $0x84] sm:$0xe]
    %v5570 = vld [vmem:[%s1072 + $0x88] sm:$0xf]
    %v5571 = vld [vmem:[%s1072 + $0x8c] sm:$0x1]
    %v5572 = vld [vmem:[%s1072 + $0x90] sm:$0xe]
    %v5573 = vld [vmem:[%s1072 + $0x94] sm:$0xf]
    %v5574 = vld [vmem:[%s1072 + $0x98] sm:$0x1]
    %v5575 = vld [vmem:[%s1072 + $0x9c] sm:$0xe]
    %v5576 = vld [vmem:[%s1072 + $0xa0] sm:$0xf]
    %v5577 = vld [vmem:[%s1072 + $0xa4] sm:$0x1]
    %v5578 = vld [vmem:[%s1072 + $0xa8] sm:$0xe]
    %v5579 = vld [vmem:[%s1072 + $0xac] sm:$0xf]
    %v5580 = vld [vmem:[%s1072 + $0xb0] sm:$0x1]
    %v5581 = vld [vmem:[%s1072 + $0xb4] sm:$0xe]
    %v5582 = vld [vmem:[%s1072 + $0xb8] sm:$0xf]
    %v5583 = vld [vmem:[%s1072 + $0xbc] sm:$0x1]
    %v5584 = vld [vmem:[%s1072 + $0xd8] sm:$0xe]
    %v5585 = vld [vmem:[%s1072 + $0xdc] sm:$0xf]
    %v5586 = vld [vmem:[%s1072 + $0xe0] sm:$0x1]
    %v5587 = vld [vmem:[%s1072 + $0xe4] sm:$0xe]
    %v5588 = vld [vmem:[%s1072 + $0xe8] sm:$0xf]
    %v5589 = vld [vmem:[%s1072 + $0xec] sm:$0x1]
    %v5590 = vld [vmem:[%s1072 + $0xf0] sm:$0xe]
    %v5591 = vld [vmem:[%s1072 + $0xf4] sm:$0xf]
    %v5592 = vld [vmem:[%s1072 + $0xf8] sm:$0x1]
    %v5593 = vld [vmem:[%s1072 + $0xfc] sm:$0xe]
    %v5594 = vld [vmem:[%s1072 + $0x100] sm:$0xf]
    %v5595 = vld [vmem:[%s1072 + $0x104] sm:$0x1]
    %v5596 = vld [vmem:[%s1072 + $0x108] sm:$0xe]
    %v5597 = vld [vmem:[%s1072 + $0x10c] sm:$0xf]
    %v5598 = vld [vmem:[%s1072 + $0x110] sm:$0x1]
    %v5599 = vld [vmem:[%s1072 + $0x114] sm:$0xe]
    %v5600 = vld [vmem:[%s1072 + $0x118] sm:$0xf]
    %v5601 = vld [vmem:[%s1072 + $0x11c] sm:$0x1]
    %v5602 = vld [vmem:[%s1072 + $0x120] sm:$0xe]
    %v5603 = vld [vmem:[%s1072 + $0x124] sm:$0xf]
    %v5604 = vld [vmem:[%s1072 + $0x128] sm:$0x1]
    %v5605 = vld [vmem:[%s1072 + $0x12c] sm:$0xe]
    %v5606 = vld [vmem:[%s1072 + $0x130] sm:$0xf]
    %v5607 = vld [vmem:[%s1072 + $0x134] sm:$0x1]
    %v5608 = vld [vmem:[%s1072 + $0x138] sm:$0xe]
    %v5609 = vld [vmem:[%s1072 + $0x13c] sm:$0xf]
    %v5610 = vld [vmem:[%s1072 + $0x140] sm:$0x1]
    %v5611 = vld [vmem:[%s1072 + $0x144] sm:$0xe]
    %v5612 = vld [vmem:[%s1072 + $0x148] sm:$0xf]
    %v5613 = vld [vmem:[%s1072 + $0x14c] sm:$0x1]
    %v5614 = vld [vmem:[%s1072 + $0x150] sm:$0xe]
    %v5615 = vld [vmem:[%s1072 + $0x154] sm:$0xf]
    %v5616 = vld [vmem:[%s1072 + $0x158] sm:$0x1]
    %v5617 = vld [vmem:[%s1072 + $0x15c] sm:$0xe]
    %v5618 = vld [vmem:[%s1072 + $0x160] sm:$0xf]
    %v5619 = vld [vmem:[%s1072 + $0x164] sm:$0x1]
    %v5620 = vld [vmem:[%s1072 + $0x168] sm:$0xe]
    %v5621 = vld [vmem:[%s1072 + $0x16c] sm:$0xf]
    %v5622 = vld [vmem:[%s1072 + $0x170] sm:$0x1]
    %v5623 = vld [vmem:[%s1072 + $0x174] sm:$0xe]
    %v5624 = vld [vmem:[%s1072 + $0x178] sm:$0xf]
    %v5625 = vld [vmem:[%s1072 + $0x17c] sm:$0x1]
    %v5626 = vld [vmem:[%s1072 + $0x180] sm:$0xe]
    %v5627 = vld [vmem:[%s1072 + $0x184] sm:$0xf]
    %v5628 = vld [vmem:[%s1072 + $0x188] sm:$0x1]
    %v5629 = vld [vmem:[%s1072 + $0x18c] sm:$0xe]
    %v5630 = vld [vmem:[%s1072 + $0x190] sm:$0xf]
    %v5631 = vld [vmem:[%s1072 + $0x194] sm:$0x1]
    %v5728 = vrot.slane %v5536, 5
    %v5729 = vrot.slane %v5728, 4
    %v5730 = vrot.slane %v5537, 5
    %v5731 = vsel %vm3839, %v5729, %v5730
    %v5732 = vrot.slane %v5730, 4
    %v5733 = vrot.slane %v5538, 5
    %v5734 = vsel %vm3839, %v5732, %v5733
    %v5735 = vrot.slane %v5539, 5
    %v5736 = vrot.slane %v5735, 4
    %v5737 = vrot.slane %v5540, 5
    %v5738 = vsel %vm3839, %v5736, %v5737
    %v5739 = vrot.slane %v5737, 4
    %v5740 = vrot.slane %v5541, 5
    %v5741 = vsel %vm3839, %v5739, %v5740
    %v5742 = vrot.slane %v5542, 5
    %v5743 = vrot.slane %v5742, 4
    %v5744 = vrot.slane %v5543, 5
    %v5745 = vsel %vm3839, %v5743, %v5744
    %v5746 = vrot.slane %v5744, 4
    %v5747 = vrot.slane %v5544, 5
    %v5748 = vsel %vm3839, %v5746, %v5747
    %v5749 = vrot.slane %v5545, 5
    %v5750 = vrot.slane %v5749, 4
    %v5751 = vrot.slane %v5546, 5
    %v5752 = vsel %vm3839, %v5750, %v5751
    %v5753 = vrot.slane %v5751, 4
    %v5754 = vrot.slane %v5547, 5
    %v5755 = vsel %vm3839, %v5753, %v5754
    %v5756 = vrot.slane %v5548, 5
    %v5757 = vrot.slane %v5756, 4
    %v5758 = vrot.slane %v5549, 5
    %v5759 = vsel %vm3839, %v5757, %v5758
    %v5760 = vrot.slane %v5758, 4
    %v5761 = vrot.slane %v5550, 5
    %v5762 = vsel %vm3839, %v5760, %v5761
    %v5763 = vrot.slane %v5551, 5
    %v5764 = vrot.slane %v5763, 4
    %v5765 = vrot.slane %v5552, 5
    %v5766 = vsel %vm3839, %v5764, %v5765
    %v5767 = vrot.slane %v5765, 4
    %v5768 = vrot.slane %v5553, 5
    %v5769 = vsel %vm3839, %v5767, %v5768
    %v5770 = vrot.slane %v5554, 5
    %v5771 = vrot.slane %v5770, 4
    %v5772 = vrot.slane %v5555, 5
    %v5773 = vsel %vm3839, %v5771, %v5772
    %v5774 = vrot.slane %v5772, 4
    %v5775 = vrot.slane %v5556, 5
    %v5776 = vsel %vm3839, %v5774, %v5775
    %v5777 = vrot.slane %v5557, 5
    %v5778 = vrot.slane %v5777, 4
    %v5779 = vrot.slane %v5558, 5
    %v5780 = vsel %vm3839, %v5778, %v5779
    %v5781 = vrot.slane %v5779, 4
    %v5782 = vrot.slane %v5559, 5
    %v5783 = vsel %vm3839, %v5781, %v5782
    %v5784 = vrot.slane %v5560, 5
    %v5785 = vrot.slane %v5784, 4
    %v5786 = vrot.slane %v5561, 5
    %v5787 = vsel %vm3839, %v5785, %v5786
    %v5788 = vrot.slane %v5786, 4
    %v5789 = vrot.slane %v5562, 5
    %v5790 = vsel %vm3839, %v5788, %v5789
    %v5791 = vrot.slane %v5563, 5
    %v5792 = vrot.slane %v5791, 4
    %v5793 = vrot.slane %v5564, 5
    %v5794 = vsel %vm3839, %v5792, %v5793
    %v5795 = vrot.slane %v5793, 4
    %v5796 = vrot.slane %v5565, 5
    %v5797 = vsel %vm3839, %v5795, %v5796
    %v5798 = vrot.slane %v5566, 5
    %v5799 = vrot.slane %v5798, 4
    %v5800 = vrot.slane %v5567, 5
    %v5801 = vsel %vm3839, %v5799, %v5800
    %v5802 = vrot.slane %v5800, 4
    %v5803 = vrot.slane %v5568, 5
    %v5804 = vsel %vm3839, %v5802, %v5803
    %v5805 = vrot.slane %v5569, 5
    %v5806 = vrot.slane %v5805, 4
    %v5807 = vrot.slane %v5570, 5
    %v5808 = vsel %vm3839, %v5806, %v5807
    %v5809 = vrot.slane %v5807, 4
    %v5810 = vrot.slane %v5571, 5
    %v5811 = vsel %vm3839, %v5809, %v5810
    %v5812 = vrot.slane %v5572, 5
    %v5813 = vrot.slane %v5812, 4
    %v5814 = vrot.slane %v5573, 5
    %v5815 = vsel %vm3839, %v5813, %v5814
    %v5816 = vrot.slane %v5814, 4
    %v5817 = vrot.slane %v5574, 5
    %v5818 = vsel %vm3839, %v5816, %v5817
    %v5819 = vrot.slane %v5575, 5
    %v5820 = vrot.slane %v5819, 4
    %v5821 = vrot.slane %v5576, 5
    %v5822 = vsel %vm3839, %v5820, %v5821
    %v5823 = vrot.slane %v5821, 4
    %v5824 = vrot.slane %v5577, 5
    %v5825 = vsel %vm3839, %v5823, %v5824
    %v5826 = vrot.slane %v5578, 5
    %v5827 = vrot.slane %v5826, 4
    %v5828 = vrot.slane %v5579, 5
    %v5829 = vsel %vm3839, %v5827, %v5828
    %v5830 = vrot.slane %v5828, 4
    %v5831 = vrot.slane %v5580, 5
    %v5832 = vsel %vm3839, %v5830, %v5831
    %v5833 = vrot.slane %v5581, 5
    %v5834 = vrot.slane %v5833, 4
    %v5835 = vrot.slane %v5582, 5
    %v5836 = vsel %vm3839, %v5834, %v5835
    %v5837 = vrot.slane %v5835, 4
    %v5838 = vrot.slane %v5583, 5
    %v5839 = vsel %vm3839, %v5837, %v5838
    %v5840 = vrot.slane %v5584, 5
    %v5841 = vrot.slane %v5840, 4
    %v5842 = vrot.slane %v5585, 5
    %v5843 = vsel %vm3839, %v5841, %v5842
    %v5844 = vrot.slane %v5842, 4
    %v5845 = vrot.slane %v5586, 5
    %v5846 = vsel %vm3839, %v5844, %v5845
    %v5847 = vrot.slane %v5587, 5
    %v5848 = vrot.slane %v5847, 4
    %v5849 = vrot.slane %v5588, 5
    %v5850 = vsel %vm3839, %v5848, %v5849
    %v5851 = vrot.slane %v5849, 4
    %v5852 = vrot.slane %v5589, 5
    %v5853 = vsel %vm3839, %v5851, %v5852
    %v5854 = vrot.slane %v5590, 5
    %v5855 = vrot.slane %v5854, 4
    %v5856 = vrot.slane %v5591, 5
    %v5857 = vsel %vm3839, %v5855, %v5856
    %v5858 = vrot.slane %v5856, 4
    %v5859 = vrot.slane %v5592, 5
    %v5860 = vsel %vm3839, %v5858, %v5859
    %v5861 = vrot.slane %v5593, 5
    %v5862 = vrot.slane %v5861, 4
    %v5863 = vrot.slane %v5594, 5
    %v5864 = vsel %vm3839, %v5862, %v5863
    %v5865 = vrot.slane %v5863, 4
    %v5866 = vrot.slane %v5595, 5
    %v5867 = vsel %vm3839, %v5865, %v5866
    %v5868 = vrot.slane %v5596, 5
    %v5869 = vrot.slane %v5868, 4
    %v5870 = vrot.slane %v5597, 5
    %v5871 = vsel %vm3839, %v5869, %v5870
    %v5872 = vrot.slane %v5870, 4
    %v5873 = vrot.slane %v5598, 5
    %v5874 = vsel %vm3839, %v5872, %v5873
    %v5875 = vrot.slane %v5599, 5
    %v5876 = vrot.slane %v5875, 4
    %v5877 = vrot.slane %v5600, 5
    %v5878 = vsel %vm3839, %v5876, %v5877
    %v5879 = vrot.slane %v5877, 4
    %v5880 = vrot.slane %v5601, 5
    %v5881 = vsel %vm3839, %v5879, %v5880
    %v5882 = vrot.slane %v5602, 5
    %v5883 = vrot.slane %v5882, 4
    %v5884 = vrot.slane %v5603, 5
    %v5885 = vsel %vm3839, %v5883, %v5884
    %v5886 = vrot.slane %v5884, 4
    %v5887 = vrot.slane %v5604, 5
    %v5888 = vsel %vm3839, %v5886, %v5887
    %v5889 = vrot.slane %v5605, 5
    %v5890 = vrot.slane %v5889, 4
    %v5891 = vrot.slane %v5606, 5
    %v5892 = vsel %vm3839, %v5890, %v5891
    %v5893 = vrot.slane %v5891, 4
    %v5894 = vrot.slane %v5607, 5
    %v5895 = vsel %vm3839, %v5893, %v5894
    %v5896 = vrot.slane %v5608, 5
    %v5897 = vrot.slane %v5896, 4
    %v5898 = vrot.slane %v5609, 5
    %v5899 = vsel %vm3839, %v5897, %v5898
    %v5900 = vrot.slane %v5898, 4
    %v5901 = vrot.slane %v5610, 5
    %v5902 = vsel %vm3839, %v5900, %v5901
    %v5903 = vrot.slane %v5611, 5
    %v5904 = vrot.slane %v5903, 4
    %v5905 = vrot.slane %v5612, 5
    %v5906 = vsel %vm3839, %v5904, %v5905
    %v5907 = vrot.slane %v5905, 4
    %v5908 = vrot.slane %v5613, 5
    %v5909 = vsel %vm3839, %v5907, %v5908
    %v5910 = vrot.slane %v5614, 5
    %v5911 = vrot.slane %v5910, 4
    %v5912 = vrot.slane %v5615, 5
    %v5913 = vsel %vm3839, %v5911, %v5912
    %v5914 = vrot.slane %v5912, 4
    %v5915 = vrot.slane %v5616, 5
    %v5916 = vsel %vm3839, %v5914, %v5915
    %v5917 = vrot.slane %v5617, 5
    %v5918 = vrot.slane %v5917, 4
    %v5919 = vrot.slane %v5618, 5
    %v5920 = vsel %vm3839, %v5918, %v5919
    %v5921 = vrot.slane %v5919, 4
    %v5922 = vrot.slane %v5619, 5
    %v5923 = vsel %vm3839, %v5921, %v5922
    %v5924 = vrot.slane %v5620, 5
    %v5925 = vrot.slane %v5924, 4
    %v5926 = vrot.slane %v5621, 5
    %v5927 = vsel %vm3839, %v5925, %v5926
    %v5928 = vrot.slane %v5926, 4
    %v5929 = vrot.slane %v5622, 5
    %v5930 = vsel %vm3839, %v5928, %v5929
    %v5931 = vrot.slane %v5623, 5
    %v5932 = vrot.slane %v5931, 4
    %v5933 = vrot.slane %v5624, 5
    %v5934 = vsel %vm3839, %v5932, %v5933
    %v5935 = vrot.slane %v5933, 4
    %v5936 = vrot.slane %v5625, 5
    %v5937 = vsel %vm3839, %v5935, %v5936
    %v5938 = vrot.slane %v5626, 5
    %v5939 = vrot.slane %v5938, 4
    %v5940 = vrot.slane %v5627, 5
    %v5941 = vsel %vm3839, %v5939, %v5940
    %v5942 = vrot.slane %v5940, 4
    %v5943 = vrot.slane %v5628, 5
    %v5944 = vsel %vm3839, %v5942, %v5943
    %v5945 = vrot.slane %v5629, 5
    %v5946 = vrot.slane %v5945, 4
    %v5947 = vrot.slane %v5630, 5
    %v5948 = vsel %vm3839, %v5946, %v5947
    %v5949 = vrot.slane %v5947, 4
    %v5950 = vrot.slane %v5631, 5
    %v5951 = vsel %vm3839, %v5949, %v5950
    %v5952 = vunpack.c.l.b16 %v5731
    %v5953 = vunpack.c.l.b16 %v5734
    %v5954 = vunpack.c.l.b16 %v5738
    %v5955 = vunpack.c.l.b16 %v5741
    %v5956 = vunpack.c.l.b16 %v5745
    %v5957 = vunpack.c.l.b16 %v5748
    %v5958 = vunpack.c.l.b16 %v5752
    %v5959 = vunpack.c.l.b16 %v5755
    %v5960 = vunpack.c.l.b16 %v5759
    %v5961 = vunpack.c.l.b16 %v5762
    %v5962 = vunpack.c.l.b16 %v5766
    %v5963 = vunpack.c.l.b16 %v5769
    %v5964 = vunpack.c.l.b16 %v5773
    %v5965 = vunpack.c.l.b16 %v5776
    %v5966 = vunpack.c.l.b16 %v5780
    %v5967 = vunpack.c.l.b16 %v5783
    %v5968 = vunpack.c.l.b16 %v5787
    %v5969 = vunpack.c.l.b16 %v5790
    %v5970 = vunpack.c.l.b16 %v5794
    %v5971 = vunpack.c.l.b16 %v5797
    %v5972 = vunpack.c.l.b16 %v5801
    %v5973 = vunpack.c.l.b16 %v5804
    %v5974 = vunpack.c.l.b16 %v5808
    %v5975 = vunpack.c.l.b16 %v5811
    %v5976 = vunpack.c.l.b16 %v5815
    %v5977 = vunpack.c.l.b16 %v5818
    %v5978 = vunpack.c.l.b16 %v5822
    %v5979 = vunpack.c.l.b16 %v5825
    %v5980 = vunpack.c.l.b16 %v5829
    %v5981 = vunpack.c.l.b16 %v5832
    %v5982 = vunpack.c.l.b16 %v5836
    %v5983 = vunpack.c.l.b16 %v5839
    %v5984 = vunpack.c.l.b16 %v5843
    %v5985 = vunpack.c.l.b16 %v5846
    %v5986 = vunpack.c.l.b16 %v5850
    %v5987 = vunpack.c.l.b16 %v5853
    %v5988 = vunpack.c.l.b16 %v5857
    %v5989 = vunpack.c.l.b16 %v5860
    %v5990 = vunpack.c.l.b16 %v5864
    %v5991 = vunpack.c.l.b16 %v5867
    %v5992 = vunpack.c.l.b16 %v5871
    %v5993 = vunpack.c.l.b16 %v5874
    %v5994 = vunpack.c.l.b16 %v5878
    %v5995 = vunpack.c.l.b16 %v5881
    %v5996 = vunpack.c.l.b16 %v5885
    %v5997 = vunpack.c.l.b16 %v5888
    %v5998 = vunpack.c.l.b16 %v5892
    %v5999 = vunpack.c.l.b16 %v5895
    %v6000 = vunpack.c.l.b16 %v5899
    %v6001 = vunpack.c.l.b16 %v5902
    %v6002 = vunpack.c.l.b16 %v5906
    %v6003 = vunpack.c.l.b16 %v5909
    %v6004 = vunpack.c.l.b16 %v5913
    %v6005 = vunpack.c.l.b16 %v5916
    %v6006 = vunpack.c.l.b16 %v5920
    %v6007 = vunpack.c.l.b16 %v5923
    %v6008 = vunpack.c.l.b16 %v5927
    %v6009 = vunpack.c.l.b16 %v5930
    %v6010 = vunpack.c.l.b16 %v5934
    %v6011 = vunpack.c.l.b16 %v5937
    %v6012 = vunpack.c.l.b16 %v5941
    %v6013 = vunpack.c.l.b16 %v5944
    %v6014 = vunpack.c.l.b16 %v5948
    %v6015 = vunpack.c.l.b16 %v5951
    %v6016 = vpack.c.b16 %v5953, %v5952
    %v6017 = vpack.c.b16 %v5955, %v5954
    %v6018 = vpack.c.b16 %v5957, %v5956
    %v6019 = vpack.c.b16 %v5959, %v5958
    %v6020 = vpack.c.b16 %v5961, %v5960
    %v6021 = vpack.c.b16 %v5963, %v5962
    %v6022 = vpack.c.b16 %v5965, %v5964
    %v6023 = vpack.c.b16 %v5967, %v5966
    %v6024 = vpack.c.b16 %v5969, %v5968
    %v6025 = vpack.c.b16 %v5971, %v5970
    %v6026 = vpack.c.b16 %v5973, %v5972
    %v6027 = vpack.c.b16 %v5975, %v5974
    %v6028 = vpack.c.b16 %v5977, %v5976
    %v6029 = vpack.c.b16 %v5979, %v5978
    %v6030 = vpack.c.b16 %v5981, %v5980
    %v6031 = vpack.c.b16 %v5983, %v5982
    %v6032 = vpack.c.b16 %v5985, %v5984
    %v6033 = vpack.c.b16 %v5987, %v5986
    %v6034 = vpack.c.b16 %v5989, %v5988
    %v6035 = vpack.c.b16 %v5991, %v5990
    %v6036 = vpack.c.b16 %v5993, %v5992
    %v6037 = vpack.c.b16 %v5995, %v5994
    %v6038 = vpack.c.b16 %v5997, %v5996
    %v6039 = vpack.c.b16 %v5999, %v5998
    %v6040 = vpack.c.b16 %v6001, %v6000
    %v6041 = vpack.c.b16 %v6003, %v6002
    %v6042 = vpack.c.b16 %v6005, %v6004
    %v6043 = vpack.c.b16 %v6007, %v6006
    %v6044 = vpack.c.b16 %v6009, %v6008
    %v6045 = vpack.c.b16 %v6011, %v6010
    %v6046 = vpack.c.b16 %v6013, %v6012
    %v6047 = vpack.c.b16 %v6015, %v6014
    %6080 = vst [vmem:[#allocation3 + $0x28] sm:$0xff] %v6016
    %6081 = vst [vmem:[#allocation3 + $0x70] sm:$0xff] %v6017
    %6082 = vst [vmem:[#allocation3 + $0xb8] sm:$0xff] %v6018
    %6083 = vst [vmem:[#allocation3 + $0x100] sm:$0xff] %v6019
    %6084 = vst [vmem:[#allocation3 + $0x148] sm:$0xff] %v6020
    %6085 = vst [vmem:[#allocation3 + $0x190] sm:$0xff] %v6021
    %6086 = vst [vmem:[#allocation3 + $0x1d8] sm:$0xff] %v6022
    %6087 = vst [vmem:[#allocation3 + $0x220] sm:$0xff] %v6023
    %6088 = vst [vmem:[#allocation3 + $0x268] sm:$0xff] %v6024
    %6089 = vst [vmem:[#allocation3 + $0x2b0] sm:$0xff] %v6025
    %6090 = vst [vmem:[#allocation3 + $0x2f8] sm:$0xff] %v6026
    %6091 = vst [vmem:[#allocation3 + $0x340] sm:$0xff] %v6027
    %6092 = vst [vmem:[#allocation3 + $0x388] sm:$0xff] %v6028
    %6093 = vst [vmem:[#allocation3 + $0x3d0] sm:$0xff] %v6029
    %6094 = vst [vmem:[#allocation3 + $0x418] sm:$0xff] %v6030
    %6095 = vst [vmem:[#allocation3 + $0x460] sm:$0xff] %v6031
    %6096 = vst [vmem:[#allocation3 + $0x4a8] sm:$0xff] %v6032
    %6097 = vst [vmem:[#allocation3 + $0x4f0] sm:$0xff] %v6033
    %6098 = vst [vmem:[#allocation3 + $0x538] sm:$0xff] %v6034
    %6099 = vst [vmem:[#allocation3 + $0x580] sm:$0xff] %v6035
    %6100 = vst [vmem:[#allocation3 + $0x5c8] sm:$0xff] %v6036
    %6101 = vst [vmem:[#allocation3 + $0x610] sm:$0xff] %v6037
    %6102 = vst [vmem:[#allocation3 + $0x658] sm:$0xff] %v6038
    %6103 = vst [vmem:[#allocation3 + $0x6a0] sm:$0xff] %v6039
    %6104 = vst [vmem:[#allocation3 + $0x6e8] sm:$0xff] %v6040
    %6105 = vst [vmem:[#allocation3 + $0x730] sm:$0xff] %v6041
    %6106 = vst [vmem:[#allocation3 + $0x778] sm:$0xff] %v6042
    %6107 = vst [vmem:[#allocation3 + $0x7c0] sm:$0xff] %v6043
    %6108 = vst [vmem:[#allocation3 + $0x808] sm:$0xff] %v6044
    %6109 = vst [vmem:[#allocation3 + $0x850] sm:$0xff] %v6045
    %6110 = vst [vmem:[#allocation3 + $0x898] sm:$0xff] %v6046
    %6111 = vst [vmem:[#allocation3 + $0x8e0] sm:$0xff] %v6047
    %s6112 = scalar_lea.vmem [#allocation2], 24
    %v6113 = vld [vmem:[%s6112] sm:$0xf]
    %v6114 = vld [vmem:[%s6112 + $0x4] sm:$0xf]
    %v6115 = vld [vmem:[%s6112 + $0xc] sm:$0xf]
    %v6116 = vld [vmem:[%s6112 + $0x10] sm:$0xf]
    %v6117 = vld [vmem:[%s6112 + $0x18] sm:$0xf]
    %v6118 = vld [vmem:[%s6112 + $0x1c] sm:$0xf]
    %v6119 = vld [vmem:[%s6112 + $0x24] sm:$0xf]
    %v6120 = vld [vmem:[%s6112 + $0x28] sm:$0xf]
    %v6121 = vld [vmem:[%s6112 + $0x30] sm:$0xf]
    %v6122 = vld [vmem:[%s6112 + $0x34] sm:$0xf]
    %v6123 = vld [vmem:[%s6112 + $0x3c] sm:$0xf]
    %v6124 = vld [vmem:[%s6112 + $0x40] sm:$0xf]
    %v6125 = vld [vmem:[%s6112 + $0x48] sm:$0xf]
    %v6126 = vld [vmem:[%s6112 + $0x4c] sm:$0xf]
    %v6127 = vld [vmem:[%s6112 + $0x54] sm:$0xf]
    %v6128 = vld [vmem:[%s6112 + $0x58] sm:$0xf]
    %v6129 = vld [vmem:[%s6112 + $0x60] sm:$0xf]
    %v6130 = vld [vmem:[%s6112 + $0x64] sm:$0xf]
    %v6131 = vld [vmem:[%s6112 + $0x6c] sm:$0xf]
    %v6132 = vld [vmem:[%s6112 + $0x70] sm:$0xf]
    %v6133 = vld [vmem:[%s6112 + $0x78] sm:$0xf]
    %v6134 = vld [vmem:[%s6112 + $0x7c] sm:$0xf]
    %v6135 = vld [vmem:[%s6112 + $0x84] sm:$0xf]
    %v6136 = vld [vmem:[%s6112 + $0x88] sm:$0xf]
    %v6137 = vld [vmem:[%s6112 + $0x90] sm:$0xf]
    %v6138 = vld [vmem:[%s6112 + $0x94] sm:$0xf]
    %v6139 = vld [vmem:[%s6112 + $0x9c] sm:$0xf]
    %v6140 = vld [vmem:[%s6112 + $0xa0] sm:$0xf]
    %v6141 = vld [vmem:[%s6112 + $0xa8] sm:$0xf]
    %v6142 = vld [vmem:[%s6112 + $0xac] sm:$0xf]
    %v6143 = vld [vmem:[%s6112 + $0xb4] sm:$0xf]
    %v6144 = vld [vmem:[%s6112 + $0xb8] sm:$0xf]
    %v6145 = vld [vmem:[%s6112 + $0xd8] sm:$0xf]
    %v6146 = vld [vmem:[%s6112 + $0xdc] sm:$0xf]
    %v6147 = vld [vmem:[%s6112 + $0xe4] sm:$0xf]
    %v6148 = vld [vmem:[%s6112 + $0xe8] sm:$0xf]
    %v6149 = vld [vmem:[%s6112 + $0xf0] sm:$0xf]
    %v6150 = vld [vmem:[%s6112 + $0xf4] sm:$0xf]
    %v6151 = vld [vmem:[%s6112 + $0xfc] sm:$0xf]
    %v6152 = vld [vmem:[%s6112 + $0x100] sm:$0xf]
    %v6153 = vld [vmem:[%s6112 + $0x108] sm:$0xf]
    %v6154 = vld [vmem:[%s6112 + $0x10c] sm:$0xf]
    %v6155 = vld [vmem:[%s6112 + $0x114] sm:$0xf]
    %v6156 = vld [vmem:[%s6112 + $0x118] sm:$0xf]
    %v6157 = vld [vmem:[%s6112 + $0x120] sm:$0xf]
    %v6158 = vld [vmem:[%s6112 + $0x124] sm:$0xf]
    %v6159 = vld [vmem:[%s6112 + $0x12c] sm:$0xf]
    %v6160 = vld [vmem:[%s6112 + $0x130] sm:$0xf]
    %v6161 = vld [vmem:[%s6112 + $0x138] sm:$0xf]
    %v6162 = vld [vmem:[%s6112 + $0x13c] sm:$0xf]
    %v6163 = vld [vmem:[%s6112 + $0x144] sm:$0xf]
    %v6164 = vld [vmem:[%s6112 + $0x148] sm:$0xf]
    %v6165 = vld [vmem:[%s6112 + $0x150] sm:$0xf]
    %v6166 = vld [vmem:[%s6112 + $0x154] sm:$0xf]
    %v6167 = vld [vmem:[%s6112 + $0x15c] sm:$0xf]
    %v6168 = vld [vmem:[%s6112 + $0x160] sm:$0xf]
    %v6169 = vld [vmem:[%s6112 + $0x168] sm:$0xf]
    %v6170 = vld [vmem:[%s6112 + $0x16c] sm:$0xf]
    %v6171 = vld [vmem:[%s6112 + $0x174] sm:$0xf]
    %v6172 = vld [vmem:[%s6112 + $0x178] sm:$0xf]
    %v6173 = vld [vmem:[%s6112 + $0x180] sm:$0xf]
    %v6174 = vld [vmem:[%s6112 + $0x184] sm:$0xf]
    %v6175 = vld [vmem:[%s6112 + $0x18c] sm:$0xf]
    %v6176 = vld [vmem:[%s6112 + $0x190] sm:$0xf]
    %v6241 = vunpack.c.l.b16 %v6113
    %v6242 = vunpack.c.l.b16 %v6114
    %v6243 = vunpack.c.l.b16 %v6115
    %v6244 = vunpack.c.l.b16 %v6116
    %v6245 = vunpack.c.l.b16 %v6117
    %v6246 = vunpack.c.l.b16 %v6118
    %v6247 = vunpack.c.l.b16 %v6119
    %v6248 = vunpack.c.l.b16 %v6120
    %v6249 = vunpack.c.l.b16 %v6121
    %v6250 = vunpack.c.l.b16 %v6122
    %v6251 = vunpack.c.l.b16 %v6123
    %v6252 = vunpack.c.l.b16 %v6124
    %v6253 = vunpack.c.l.b16 %v6125
    %v6254 = vunpack.c.l.b16 %v6126
    %v6255 = vunpack.c.l.b16 %v6127
    %v6256 = vunpack.c.l.b16 %v6128
    %v6257 = vunpack.c.l.b16 %v6129
    %v6258 = vunpack.c.l.b16 %v6130
    %v6259 = vunpack.c.l.b16 %v6131
    %v6260 = vunpack.c.l.b16 %v6132
    %v6261 = vunpack.c.l.b16 %v6133
    %v6262 = vunpack.c.l.b16 %v6134
    %v6263 = vunpack.c.l.b16 %v6135
    %v6264 = vunpack.c.l.b16 %v6136
    %v6265 = vunpack.c.l.b16 %v6137
    %v6266 = vunpack.c.l.b16 %v6138
    %v6267 = vunpack.c.l.b16 %v6139
    %v6268 = vunpack.c.l.b16 %v6140
    %v6269 = vunpack.c.l.b16 %v6141
    %v6270 = vunpack.c.l.b16 %v6142
    %v6271 = vunpack.c.l.b16 %v6143
    %v6272 = vunpack.c.l.b16 %v6144
    %v6273 = vunpack.c.l.b16 %v6145
    %v6274 = vunpack.c.l.b16 %v6146
    %v6275 = vunpack.c.l.b16 %v6147
    %v6276 = vunpack.c.l.b16 %v6148
    %v6277 = vunpack.c.l.b16 %v6149
    %v6278 = vunpack.c.l.b16 %v6150
    %v6279 = vunpack.c.l.b16 %v6151
    %v6280 = vunpack.c.l.b16 %v6152
    %v6281 = vunpack.c.l.b16 %v6153
    %v6282 = vunpack.c.l.b16 %v6154
    %v6283 = vunpack.c.l.b16 %v6155
    %v6284 = vunpack.c.l.b16 %v6156
    %v6285 = vunpack.c.l.b16 %v6157
    %v6286 = vunpack.c.l.b16 %v6158
    %v6287 = vunpack.c.l.b16 %v6159
    %v6288 = vunpack.c.l.b16 %v6160
    %v6289 = vunpack.c.l.b16 %v6161
    %v6290 = vunpack.c.l.b16 %v6162
    %v6291 = vunpack.c.l.b16 %v6163
    %v6292 = vunpack.c.l.b16 %v6164
    %v6293 = vunpack.c.l.b16 %v6165
    %v6294 = vunpack.c.l.b16 %v6166
    %v6295 = vunpack.c.l.b16 %v6167
    %v6296 = vunpack.c.l.b16 %v6168
    %v6297 = vunpack.c.l.b16 %v6169
    %v6298 = vunpack.c.l.b16 %v6170
    %v6299 = vunpack.c.l.b16 %v6171
    %v6300 = vunpack.c.l.b16 %v6172
    %v6301 = vunpack.c.l.b16 %v6173
    %v6302 = vunpack.c.l.b16 %v6174
    %v6303 = vunpack.c.l.b16 %v6175
    %v6304 = vunpack.c.l.b16 %v6176
    %v6305 = vpack.c.b16 %v6242, %v6241
    %v6306 = vpack.c.b16 %v6244, %v6243
    %v6307 = vpack.c.b16 %v6246, %v6245
    %v6308 = vpack.c.b16 %v6248, %v6247
    %v6309 = vpack.c.b16 %v6250, %v6249
    %v6310 = vpack.c.b16 %v6252, %v6251
    %v6311 = vpack.c.b16 %v6254, %v6253
    %v6312 = vpack.c.b16 %v6256, %v6255
    %v6313 = vpack.c.b16 %v6258, %v6257
    %v6314 = vpack.c.b16 %v6260, %v6259
    %v6315 = vpack.c.b16 %v6262, %v6261
    %v6316 = vpack.c.b16 %v6264, %v6263
    %v6317 = vpack.c.b16 %v6266, %v6265
    %v6318 = vpack.c.b16 %v6268, %v6267
    %v6319 = vpack.c.b16 %v6270, %v6269
    %v6320 = vpack.c.b16 %v6272, %v6271
    %v6321 = vpack.c.b16 %v6274, %v6273
    %v6322 = vpack.c.b16 %v6276, %v6275
    %v6323 = vpack.c.b16 %v6278, %v6277
    %v6324 = vpack.c.b16 %v6280, %v6279
    %v6325 = vpack.c.b16 %v6282, %v6281
    %v6326 = vpack.c.b16 %v6284, %v6283
    %v6327 = vpack.c.b16 %v6286, %v6285
    %v6328 = vpack.c.b16 %v6288, %v6287
    %v6329 = vpack.c.b16 %v6290, %v6289
    %v6330 = vpack.c.b16 %v6292, %v6291
    %v6331 = vpack.c.b16 %v6294, %v6293
    %v6332 = vpack.c.b16 %v6296, %v6295
    %v6333 = vpack.c.b16 %v6298, %v6297
    %v6334 = vpack.c.b16 %v6300, %v6299
    %v6335 = vpack.c.b16 %v6302, %v6301
    %v6336 = vpack.c.b16 %v6304, %v6303
    %6369 = vst [vmem:[#allocation3 + $0x30] sm:$0xff] %v6305
    %6370 = vst [vmem:[#allocation3 + $0x78] sm:$0xff] %v6306
    %6371 = vst [vmem:[#allocation3 + $0xc0] sm:$0xff] %v6307
    %6372 = vst [vmem:[#allocation3 + $0x108] sm:$0xff] %v6308
    %6373 = vst [vmem:[#allocation3 + $0x150] sm:$0xff] %v6309
    %6374 = vst [vmem:[#allocation3 + $0x198] sm:$0xff] %v6310
    %6375 = vst [vmem:[#allocation3 + $0x1e0] sm:$0xff] %v6311
    %6376 = vst [vmem:[#allocation3 + $0x228] sm:$0xff] %v6312
    %6377 = vst [vmem:[#allocation3 + $0x270] sm:$0xff] %v6313
    %6378 = vst [vmem:[#allocation3 + $0x2b8] sm:$0xff] %v6314
    %6379 = vst [vmem:[#allocation3 + $0x300] sm:$0xff] %v6315
    %6380 = vst [vmem:[#allocation3 + $0x348] sm:$0xff] %v6316
    %6381 = vst [vmem:[#allocation3 + $0x390] sm:$0xff] %v6317
    %6382 = vst [vmem:[#allocation3 + $0x3d8] sm:$0xff] %v6318
    %6383 = vst [vmem:[#allocation3 + $0x420] sm:$0xff] %v6319
    %6384 = vst [vmem:[#allocation3 + $0x468] sm:$0xff] %v6320
    %6385 = vst [vmem:[#allocation3 + $0x4b0] sm:$0xff] %v6321
    %6386 = vst [vmem:[#allocation3 + $0x4f8] sm:$0xff] %v6322
    %6387 = vst [vmem:[#allocation3 + $0x540] sm:$0xff] %v6323
    %6388 = vst [vmem:[#allocation3 + $0x588] sm:$0xff] %v6324
    %6389 = vst [vmem:[#allocation3 + $0x5d0] sm:$0xff] %v6325
    %6390 = vst [vmem:[#allocation3 + $0x618] sm:$0xff] %v6326
    %6391 = vst [vmem:[#allocation3 + $0x660] sm:$0xff] %v6327
    %6392 = vst [vmem:[#allocation3 + $0x6a8] sm:$0xff] %v6328
    %6393 = vst [vmem:[#allocation3 + $0x6f0] sm:$0xff] %v6329
    %6394 = vst [vmem:[#allocation3 + $0x738] sm:$0xff] %v6330
    %6395 = vst [vmem:[#allocation3 + $0x780] sm:$0xff] %v6331
    %6396 = vst [vmem:[#allocation3 + $0x7c8] sm:$0xff] %v6332
    %6397 = vst [vmem:[#allocation3 + $0x810] sm:$0xff] %v6333
    %6398 = vst [vmem:[#allocation3 + $0x858] sm:$0xff] %v6334
    %6399 = vst [vmem:[#allocation3 + $0x8a0] sm:$0xff] %v6335
    %6400 = vst [vmem:[#allocation3 + $0x8e8] sm:$0xff] %v6336
    %v6401 = vld [vmem:[%s6112] sm:$0xf]
    %v6402 = vld [vmem:[%s6112 + $0x4] sm:$0xf]
    %v6403 = vld [vmem:[%s6112 + $0x8] sm:$0x1]
    %v6404 = vld [vmem:[%s6112 + $0xc] sm:$0xf]
    %v6405 = vld [vmem:[%s6112 + $0x10] sm:$0xf]
    %v6406 = vld [vmem:[%s6112 + $0x14] sm:$0x1]
    %v6407 = vld [vmem:[%s6112 + $0x18] sm:$0xf]
    %v6408 = vld [vmem:[%s6112 + $0x1c] sm:$0xf]
    %v6409 = vld [vmem:[%s6112 + $0x20] sm:$0x1]
    %v6410 = vld [vmem:[%s6112 + $0x24] sm:$0xf]
    %v6411 = vld [vmem:[%s6112 + $0x28] sm:$0xf]
    %v6412 = vld [vmem:[%s6112 + $0x2c] sm:$0x1]
    %v6413 = vld [vmem:[%s6112 + $0x30] sm:$0xf]
    %v6414 = vld [vmem:[%s6112 + $0x34] sm:$0xf]
    %v6415 = vld [vmem:[%s6112 + $0x38] sm:$0x1]
    %v6416 = vld [vmem:[%s6112 + $0x3c] sm:$0xf]
    %v6417 = vld [vmem:[%s6112 + $0x40] sm:$0xf]
    %v6418 = vld [vmem:[%s6112 + $0x44] sm:$0x1]
    %v6419 = vld [vmem:[%s6112 + $0x48] sm:$0xf]
    %v6420 = vld [vmem:[%s6112 + $0x4c] sm:$0xf]
    %v6421 = vld [vmem:[%s6112 + $0x50] sm:$0x1]
    %v6422 = vld [vmem:[%s6112 + $0x54] sm:$0xf]
    %v6423 = vld [vmem:[%s6112 + $0x58] sm:$0xf]
    %v6424 = vld [vmem:[%s6112 + $0x5c] sm:$0x1]
    %v6425 = vld [vmem:[%s6112 + $0x60] sm:$0xf]
    %v6426 = vld [vmem:[%s6112 + $0x64] sm:$0xf]
    %v6427 = vld [vmem:[%s6112 + $0x68] sm:$0x1]
    %v6428 = vld [vmem:[%s6112 + $0x6c] sm:$0xf]
    %v6429 = vld [vmem:[%s6112 + $0x70] sm:$0xf]
    %v6430 = vld [vmem:[%s6112 + $0x74] sm:$0x1]
    %v6431 = vld [vmem:[%s6112 + $0x78] sm:$0xf]
    %v6432 = vld [vmem:[%s6112 + $0x7c] sm:$0xf]
    %v6433 = vld [vmem:[%s6112 + $0x80] sm:$0x1]
    %v6434 = vld [vmem:[%s6112 + $0x84] sm:$0xf]
    %v6435 = vld [vmem:[%s6112 + $0x88] sm:$0xf]
    %v6436 = vld [vmem:[%s6112 + $0x8c] sm:$0x1]
    %v6437 = vld [vmem:[%s6112 + $0x90] sm:$0xf]
    %v6438 = vld [vmem:[%s6112 + $0x94] sm:$0xf]
    %v6439 = vld [vmem:[%s6112 + $0x98] sm:$0x1]
    %v6440 = vld [vmem:[%s6112 + $0x9c] sm:$0xf]
    %v6441 = vld [vmem:[%s6112 + $0xa0] sm:$0xf]
    %v6442 = vld [vmem:[%s6112 + $0xa4] sm:$0x1]
    %v6443 = vld [vmem:[%s6112 + $0xa8] sm:$0xf]
    %v6444 = vld [vmem:[%s6112 + $0xac] sm:$0xf]
    %v6445 = vld [vmem:[%s6112 + $0xb0] sm:$0x1]
    %v6446 = vld [vmem:[%s6112 + $0xb4] sm:$0xf]
    %v6447 = vld [vmem:[%s6112 + $0xb8] sm:$0xf]
    %v6448 = vld [vmem:[%s6112 + $0xbc] sm:$0x1]
    %v6449 = vld [vmem:[%s6112 + $0xd8] sm:$0xf]
    %v6450 = vld [vmem:[%s6112 + $0xdc] sm:$0xf]
    %v6451 = vld [vmem:[%s6112 + $0xe0] sm:$0x1]
    %v6452 = vld [vmem:[%s6112 + $0xe4] sm:$0xf]
    %v6453 = vld [vmem:[%s6112 + $0xe8] sm:$0xf]
    %v6454 = vld [vmem:[%s6112 + $0xec] sm:$0x1]
    %v6455 = vld [vmem:[%s6112 + $0xf0] sm:$0xf]
    %v6456 = vld [vmem:[%s6112 + $0xf4] sm:$0xf]
    %v6457 = vld [vmem:[%s6112 + $0xf8] sm:$0x1]
    %v6458 = vld [vmem:[%s6112 + $0xfc] sm:$0xf]
    %v6459 = vld [vmem:[%s6112 + $0x100] sm:$0xf]
    %v6460 = vld [vmem:[%s6112 + $0x104] sm:$0x1]
    %v6461 = vld [vmem:[%s6112 + $0x108] sm:$0xf]
    %v6462 = vld [vmem:[%s6112 + $0x10c] sm:$0xf]
    %v6463 = vld [vmem:[%s6112 + $0x110] sm:$0x1]
    %v6464 = vld [vmem:[%s6112 + $0x114] sm:$0xf]
    %v6465 = vld [vmem:[%s6112 + $0x118] sm:$0xf]
    %v6466 = vld [vmem:[%s6112 + $0x11c] sm:$0x1]
    %v6467 = vld [vmem:[%s6112 + $0x120] sm:$0xf]
    %v6468 = vld [vmem:[%s6112 + $0x124] sm:$0xf]
    %v6469 = vld [vmem:[%s6112 + $0x128] sm:$0x1]
    %v6470 = vld [vmem:[%s6112 + $0x12c] sm:$0xf]
    %v6471 = vld [vmem:[%s6112 + $0x130] sm:$0xf]
    %v6472 = vld [vmem:[%s6112 + $0x134] sm:$0x1]
    %v6473 = vld [vmem:[%s6112 + $0x138] sm:$0xf]
    %v6474 = vld [vmem:[%s6112 + $0x13c] sm:$0xf]
    %v6475 = vld [vmem:[%s6112 + $0x140] sm:$0x1]
    %v6476 = vld [vmem:[%s6112 + $0x144] sm:$0xf]
    %v6477 = vld [vmem:[%s6112 + $0x148] sm:$0xf]
    %v6478 = vld [vmem:[%s6112 + $0x14c] sm:$0x1]
    %v6479 = vld [vmem:[%s6112 + $0x150] sm:$0xf]
    %v6480 = vld [vmem:[%s6112 + $0x154] sm:$0xf]
    %v6481 = vld [vmem:[%s6112 + $0x158] sm:$0x1]
    %v6482 = vld [vmem:[%s6112 + $0x15c] sm:$0xf]
    %v6483 = vld [vmem:[%s6112 + $0x160] sm:$0xf]
    %v6484 = vld [vmem:[%s6112 + $0x164] sm:$0x1]
    %v6485 = vld [vmem:[%s6112 + $0x168] sm:$0xf]
    %v6486 = vld [vmem:[%s6112 + $0x16c] sm:$0xf]
    %v6487 = vld [vmem:[%s6112 + $0x170] sm:$0x1]
    %v6488 = vld [vmem:[%s6112 + $0x174] sm:$0xf]
    %v6489 = vld [vmem:[%s6112 + $0x178] sm:$0xf]
    %v6490 = vld [vmem:[%s6112 + $0x17c] sm:$0x1]
    %v6491 = vld [vmem:[%s6112 + $0x180] sm:$0xf]
    %v6492 = vld [vmem:[%s6112 + $0x184] sm:$0xf]
    %v6493 = vld [vmem:[%s6112 + $0x188] sm:$0x1]
    %v6494 = vld [vmem:[%s6112 + $0x18c] sm:$0xf]
    %v6495 = vld [vmem:[%s6112 + $0x190] sm:$0xf]
    %v6496 = vld [vmem:[%s6112 + $0x194] sm:$0x1]
    %v6498 = vshrl.u32 %v6401, 16
    %v6500 = vrot.slane %v6498, 4
    %v6501 = vshll.u32 %v6401, 16
    %v6503 = vrot.slane %v6501, 5
    %v6504 = vor.u32 %v6500, %v6503
    %v6505 = vrot.slane %v6504, 4
    %v6507 = vshll.u32 %v6402, 16
    %v6509 = vrot.slane %v6507, 5
    %v6510 = vsel %vm2716, %v6505, %v6509
    %v6511 = vshrl.u32 %v6402, 16
    %v6513 = vrot.slane %v6511, 4
    %v6514 = vor.u32 %v6513, %v6509
    %v6515 = vrot.slane %v6514, 4
    %v6517 = vshll.u32 %v6403, 16
    %v6519 = vrot.slane %v6517, 5
    %v6520 = vsel %vm2716, %v6515, %v6519
    %v6522 = vshrl.u32 %v6404, 16
    %v6524 = vrot.slane %v6522, 4
    %v6525 = vshll.u32 %v6404, 16
    %v6527 = vrot.slane %v6525, 5
    %v6528 = vor.u32 %v6524, %v6527
    %v6529 = vrot.slane %v6528, 4
    %v6531 = vshll.u32 %v6405, 16
    %v6533 = vrot.slane %v6531, 5
    %v6534 = vsel %vm2716, %v6529, %v6533
    %v6535 = vshrl.u32 %v6405, 16
    %v6537 = vrot.slane %v6535, 4
    %v6538 = vor.u32 %v6537, %v6533
    %v6539 = vrot.slane %v6538, 4
    %v6541 = vshll.u32 %v6406, 16
    %v6543 = vrot.slane %v6541, 5
    %v6544 = vsel %vm2716, %v6539, %v6543
    %v6546 = vshrl.u32 %v6407, 16
    %v6548 = vrot.slane %v6546, 4
    %v6549 = vshll.u32 %v6407, 16
    %v6551 = vrot.slane %v6549, 5
    %v6552 = vor.u32 %v6548, %v6551
    %v6553 = vrot.slane %v6552, 4
    %v6555 = vshll.u32 %v6408, 16
    %v6557 = vrot.slane %v6555, 5
    %v6558 = vsel %vm2716, %v6553, %v6557
    %v6559 = vshrl.u32 %v6408, 16
    %v6561 = vrot.slane %v6559, 4
    %v6562 = vor.u32 %v6561, %v6557
    %v6563 = vrot.slane %v6562, 4
    %v6565 = vshll.u32 %v6409, 16
    %v6567 = vrot.slane %v6565, 5
    %v6568 = vsel %vm2716, %v6563, %v6567
    %v6570 = vshrl.u32 %v6410, 16
    %v6572 = vrot.slane %v6570, 4
    %v6573 = vshll.u32 %v6410, 16
    %v6575 = vrot.slane %v6573, 5
    %v6576 = vor.u32 %v6572, %v6575
    %v6577 = vrot.slane %v6576, 4
    %v6579 = vshll.u32 %v6411, 16
    %v6581 = vrot.slane %v6579, 5
    %v6582 = vsel %vm2716, %v6577, %v6581
    %v6583 = vshrl.u32 %v6411, 16
    %v6585 = vrot.slane %v6583, 4
    %v6586 = vor.u32 %v6585, %v6581
    %v6587 = vrot.slane %v6586, 4
    %v6589 = vshll.u32 %v6412, 16
    %v6591 = vrot.slane %v6589, 5
    %v6592 = vsel %vm2716, %v6587, %v6591
    %v6594 = vshrl.u32 %v6413, 16
    %v6596 = vrot.slane %v6594, 4
    %v6597 = vshll.u32 %v6413, 16
    %v6599 = vrot.slane %v6597, 5
    %v6600 = vor.u32 %v6596, %v6599
    %v6601 = vrot.slane %v6600, 4
    %v6603 = vshll.u32 %v6414, 16
    %v6605 = vrot.slane %v6603, 5
    %v6606 = vsel %vm2716, %v6601, %v6605
    %v6607 = vshrl.u32 %v6414, 16
    %v6609 = vrot.slane %v6607, 4
    %v6610 = vor.u32 %v6609, %v6605
    %v6611 = vrot.slane %v6610, 4
    %v6613 = vshll.u32 %v6415, 16
    %v6615 = vrot.slane %v6613, 5
    %v6616 = vsel %vm2716, %v6611, %v6615
    %v6618 = vshrl.u32 %v6416, 16
    %v6620 = vrot.slane %v6618, 4
    %v6621 = vshll.u32 %v6416, 16
    %v6623 = vrot.slane %v6621, 5
    %v6624 = vor.u32 %v6620, %v6623
    %v6625 = vrot.slane %v6624, 4
    %v6627 = vshll.u32 %v6417, 16
    %v6629 = vrot.slane %v6627, 5
    %v6630 = vsel %vm2716, %v6625, %v6629
    %v6631 = vshrl.u32 %v6417, 16
    %v6633 = vrot.slane %v6631, 4
    %v6634 = vor.u32 %v6633, %v6629
    %v6635 = vrot.slane %v6634, 4
    %v6637 = vshll.u32 %v6418, 16
    %v6639 = vrot.slane %v6637, 5
    %v6640 = vsel %vm2716, %v6635, %v6639
    %v6642 = vshrl.u32 %v6419, 16
    %v6644 = vrot.slane %v6642, 4
    %v6645 = vshll.u32 %v6419, 16
    %v6647 = vrot.slane %v6645, 5
    %v6648 = vor.u32 %v6644, %v6647
    %v6649 = vrot.slane %v6648, 4
    %v6651 = vshll.u32 %v6420, 16
    %v6653 = vrot.slane %v6651, 5
    %v6654 = vsel %vm2716, %v6649, %v6653
    %v6655 = vshrl.u32 %v6420, 16
    %v6657 = vrot.slane %v6655, 4
    %v6658 = vor.u32 %v6657, %v6653
    %v6659 = vrot.slane %v6658, 4
    %v6661 = vshll.u32 %v6421, 16
    %v6663 = vrot.slane %v6661, 5
    %v6664 = vsel %vm2716, %v6659, %v6663
    %v6666 = vshrl.u32 %v6422, 16
    %v6668 = vrot.slane %v6666, 4
    %v6669 = vshll.u32 %v6422, 16
    %v6671 = vrot.slane %v6669, 5
    %v6672 = vor.u32 %v6668, %v6671
    %v6673 = vrot.slane %v6672, 4
    %v6675 = vshll.u32 %v6423, 16
    %v6677 = vrot.slane %v6675, 5
    %v6678 = vsel %vm2716, %v6673, %v6677
    %v6679 = vshrl.u32 %v6423, 16
    %v6681 = vrot.slane %v6679, 4
    %v6682 = vor.u32 %v6681, %v6677
    %v6683 = vrot.slane %v6682, 4
    %v6685 = vshll.u32 %v6424, 16
    %v6687 = vrot.slane %v6685, 5
    %v6688 = vsel %vm2716, %v6683, %v6687
    %v6690 = vshrl.u32 %v6425, 16
    %v6692 = vrot.slane %v6690, 4
    %v6693 = vshll.u32 %v6425, 16
    %v6695 = vrot.slane %v6693, 5
    %v6696 = vor.u32 %v6692, %v6695
    %v6697 = vrot.slane %v6696, 4
    %v6699 = vshll.u32 %v6426, 16
    %v6701 = vrot.slane %v6699, 5
    %v6702 = vsel %vm2716, %v6697, %v6701
    %v6703 = vshrl.u32 %v6426, 16
    %v6705 = vrot.slane %v6703, 4
    %v6706 = vor.u32 %v6705, %v6701
    %v6707 = vrot.slane %v6706, 4
    %v6709 = vshll.u32 %v6427, 16
    %v6711 = vrot.slane %v6709, 5
    %v6712 = vsel %vm2716, %v6707, %v6711
    %v6714 = vshrl.u32 %v6428, 16
    %v6716 = vrot.slane %v6714, 4
    %v6717 = vshll.u32 %v6428, 16
    %v6719 = vrot.slane %v6717, 5
    %v6720 = vor.u32 %v6716, %v6719
    %v6721 = vrot.slane %v6720, 4
    %v6723 = vshll.u32 %v6429, 16
    %v6725 = vrot.slane %v6723, 5
    %v6726 = vsel %vm2716, %v6721, %v6725
    %v6727 = vshrl.u32 %v6429, 16
    %v6729 = vrot.slane %v6727, 4
    %v6730 = vor.u32 %v6729, %v6725
    %v6731 = vrot.slane %v6730, 4
    %v6733 = vshll.u32 %v6430, 16
    %v6735 = vrot.slane %v6733, 5
    %v6736 = vsel %vm2716, %v6731, %v6735
    %v6738 = vshrl.u32 %v6431, 16
    %v6740 = vrot.slane %v6738, 4
    %v6741 = vshll.u32 %v6431, 16
    %v6743 = vrot.slane %v6741, 5
    %v6744 = vor.u32 %v6740, %v6743
    %v6745 = vrot.slane %v6744, 4
    %v6747 = vshll.u32 %v6432, 16
    %v6749 = vrot.slane %v6747, 5
    %v6750 = vsel %vm2716, %v6745, %v6749
    %v6751 = vshrl.u32 %v6432, 16
    %v6753 = vrot.slane %v6751, 4
    %v6754 = vor.u32 %v6753, %v6749
    %v6755 = vrot.slane %v6754, 4
    %v6757 = vshll.u32 %v6433, 16
    %v6759 = vrot.slane %v6757, 5
    %v6760 = vsel %vm2716, %v6755, %v6759
    %v6762 = vshrl.u32 %v6434, 16
    %v6764 = vrot.slane %v6762, 4
    %v6765 = vshll.u32 %v6434, 16
    %v6767 = vrot.slane %v6765, 5
    %v6768 = vor.u32 %v6764, %v6767
    %v6769 = vrot.slane %v6768, 4
    %v6771 = vshll.u32 %v6435, 16
    %v6773 = vrot.slane %v6771, 5
    %v6774 = vsel %vm2716, %v6769, %v6773
    %v6775 = vshrl.u32 %v6435, 16
    %v6777 = vrot.slane %v6775, 4
    %v6778 = vor.u32 %v6777, %v6773
    %v6779 = vrot.slane %v6778, 4
    %v6781 = vshll.u32 %v6436, 16
    %v6783 = vrot.slane %v6781, 5
    %v6784 = vsel %vm2716, %v6779, %v6783
    %v6786 = vshrl.u32 %v6437, 16
    %v6788 = vrot.slane %v6786, 4
    %v6789 = vshll.u32 %v6437, 16
    %v6791 = vrot.slane %v6789, 5
    %v6792 = vor.u32 %v6788, %v6791
    %v6793 = vrot.slane %v6792, 4
    %v6795 = vshll.u32 %v6438, 16
    %v6797 = vrot.slane %v6795, 5
    %v6798 = vsel %vm2716, %v6793, %v6797
    %v6799 = vshrl.u32 %v6438, 16
    %v6801 = vrot.slane %v6799, 4
    %v6802 = vor.u32 %v6801, %v6797
    %v6803 = vrot.slane %v6802, 4
    %v6805 = vshll.u32 %v6439, 16
    %v6807 = vrot.slane %v6805, 5
    %v6808 = vsel %vm2716, %v6803, %v6807
    %v6810 = vshrl.u32 %v6440, 16
    %v6812 = vrot.slane %v6810, 4
    %v6813 = vshll.u32 %v6440, 16
    %v6815 = vrot.slane %v6813, 5
    %v6816 = vor.u32 %v6812, %v6815
    %v6817 = vrot.slane %v6816, 4
    %v6819 = vshll.u32 %v6441, 16
    %v6821 = vrot.slane %v6819, 5
    %v6822 = vsel %vm2716, %v6817, %v6821
    %v6823 = vshrl.u32 %v6441, 16
    %v6825 = vrot.slane %v6823, 4
    %v6826 = vor.u32 %v6825, %v6821
    %v6827 = vrot.slane %v6826, 4
    %v6829 = vshll.u32 %v6442, 16
    %v6831 = vrot.slane %v6829, 5
    %v6832 = vsel %vm2716, %v6827, %v6831
    %v6834 = vshrl.u32 %v6443, 16
    %v6836 = vrot.slane %v6834, 4
    %v6837 = vshll.u32 %v6443, 16
    %v6839 = vrot.slane %v6837, 5
    %v6840 = vor.u32 %v6836, %v6839
    %v6841 = vrot.slane %v6840, 4
    %v6843 = vshll.u32 %v6444, 16
    %v6845 = vrot.slane %v6843, 5
    %v6846 = vsel %vm2716, %v6841, %v6845
    %v6847 = vshrl.u32 %v6444, 16
    %v6849 = vrot.slane %v6847, 4
    %v6850 = vor.u32 %v6849, %v6845
    %v6851 = vrot.slane %v6850, 4
    %v6853 = vshll.u32 %v6445, 16
    %v6855 = vrot.slane %v6853, 5
    %v6856 = vsel %vm2716, %v6851, %v6855
    %v6858 = vshrl.u32 %v6446, 16
    %v6860 = vrot.slane %v6858, 4
    %v6861 = vshll.u32 %v6446, 16
    %v6863 = vrot.slane %v6861, 5
    %v6864 = vor.u32 %v6860, %v6863
    %v6865 = vrot.slane %v6864, 4
    %v6867 = vshll.u32 %v6447, 16
    %v6869 = vrot.slane %v6867, 5
    %v6870 = vsel %vm2716, %v6865, %v6869
    %v6871 = vshrl.u32 %v6447, 16
    %v6873 = vrot.slane %v6871, 4
    %v6874 = vor.u32 %v6873, %v6869
    %v6875 = vrot.slane %v6874, 4
    %v6877 = vshll.u32 %v6448, 16
    %v6879 = vrot.slane %v6877, 5
    %v6880 = vsel %vm2716, %v6875, %v6879
    %v6882 = vshrl.u32 %v6449, 16
    %v6884 = vrot.slane %v6882, 4
    %v6885 = vshll.u32 %v6449, 16
    %v6887 = vrot.slane %v6885, 5
    %v6888 = vor.u32 %v6884, %v6887
    %v6889 = vrot.slane %v6888, 4
    %v6891 = vshll.u32 %v6450, 16
    %v6893 = vrot.slane %v6891, 5
    %v6894 = vsel %vm2716, %v6889, %v6893
    %v6895 = vshrl.u32 %v6450, 16
    %v6897 = vrot.slane %v6895, 4
    %v6898 = vor.u32 %v6897, %v6893
    %v6899 = vrot.slane %v6898, 4
    %v6901 = vshll.u32 %v6451, 16
    %v6903 = vrot.slane %v6901, 5
    %v6904 = vsel %vm2716, %v6899, %v6903
    %v6906 = vshrl.u32 %v6452, 16
    %v6908 = vrot.slane %v6906, 4
    %v6909 = vshll.u32 %v6452, 16
    %v6911 = vrot.slane %v6909, 5
    %v6912 = vor.u32 %v6908, %v6911
    %v6913 = vrot.slane %v6912, 4
    %v6915 = vshll.u32 %v6453, 16
    %v6917 = vrot.slane %v6915, 5
    %v6918 = vsel %vm2716, %v6913, %v6917
    %v6919 = vshrl.u32 %v6453, 16
    %v6921 = vrot.slane %v6919, 4
    %v6922 = vor.u32 %v6921, %v6917
    %v6923 = vrot.slane %v6922, 4
    %v6925 = vshll.u32 %v6454, 16
    %v6927 = vrot.slane %v6925, 5
    %v6928 = vsel %vm2716, %v6923, %v6927
    %v6930 = vshrl.u32 %v6455, 16
    %v6932 = vrot.slane %v6930, 4
    %v6933 = vshll.u32 %v6455, 16
    %v6935 = vrot.slane %v6933, 5
    %v6936 = vor.u32 %v6932, %v6935
    %v6937 = vrot.slane %v6936, 4
    %v6939 = vshll.u32 %v6456, 16
    %v6941 = vrot.slane %v6939, 5
    %v6942 = vsel %vm2716, %v6937, %v6941
    %v6943 = vshrl.u32 %v6456, 16
    %v6945 = vrot.slane %v6943, 4
    %v6946 = vor.u32 %v6945, %v6941
    %v6947 = vrot.slane %v6946, 4
    %v6949 = vshll.u32 %v6457, 16
    %v6951 = vrot.slane %v6949, 5
    %v6952 = vsel %vm2716, %v6947, %v6951
    %v6954 = vshrl.u32 %v6458, 16
    %v6956 = vrot.slane %v6954, 4
    %v6957 = vshll.u32 %v6458, 16
    %v6959 = vrot.slane %v6957, 5
    %v6960 = vor.u32 %v6956, %v6959
    %v6961 = vrot.slane %v6960, 4
    %v6963 = vshll.u32 %v6459, 16
    %v6965 = vrot.slane %v6963, 5
    %v6966 = vsel %vm2716, %v6961, %v6965
    %v6967 = vshrl.u32 %v6459, 16
    %v6969 = vrot.slane %v6967, 4
    %v6970 = vor.u32 %v6969, %v6965
    %v6971 = vrot.slane %v6970, 4
    %v6973 = vshll.u32 %v6460, 16
    %v6975 = vrot.slane %v6973, 5
    %v6976 = vsel %vm2716, %v6971, %v6975
    %v6978 = vshrl.u32 %v6461, 16
    %v6980 = vrot.slane %v6978, 4
    %v6981 = vshll.u32 %v6461, 16
    %v6983 = vrot.slane %v6981, 5
    %v6984 = vor.u32 %v6980, %v6983
    %v6985 = vrot.slane %v6984, 4
    %v6987 = vshll.u32 %v6462, 16
    %v6989 = vrot.slane %v6987, 5
    %v6990 = vsel %vm2716, %v6985, %v6989
    %v6991 = vshrl.u32 %v6462, 16
    %v6993 = vrot.slane %v6991, 4
    %v6994 = vor.u32 %v6993, %v6989
    %v6995 = vrot.slane %v6994, 4
    %v6997 = vshll.u32 %v6463, 16
    %v6999 = vrot.slane %v6997, 5
    %v7000 = vsel %vm2716, %v6995, %v6999
    %v7002 = vshrl.u32 %v6464, 16
    %v7004 = vrot.slane %v7002, 4
    %v7005 = vshll.u32 %v6464, 16
    %v7007 = vrot.slane %v7005, 5
    %v7008 = vor.u32 %v7004, %v7007
    %v7009 = vrot.slane %v7008, 4
    %v7011 = vshll.u32 %v6465, 16
    %v7013 = vrot.slane %v7011, 5
    %v7014 = vsel %vm2716, %v7009, %v7013
    %v7015 = vshrl.u32 %v6465, 16
    %v7017 = vrot.slane %v7015, 4
    %v7018 = vor.u32 %v7017, %v7013
    %v7019 = vrot.slane %v7018, 4
    %v7021 = vshll.u32 %v6466, 16
    %v7023 = vrot.slane %v7021, 5
    %v7024 = vsel %vm2716, %v7019, %v7023
    %v7026 = vshrl.u32 %v6467, 16
    %v7028 = vrot.slane %v7026, 4
    %v7029 = vshll.u32 %v6467, 16
    %v7031 = vrot.slane %v7029, 5
    %v7032 = vor.u32 %v7028, %v7031
    %v7033 = vrot.slane %v7032, 4
    %v7035 = vshll.u32 %v6468, 16
    %v7037 = vrot.slane %v7035, 5
    %v7038 = vsel %vm2716, %v7033, %v7037
    %v7039 = vshrl.u32 %v6468, 16
    %v7041 = vrot.slane %v7039, 4
    %v7042 = vor.u32 %v7041, %v7037
    %v7043 = vrot.slane %v7042, 4
    %v7045 = vshll.u32 %v6469, 16
    %v7047 = vrot.slane %v7045, 5
    %v7048 = vsel %vm2716, %v7043, %v7047
    %v7050 = vshrl.u32 %v6470, 16
    %v7052 = vrot.slane %v7050, 4
    %v7053 = vshll.u32 %v6470, 16
    %v7055 = vrot.slane %v7053, 5
    %v7056 = vor.u32 %v7052, %v7055
    %v7057 = vrot.slane %v7056, 4
    %v7059 = vshll.u32 %v6471, 16
    %v7061 = vrot.slane %v7059, 5
    %v7062 = vsel %vm2716, %v7057, %v7061
    %v7063 = vshrl.u32 %v6471, 16
    %v7065 = vrot.slane %v7063, 4
    %v7066 = vor.u32 %v7065, %v7061
    %v7067 = vrot.slane %v7066, 4
    %v7069 = vshll.u32 %v6472, 16
    %v7071 = vrot.slane %v7069, 5
    %v7072 = vsel %vm2716, %v7067, %v7071
    %v7074 = vshrl.u32 %v6473, 16
    %v7076 = vrot.slane %v7074, 4
    %v7077 = vshll.u32 %v6473, 16
    %v7079 = vrot.slane %v7077, 5
    %v7080 = vor.u32 %v7076, %v7079
    %v7081 = vrot.slane %v7080, 4
    %v7083 = vshll.u32 %v6474, 16
    %v7085 = vrot.slane %v7083, 5
    %v7086 = vsel %vm2716, %v7081, %v7085
    %v7087 = vshrl.u32 %v6474, 16
    %v7089 = vrot.slane %v7087, 4
    %v7090 = vor.u32 %v7089, %v7085
    %v7091 = vrot.slane %v7090, 4
    %v7093 = vshll.u32 %v6475, 16
    %v7095 = vrot.slane %v7093, 5
    %v7096 = vsel %vm2716, %v7091, %v7095
    %v7098 = vshrl.u32 %v6476, 16
    %v7100 = vrot.slane %v7098, 4
    %v7101 = vshll.u32 %v6476, 16
    %v7103 = vrot.slane %v7101, 5
    %v7104 = vor.u32 %v7100, %v7103
    %v7105 = vrot.slane %v7104, 4
    %v7107 = vshll.u32 %v6477, 16
    %v7109 = vrot.slane %v7107, 5
    %v7110 = vsel %vm2716, %v7105, %v7109
    %v7111 = vshrl.u32 %v6477, 16
    %v7113 = vrot.slane %v7111, 4
    %v7114 = vor.u32 %v7113, %v7109
    %v7115 = vrot.slane %v7114, 4
    %v7117 = vshll.u32 %v6478, 16
    %v7119 = vrot.slane %v7117, 5
    %v7120 = vsel %vm2716, %v7115, %v7119
    %v7122 = vshrl.u32 %v6479, 16
    %v7124 = vrot.slane %v7122, 4
    %v7125 = vshll.u32 %v6479, 16
    %v7127 = vrot.slane %v7125, 5
    %v7128 = vor.u32 %v7124, %v7127
    %v7129 = vrot.slane %v7128, 4
    %v7131 = vshll.u32 %v6480, 16
    %v7133 = vrot.slane %v7131, 5
    %v7134 = vsel %vm2716, %v7129, %v7133
    %v7135 = vshrl.u32 %v6480, 16
    %v7137 = vrot.slane %v7135, 4
    %v7138 = vor.u32 %v7137, %v7133
    %v7139 = vrot.slane %v7138, 4
    %v7141 = vshll.u32 %v6481, 16
    %v7143 = vrot.slane %v7141, 5
    %v7144 = vsel %vm2716, %v7139, %v7143
    %v7146 = vshrl.u32 %v6482, 16
    %v7148 = vrot.slane %v7146, 4
    %v7149 = vshll.u32 %v6482, 16
    %v7151 = vrot.slane %v7149, 5
    %v7152 = vor.u32 %v7148, %v7151
    %v7153 = vrot.slane %v7152, 4
    %v7155 = vshll.u32 %v6483, 16
    %v7157 = vrot.slane %v7155, 5
    %v7158 = vsel %vm2716, %v7153, %v7157
    %v7159 = vshrl.u32 %v6483, 16
    %v7161 = vrot.slane %v7159, 4
    %v7162 = vor.u32 %v7161, %v7157
    %v7163 = vrot.slane %v7162, 4
    %v7165 = vshll.u32 %v6484, 16
    %v7167 = vrot.slane %v7165, 5
    %v7168 = vsel %vm2716, %v7163, %v7167
    %v7170 = vshrl.u32 %v6485, 16
    %v7172 = vrot.slane %v7170, 4
    %v7173 = vshll.u32 %v6485, 16
    %v7175 = vrot.slane %v7173, 5
    %v7176 = vor.u32 %v7172, %v7175
    %v7177 = vrot.slane %v7176, 4
    %v7179 = vshll.u32 %v6486, 16
    %v7181 = vrot.slane %v7179, 5
    %v7182 = vsel %vm2716, %v7177, %v7181
    %v7183 = vshrl.u32 %v6486, 16
    %v7185 = vrot.slane %v7183, 4
    %v7186 = vor.u32 %v7185, %v7181
    %v7187 = vrot.slane %v7186, 4
    %v7189 = vshll.u32 %v6487, 16
    %v7191 = vrot.slane %v7189, 5
    %v7192 = vsel %vm2716, %v7187, %v7191
    %v7194 = vshrl.u32 %v6488, 16
    %v7196 = vrot.slane %v7194, 4
    %v7197 = vshll.u32 %v6488, 16
    %v7199 = vrot.slane %v7197, 5
    %v7200 = vor.u32 %v7196, %v7199
    %v7201 = vrot.slane %v7200, 4
    %v7203 = vshll.u32 %v6489, 16
    %v7205 = vrot.slane %v7203, 5
    %v7206 = vsel %vm2716, %v7201, %v7205
    %v7207 = vshrl.u32 %v6489, 16
    %v7209 = vrot.slane %v7207, 4
    %v7210 = vor.u32 %v7209, %v7205
    %v7211 = vrot.slane %v7210, 4
    %v7213 = vshll.u32 %v6490, 16
    %v7215 = vrot.slane %v7213, 5
    %v7216 = vsel %vm2716, %v7211, %v7215
    %v7218 = vshrl.u32 %v6491, 16
    %v7220 = vrot.slane %v7218, 4
    %v7221 = vshll.u32 %v6491, 16
    %v7223 = vrot.slane %v7221, 5
    %v7224 = vor.u32 %v7220, %v7223
    %v7225 = vrot.slane %v7224, 4
    %v7227 = vshll.u32 %v6492, 16
    %v7229 = vrot.slane %v7227, 5
    %v7230 = vsel %vm2716, %v7225, %v7229
    %v7231 = vshrl.u32 %v6492, 16
    %v7233 = vrot.slane %v7231, 4
    %v7234 = vor.u32 %v7233, %v7229
    %v7235 = vrot.slane %v7234, 4
    %v7237 = vshll.u32 %v6493, 16
    %v7239 = vrot.slane %v7237, 5
    %v7240 = vsel %vm2716, %v7235, %v7239
    %v7242 = vshrl.u32 %v6494, 16
    %v7244 = vrot.slane %v7242, 4
    %v7245 = vshll.u32 %v6494, 16
    %v7247 = vrot.slane %v7245, 5
    %v7248 = vor.u32 %v7244, %v7247
    %v7249 = vrot.slane %v7248, 4
    %v7251 = vshll.u32 %v6495, 16
    %v7253 = vrot.slane %v7251, 5
    %v7254 = vsel %vm2716, %v7249, %v7253
    %v7255 = vshrl.u32 %v6495, 16
    %v7257 = vrot.slane %v7255, 4
    %v7258 = vor.u32 %v7257, %v7253
    %v7259 = vrot.slane %v7258, 4
    %v7261 = vshll.u32 %v6496, 16
    %v7263 = vrot.slane %v7261, 5
    %v7264 = vsel %vm2716, %v7259, %v7263
    %v7265 = vunpack.c.l.b16 %v6510
    %v7266 = vunpack.c.l.b16 %v6520
    %v7267 = vunpack.c.l.b16 %v6534
    %v7268 = vunpack.c.l.b16 %v6544
    %v7269 = vunpack.c.l.b16 %v6558
    %v7270 = vunpack.c.l.b16 %v6568
    %v7271 = vunpack.c.l.b16 %v6582
    %v7272 = vunpack.c.l.b16 %v6592
    %v7273 = vunpack.c.l.b16 %v6606
    %v7274 = vunpack.c.l.b16 %v6616
    %v7275 = vunpack.c.l.b16 %v6630
    %v7276 = vunpack.c.l.b16 %v6640
    %v7277 = vunpack.c.l.b16 %v6654
    %v7278 = vunpack.c.l.b16 %v6664
    %v7279 = vunpack.c.l.b16 %v6678
    %v7280 = vunpack.c.l.b16 %v6688
    %v7281 = vunpack.c.l.b16 %v6702
    %v7282 = vunpack.c.l.b16 %v6712
    %v7283 = vunpack.c.l.b16 %v6726
    %v7284 = vunpack.c.l.b16 %v6736
    %v7285 = vunpack.c.l.b16 %v6750
    %v7286 = vunpack.c.l.b16 %v6760
    %v7287 = vunpack.c.l.b16 %v6774
    %v7288 = vunpack.c.l.b16 %v6784
    %v7289 = vunpack.c.l.b16 %v6798
    %v7290 = vunpack.c.l.b16 %v6808
    %v7291 = vunpack.c.l.b16 %v6822
    %v7292 = vunpack.c.l.b16 %v6832
    %v7293 = vunpack.c.l.b16 %v6846
    %v7294 = vunpack.c.l.b16 %v6856
    %v7295 = vunpack.c.l.b16 %v6870
    %v7296 = vunpack.c.l.b16 %v6880
    %v7297 = vunpack.c.l.b16 %v6894
    %v7298 = vunpack.c.l.b16 %v6904
    %v7299 = vunpack.c.l.b16 %v6918
    %v7300 = vunpack.c.l.b16 %v6928
    %v7301 = vunpack.c.l.b16 %v6942
    %v7302 = vunpack.c.l.b16 %v6952
    %v7303 = vunpack.c.l.b16 %v6966
    %v7304 = vunpack.c.l.b16 %v6976
    %v7305 = vunpack.c.l.b16 %v6990
    %v7306 = vunpack.c.l.b16 %v7000
    %v7307 = vunpack.c.l.b16 %v7014
    %v7308 = vunpack.c.l.b16 %v7024
    %v7309 = vunpack.c.l.b16 %v7038
    %v7310 = vunpack.c.l.b16 %v7048
    %v7311 = vunpack.c.l.b16 %v7062
    %v7312 = vunpack.c.l.b16 %v7072
    %v7313 = vunpack.c.l.b16 %v7086
    %v7314 = vunpack.c.l.b16 %v7096
    %v7315 = vunpack.c.l.b16 %v7110
    %v7316 = vunpack.c.l.b16 %v7120
    %v7317 = vunpack.c.l.b16 %v7134
    %v7318 = vunpack.c.l.b16 %v7144
    %v7319 = vunpack.c.l.b16 %v7158
    %v7320 = vunpack.c.l.b16 %v7168
    %v7321 = vunpack.c.l.b16 %v7182
    %v7322 = vunpack.c.l.b16 %v7192
    %v7323 = vunpack.c.l.b16 %v7206
    %v7324 = vunpack.c.l.b16 %v7216
    %v7325 = vunpack.c.l.b16 %v7230
    %v7326 = vunpack.c.l.b16 %v7240
    %v7327 = vunpack.c.l.b16 %v7254
    %v7328 = vunpack.c.l.b16 %v7264
    %v7329 = vpack.c.b16 %v7266, %v7265
    %v7330 = vpack.c.b16 %v7268, %v7267
    %v7331 = vpack.c.b16 %v7270, %v7269
    %v7332 = vpack.c.b16 %v7272, %v7271
    %v7333 = vpack.c.b16 %v7274, %v7273
    %v7334 = vpack.c.b16 %v7276, %v7275
    %v7335 = vpack.c.b16 %v7278, %v7277
    %v7336 = vpack.c.b16 %v7280, %v7279
    %v7337 = vpack.c.b16 %v7282, %v7281
    %v7338 = vpack.c.b16 %v7284, %v7283
    %v7339 = vpack.c.b16 %v7286, %v7285
    %v7340 = vpack.c.b16 %v7288, %v7287
    %v7341 = vpack.c.b16 %v7290, %v7289
    %v7342 = vpack.c.b16 %v7292, %v7291
    %v7343 = vpack.c.b16 %v7294, %v7293
    %v7344 = vpack.c.b16 %v7296, %v7295
    %v7345 = vpack.c.b16 %v7298, %v7297
    %v7346 = vpack.c.b16 %v7300, %v7299
    %v7347 = vpack.c.b16 %v7302, %v7301
    %v7348 = vpack.c.b16 %v7304, %v7303
    %v7349 = vpack.c.b16 %v7306, %v7305
    %v7350 = vpack.c.b16 %v7308, %v7307
    %v7351 = vpack.c.b16 %v7310, %v7309
    %v7352 = vpack.c.b16 %v7312, %v7311
    %v7353 = vpack.c.b16 %v7314, %v7313
    %v7354 = vpack.c.b16 %v7316, %v7315
    %v7355 = vpack.c.b16 %v7318, %v7317
    %v7356 = vpack.c.b16 %v7320, %v7319
    %v7357 = vpack.c.b16 %v7322, %v7321
    %v7358 = vpack.c.b16 %v7324, %v7323
    %v7359 = vpack.c.b16 %v7326, %v7325
    %v7360 = vpack.c.b16 %v7328, %v7327
    %7393 = vst [vmem:[#allocation3 + $0x38] sm:$0xff] %v7329
    %7394 = vst [vmem:[#allocation3 + $0x80] sm:$0xff] %v7330
    %7395 = vst [vmem:[#allocation3 + $0xc8] sm:$0xff] %v7331
    %7396 = vst [vmem:[#allocation3 + $0x110] sm:$0xff] %v7332
    %7397 = vst [vmem:[#allocation3 + $0x158] sm:$0xff] %v7333
    %7398 = vst [vmem:[#allocation3 + $0x1a0] sm:$0xff] %v7334
    %7399 = vst [vmem:[#allocation3 + $0x1e8] sm:$0xff] %v7335
    %7400 = vst [vmem:[#allocation3 + $0x230] sm:$0xff] %v7336
    %7401 = vst [vmem:[#allocation3 + $0x278] sm:$0xff] %v7337
    %7402 = vst [vmem:[#allocation3 + $0x2c0] sm:$0xff] %v7338
    %7403 = vst [vmem:[#allocation3 + $0x308] sm:$0xff] %v7339
    %7404 = vst [vmem:[#allocation3 + $0x350] sm:$0xff] %v7340
    %7405 = vst [vmem:[#allocation3 + $0x398] sm:$0xff] %v7341
    %7406 = vst [vmem:[#allocation3 + $0x3e0] sm:$0xff] %v7342
    %7407 = vst [vmem:[#allocation3 + $0x428] sm:$0xff] %v7343
    %7408 = vst [vmem:[#allocation3 + $0x470] sm:$0xff] %v7344
    %7409 = vst [vmem:[#allocation3 + $0x4b8] sm:$0xff] %v7345
    %7410 = vst [vmem:[#allocation3 + $0x500] sm:$0xff] %v7346
    %7411 = vst [vmem:[#allocation3 + $0x548] sm:$0xff] %v7347
    %7412 = vst [vmem:[#allocation3 + $0x590] sm:$0xff] %v7348
    %7413 = vst [vmem:[#allocation3 + $0x5d8] sm:$0xff] %v7349
    %7414 = vst [vmem:[#allocation3 + $0x620] sm:$0xff] %v7350
    %7415 = vst [vmem:[#allocation3 + $0x668] sm:$0xff] %v7351
    %7416 = vst [vmem:[#allocation3 + $0x6b0] sm:$0xff] %v7352
    %7417 = vst [vmem:[#allocation3 + $0x6f8] sm:$0xff] %v7353
    %7418 = vst [vmem:[#allocation3 + $0x740] sm:$0xff] %v7354
    %7419 = vst [vmem:[#allocation3 + $0x788] sm:$0xff] %v7355
    %7420 = vst [vmem:[#allocation3 + $0x7d0] sm:$0xff] %v7356
    %7421 = vst [vmem:[#allocation3 + $0x818] sm:$0xff] %v7357
    %7422 = vst [vmem:[#allocation3 + $0x860] sm:$0xff] %v7358
    %7423 = vst [vmem:[#allocation3 + $0x8a8] sm:$0xff] %v7359
    %7424 = vst [vmem:[#allocation3 + $0x8f0] sm:$0xff] %v7360
    %v7425 = vld [vmem:[%s6112] sm:$0xe]
    %v7426 = vld [vmem:[%s6112 + $0x4] sm:$0xf]
    %v7427 = vld [vmem:[%s6112 + $0x8] sm:$0x1]
    %v7428 = vld [vmem:[%s6112 + $0xc] sm:$0xe]
    %v7429 = vld [vmem:[%s6112 + $0x10] sm:$0xf]
    %v7430 = vld [vmem:[%s6112 + $0x14] sm:$0x1]
    %v7431 = vld [vmem:[%s6112 + $0x18] sm:$0xe]
    %v7432 = vld [vmem:[%s6112 + $0x1c] sm:$0xf]
    %v7433 = vld [vmem:[%s6112 + $0x20] sm:$0x1]
    %v7434 = vld [vmem:[%s6112 + $0x24] sm:$0xe]
    %v7435 = vld [vmem:[%s6112 + $0x28] sm:$0xf]
    %v7436 = vld [vmem:[%s6112 + $0x2c] sm:$0x1]
    %v7437 = vld [vmem:[%s6112 + $0x30] sm:$0xe]
    %v7438 = vld [vmem:[%s6112 + $0x34] sm:$0xf]
    %v7439 = vld [vmem:[%s6112 + $0x38] sm:$0x1]
    %v7440 = vld [vmem:[%s6112 + $0x3c] sm:$0xe]
    %v7441 = vld [vmem:[%s6112 + $0x40] sm:$0xf]
    %v7442 = vld [vmem:[%s6112 + $0x44] sm:$0x1]
    %v7443 = vld [vmem:[%s6112 + $0x48] sm:$0xe]
    %v7444 = vld [vmem:[%s6112 + $0x4c] sm:$0xf]
    %v7445 = vld [vmem:[%s6112 + $0x50] sm:$0x1]
    %v7446 = vld [vmem:[%s6112 + $0x54] sm:$0xe]
    %v7447 = vld [vmem:[%s6112 + $0x58] sm:$0xf]
    %v7448 = vld [vmem:[%s6112 + $0x5c] sm:$0x1]
    %v7449 = vld [vmem:[%s6112 + $0x60] sm:$0xe]
    %v7450 = vld [vmem:[%s6112 + $0x64] sm:$0xf]
    %v7451 = vld [vmem:[%s6112 + $0x68] sm:$0x1]
    %v7452 = vld [vmem:[%s6112 + $0x6c] sm:$0xe]
    %v7453 = vld [vmem:[%s6112 + $0x70] sm:$0xf]
    %v7454 = vld [vmem:[%s6112 + $0x74] sm:$0x1]
    %v7455 = vld [vmem:[%s6112 + $0x78] sm:$0xe]
    %v7456 = vld [vmem:[%s6112 + $0x7c] sm:$0xf]
    %v7457 = vld [vmem:[%s6112 + $0x80] sm:$0x1]
    %v7458 = vld [vmem:[%s6112 + $0x84] sm:$0xe]
    %v7459 = vld [vmem:[%s6112 + $0x88] sm:$0xf]
    %v7460 = vld [vmem:[%s6112 + $0x8c] sm:$0x1]
    %v7461 = vld [vmem:[%s6112 + $0x90] sm:$0xe]
    %v7462 = vld [vmem:[%s6112 + $0x94] sm:$0xf]
    %v7463 = vld [vmem:[%s6112 + $0x98] sm:$0x1]
    %v7464 = vld [vmem:[%s6112 + $0x9c] sm:$0xe]
    %v7465 = vld [vmem:[%s6112 + $0xa0] sm:$0xf]
    %v7466 = vld [vmem:[%s6112 + $0xa4] sm:$0x1]
    %v7467 = vld [vmem:[%s6112 + $0xa8] sm:$0xe]
    %v7468 = vld [vmem:[%s6112 + $0xac] sm:$0xf]
    %v7469 = vld [vmem:[%s6112 + $0xb0] sm:$0x1]
    %v7470 = vld [vmem:[%s6112 + $0xb4] sm:$0xe]
    %v7471 = vld [vmem:[%s6112 + $0xb8] sm:$0xf]
    %v7472 = vld [vmem:[%s6112 + $0xbc] sm:$0x1]
    %v7473 = vld [vmem:[%s6112 + $0xd8] sm:$0xe]
    %v7474 = vld [vmem:[%s6112 + $0xdc] sm:$0xf]
    %v7475 = vld [vmem:[%s6112 + $0xe0] sm:$0x1]
    %v7476 = vld [vmem:[%s6112 + $0xe4] sm:$0xe]
    %v7477 = vld [vmem:[%s6112 + $0xe8] sm:$0xf]
    %v7478 = vld [vmem:[%s6112 + $0xec] sm:$0x1]
    %v7479 = vld [vmem:[%s6112 + $0xf0] sm:$0xe]
    %v7480 = vld [vmem:[%s6112 + $0xf4] sm:$0xf]
    %v7481 = vld [vmem:[%s6112 + $0xf8] sm:$0x1]
    %v7482 = vld [vmem:[%s6112 + $0xfc] sm:$0xe]
    %v7483 = vld [vmem:[%s6112 + $0x100] sm:$0xf]
    %v7484 = vld [vmem:[%s6112 + $0x104] sm:$0x1]
    %v7485 = vld [vmem:[%s6112 + $0x108] sm:$0xe]
    %v7486 = vld [vmem:[%s6112 + $0x10c] sm:$0xf]
    %v7487 = vld [vmem:[%s6112 + $0x110] sm:$0x1]
    %v7488 = vld [vmem:[%s6112 + $0x114] sm:$0xe]
    %v7489 = vld [vmem:[%s6112 + $0x118] sm:$0xf]
    %v7490 = vld [vmem:[%s6112 + $0x11c] sm:$0x1]
    %v7491 = vld [vmem:[%s6112 + $0x120] sm:$0xe]
    %v7492 = vld [vmem:[%s6112 + $0x124] sm:$0xf]
    %v7493 = vld [vmem:[%s6112 + $0x128] sm:$0x1]
    %v7494 = vld [vmem:[%s6112 + $0x12c] sm:$0xe]
    %v7495 = vld [vmem:[%s6112 + $0x130] sm:$0xf]
    %v7496 = vld [vmem:[%s6112 + $0x134] sm:$0x1]
    %v7497 = vld [vmem:[%s6112 + $0x138] sm:$0xe]
    %v7498 = vld [vmem:[%s6112 + $0x13c] sm:$0xf]
    %v7499 = vld [vmem:[%s6112 + $0x140] sm:$0x1]
    %v7500 = vld [vmem:[%s6112 + $0x144] sm:$0xe]
    %v7501 = vld [vmem:[%s6112 + $0x148] sm:$0xf]
    %v7502 = vld [vmem:[%s6112 + $0x14c] sm:$0x1]
    %v7503 = vld [vmem:[%s6112 + $0x150] sm:$0xe]
    %v7504 = vld [vmem:[%s6112 + $0x154] sm:$0xf]
    %v7505 = vld [vmem:[%s6112 + $0x158] sm:$0x1]
    %v7506 = vld [vmem:[%s6112 + $0x15c] sm:$0xe]
    %v7507 = vld [vmem:[%s6112 + $0x160] sm:$0xf]
    %v7508 = vld [vmem:[%s6112 + $0x164] sm:$0x1]
    %v7509 = vld [vmem:[%s6112 + $0x168] sm:$0xe]
    %v7510 = vld [vmem:[%s6112 + $0x16c] sm:$0xf]
    %v7511 = vld [vmem:[%s6112 + $0x170] sm:$0x1]
    %v7512 = vld [vmem:[%s6112 + $0x174] sm:$0xe]
    %v7513 = vld [vmem:[%s6112 + $0x178] sm:$0xf]
    %v7514 = vld [vmem:[%s6112 + $0x17c] sm:$0x1]
    %v7515 = vld [vmem:[%s6112 + $0x180] sm:$0xe]
    %v7516 = vld [vmem:[%s6112 + $0x184] sm:$0xf]
    %v7517 = vld [vmem:[%s6112 + $0x188] sm:$0x1]
    %v7518 = vld [vmem:[%s6112 + $0x18c] sm:$0xe]
    %v7519 = vld [vmem:[%s6112 + $0x190] sm:$0xf]
    %v7520 = vld [vmem:[%s6112 + $0x194] sm:$0x1]
    %v7617 = vrot.slane %v7425, 5
    %v7618 = vrot.slane %v7617, 4
    %v7619 = vrot.slane %v7426, 5
    %v7620 = vsel %vm3839, %v7618, %v7619
    %v7621 = vrot.slane %v7619, 4
    %v7622 = vrot.slane %v7427, 5
    %v7623 = vsel %vm3839, %v7621, %v7622
    %v7624 = vrot.slane %v7428, 5
    %v7625 = vrot.slane %v7624, 4
    %v7626 = vrot.slane %v7429, 5
    %v7627 = vsel %vm3839, %v7625, %v7626
    %v7628 = vrot.slane %v7626, 4
    %v7629 = vrot.slane %v7430, 5
    %v7630 = vsel %vm3839, %v7628, %v7629
    %v7631 = vrot.slane %v7431, 5
    %v7632 = vrot.slane %v7631, 4
    %v7633 = vrot.slane %v7432, 5
    %v7634 = vsel %vm3839, %v7632, %v7633
    %v7635 = vrot.slane %v7633, 4
    %v7636 = vrot.slane %v7433, 5
    %v7637 = vsel %vm3839, %v7635, %v7636
    %v7638 = vrot.slane %v7434, 5
    %v7639 = vrot.slane %v7638, 4
    %v7640 = vrot.slane %v7435, 5
    %v7641 = vsel %vm3839, %v7639, %v7640
    %v7642 = vrot.slane %v7640, 4
    %v7643 = vrot.slane %v7436, 5
    %v7644 = vsel %vm3839, %v7642, %v7643
    %v7645 = vrot.slane %v7437, 5
    %v7646 = vrot.slane %v7645, 4
    %v7647 = vrot.slane %v7438, 5
    %v7648 = vsel %vm3839, %v7646, %v7647
    %v7649 = vrot.slane %v7647, 4
    %v7650 = vrot.slane %v7439, 5
    %v7651 = vsel %vm3839, %v7649, %v7650
    %v7652 = vrot.slane %v7440, 5
    %v7653 = vrot.slane %v7652, 4
    %v7654 = vrot.slane %v7441, 5
    %v7655 = vsel %vm3839, %v7653, %v7654
    %v7656 = vrot.slane %v7654, 4
    %v7657 = vrot.slane %v7442, 5
    %v7658 = vsel %vm3839, %v7656, %v7657
    %v7659 = vrot.slane %v7443, 5
    %v7660 = vrot.slane %v7659, 4
    %v7661 = vrot.slane %v7444, 5
    %v7662 = vsel %vm3839, %v7660, %v7661
    %v7663 = vrot.slane %v7661, 4
    %v7664 = vrot.slane %v7445, 5
    %v7665 = vsel %vm3839, %v7663, %v7664
    %v7666 = vrot.slane %v7446, 5
    %v7667 = vrot.slane %v7666, 4
    %v7668 = vrot.slane %v7447, 5
    %v7669 = vsel %vm3839, %v7667, %v7668
    %v7670 = vrot.slane %v7668, 4
    %v7671 = vrot.slane %v7448, 5
    %v7672 = vsel %vm3839, %v7670, %v7671
    %v7673 = vrot.slane %v7449, 5
    %v7674 = vrot.slane %v7673, 4
    %v7675 = vrot.slane %v7450, 5
    %v7676 = vsel %vm3839, %v7674, %v7675
    %v7677 = vrot.slane %v7675, 4
    %v7678 = vrot.slane %v7451, 5
    %v7679 = vsel %vm3839, %v7677, %v7678
    %v7680 = vrot.slane %v7452, 5
    %v7681 = vrot.slane %v7680, 4
    %v7682 = vrot.slane %v7453, 5
    %v7683 = vsel %vm3839, %v7681, %v7682
    %v7684 = vrot.slane %v7682, 4
    %v7685 = vrot.slane %v7454, 5
    %v7686 = vsel %vm3839, %v7684, %v7685
    %v7687 = vrot.slane %v7455, 5
    %v7688 = vrot.slane %v7687, 4
    %v7689 = vrot.slane %v7456, 5
    %v7690 = vsel %vm3839, %v7688, %v7689
    %v7691 = vrot.slane %v7689, 4
    %v7692 = vrot.slane %v7457, 5
    %v7693 = vsel %vm3839, %v7691, %v7692
    %v7694 = vrot.slane %v7458, 5
    %v7695 = vrot.slane %v7694, 4
    %v7696 = vrot.slane %v7459, 5
    %v7697 = vsel %vm3839, %v7695, %v7696
    %v7698 = vrot.slane %v7696, 4
    %v7699 = vrot.slane %v7460, 5
    %v7700 = vsel %vm3839, %v7698, %v7699
    %v7701 = vrot.slane %v7461, 5
    %v7702 = vrot.slane %v7701, 4
    %v7703 = vrot.slane %v7462, 5
    %v7704 = vsel %vm3839, %v7702, %v7703
    %v7705 = vrot.slane %v7703, 4
    %v7706 = vrot.slane %v7463, 5
    %v7707 = vsel %vm3839, %v7705, %v7706
    %v7708 = vrot.slane %v7464, 5
    %v7709 = vrot.slane %v7708, 4
    %v7710 = vrot.slane %v7465, 5
    %v7711 = vsel %vm3839, %v7709, %v7710
    %v7712 = vrot.slane %v7710, 4
    %v7713 = vrot.slane %v7466, 5
    %v7714 = vsel %vm3839, %v7712, %v7713
    %v7715 = vrot.slane %v7467, 5
    %v7716 = vrot.slane %v7715, 4
    %v7717 = vrot.slane %v7468, 5
    %v7718 = vsel %vm3839, %v7716, %v7717
    %v7719 = vrot.slane %v7717, 4
    %v7720 = vrot.slane %v7469, 5
    %v7721 = vsel %vm3839, %v7719, %v7720
    %v7722 = vrot.slane %v7470, 5
    %v7723 = vrot.slane %v7722, 4
    %v7724 = vrot.slane %v7471, 5
    %v7725 = vsel %vm3839, %v7723, %v7724
    %v7726 = vrot.slane %v7724, 4
    %v7727 = vrot.slane %v7472, 5
    %v7728 = vsel %vm3839, %v7726, %v7727
    %v7729 = vrot.slane %v7473, 5
    %v7730 = vrot.slane %v7729, 4
    %v7731 = vrot.slane %v7474, 5
    %v7732 = vsel %vm3839, %v7730, %v7731
    %v7733 = vrot.slane %v7731, 4
    %v7734 = vrot.slane %v7475, 5
    %v7735 = vsel %vm3839, %v7733, %v7734
    %v7736 = vrot.slane %v7476, 5
    %v7737 = vrot.slane %v7736, 4
    %v7738 = vrot.slane %v7477, 5
    %v7739 = vsel %vm3839, %v7737, %v7738
    %v7740 = vrot.slane %v7738, 4
    %v7741 = vrot.slane %v7478, 5
    %v7742 = vsel %vm3839, %v7740, %v7741
    %v7743 = vrot.slane %v7479, 5
    %v7744 = vrot.slane %v7743, 4
    %v7745 = vrot.slane %v7480, 5
    %v7746 = vsel %vm3839, %v7744, %v7745
    %v7747 = vrot.slane %v7745, 4
    %v7748 = vrot.slane %v7481, 5
    %v7749 = vsel %vm3839, %v7747, %v7748
    %v7750 = vrot.slane %v7482, 5
    %v7751 = vrot.slane %v7750, 4
    %v7752 = vrot.slane %v7483, 5
    %v7753 = vsel %vm3839, %v7751, %v7752
    %v7754 = vrot.slane %v7752, 4
    %v7755 = vrot.slane %v7484, 5
    %v7756 = vsel %vm3839, %v7754, %v7755
    %v7757 = vrot.slane %v7485, 5
    %v7758 = vrot.slane %v7757, 4
    %v7759 = vrot.slane %v7486, 5
    %v7760 = vsel %vm3839, %v7758, %v7759
    %v7761 = vrot.slane %v7759, 4
    %v7762 = vrot.slane %v7487, 5
    %v7763 = vsel %vm3839, %v7761, %v7762
    %v7764 = vrot.slane %v7488, 5
    %v7765 = vrot.slane %v7764, 4
    %v7766 = vrot.slane %v7489, 5
    %v7767 = vsel %vm3839, %v7765, %v7766
    %v7768 = vrot.slane %v7766, 4
    %v7769 = vrot.slane %v7490, 5
    %v7770 = vsel %vm3839, %v7768, %v7769
    %v7771 = vrot.slane %v7491, 5
    %v7772 = vrot.slane %v7771, 4
    %v7773 = vrot.slane %v7492, 5
    %v7774 = vsel %vm3839, %v7772, %v7773
    %v7775 = vrot.slane %v7773, 4
    %v7776 = vrot.slane %v7493, 5
    %v7777 = vsel %vm3839, %v7775, %v7776
    %v7778 = vrot.slane %v7494, 5
    %v7779 = vrot.slane %v7778, 4
    %v7780 = vrot.slane %v7495, 5
    %v7781 = vsel %vm3839, %v7779, %v7780
    %v7782 = vrot.slane %v7780, 4
    %v7783 = vrot.slane %v7496, 5
    %v7784 = vsel %vm3839, %v7782, %v7783
    %v7785 = vrot.slane %v7497, 5
    %v7786 = vrot.slane %v7785, 4
    %v7787 = vrot.slane %v7498, 5
    %v7788 = vsel %vm3839, %v7786, %v7787
    %v7789 = vrot.slane %v7787, 4
    %v7790 = vrot.slane %v7499, 5
    %v7791 = vsel %vm3839, %v7789, %v7790
    %v7792 = vrot.slane %v7500, 5
    %v7793 = vrot.slane %v7792, 4
    %v7794 = vrot.slane %v7501, 5
    %v7795 = vsel %vm3839, %v7793, %v7794
    %v7796 = vrot.slane %v7794, 4
    %v7797 = vrot.slane %v7502, 5
    %v7798 = vsel %vm3839, %v7796, %v7797
    %v7799 = vrot.slane %v7503, 5
    %v7800 = vrot.slane %v7799, 4
    %v7801 = vrot.slane %v7504, 5
    %v7802 = vsel %vm3839, %v7800, %v7801
    %v7803 = vrot.slane %v7801, 4
    %v7804 = vrot.slane %v7505, 5
    %v7805 = vsel %vm3839, %v7803, %v7804
    %v7806 = vrot.slane %v7506, 5
    %v7807 = vrot.slane %v7806, 4
    %v7808 = vrot.slane %v7507, 5
    %v7809 = vsel %vm3839, %v7807, %v7808
    %v7810 = vrot.slane %v7808, 4
    %v7811 = vrot.slane %v7508, 5
    %v7812 = vsel %vm3839, %v7810, %v7811
    %v7813 = vrot.slane %v7509, 5
    %v7814 = vrot.slane %v7813, 4
    %v7815 = vrot.slane %v7510, 5
    %v7816 = vsel %vm3839, %v7814, %v7815
    %v7817 = vrot.slane %v7815, 4
    %v7818 = vrot.slane %v7511, 5
    %v7819 = vsel %vm3839, %v7817, %v7818
    %v7820 = vrot.slane %v7512, 5
    %v7821 = vrot.slane %v7820, 4
    %v7822 = vrot.slane %v7513, 5
    %v7823 = vsel %vm3839, %v7821, %v7822
    %v7824 = vrot.slane %v7822, 4
    %v7825 = vrot.slane %v7514, 5
    %v7826 = vsel %vm3839, %v7824, %v7825
    %v7827 = vrot.slane %v7515, 5
    %v7828 = vrot.slane %v7827, 4
    %v7829 = vrot.slane %v7516, 5
    %v7830 = vsel %vm3839, %v7828, %v7829
    %v7831 = vrot.slane %v7829, 4
    %v7832 = vrot.slane %v7517, 5
    %v7833 = vsel %vm3839, %v7831, %v7832
    %v7834 = vrot.slane %v7518, 5
    %v7835 = vrot.slane %v7834, 4
    %v7836 = vrot.slane %v7519, 5
    %v7837 = vsel %vm3839, %v7835, %v7836
    %v7838 = vrot.slane %v7836, 4
    %v7839 = vrot.slane %v7520, 5
    %v7840 = vsel %vm3839, %v7838, %v7839
    %v7841 = vunpack.c.l.b16 %v7620
    %v7842 = vunpack.c.l.b16 %v7623
    %v7843 = vunpack.c.l.b16 %v7627
    %v7844 = vunpack.c.l.b16 %v7630
    %v7845 = vunpack.c.l.b16 %v7634
    %v7846 = vunpack.c.l.b16 %v7637
    %v7847 = vunpack.c.l.b16 %v7641
    %v7848 = vunpack.c.l.b16 %v7644
    %v7849 = vunpack.c.l.b16 %v7648
    %v7850 = vunpack.c.l.b16 %v7651
    %v7851 = vunpack.c.l.b16 %v7655
    %v7852 = vunpack.c.l.b16 %v7658
    %v7853 = vunpack.c.l.b16 %v7662
    %v7854 = vunpack.c.l.b16 %v7665
    %v7855 = vunpack.c.l.b16 %v7669
    %v7856 = vunpack.c.l.b16 %v7672
    %v7857 = vunpack.c.l.b16 %v7676
    %v7858 = vunpack.c.l.b16 %v7679
    %v7859 = vunpack.c.l.b16 %v7683
    %v7860 = vunpack.c.l.b16 %v7686
    %v7861 = vunpack.c.l.b16 %v7690
    %v7862 = vunpack.c.l.b16 %v7693
    %v7863 = vunpack.c.l.b16 %v7697
    %v7864 = vunpack.c.l.b16 %v7700
    %v7865 = vunpack.c.l.b16 %v7704
    %v7866 = vunpack.c.l.b16 %v7707
    %v7867 = vunpack.c.l.b16 %v7711
    %v7868 = vunpack.c.l.b16 %v7714
    %v7869 = vunpack.c.l.b16 %v7718
    %v7870 = vunpack.c.l.b16 %v7721
    %v7871 = vunpack.c.l.b16 %v7725
    %v7872 = vunpack.c.l.b16 %v7728
    %v7873 = vunpack.c.l.b16 %v7732
    %v7874 = vunpack.c.l.b16 %v7735
    %v7875 = vunpack.c.l.b16 %v7739
    %v7876 = vunpack.c.l.b16 %v7742
    %v7877 = vunpack.c.l.b16 %v7746
    %v7878 = vunpack.c.l.b16 %v7749
    %v7879 = vunpack.c.l.b16 %v7753
    %v7880 = vunpack.c.l.b16 %v7756
    %v7881 = vunpack.c.l.b16 %v7760
    %v7882 = vunpack.c.l.b16 %v7763
    %v7883 = vunpack.c.l.b16 %v7767
    %v7884 = vunpack.c.l.b16 %v7770
    %v7885 = vunpack.c.l.b16 %v7774
    %v7886 = vunpack.c.l.b16 %v7777
    %v7887 = vunpack.c.l.b16 %v7781
    %v7888 = vunpack.c.l.b16 %v7784
    %v7889 = vunpack.c.l.b16 %v7788
    %v7890 = vunpack.c.l.b16 %v7791
    %v7891 = vunpack.c.l.b16 %v7795
    %v7892 = vunpack.c.l.b16 %v7798
    %v7893 = vunpack.c.l.b16 %v7802
    %v7894 = vunpack.c.l.b16 %v7805
    %v7895 = vunpack.c.l.b16 %v7809
    %v7896 = vunpack.c.l.b16 %v7812
    %v7897 = vunpack.c.l.b16 %v7816
    %v7898 = vunpack.c.l.b16 %v7819
    %v7899 = vunpack.c.l.b16 %v7823
    %v7900 = vunpack.c.l.b16 %v7826
    %v7901 = vunpack.c.l.b16 %v7830
    %v7902 = vunpack.c.l.b16 %v7833
    %v7903 = vunpack.c.l.b16 %v7837
    %v7904 = vunpack.c.l.b16 %v7840
    %v7905 = vpack.c.b16 %v7842, %v7841
    %v7906 = vpack.c.b16 %v7844, %v7843
    %v7907 = vpack.c.b16 %v7846, %v7845
    %v7908 = vpack.c.b16 %v7848, %v7847
    %v7909 = vpack.c.b16 %v7850, %v7849
    %v7910 = vpack.c.b16 %v7852, %v7851
    %v7911 = vpack.c.b16 %v7854, %v7853
    %v7912 = vpack.c.b16 %v7856, %v7855
    %v7913 = vpack.c.b16 %v7858, %v7857
    %v7914 = vpack.c.b16 %v7860, %v7859
    %v7915 = vpack.c.b16 %v7862, %v7861
    %v7916 = vpack.c.b16 %v7864, %v7863
    %v7917 = vpack.c.b16 %v7866, %v7865
    %v7918 = vpack.c.b16 %v7868, %v7867
    %v7919 = vpack.c.b16 %v7870, %v7869
    %v7920 = vpack.c.b16 %v7872, %v7871
    %v7921 = vpack.c.b16 %v7874, %v7873
    %v7922 = vpack.c.b16 %v7876, %v7875
    %v7923 = vpack.c.b16 %v7878, %v7877
    %v7924 = vpack.c.b16 %v7880, %v7879
    %v7925 = vpack.c.b16 %v7882, %v7881
    %v7926 = vpack.c.b16 %v7884, %v7883
    %v7927 = vpack.c.b16 %v7886, %v7885
    %v7928 = vpack.c.b16 %v7888, %v7887
    %v7929 = vpack.c.b16 %v7890, %v7889
    %v7930 = vpack.c.b16 %v7892, %v7891
    %v7931 = vpack.c.b16 %v7894, %v7893
    %v7932 = vpack.c.b16 %v7896, %v7895
    %v7933 = vpack.c.b16 %v7898, %v7897
    %v7934 = vpack.c.b16 %v7900, %v7899
    %v7935 = vpack.c.b16 %v7902, %v7901
    %v7936 = vpack.c.b16 %v7904, %v7903
    %7969 = vst [vmem:[#allocation3 + $0x40] sm:$0xff] %v7905
    %7970 = vst [vmem:[#allocation3 + $0x88] sm:$0xff] %v7906
    %7971 = vst [vmem:[#allocation3 + $0xd0] sm:$0xff] %v7907
    %7972 = vst [vmem:[#allocation3 + $0x118] sm:$0xff] %v7908
    %7973 = vst [vmem:[#allocation3 + $0x160] sm:$0xff] %v7909
    %7974 = vst [vmem:[#allocation3 + $0x1a8] sm:$0xff] %v7910
    %7975 = vst [vmem:[#allocation3 + $0x1f0] sm:$0xff] %v7911
    %7976 = vst [vmem:[#allocation3 + $0x238] sm:$0xff] %v7912
    %7977 = vst [vmem:[#allocation3 + $0x280] sm:$0xff] %v7913
    %7978 = vst [vmem:[#allocation3 + $0x2c8] sm:$0xff] %v7914
    %7979 = vst [vmem:[#allocation3 + $0x310] sm:$0xff] %v7915
    %7980 = vst [vmem:[#allocation3 + $0x358] sm:$0xff] %v7916
    %7981 = vst [vmem:[#allocation3 + $0x3a0] sm:$0xff] %v7917
    %7982 = vst [vmem:[#allocation3 + $0x3e8] sm:$0xff] %v7918
    %7983 = vst [vmem:[#allocation3 + $0x430] sm:$0xff] %v7919
    %7984 = vst [vmem:[#allocation3 + $0x478] sm:$0xff] %v7920
    %7985 = vst [vmem:[#allocation3 + $0x4c0] sm:$0xff] %v7921
    %7986 = vst [vmem:[#allocation3 + $0x508] sm:$0xff] %v7922
    %7987 = vst [vmem:[#allocation3 + $0x550] sm:$0xff] %v7923
    %7988 = vst [vmem:[#allocation3 + $0x598] sm:$0xff] %v7924
    %7989 = vst [vmem:[#allocation3 + $0x5e0] sm:$0xff] %v7925
    %7990 = vst [vmem:[#allocation3 + $0x628] sm:$0xff] %v7926
    %7991 = vst [vmem:[#allocation3 + $0x670] sm:$0xff] %v7927
    %7992 = vst [vmem:[#allocation3 + $0x6b8] sm:$0xff] %v7928
    %7993 = vst [vmem:[#allocation3 + $0x700] sm:$0xff] %v7929
    %7994 = vst [vmem:[#allocation3 + $0x748] sm:$0xff] %v7930
    %7995 = vst [vmem:[#allocation3 + $0x790] sm:$0xff] %v7931
    %7996 = vst [vmem:[#allocation3 + $0x7d8] sm:$0xff] %v7932
    %7997 = vst [vmem:[#allocation3 + $0x820] sm:$0xff] %v7933
    %7998 = vst [vmem:[#allocation3 + $0x868] sm:$0xff] %v7934
    %7999 = vst [vmem:[#allocation3 + $0x8b0] sm:$0xff] %v7935
    %8000 = vst [vmem:[#allocation3 + $0x8f8] sm:$0xff] %v7936
    %v8001 = vld [vmem:[#allocation3] sm:$0xff]
    %v8002 = vld [vmem:[#allocation3 + $0x8] sm:$0xff]
    %v8003 = vld [vmem:[#allocation3 + $0x10] sm:$0xff]
    %v8004 = vld [vmem:[#allocation3 + $0x18] sm:$0xff]
    %v8005 = vld [vmem:[#allocation3 + $0x20] sm:$0xff]
    %v8006 = vld [vmem:[#allocation3 + $0x28] sm:$0xff]
    %v8007 = vld [vmem:[#allocation3 + $0x30] sm:$0xff]
    %v8008 = vld [vmem:[#allocation3 + $0x38] sm:$0xff]
    %v8009 = vld [vmem:[#allocation3 + $0x40] sm:$0xff]
    %v8010 = vld [vmem:[#allocation3 + $0x48] sm:$0xff]
    %v8011 = vld [vmem:[#allocation3 + $0x50] sm:$0xff]
    %v8012 = vld [vmem:[#allocation3 + $0x58] sm:$0xff]
    %v8013 = vld [vmem:[#allocation3 + $0x60] sm:$0xff]
    %v8014 = vld [vmem:[#allocation3 + $0x68] sm:$0xff]
    %v8015 = vld [vmem:[#allocation3 + $0x70] sm:$0xff]
    %v8016 = vld [vmem:[#allocation3 + $0x78] sm:$0xff]
    %v8017 = vld [vmem:[#allocation3 + $0x80] sm:$0xff]
    %v8018 = vld [vmem:[#allocation3 + $0x88] sm:$0xff]
    %v8019 = vld [vmem:[#allocation3 + $0x90] sm:$0xff]
    %v8020 = vld [vmem:[#allocation3 + $0x98] sm:$0xff]
    %v8021 = vld [vmem:[#allocation3 + $0xa0] sm:$0xff]
    %v8022 = vld [vmem:[#allocation3 + $0xa8] sm:$0xff]
    %v8023 = vld [vmem:[#allocation3 + $0xb0] sm:$0xff]
    %v8024 = vld [vmem:[#allocation3 + $0xb8] sm:$0xff]
    %v8025 = vld [vmem:[#allocation3 + $0xc0] sm:$0xff]
    %v8026 = vld [vmem:[#allocation3 + $0xc8] sm:$0xff]
    %v8027 = vld [vmem:[#allocation3 + $0xd0] sm:$0xff]
    %v8028 = vld [vmem:[#allocation3 + $0xd8] sm:$0xff]
    %v8029 = vld [vmem:[#allocation3 + $0xe0] sm:$0xff]
    %v8030 = vld [vmem:[#allocation3 + $0xe8] sm:$0xff]
    %v8031 = vld [vmem:[#allocation3 + $0xf0] sm:$0xff]
    %v8032 = vld [vmem:[#allocation3 + $0xf8] sm:$0xff]
    %v8033 = vld [vmem:[#allocation3 + $0x100] sm:$0xff]
    %v8034 = vld [vmem:[#allocation3 + $0x108] sm:$0xff]
    %v8035 = vld [vmem:[#allocation3 + $0x110] sm:$0xff]
    %v8036 = vld [vmem:[#allocation3 + $0x118] sm:$0xff]
    %v8037 = vld [vmem:[#allocation3 + $0x120] sm:$0xff]
    %v8038 = vld [vmem:[#allocation3 + $0x128] sm:$0xff]
    %v8039 = vld [vmem:[#allocation3 + $0x130] sm:$0xff]
    %v8040 = vld [vmem:[#allocation3 + $0x138] sm:$0xff]
    %v8041 = vld [vmem:[#allocation3 + $0x140] sm:$0xff]
    %v8042 = vld [vmem:[#allocation3 + $0x148] sm:$0xff]
    %v8043 = vld [vmem:[#allocation3 + $0x150] sm:$0xff]
    %v8044 = vld [vmem:[#allocation3 + $0x158] sm:$0xff]
    %v8045 = vld [vmem:[#allocation3 + $0x160] sm:$0xff]
    %v8046 = vld [vmem:[#allocation3 + $0x168] sm:$0xff]
    %v8047 = vld [vmem:[#allocation3 + $0x170] sm:$0xff]
    %v8048 = vld [vmem:[#allocation3 + $0x178] sm:$0xff]
    %v8049 = vld [vmem:[#allocation3 + $0x180] sm:$0xff]
    %v8050 = vld [vmem:[#allocation3 + $0x188] sm:$0xff]
    %v8051 = vld [vmem:[#allocation3 + $0x190] sm:$0xff]
    %v8052 = vld [vmem:[#allocation3 + $0x198] sm:$0xff]
    %v8053 = vld [vmem:[#allocation3 + $0x1a0] sm:$0xff]
    %v8054 = vld [vmem:[#allocation3 + $0x1a8] sm:$0xff]
    %v8055 = vld [vmem:[#allocation3 + $0x1b0] sm:$0xff]
    %v8056 = vld [vmem:[#allocation3 + $0x1b8] sm:$0xff]
    %v8057 = vld [vmem:[#allocation3 + $0x1c0] sm:$0xff]
    %v8058 = vld [vmem:[#allocation3 + $0x1c8] sm:$0xff]
    %v8059 = vld [vmem:[#allocation3 + $0x1d0] sm:$0xff]
    %v8060 = vld [vmem:[#allocation3 + $0x1d8] sm:$0xff]
    %v8061 = vld [vmem:[#allocation3 + $0x1e0] sm:$0xff]
    %v8062 = vld [vmem:[#allocation3 + $0x1e8] sm:$0xff]
    %v8063 = vld [vmem:[#allocation3 + $0x1f0] sm:$0xff]
    %v8064 = vld [vmem:[#allocation3 + $0x1f8] sm:$0xff]
    %v8065 = vld [vmem:[#allocation3 + $0x200] sm:$0xff]
    %v8066 = vld [vmem:[#allocation3 + $0x208] sm:$0xff]
    %v8067 = vld [vmem:[#allocation3 + $0x210] sm:$0xff]
    %v8068 = vld [vmem:[#allocation3 + $0x218] sm:$0xff]
    %v8069 = vld [vmem:[#allocation3 + $0x220] sm:$0xff]
    %v8070 = vld [vmem:[#allocation3 + $0x228] sm:$0xff]
    %v8071 = vld [vmem:[#allocation3 + $0x230] sm:$0xff]
    %v8072 = vld [vmem:[#allocation3 + $0x238] sm:$0xff]
    %v8073 = vld [vmem:[#allocation3 + $0x240] sm:$0xff]
    %v8074 = vld [vmem:[#allocation3 + $0x248] sm:$0xff]
    %v8075 = vld [vmem:[#allocation3 + $0x250] sm:$0xff]
    %v8076 = vld [vmem:[#allocation3 + $0x258] sm:$0xff]
    %v8077 = vld [vmem:[#allocation3 + $0x260] sm:$0xff]
    %v8078 = vld [vmem:[#allocation3 + $0x268] sm:$0xff]
    %v8079 = vld [vmem:[#allocation3 + $0x270] sm:$0xff]
    %v8080 = vld [vmem:[#allocation3 + $0x278] sm:$0xff]
    %v8081 = vld [vmem:[#allocation3 + $0x280] sm:$0xff]
    %v8082 = vld [vmem:[#allocation3 + $0x288] sm:$0xff]
    %v8083 = vld [vmem:[#allocation3 + $0x290] sm:$0xff]
    %v8084 = vld [vmem:[#allocation3 + $0x298] sm:$0xff]
    %v8085 = vld [vmem:[#allocation3 + $0x2a0] sm:$0xff]
    %v8086 = vld [vmem:[#allocation3 + $0x2a8] sm:$0xff]
    %v8087 = vld [vmem:[#allocation3 + $0x2b0] sm:$0xff]
    %v8088 = vld [vmem:[#allocation3 + $0x2b8] sm:$0xff]
    %v8089 = vld [vmem:[#allocation3 + $0x2c0] sm:$0xff]
    %v8090 = vld [vmem:[#allocation3 + $0x2c8] sm:$0xff]
    %v8091 = vld [vmem:[#allocation3 + $0x2d0] sm:$0xff]
    %v8092 = vld [vmem:[#allocation3 + $0x2d8] sm:$0xff]
    %v8093 = vld [vmem:[#allocation3 + $0x2e0] sm:$0xff]
    %v8094 = vld [vmem:[#allocation3 + $0x2e8] sm:$0xff]
    %v8095 = vld [vmem:[#allocation3 + $0x2f0] sm:$0xff]
    %v8096 = vld [vmem:[#allocation3 + $0x2f8] sm:$0xff]
    %v8097 = vld [vmem:[#allocation3 + $0x300] sm:$0xff]
    %v8098 = vld [vmem:[#allocation3 + $0x308] sm:$0xff]
    %v8099 = vld [vmem:[#allocation3 + $0x310] sm:$0xff]
    %v8100 = vld [vmem:[#allocation3 + $0x318] sm:$0xff]
    %v8101 = vld [vmem:[#allocation3 + $0x320] sm:$0xff]
    %v8102 = vld [vmem:[#allocation3 + $0x328] sm:$0xff]
    %v8103 = vld [vmem:[#allocation3 + $0x330] sm:$0xff]
    %v8104 = vld [vmem:[#allocation3 + $0x338] sm:$0xff]
    %v8105 = vld [vmem:[#allocation3 + $0x340] sm:$0xff]
    %v8106 = vld [vmem:[#allocation3 + $0x348] sm:$0xff]
    %v8107 = vld [vmem:[#allocation3 + $0x350] sm:$0xff]
    %v8108 = vld [vmem:[#allocation3 + $0x358] sm:$0xff]
    %v8109 = vld [vmem:[#allocation3 + $0x360] sm:$0xff]
    %v8110 = vld [vmem:[#allocation3 + $0x368] sm:$0xff]
    %v8111 = vld [vmem:[#allocation3 + $0x370] sm:$0xff]
    %v8112 = vld [vmem:[#allocation3 + $0x378] sm:$0xff]
    %v8113 = vld [vmem:[#allocation3 + $0x380] sm:$0xff]
    %v8114 = vld [vmem:[#allocation3 + $0x388] sm:$0xff]
    %v8115 = vld [vmem:[#allocation3 + $0x390] sm:$0xff]
    %v8116 = vld [vmem:[#allocation3 + $0x398] sm:$0xff]
    %v8117 = vld [vmem:[#allocation3 + $0x3a0] sm:$0xff]
    %v8118 = vld [vmem:[#allocation3 + $0x3a8] sm:$0xff]
    %v8119 = vld [vmem:[#allocation3 + $0x3b0] sm:$0xff]
    %v8120 = vld [vmem:[#allocation3 + $0x3b8] sm:$0xff]
    %v8121 = vld [vmem:[#allocation3 + $0x3c0] sm:$0xff]
    %v8122 = vld [vmem:[#allocation3 + $0x3c8] sm:$0xff]
    %v8123 = vld [vmem:[#allocation3 + $0x3d0] sm:$0xff]
    %v8124 = vld [vmem:[#allocation3 + $0x3d8] sm:$0xff]
    %v8125 = vld [vmem:[#allocation3 + $0x3e0] sm:$0xff]
    %v8126 = vld [vmem:[#allocation3 + $0x3e8] sm:$0xff]
    %v8127 = vld [vmem:[#allocation3 + $0x3f0] sm:$0xff]
    %v8128 = vld [vmem:[#allocation3 + $0x3f8] sm:$0xff]
    %v8129 = vld [vmem:[#allocation3 + $0x400] sm:$0xff]
    %v8130 = vld [vmem:[#allocation3 + $0x408] sm:$0xff]
    %v8131 = vld [vmem:[#allocation3 + $0x410] sm:$0xff]
    %v8132 = vld [vmem:[#allocation3 + $0x418] sm:$0xff]
    %v8133 = vld [vmem:[#allocation3 + $0x420] sm:$0xff]
    %v8134 = vld [vmem:[#allocation3 + $0x428] sm:$0xff]
    %v8135 = vld [vmem:[#allocation3 + $0x430] sm:$0xff]
    %v8136 = vld [vmem:[#allocation3 + $0x438] sm:$0xff]
    %v8137 = vld [vmem:[#allocation3 + $0x440] sm:$0xff]
    %v8138 = vld [vmem:[#allocation3 + $0x448] sm:$0xff]
    %v8139 = vld [vmem:[#allocation3 + $0x450] sm:$0xff]
    %v8140 = vld [vmem:[#allocation3 + $0x458] sm:$0xff]
    %v8141 = vld [vmem:[#allocation3 + $0x460] sm:$0xff]
    %v8142 = vld [vmem:[#allocation3 + $0x468] sm:$0xff]
    %v8143 = vld [vmem:[#allocation3 + $0x470] sm:$0xff]
    %v8144 = vld [vmem:[#allocation3 + $0x478] sm:$0xff]
    %v8145 = vld [vmem:[#allocation3 + $0x480] sm:$0xff]
    %v8146 = vld [vmem:[#allocation3 + $0x488] sm:$0xff]
    %v8147 = vld [vmem:[#allocation3 + $0x490] sm:$0xff]
    %v8148 = vld [vmem:[#allocation3 + $0x498] sm:$0xff]
    %v8149 = vld [vmem:[#allocation3 + $0x4a0] sm:$0xff]
    %v8150 = vld [vmem:[#allocation3 + $0x4a8] sm:$0xff]
    %v8151 = vld [vmem:[#allocation3 + $0x4b0] sm:$0xff]
    %v8152 = vld [vmem:[#allocation3 + $0x4b8] sm:$0xff]
    %v8153 = vld [vmem:[#allocation3 + $0x4c0] sm:$0xff]
    %v8154 = vld [vmem:[#allocation3 + $0x4c8] sm:$0xff]
    %v8155 = vld [vmem:[#allocation3 + $0x4d0] sm:$0xff]
    %v8156 = vld [vmem:[#allocation3 + $0x4d8] sm:$0xff]
    %v8157 = vld [vmem:[#allocation3 + $0x4e0] sm:$0xff]
    %v8158 = vld [vmem:[#allocation3 + $0x4e8] sm:$0xff]
    %v8159 = vld [vmem:[#allocation3 + $0x4f0] sm:$0xff]
    %v8160 = vld [vmem:[#allocation3 + $0x4f8] sm:$0xff]
    %v8161 = vld [vmem:[#allocation3 + $0x500] sm:$0xff]
    %v8162 = vld [vmem:[#allocation3 + $0x508] sm:$0xff]
    %v8163 = vld [vmem:[#allocation3 + $0x510] sm:$0xff]
    %v8164 = vld [vmem:[#allocation3 + $0x518] sm:$0xff]
    %v8165 = vld [vmem:[#allocation3 + $0x520] sm:$0xff]
    %v8166 = vld [vmem:[#allocation3 + $0x528] sm:$0xff]
    %v8167 = vld [vmem:[#allocation3 + $0x530] sm:$0xff]
    %v8168 = vld [vmem:[#allocation3 + $0x538] sm:$0xff]
    %v8169 = vld [vmem:[#allocation3 + $0x540] sm:$0xff]
    %v8170 = vld [vmem:[#allocation3 + $0x548] sm:$0xff]
    %v8171 = vld [vmem:[#allocation3 + $0x550] sm:$0xff]
    %v8172 = vld [vmem:[#allocation3 + $0x558] sm:$0xff]
    %v8173 = vld [vmem:[#allocation3 + $0x560] sm:$0xff]
    %v8174 = vld [vmem:[#allocation3 + $0x568] sm:$0xff]
    %v8175 = vld [vmem:[#allocation3 + $0x570] sm:$0xff]
    %v8176 = vld [vmem:[#allocation3 + $0x578] sm:$0xff]
    %v8177 = vld [vmem:[#allocation3 + $0x580] sm:$0xff]
    %v8178 = vld [vmem:[#allocation3 + $0x588] sm:$0xff]
    %v8179 = vld [vmem:[#allocation3 + $0x590] sm:$0xff]
    %v8180 = vld [vmem:[#allocation3 + $0x598] sm:$0xff]
    %v8181 = vld [vmem:[#allocation3 + $0x5a0] sm:$0xff]
    %v8182 = vld [vmem:[#allocation3 + $0x5a8] sm:$0xff]
    %v8183 = vld [vmem:[#allocation3 + $0x5b0] sm:$0xff]
    %v8184 = vld [vmem:[#allocation3 + $0x5b8] sm:$0xff]
    %v8185 = vld [vmem:[#allocation3 + $0x5c0] sm:$0xff]
    %v8186 = vld [vmem:[#allocation3 + $0x5c8] sm:$0xff]
    %v8187 = vld [vmem:[#allocation3 + $0x5d0] sm:$0xff]
    %v8188 = vld [vmem:[#allocation3 + $0x5d8] sm:$0xff]
    %v8189 = vld [vmem:[#allocation3 + $0x5e0] sm:$0xff]
    %v8190 = vld [vmem:[#allocation3 + $0x5e8] sm:$0xff]
    %v8191 = vld [vmem:[#allocation3 + $0x5f0] sm:$0xff]
    %v8192 = vld [vmem:[#allocation3 + $0x5f8] sm:$0xff]
    %v8193 = vld [vmem:[#allocation3 + $0x600] sm:$0xff]
    %v8194 = vld [vmem:[#allocation3 + $0x608] sm:$0xff]
    %v8195 = vld [vmem:[#allocation3 + $0x610] sm:$0xff]
    %v8196 = vld [vmem:[#allocation3 + $0x618] sm:$0xff]
    %v8197 = vld [vmem:[#allocation3 + $0x620] sm:$0xff]
    %v8198 = vld [vmem:[#allocation3 + $0x628] sm:$0xff]
    %v8199 = vld [vmem:[#allocation3 + $0x630] sm:$0xff]
    %v8200 = vld [vmem:[#allocation3 + $0x638] sm:$0xff]
    %v8201 = vld [vmem:[#allocation3 + $0x640] sm:$0xff]
    %v8202 = vld [vmem:[#allocation3 + $0x648] sm:$0xff]
    %v8203 = vld [vmem:[#allocation3 + $0x650] sm:$0xff]
    %v8204 = vld [vmem:[#allocation3 + $0x658] sm:$0xff]
    %v8205 = vld [vmem:[#allocation3 + $0x660] sm:$0xff]
    %v8206 = vld [vmem:[#allocation3 + $0x668] sm:$0xff]
    %v8207 = vld [vmem:[#allocation3 + $0x670] sm:$0xff]
    %v8208 = vld [vmem:[#allocation3 + $0x678] sm:$0xff]
    %v8209 = vld [vmem:[#allocation3 + $0x680] sm:$0xff]
    %v8210 = vld [vmem:[#allocation3 + $0x688] sm:$0xff]
    %v8211 = vld [vmem:[#allocation3 + $0x690] sm:$0xff]
    %v8212 = vld [vmem:[#allocation3 + $0x698] sm:$0xff]
    %v8213 = vld [vmem:[#allocation3 + $0x6a0] sm:$0xff]
    %v8214 = vld [vmem:[#allocation3 + $0x6a8] sm:$0xff]
    %v8215 = vld [vmem:[#allocation3 + $0x6b0] sm:$0xff]
    %v8216 = vld [vmem:[#allocation3 + $0x6b8] sm:$0xff]
    %v8217 = vld [vmem:[#allocation3 + $0x6c0] sm:$0xff]
    %v8218 = vld [vmem:[#allocation3 + $0x6c8] sm:$0xff]
    %v8219 = vld [vmem:[#allocation3 + $0x6d0] sm:$0xff]
    %v8220 = vld [vmem:[#allocation3 + $0x6d8] sm:$0xff]
    %v8221 = vld [vmem:[#allocation3 + $0x6e0] sm:$0xff]
    %v8222 = vld [vmem:[#allocation3 + $0x6e8] sm:$0xff]
    %v8223 = vld [vmem:[#allocation3 + $0x6f0] sm:$0xff]
    %v8224 = vld [vmem:[#allocation3 + $0x6f8] sm:$0xff]
    %v8225 = vld [vmem:[#allocation3 + $0x700] sm:$0xff]
    %v8226 = vld [vmem:[#allocation3 + $0x708] sm:$0xff]
    %v8227 = vld [vmem:[#allocation3 + $0x710] sm:$0xff]
    %v8228 = vld [vmem:[#allocation3 + $0x718] sm:$0xff]
    %v8229 = vld [vmem:[#allocation3 + $0x720] sm:$0xff]
    %v8230 = vld [vmem:[#allocation3 + $0x728] sm:$0xff]
    %v8231 = vld [vmem:[#allocation3 + $0x730] sm:$0xff]
    %v8232 = vld [vmem:[#allocation3 + $0x738] sm:$0xff]
    %v8233 = vld [vmem:[#allocation3 + $0x740] sm:$0xff]
    %v8234 = vld [vmem:[#allocation3 + $0x748] sm:$0xff]
    %v8235 = vld [vmem:[#allocation3 + $0x750] sm:$0xff]
    %v8236 = vld [vmem:[#allocation3 + $0x758] sm:$0xff]
    %v8237 = vld [vmem:[#allocation3 + $0x760] sm:$0xff]
    %v8238 = vld [vmem:[#allocation3 + $0x768] sm:$0xff]
    %v8239 = vld [vmem:[#allocation3 + $0x770] sm:$0xff]
    %v8240 = vld [vmem:[#allocation3 + $0x778] sm:$0xff]
    %v8241 = vld [vmem:[#allocation3 + $0x780] sm:$0xff]
    %v8242 = vld [vmem:[#allocation3 + $0x788] sm:$0xff]
    %v8243 = vld [vmem:[#allocation3 + $0x790] sm:$0xff]
    %v8244 = vld [vmem:[#allocation3 + $0x798] sm:$0xff]
    %v8245 = vld [vmem:[#allocation3 + $0x7a0] sm:$0xff]
    %v8246 = vld [vmem:[#allocation3 + $0x7a8] sm:$0xff]
    %v8247 = vld [vmem:[#allocation3 + $0x7b0] sm:$0xff]
    %v8248 = vld [vmem:[#allocation3 + $0x7b8] sm:$0xff]
    %v8249 = vld [vmem:[#allocation3 + $0x7c0] sm:$0xff]
    %v8250 = vld [vmem:[#allocation3 + $0x7c8] sm:$0xff]
    %v8251 = vld [vmem:[#allocation3 + $0x7d0] sm:$0xff]
    %v8252 = vld [vmem:[#allocation3 + $0x7d8] sm:$0xff]
    %v8253 = vld [vmem:[#allocation3 + $0x7e0] sm:$0xff]
    %v8254 = vld [vmem:[#allocation3 + $0x7e8] sm:$0xff]
    %v8255 = vld [vmem:[#allocation3 + $0x7f0] sm:$0xff]
    %v8256 = vld [vmem:[#allocation3 + $0x7f8] sm:$0xff]
    %v8257 = vld [vmem:[#allocation3 + $0x800] sm:$0xff]
    %v8258 = vld [vmem:[#allocation3 + $0x808] sm:$0xff]
    %v8259 = vld [vmem:[#allocation3 + $0x810] sm:$0xff]
    %v8260 = vld [vmem:[#allocation3 + $0x818] sm:$0xff]
    %v8261 = vld [vmem:[#allocation3 + $0x820] sm:$0xff]
    %v8262 = vld [vmem:[#allocation3 + $0x828] sm:$0xff]
    %v8263 = vld [vmem:[#allocation3 + $0x830] sm:$0xff]
    %v8264 = vld [vmem:[#allocation3 + $0x838] sm:$0xff]
    %v8265 = vld [vmem:[#allocation3 + $0x840] sm:$0xff]
    %v8266 = vld [vmem:[#allocation3 + $0x848] sm:$0xff]
    %v8267 = vld [vmem:[#allocation3 + $0x850] sm:$0xff]
    %v8268 = vld [vmem:[#allocation3 + $0x858] sm:$0xff]
    %v8269 = vld [vmem:[#allocation3 + $0x860] sm:$0xff]
    %v8270 = vld [vmem:[#allocation3 + $0x868] sm:$0xff]
    %v8271 = vld [vmem:[#allocation3 + $0x870] sm:$0xff]
    %v8272 = vld [vmem:[#allocation3 + $0x878] sm:$0xff]
    %v8273 = vld [vmem:[#allocation3 + $0x880] sm:$0xff]
    %v8274 = vld [vmem:[#allocation3 + $0x888] sm:$0xff]
    %v8275 = vld [vmem:[#allocation3 + $0x890] sm:$0xff]
    %v8276 = vld [vmem:[#allocation3 + $0x898] sm:$0xff]
    %v8277 = vld [vmem:[#allocation3 + $0x8a0] sm:$0xff]
    %v8278 = vld [vmem:[#allocation3 + $0x8a8] sm:$0xff]
    %v8279 = vld [vmem:[#allocation3 + $0x8b0] sm:$0xff]
    %v8280 = vld [vmem:[#allocation3 + $0x8b8] sm:$0xff]
    %v8281 = vld [vmem:[#allocation3 + $0x8c0] sm:$0xff]
    %v8282 = vld [vmem:[#allocation3 + $0x8c8] sm:$0xff]
    %v8283 = vld [vmem:[#allocation3 + $0x8d0] sm:$0xff]
    %v8284 = vld [vmem:[#allocation3 + $0x8d8] sm:$0xff]
    %v8285 = vld [vmem:[#allocation3 + $0x8e0] sm:$0xff]
    %v8286 = vld [vmem:[#allocation3 + $0x8e8] sm:$0xff]
    %v8287 = vld [vmem:[#allocation3 + $0x8f0] sm:$0xff]
    %v8288 = vld [vmem:[#allocation3 + $0x8f8] sm:$0xff]
    %v8289 = vld [vmem:[#allocation12] sm:$0xf]
    %v8290 = vld [vmem:[#allocation12 + $0x4] sm:$0xf]
    %v8291 = vld [vmem:[#allocation12 + $0x8] sm:$0xf]
    %v8292 = vld [vmem:[#allocation12 + $0xc] sm:$0xf]
    %v8293 = vld [vmem:[#allocation12 + $0x10] sm:$0xf]
    %v8294 = vld [vmem:[#allocation12 + $0x14] sm:$0xf]
    %v8295 = vld [vmem:[#allocation12 + $0x18] sm:$0xf]
    %v8296 = vld [vmem:[#allocation12 + $0x1c] sm:$0xf]
    %v8297 = vld [vmem:[#allocation12 + $0x20] sm:$0xf]
    %v8298 = vld [vmem:[#allocation12 + $0x24] sm:$0xf]
    %v8299 = vld [vmem:[#allocation12 + $0x28] sm:$0xf]
    %v8300 = vld [vmem:[#allocation12 + $0x2c] sm:$0xf]
    %v8301 = vld [vmem:[#allocation12 + $0x30] sm:$0xf]
    %v8302 = vld [vmem:[#allocation12 + $0x34] sm:$0xf]
    %v8303 = vld [vmem:[#allocation12 + $0x38] sm:$0xf]
    %v8304 = vld [vmem:[#allocation12 + $0x3c] sm:$0xf]
    %v8305 = vld [vmem:[#allocation12 + $0x40] sm:$0xf]
    %v8306 = vld [vmem:[#allocation12 + $0x44] sm:$0xf]
    %v8307 = vld [vmem:[#allocation12 + $0x48] sm:$0xf]
    %v8308 = vld [vmem:[#allocation12 + $0x4c] sm:$0xf]
    %v8309 = vld [vmem:[#allocation12 + $0x50] sm:$0xf]
    %v8310 = vld [vmem:[#allocation12 + $0x54] sm:$0xf]
    %v8311 = vld [vmem:[#allocation12 + $0x58] sm:$0xf]
    %v8312 = vld [vmem:[#allocation12 + $0x5c] sm:$0xf]
    %v8313 = vld [vmem:[#allocation12 + $0x60] sm:$0xf]
    %v8314 = vld [vmem:[#allocation12 + $0x64] sm:$0xf]
    %v8315 = vld [vmem:[#allocation12 + $0x68] sm:$0xf]
    %v8316 = vld [vmem:[#allocation12 + $0x6c] sm:$0xf]
    %v8317 = vld [vmem:[#allocation12 + $0x70] sm:$0xf]
    %v8318 = vld [vmem:[#allocation12 + $0x74] sm:$0xf]
    %v8319 = vld [vmem:[#allocation12 + $0x78] sm:$0xf]
    %v8320 = vld [vmem:[#allocation12 + $0x7c] sm:$0xf]
    %v8321 = vld [vmem:[#allocation12 + $0x80] sm:$0xf]
    %v8322 = vld [vmem:[#allocation12 + $0x84] sm:$0xf]
    %v8323 = vld [vmem:[#allocation12 + $0x88] sm:$0xf]
    %v8324 = vld [vmem:[#allocation12 + $0x8c] sm:$0xf]
    %v8325 = vld [vmem:[#allocation12 + $0x90] sm:$0xf]
    %v8326 = vld [vmem:[#allocation12 + $0x94] sm:$0xf]
    %v8327 = vld [vmem:[#allocation12 + $0x98] sm:$0xf]
    %v8328 = vld [vmem:[#allocation12 + $0x9c] sm:$0xf]
    %v8329 = vld [vmem:[#allocation12 + $0xa0] sm:$0xf]
    %v8330 = vld [vmem:[#allocation12 + $0xa4] sm:$0xf]
    %v8331 = vld [vmem:[#allocation12 + $0xa8] sm:$0xf]
    %v8332 = vld [vmem:[#allocation12 + $0xac] sm:$0xf]
    %v8333 = vld [vmem:[#allocation12 + $0xb0] sm:$0xf]
    %v8334 = vld [vmem:[#allocation12 + $0xb4] sm:$0xf]
    %v8335 = vld [vmem:[#allocation12 + $0xb8] sm:$0xf]
    %v8336 = vld [vmem:[#allocation12 + $0xbc] sm:$0xf]
    %v8337 = vld [vmem:[#allocation12 + $0xc0] sm:$0xf]
    %v8338 = vld [vmem:[#allocation12 + $0xc4] sm:$0xf]
    %v8339 = vld [vmem:[#allocation12 + $0xc8] sm:$0xf]
    %v8340 = vld [vmem:[#allocation12 + $0xcc] sm:$0xf]
    %v8341 = vld [vmem:[#allocation12 + $0xd0] sm:$0xf]
    %v8342 = vld [vmem:[#allocation12 + $0xd4] sm:$0xf]
    %v8343 = vld [vmem:[#allocation12 + $0xd8] sm:$0xf]
    %v8344 = vld [vmem:[#allocation12 + $0xdc] sm:$0xf]
    %v8345 = vld [vmem:[#allocation12 + $0xe0] sm:$0xf]
    %v8346 = vld [vmem:[#allocation12 + $0xe4] sm:$0xf]
    %v8347 = vld [vmem:[#allocation12 + $0xe8] sm:$0xf]
    %v8348 = vld [vmem:[#allocation12 + $0xec] sm:$0xf]
    %v8349 = vld [vmem:[#allocation12 + $0xf0] sm:$0xf]
    %v8350 = vld [vmem:[#allocation12 + $0xf4] sm:$0xf]
    %v8351 = vld [vmem:[#allocation12 + $0xf8] sm:$0xf]
    %v8352 = vld [vmem:[#allocation12 + $0xfc] sm:$0xf]
    %v8353 = vld [vmem:[#allocation12 + $0x100] sm:$0xf]
    %v8354 = vld [vmem:[#allocation12 + $0x104] sm:$0xf]
    %v8355 = vld [vmem:[#allocation12 + $0x108] sm:$0xf]
    %v8356 = vld [vmem:[#allocation12 + $0x10c] sm:$0xf]
    %v8357 = vld [vmem:[#allocation12 + $0x110] sm:$0xf]
    %v8358 = vld [vmem:[#allocation12 + $0x114] sm:$0xf]
    %v8359 = vld [vmem:[#allocation12 + $0x118] sm:$0xf]
    %v8360 = vld [vmem:[#allocation12 + $0x11c] sm:$0xf]
    %v8361 = vld [vmem:[#allocation12 + $0x120] sm:$0xf]
    %v8362 = vld [vmem:[#allocation12 + $0x124] sm:$0xf]
    %v8363 = vld [vmem:[#allocation12 + $0x128] sm:$0xf]
    %v8364 = vld [vmem:[#allocation12 + $0x12c] sm:$0xf]
    %v8365 = vld [vmem:[#allocation12 + $0x130] sm:$0xf]
    %v8366 = vld [vmem:[#allocation12 + $0x134] sm:$0xf]
    %v8367 = vld [vmem:[#allocation12 + $0x138] sm:$0xf]
    %v8368 = vld [vmem:[#allocation12 + $0x13c] sm:$0xf]
    %v8369 = vld [vmem:[#allocation12 + $0x140] sm:$0xf]
    %v8370 = vld [vmem:[#allocation12 + $0x144] sm:$0xf]
    %v8371 = vld [vmem:[#allocation12 + $0x148] sm:$0xf]
    %v8372 = vld [vmem:[#allocation12 + $0x14c] sm:$0xf]
    %v8373 = vld [vmem:[#allocation12 + $0x150] sm:$0xf]
    %v8374 = vld [vmem:[#allocation12 + $0x154] sm:$0xf]
    %v8375 = vld [vmem:[#allocation12 + $0x158] sm:$0xf]
    %v8376 = vld [vmem:[#allocation12 + $0x15c] sm:$0xf]
    %v8377 = vld [vmem:[#allocation12 + $0x160] sm:$0xf]
    %v8378 = vld [vmem:[#allocation12 + $0x164] sm:$0xf]
    %v8379 = vld [vmem:[#allocation12 + $0x168] sm:$0xf]
    %v8380 = vld [vmem:[#allocation12 + $0x16c] sm:$0xf]
    %v8381 = vld [vmem:[#allocation12 + $0x170] sm:$0xf]
    %v8382 = vld [vmem:[#allocation12 + $0x174] sm:$0xf]
    %v8383 = vld [vmem:[#allocation12 + $0x178] sm:$0xf]
    %v8384 = vld [vmem:[#allocation12 + $0x17c] sm:$0xf]
    %v8385 = vld [vmem:[#allocation12 + $0x180] sm:$0xf]
    %v8386 = vld [vmem:[#allocation12 + $0x184] sm:$0xf]
    %v8387 = vld [vmem:[#allocation12 + $0x188] sm:$0xf]
    %v8388 = vld [vmem:[#allocation12 + $0x18c] sm:$0xf]
    %v8389 = vld [vmem:[#allocation12 + $0x190] sm:$0xf]
    %v8390 = vld [vmem:[#allocation12 + $0x194] sm:$0xf]
    %v8391 = vld [vmem:[#allocation12 + $0x198] sm:$0xf]
    %v8392 = vld [vmem:[#allocation12 + $0x19c] sm:$0xf]
    %v8393 = vld [vmem:[#allocation12 + $0x1a0] sm:$0xf]
    %v8394 = vld [vmem:[#allocation12 + $0x1a4] sm:$0xf]
    %v8395 = vld [vmem:[#allocation12 + $0x1a8] sm:$0xf]
    %v8396 = vld [vmem:[#allocation12 + $0x1ac] sm:$0xf]
    %v8397 = vld [vmem:[#allocation12 + $0x1b0] sm:$0xf]
    %v8398 = vld [vmem:[#allocation12 + $0x1b4] sm:$0xf]
    %v8399 = vld [vmem:[#allocation12 + $0x1b8] sm:$0xf]
    %v8400 = vld [vmem:[#allocation12 + $0x1bc] sm:$0xf]
    %v8401 = vld [vmem:[#allocation12 + $0x1c0] sm:$0xf]
    %v8402 = vld [vmem:[#allocation12 + $0x1c4] sm:$0xf]
    %v8403 = vld [vmem:[#allocation12 + $0x1c8] sm:$0xf]
    %v8404 = vld [vmem:[#allocation12 + $0x1cc] sm:$0xf]
    %v8405 = vld [vmem:[#allocation12 + $0x1d0] sm:$0xf]
    %v8406 = vld [vmem:[#allocation12 + $0x1d4] sm:$0xf]
    %v8407 = vld [vmem:[#allocation12 + $0x1d8] sm:$0xf]
    %v8408 = vld [vmem:[#allocation12 + $0x1dc] sm:$0xf]
    %v8409 = vld [vmem:[#allocation12 + $0x1e0] sm:$0xf]
    %v8410 = vld [vmem:[#allocation12 + $0x1e4] sm:$0xf]
    %v8411 = vld [vmem:[#allocation12 + $0x1e8] sm:$0xf]
    %v8412 = vld [vmem:[#allocation12 + $0x1ec] sm:$0xf]
    %v8413 = vld [vmem:[#allocation12 + $0x1f0] sm:$0xf]
    %v8414 = vld [vmem:[#allocation12 + $0x1f4] sm:$0xf]
    %v8415 = vld [vmem:[#allocation12 + $0x1f8] sm:$0xf]
    %v8416 = vld [vmem:[#allocation12 + $0x1fc] sm:$0xf]
    %v8417 = vld [vmem:[#allocation12 + $0x200] sm:$0xf]
    %v8418 = vld [vmem:[#allocation12 + $0x204] sm:$0xf]
    %v8419 = vld [vmem:[#allocation12 + $0x208] sm:$0xf]
    %v8420 = vld [vmem:[#allocation12 + $0x20c] sm:$0xf]
    %v8421 = vld [vmem:[#allocation12 + $0x210] sm:$0xf]
    %v8422 = vld [vmem:[#allocation12 + $0x214] sm:$0xf]
    %v8423 = vld [vmem:[#allocation12 + $0x218] sm:$0xf]
    %v8424 = vld [vmem:[#allocation12 + $0x21c] sm:$0xf]
    %v8425 = vld [vmem:[#allocation12 + $0x220] sm:$0xf]
    %v8426 = vld [vmem:[#allocation12 + $0x224] sm:$0xf]
    %v8427 = vld [vmem:[#allocation12 + $0x228] sm:$0xf]
    %v8428 = vld [vmem:[#allocation12 + $0x22c] sm:$0xf]
    %v8429 = vld [vmem:[#allocation12 + $0x230] sm:$0xf]
    %v8430 = vld [vmem:[#allocation12 + $0x234] sm:$0xf]
    %v8431 = vld [vmem:[#allocation12 + $0x238] sm:$0xf]
    %v8432 = vld [vmem:[#allocation12 + $0x23c] sm:$0xf]
    %v8577 = vunpack.c.l.b16 %v8289
    %v8578 = vunpack.c.l.b16 %v8290
    %v8579 = vunpack.c.l.b16 %v8291
    %v8580 = vunpack.c.l.b16 %v8292
    %v8581 = vunpack.c.l.b16 %v8293
    %v8582 = vunpack.c.l.b16 %v8294
    %v8583 = vunpack.c.l.b16 %v8295
    %v8584 = vunpack.c.l.b16 %v8296
    %v8585 = vunpack.c.l.b16 %v8297
    %v8586 = vunpack.c.l.b16 %v8298
    %v8587 = vunpack.c.l.b16 %v8299
    %v8588 = vunpack.c.l.b16 %v8300
    %v8589 = vunpack.c.l.b16 %v8301
    %v8590 = vunpack.c.l.b16 %v8302
    %v8591 = vunpack.c.l.b16 %v8303
    %v8592 = vunpack.c.l.b16 %v8304
    %v8593 = vunpack.c.l.b16 %v8305
    %v8594 = vunpack.c.l.b16 %v8306
    %v8595 = vunpack.c.l.b16 %v8307
    %v8596 = vunpack.c.l.b16 %v8308
    %v8597 = vunpack.c.l.b16 %v8309
    %v8598 = vunpack.c.l.b16 %v8310
    %v8599 = vunpack.c.l.b16 %v8311
    %v8600 = vunpack.c.l.b16 %v8312
    %v8601 = vunpack.c.l.b16 %v8313
    %v8602 = vunpack.c.l.b16 %v8314
    %v8603 = vunpack.c.l.b16 %v8315
    %v8604 = vunpack.c.l.b16 %v8316
    %v8605 = vunpack.c.l.b16 %v8317
    %v8606 = vunpack.c.l.b16 %v8318
    %v8607 = vunpack.c.l.b16 %v8319
    %v8608 = vunpack.c.l.b16 %v8320
    %v8609 = vunpack.c.l.b16 %v8321
    %v8610 = vunpack.c.l.b16 %v8322
    %v8611 = vunpack.c.l.b16 %v8323
    %v8612 = vunpack.c.l.b16 %v8324
    %v8613 = vunpack.c.l.b16 %v8325
    %v8614 = vunpack.c.l.b16 %v8326
    %v8615 = vunpack.c.l.b16 %v8327
    %v8616 = vunpack.c.l.b16 %v8328
    %v8617 = vunpack.c.l.b16 %v8329
    %v8618 = vunpack.c.l.b16 %v8330
    %v8619 = vunpack.c.l.b16 %v8331
    %v8620 = vunpack.c.l.b16 %v8332
    %v8621 = vunpack.c.l.b16 %v8333
    %v8622 = vunpack.c.l.b16 %v8334
    %v8623 = vunpack.c.l.b16 %v8335
    %v8624 = vunpack.c.l.b16 %v8336
    %v8625 = vunpack.c.l.b16 %v8337
    %v8626 = vunpack.c.l.b16 %v8338
    %v8627 = vunpack.c.l.b16 %v8339
    %v8628 = vunpack.c.l.b16 %v8340
    %v8629 = vunpack.c.l.b16 %v8341
    %v8630 = vunpack.c.l.b16 %v8342
    %v8631 = vunpack.c.l.b16 %v8343
    %v8632 = vunpack.c.l.b16 %v8344
    %v8633 = vunpack.c.l.b16 %v8345
    %v8634 = vunpack.c.l.b16 %v8346
    %v8635 = vunpack.c.l.b16 %v8347
    %v8636 = vunpack.c.l.b16 %v8348
    %v8637 = vunpack.c.l.b16 %v8349
    %v8638 = vunpack.c.l.b16 %v8350
    %v8639 = vunpack.c.l.b16 %v8351
    %v8640 = vunpack.c.l.b16 %v8352
    %v8641 = vunpack.c.l.b16 %v8353
    %v8642 = vunpack.c.l.b16 %v8354
    %v8643 = vunpack.c.l.b16 %v8355
    %v8644 = vunpack.c.l.b16 %v8356
    %v8645 = vunpack.c.l.b16 %v8357
    %v8646 = vunpack.c.l.b16 %v8358
    %v8647 = vunpack.c.l.b16 %v8359
    %v8648 = vunpack.c.l.b16 %v8360
    %v8649 = vunpack.c.l.b16 %v8361
    %v8650 = vunpack.c.l.b16 %v8362
    %v8651 = vunpack.c.l.b16 %v8363
    %v8652 = vunpack.c.l.b16 %v8364
    %v8653 = vunpack.c.l.b16 %v8365
    %v8654 = vunpack.c.l.b16 %v8366
    %v8655 = vunpack.c.l.b16 %v8367
    %v8656 = vunpack.c.l.b16 %v8368
    %v8657 = vunpack.c.l.b16 %v8369
    %v8658 = vunpack.c.l.b16 %v8370
    %v8659 = vunpack.c.l.b16 %v8371
    %v8660 = vunpack.c.l.b16 %v8372
    %v8661 = vunpack.c.l.b16 %v8373
    %v8662 = vunpack.c.l.b16 %v8374
    %v8663 = vunpack.c.l.b16 %v8375
    %v8664 = vunpack.c.l.b16 %v8376
    %v8665 = vunpack.c.l.b16 %v8377
    %v8666 = vunpack.c.l.b16 %v8378
    %v8667 = vunpack.c.l.b16 %v8379
    %v8668 = vunpack.c.l.b16 %v8380
    %v8669 = vunpack.c.l.b16 %v8381
    %v8670 = vunpack.c.l.b16 %v8382
    %v8671 = vunpack.c.l.b16 %v8383
    %v8672 = vunpack.c.l.b16 %v8384
    %v8673 = vunpack.c.l.b16 %v8385
    %v8674 = vunpack.c.l.b16 %v8386
    %v8675 = vunpack.c.l.b16 %v8387
    %v8676 = vunpack.c.l.b16 %v8388
    %v8677 = vunpack.c.l.b16 %v8389
    %v8678 = vunpack.c.l.b16 %v8390
    %v8679 = vunpack.c.l.b16 %v8391
    %v8680 = vunpack.c.l.b16 %v8392
    %v8681 = vunpack.c.l.b16 %v8393
    %v8682 = vunpack.c.l.b16 %v8394
    %v8683 = vunpack.c.l.b16 %v8395
    %v8684 = vunpack.c.l.b16 %v8396
    %v8685 = vunpack.c.l.b16 %v8397
    %v8686 = vunpack.c.l.b16 %v8398
    %v8687 = vunpack.c.l.b16 %v8399
    %v8688 = vunpack.c.l.b16 %v8400
    %v8689 = vunpack.c.l.b16 %v8401
    %v8690 = vunpack.c.l.b16 %v8402
    %v8691 = vunpack.c.l.b16 %v8403
    %v8692 = vunpack.c.l.b16 %v8404
    %v8693 = vunpack.c.l.b16 %v8405
    %v8694 = vunpack.c.l.b16 %v8406
    %v8695 = vunpack.c.l.b16 %v8407
    %v8696 = vunpack.c.l.b16 %v8408
    %v8697 = vunpack.c.l.b16 %v8409
    %v8698 = vunpack.c.l.b16 %v8410
    %v8699 = vunpack.c.l.b16 %v8411
    %v8700 = vunpack.c.l.b16 %v8412
    %v8701 = vunpack.c.l.b16 %v8413
    %v8702 = vunpack.c.l.b16 %v8414
    %v8703 = vunpack.c.l.b16 %v8415
    %v8704 = vunpack.c.l.b16 %v8416
    %v8705 = vunpack.c.l.b16 %v8417
    %v8706 = vunpack.c.l.b16 %v8418
    %v8707 = vunpack.c.l.b16 %v8419
    %v8708 = vunpack.c.l.b16 %v8420
    %v8709 = vunpack.c.l.b16 %v8421
    %v8710 = vunpack.c.l.b16 %v8422
    %v8711 = vunpack.c.l.b16 %v8423
    %v8712 = vunpack.c.l.b16 %v8424
    %v8713 = vunpack.c.l.b16 %v8425
    %v8714 = vunpack.c.l.b16 %v8426
    %v8715 = vunpack.c.l.b16 %v8427
    %v8716 = vunpack.c.l.b16 %v8428
    %v8717 = vunpack.c.l.b16 %v8429
    %v8718 = vunpack.c.l.b16 %v8430
    %v8719 = vunpack.c.l.b16 %v8431
    %v8720 = vunpack.c.l.b16 %v8432
    %v8721 = vpack.c.b16 %v8578, %v8577
    %v8722 = vpack.c.b16 %v8580, %v8579
    %v8723 = vpack.c.b16 %v8582, %v8581
    %v8724 = vpack.c.b16 %v8584, %v8583
    %v8725 = vpack.c.b16 %v8586, %v8585
    %v8726 = vpack.c.b16 %v8588, %v8587
    %v8727 = vpack.c.b16 %v8590, %v8589
    %v8728 = vpack.c.b16 %v8592, %v8591
    %v8729 = vpack.c.b16 %v8594, %v8593
    %v8730 = vpack.c.b16 %v8596, %v8595
    %v8731 = vpack.c.b16 %v8598, %v8597
    %v8732 = vpack.c.b16 %v8600, %v8599
    %v8733 = vpack.c.b16 %v8602, %v8601
    %v8734 = vpack.c.b16 %v8604, %v8603
    %v8735 = vpack.c.b16 %v8606, %v8605
    %v8736 = vpack.c.b16 %v8608, %v8607
    %v8737 = vpack.c.b16 %v8610, %v8609
    %v8738 = vpack.c.b16 %v8612, %v8611
    %v8739 = vpack.c.b16 %v8614, %v8613
    %v8740 = vpack.c.b16 %v8616, %v8615
    %v8741 = vpack.c.b16 %v8618, %v8617
    %v8742 = vpack.c.b16 %v8620, %v8619
    %v8743 = vpack.c.b16 %v8622, %v8621
    %v8744 = vpack.c.b16 %v8624, %v8623
    %v8745 = vpack.c.b16 %v8626, %v8625
    %v8746 = vpack.c.b16 %v8628, %v8627
    %v8747 = vpack.c.b16 %v8630, %v8629
    %v8748 = vpack.c.b16 %v8632, %v8631
    %v8749 = vpack.c.b16 %v8634, %v8633
    %v8750 = vpack.c.b16 %v8636, %v8635
    %v8751 = vpack.c.b16 %v8638, %v8637
    %v8752 = vpack.c.b16 %v8640, %v8639
    %v8753 = vpack.c.b16 %v8642, %v8641
    %v8754 = vpack.c.b16 %v8644, %v8643
    %v8755 = vpack.c.b16 %v8646, %v8645
    %v8756 = vpack.c.b16 %v8648, %v8647
    %v8757 = vpack.c.b16 %v8650, %v8649
    %v8758 = vpack.c.b16 %v8652, %v8651
    %v8759 = vpack.c.b16 %v8654, %v8653
    %v8760 = vpack.c.b16 %v8656, %v8655
    %v8761 = vpack.c.b16 %v8658, %v8657
    %v8762 = vpack.c.b16 %v8660, %v8659
    %v8763 = vpack.c.b16 %v8662, %v8661
    %v8764 = vpack.c.b16 %v8664, %v8663
    %v8765 = vpack.c.b16 %v8666, %v8665
    %v8766 = vpack.c.b16 %v8668, %v8667
    %v8767 = vpack.c.b16 %v8670, %v8669
    %v8768 = vpack.c.b16 %v8672, %v8671
    %v8769 = vpack.c.b16 %v8674, %v8673
    %v8770 = vpack.c.b16 %v8676, %v8675
    %v8771 = vpack.c.b16 %v8678, %v8677
    %v8772 = vpack.c.b16 %v8680, %v8679
    %v8773 = vpack.c.b16 %v8682, %v8681
    %v8774 = vpack.c.b16 %v8684, %v8683
    %v8775 = vpack.c.b16 %v8686, %v8685
    %v8776 = vpack.c.b16 %v8688, %v8687
    %v8777 = vpack.c.b16 %v8690, %v8689
    %v8778 = vpack.c.b16 %v8692, %v8691
    %v8779 = vpack.c.b16 %v8694, %v8693
    %v8780 = vpack.c.b16 %v8696, %v8695
    %v8781 = vpack.c.b16 %v8698, %v8697
    %v8782 = vpack.c.b16 %v8700, %v8699
    %v8783 = vpack.c.b16 %v8702, %v8701
    %v8784 = vpack.c.b16 %v8704, %v8703
    %v8785 = vpack.c.b16 %v8706, %v8705
    %v8786 = vpack.c.b16 %v8708, %v8707
    %v8787 = vpack.c.b16 %v8710, %v8709
    %v8788 = vpack.c.b16 %v8712, %v8711
    %v8789 = vpack.c.b16 %v8714, %v8713
    %v8790 = vpack.c.b16 %v8716, %v8715
    %v8791 = vpack.c.b16 %v8718, %v8717
    %v8792 = vpack.c.b16 %v8720, %v8719
    %8865 = vmatprep.subr.bf16.mxu0 0
    %8866 = vmatpush1.bf16.msra.mxu0 %v8721
    %8867 = vmatprep.subr.bf16.mxu0 0
    %8868 = vmatpush1.bf16.msra.mxu0 %v8722
    %8869 = vmatprep.subr.bf16.mxu0 0
    %8870 = vmatpush1.bf16.msra.mxu0 %v8723
    %8871 = vmatprep.subr.bf16.mxu0 0
    %8872 = vmatpush1.bf16.msra.mxu0 %v8724
    %8873 = vmatprep.subr.bf16.mxu0 0
    %8874 = vmatpush1.bf16.msra.mxu0 %v8725
    %8875 = vmatprep.subr.bf16.mxu0 0
    %8876 = vmatpush1.bf16.msra.mxu0 %v8726
    %8877 = vmatprep.subr.bf16.mxu0 0
    %8878 = vmatpush1.bf16.msra.mxu0 %v8727
    %8879 = vmatprep.subr.bf16.mxu0 0
    %8880 = vmatpush1.bf16.msra.mxu0 %v8728
    %8881 = vmatprep.subr.bf16.mxu0 0
    %8882 = vmatpush1.bf16.msra.mxu0 %v8729
    %8883 = vmatprep.subr.bf16.mxu0 0
    %8884 = vmatpush1.bf16.msra.mxu0 %v8730
    %8885 = vmatprep.subr.bf16.mxu0 0
    %8886 = vmatpush1.bf16.msra.mxu0 %v8731
    %8887 = vmatprep.subr.bf16.mxu0 0
    %8888 = vmatpush1.bf16.msra.mxu0 %v8732
    %8889 = vmatprep.subr.bf16.mxu0 0
    %8890 = vmatpush1.bf16.msra.mxu0 %v8733
    %8891 = vmatprep.subr.bf16.mxu0 0
    %8892 = vmatpush1.bf16.msra.mxu0 %v8734
    %8893 = vmatprep.subr.bf16.mxu0 0
    %8894 = vmatpush1.bf16.msra.mxu0 %v8735
    %8895 = vmatprep.subr.bf16.mxu0 0
    %8896 = vmatpush1.bf16.msra.mxu0 %v8736
    %8897 = vmatprep.mubr.bf16.mxu0 %v8002
    %8898 = vmatmul.mubr.bf16.gmra.mrb[0].mxu0 %v8001
    %v8899 = vpop.f32.mrb[0].mxu0
    %v8900 = vadd.f32 0.0, %v8899
    %v8901 = vpop.f32.mrb[0].mxu0
    %v8902 = vpop.f32.mrb[0].mxu0
    %v8903 = vadd.f32 0.0, %v8902
    %v8904 = vpop.f32.mrb[0].mxu0
    %8905 = vmatprep.mubr.bf16.mxu0 %v8011
    %8906 = vmatmul.mubr.bf16.gmra.mrb[0].mxu0 %v8010
    %v8907 = vpop.f32.mrb[0].mxu0
    %v8908 = vadd.f32 0.0, %v8907
    %v8909 = vpop.f32.mrb[0].mxu0
    %v8910 = vpop.f32.mrb[0].mxu0
    %v8911 = vadd.f32 0.0, %v8910
    %v8912 = vpop.f32.mrb[0].mxu0
    %8913 = vmatprep.mubr.bf16.mxu0 %v8020
    %8914 = vmatmul.mubr.bf16.gmra.mrb[0].mxu0 %v8019
    %v8915 = vpop.f32.mrb[0].mxu0
    %v8916 = vadd.f32 0.0, %v8915
    %v8917 = vpop.f32.mrb[0].mxu0
    %v8918 = vpop.f32.mrb[0].mxu0
    %v8919 = vadd.f32 0.0, %v8918
    %v8920 = vpop.f32.mrb[0].mxu0
    %8921 = vmatprep.mubr.bf16.mxu0 %v8029
    %8922 = vmatmul.mubr.bf16.gmra.mrb[0].mxu0 %v8028
    %v8923 = vpop.f32.mrb[0].mxu0
    %v8924 = vadd.f32 0.0, %v8923
    %v8925 = vpop.f32.mrb[0].mxu0
    %v8926 = vpop.f32.mrb[0].mxu0
    %v8927 = vadd.f32 0.0, %v8926
    %v8928 = vpop.f32.mrb[0].mxu0
    %8929 = vmatprep.mubr.bf16.mxu0 %v8038
    %8930 = vmatmul.mubr.bf16.gmra.mrb[0].mxu0 %v8037
    %v8931 = vpop.f32.mrb[0].mxu0
    %v8932 = vadd.f32 0.0, %v8931
    %v8933 = vpop.f32.mrb[0].mxu0
    %v8934 = vpop.f32.mrb[0].mxu0
    %v8935 = vadd.f32 0.0, %v8934
    %v8936 = vpop.f32.mrb[0].mxu0
    %8937 = vmatprep.mubr.bf16.mxu0 %v8047
    %8938 = vmatmul.mubr.bf16.gmra.mrb[0].mxu0 %v8046
    %v8939 = vpop.f32.mrb[0].mxu0
    %v8940 = vadd.f32 0.0, %v8939
    %v8941 = vpop.f32.mrb[0].mxu0
    %v8942 = vpop.f32.mrb[0].mxu0
    %v8943 = vadd.f32 0.0, %v8942
    %v8944 = vpop.f32.mrb[0].mxu0
    %8945 = vmatprep.mubr.bf16.mxu0 %v8056
    %8946 = vmatmul.mubr.bf16.gmra.mrb[0].mxu0 %v8055
    %v8947 = vpop.f32.mrb[0].mxu0
    %v8948 = vadd.f32 0.0, %v8947
    %v8949 = vpop.f32.mrb[0].mxu0
    %v8950 = vpop.f32.mrb[0].mxu0
    %v8951 = vadd.f32 0.0, %v8950
    %v8952 = vpop.f32.mrb[0].mxu0
    %8953 = vmatprep.mubr.bf16.mxu0 %v8065
    %8954 = vmatmul.mubr.bf16.gmra.mrb[0].mxu0 %v8064
    %v8955 = vpop.f32.mrb[0].mxu0
    %v8956 = vadd.f32 0.0, %v8955
    %v8957 = vpop.f32.mrb[0].mxu0
    %v8958 = vpop.f32.mrb[0].mxu0
    %v8959 = vadd.f32 0.0, %v8958
    %v8960 = vpop.f32.mrb[0].mxu0
    %8961 = vmatprep.mubr.bf16.mxu0 %v8074
    %8962 = vmatmul.mubr.bf16.gmra.mrb[0].mxu0 %v8073
    %v8963 = vpop.f32.mrb[0].mxu0
    %v8964 = vadd.f32 0.0, %v8963
    %v8965 = vpop.f32.mrb[0].mxu0
    %v8966 = vpop.f32.mrb[0].mxu0
    %v8967 = vadd.f32 0.0, %v8966
    %v8968 = vpop.f32.mrb[0].mxu0
    %8969 = vmatprep.mubr.bf16.mxu0 %v8083
    %8970 = vmatmul.mubr.bf16.gmra.mrb[0].mxu0 %v8082
    %v8971 = vpop.f32.mrb[0].mxu0
    %v8972 = vadd.f32 0.0, %v8971
    %v8973 = vpop.f32.mrb[0].mxu0
    %v8974 = vpop.f32.mrb[0].mxu0
    %v8975 = vadd.f32 0.0, %v8974
    %v8976 = vpop.f32.mrb[0].mxu0
    %8977 = vmatprep.mubr.bf16.mxu0 %v8092
    %8978 = vmatmul.mubr.bf16.gmra.mrb[0].mxu0 %v8091
    %v8979 = vpop.f32.mrb[0].mxu0
    %v8980 = vadd.f32 0.0, %v8979
    %v8981 = vpop.f32.mrb[0].mxu0
    %v8982 = vpop.f32.mrb[0].mxu0
    %v8983 = vadd.f32 0.0, %v8982
    %v8984 = vpop.f32.mrb[0].mxu0
    %8985 = vmatprep.mubr.bf16.mxu0 %v8101
    %8986 = vmatmul.mubr.bf16.gmra.mrb[0].mxu0 %v8100
    %v8987 = vpop.f32.mrb[0].mxu0
    %v8988 = vadd.f32 0.0, %v8987
    %v8989 = vpop.f32.mrb[0].mxu0
    %v8990 = vpop.f32.mrb[0].mxu0
    %v8991 = vadd.f32 0.0, %v8990
    %v8992 = vpop.f32.mrb[0].mxu0
    %8993 = vmatprep.mubr.bf16.mxu0 %v8110
    %8994 = vmatmul.mubr.bf16.gmra.mrb[0].mxu0 %v8109
    %v8995 = vpop.f32.mrb[0].mxu0
    %v8996 = vadd.f32 0.0, %v8995
    %v8997 = vpop.f32.mrb[0].mxu0
    %v8998 = vpop.f32.mrb[0].mxu0
    %v8999 = vadd.f32 0.0, %v8998
    %v9000 = vpop.f32.mrb[0].mxu0
    %9001 = vmatprep.mubr.bf16.mxu0 %v8119
    %9002 = vmatmul.mubr.bf16.gmra.mrb[0].mxu0 %v8118
    %v9003 = vpop.f32.mrb[0].mxu0
    %v9004 = vadd.f32 0.0, %v9003
    %v9005 = vpop.f32.mrb[0].mxu0
    %v9006 = vpop.f32.mrb[0].mxu0
    %v9007 = vadd.f32 0.0, %v9006
    %v9008 = vpop.f32.mrb[0].mxu0
    %9009 = vmatprep.mubr.bf16.mxu0 %v8128
    %9010 = vmatmul.mubr.bf16.gmra.mrb[0].mxu0 %v8127
    %v9011 = vpop.f32.mrb[0].mxu0
    %v9012 = vadd.f32 0.0, %v9011
    %v9013 = vpop.f32.mrb[0].mxu0
    %v9014 = vpop.f32.mrb[0].mxu0
    %v9015 = vadd.f32 0.0, %v9014
    %v9016 = vpop.f32.mrb[0].mxu0
    %9017 = vmatprep.mubr.bf16.mxu0 %v8137
    %9018 = vmatmul.mubr.bf16.gmra.mrb[0].mxu0 %v8136
    %v9019 = vpop.f32.mrb[0].mxu0
    %v9020 = vadd.f32 0.0, %v9019
    %v9021 = vpop.f32.mrb[0].mxu0
    %v9022 = vpop.f32.mrb[0].mxu0
    %v9023 = vadd.f32 0.0, %v9022
    %v9024 = vpop.f32.mrb[0].mxu0
    %9025 = vmatprep.mubr.bf16.mxu0 %v8146
    %9026 = vmatmul.mubr.bf16.gmra.mrb[0].mxu0 %v8145
    %v9027 = vpop.f32.mrb[0].mxu0
    %v9028 = vadd.f32 0.0, %v9027
    %v9029 = vpop.f32.mrb[0].mxu0
    %v9030 = vpop.f32.mrb[0].mxu0
    %v9031 = vadd.f32 0.0, %v9030
    %v9032 = vpop.f32.mrb[0].mxu0
    %9033 = vmatprep.mubr.bf16.mxu0 %v8155
    %9034 = vmatmul.mubr.bf16.gmra.mrb[0].mxu0 %v8154
    %v9035 = vpop.f32.mrb[0].mxu0
    %v9036 = vadd.f32 0.0, %v9035
    %v9037 = vpop.f32.mrb[0].mxu0
    %v9038 = vpop.f32.mrb[0].mxu0
    %v9039 = vadd.f32 0.0, %v9038
    %v9040 = vpop.f32.mrb[0].mxu0
    %9041 = vmatprep.mubr.bf16.mxu0 %v8164
    %9042 = vmatmul.mubr.bf16.gmra.mrb[0].mxu0 %v8163
    %v9043 = vpop.f32.mrb[0].mxu0
    %v9044 = vadd.f32 0.0, %v9043
    %v9045 = vpop.f32.mrb[0].mxu0
    %v9046 = vpop.f32.mrb[0].mxu0
    %v9047 = vadd.f32 0.0, %v9046
    %v9048 = vpop.f32.mrb[0].mxu0
    %9049 = vmatprep.mubr.bf16.mxu0 %v8173
    %9050 = vmatmul.mubr.bf16.gmra.mrb[0].mxu0 %v8172
    %v9051 = vpop.f32.mrb[0].mxu0
    %v9052 = vadd.f32 0.0, %v9051
    %v9053 = vpop.f32.mrb[0].mxu0
    %v9054 = vpop.f32.mrb[0].mxu0
    %v9055 = vadd.f32 0.0, %v9054
    %v9056 = vpop.f32.mrb[0].mxu0
    %9057 = vmatprep.mubr.bf16.mxu0 %v8182
    %9058 = vmatmul.mubr.bf16.gmra.mrb[0].mxu0 %v8181
    %v9059 = vpop.f32.mrb[0].mxu0
    %v9060 = vadd.f32 0.0, %v9059
    %v9061 = vpop.f32.mrb[0].mxu0
    %v9062 = vpop.f32.mrb[0].mxu0
    %v9063 = vadd.f32 0.0, %v9062
    %v9064 = vpop.f32.mrb[0].mxu0
    %9065 = vmatprep.mubr.bf16.mxu0 %v8191
    %9066 = vmatmul.mubr.bf16.gmra.mrb[0].mxu0 %v8190
    %v9067 = vpop.f32.mrb[0].mxu0
    %v9068 = vadd.f32 0.0, %v9067
    %v9069 = vpop.f32.mrb[0].mxu0
    %v9070 = vpop.f32.mrb[0].mxu0
    %v9071 = vadd.f32 0.0, %v9070
    %v9072 = vpop.f32.mrb[0].mxu0
    %9073 = vmatprep.mubr.bf16.mxu0 %v8200
    %9074 = vmatmul.mubr.bf16.gmra.mrb[0].mxu0 %v8199
    %v9075 = vpop.f32.mrb[0].mxu0
    %v9076 = vadd.f32 0.0, %v9075
    %v9077 = vpop.f32.mrb[0].mxu0
    %v9078 = vpop.f32.mrb[0].mxu0
    %v9079 = vadd.f32 0.0, %v9078
    %v9080 = vpop.f32.mrb[0].mxu0
    %9081 = vmatprep.mubr.bf16.mxu0 %v8209
    %9082 = vmatmul.mubr.bf16.gmra.mrb[0].mxu0 %v8208
    %v9083 = vpop.f32.mrb[0].mxu0
    %v9084 = vadd.f32 0.0, %v9083
    %v9085 = vpop.f32.mrb[0].mxu0
    %v9086 = vpop.f32.mrb[0].mxu0
    %v9087 = vadd.f32 0.0, %v9086
    %v9088 = vpop.f32.mrb[0].mxu0
    %9089 = vmatprep.mubr.bf16.mxu0 %v8218
    %9090 = vmatmul.mubr.bf16.gmra.mrb[0].mxu0 %v8217
    %v9091 = vpop.f32.mrb[0].mxu0
    %v9092 = vadd.f32 0.0, %v9091
    %v9093 = vpop.f32.mrb[0].mxu0
    %v9094 = vpop.f32.mrb[0].mxu0
    %v9095 = vadd.f32 0.0, %v9094
    %v9096 = vpop.f32.mrb[0].mxu0
    %9097 = vmatprep.mubr.bf16.mxu0 %v8227
    %9098 = vmatmul.mubr.bf16.gmra.mrb[0].mxu0 %v8226
    %v9099 = vpop.f32.mrb[0].mxu0
    %v9100 = vadd.f32 0.0, %v9099
    %v9101 = vpop.f32.mrb[0].mxu0
    %v9102 = vpop.f32.mrb[0].mxu0
    %v9103 = vadd.f32 0.0, %v9102
    %v9104 = vpop.f32.mrb[0].mxu0
    %9105 = vmatprep.mubr.bf16.mxu0 %v8236
    %9106 = vmatmul.mubr.bf16.gmra.mrb[0].mxu0 %v8235
    %v9107 = vpop.f32.mrb[0].mxu0
    %v9108 = vadd.f32 0.0, %v9107
    %v9109 = vpop.f32.mrb[0].mxu0
    %v9110 = vpop.f32.mrb[0].mxu0
    %v9111 = vadd.f32 0.0, %v9110
    %v9112 = vpop.f32.mrb[0].mxu0
    %9113 = vmatprep.mubr.bf16.mxu0 %v8245
    %9114 = vmatmul.mubr.bf16.gmra.mrb[0].mxu0 %v8244
    %v9115 = vpop.f32.mrb[0].mxu0
    %v9116 = vadd.f32 0.0, %v9115
    %v9117 = vpop.f32.mrb[0].mxu0
    %v9118 = vpop.f32.mrb[0].mxu0
    %v9119 = vadd.f32 0.0, %v9118
    %v9120 = vpop.f32.mrb[0].mxu0
    %9121 = vmatprep.mubr.bf16.mxu0 %v8254
    %9122 = vmatmul.mubr.bf16.gmra.mrb[0].mxu0 %v8253
    %v9123 = vpop.f32.mrb[0].mxu0
    %v9124 = vadd.f32 0.0, %v9123
    %v9125 = vpop.f32.mrb[0].mxu0
    %v9126 = vpop.f32.mrb[0].mxu0
    %v9127 = vadd.f32 0.0, %v9126
    %v9128 = vpop.f32.mrb[0].mxu0
    %9129 = vmatprep.mubr.bf16.mxu0 %v8263
    %9130 = vmatmul.mubr.bf16.gmra.mrb[0].mxu0 %v8262
    %v9131 = vpop.f32.mrb[0].mxu0
    %v9132 = vadd.f32 0.0, %v9131
    %v9133 = vpop.f32.mrb[0].mxu0
    %v9134 = vpop.f32.mrb[0].mxu0
    %v9135 = vadd.f32 0.0, %v9134
    %v9136 = vpop.f32.mrb[0].mxu0
    %9137 = vmatprep.mubr.bf16.mxu0 %v8272
    %9138 = vmatmul.mubr.bf16.gmra.mrb[0].mxu0 %v8271
    %v9139 = vpop.f32.mrb[0].mxu0
    %v9140 = vadd.f32 0.0, %v9139
    %v9141 = vpop.f32.mrb[0].mxu0
    %v9142 = vpop.f32.mrb[0].mxu0
    %v9143 = vadd.f32 0.0, %v9142
    %v9144 = vpop.f32.mrb[0].mxu0
    %9145 = vmatprep.mubr.bf16.mxu0 %v8281
    %9146 = vmatmul.mubr.bf16.gmra.mrb[0].mxu0 %v8280
    %v9147 = vpop.f32.mrb[0].mxu0
    %v9148 = vadd.f32 0.0, %v9147
    %v9149 = vpop.f32.mrb[0].mxu0
    %v9150 = vpop.f32.mrb[0].mxu0
    %v9151 = vadd.f32 0.0, %v9150
    %v9152 = vpop.f32.mrb[0].mxu0
    %9153 = vdwg.mxu0
    %9154 = vmatprep.subr.bf16.mxu0 0
    %9155 = vmatpush1.bf16.msra.mxu0 %v8737
    %9156 = vmatprep.subr.bf16.mxu0 0
    %9157 = vmatpush1.bf16.msra.mxu0 %v8738
    %9158 = vmatprep.subr.bf16.mxu0 0
    %9159 = vmatpush1.bf16.msra.mxu0 %v8739
    %9160 = vmatprep.subr.bf16.mxu0 0
    %9161 = vmatpush1.bf16.msra.mxu0 %v8740
    %9162 = vmatprep.subr.bf16.mxu0 0
    %9163 = vmatpush1.bf16.msra.mxu0 %v8741
    %9164 = vmatprep.subr.bf16.mxu0 0
    %9165 = vmatpush1.bf16.msra.mxu0 %v8742
    %9166 = vmatprep.subr.bf16.mxu0 0
    %9167 = vmatpush1.bf16.msra.mxu0 %v8743
    %9168 = vmatprep.subr.bf16.mxu0 0
    %9169 = vmatpush1.bf16.msra.mxu0 %v8744
    %9170 = vmatprep.subr.bf16.mxu0 0
    %9171 = vmatpush1.bf16.msra.mxu0 %v8745
    %9172 = vmatprep.subr.bf16.mxu0 0
    %9173 = vmatpush1.bf16.msra.mxu0 %v8746
    %9174 = vmatprep.subr.bf16.mxu0 0
    %9175 = vmatpush1.bf16.msra.mxu0 %v8747
    %9176 = vmatprep.subr.bf16.mxu0 0
    %9177 = vmatpush1.bf16.msra.mxu0 %v8748
    %9178 = vmatprep.subr.bf16.mxu0 0
    %9179 = vmatpush1.bf16.msra.mxu0 %v8749
    %9180 = vmatprep.subr.bf16.mxu0 0
    %9181 = vmatpush1.bf16.msra.mxu0 %v8750
    %9182 = vmatprep.subr.bf16.mxu0 0
    %9183 = vmatpush1.bf16.msra.mxu0 %v8751
    %9184 = vmatprep.subr.bf16.mxu0 0
    %9185 = vmatpush1.bf16.msra.mxu0 %v8752
    %9186 = vmatprep.mubr.bf16.mxu0 %v8004
    %9187 = vmatmul.mubr.bf16.gmra.mrb[0].mxu0 %v8003
    %v9188 = vpop.f32.mrb[0].mxu0
    %v9189 = vadd.f32 %v8900, %v9188
    %v9190 = vpop.f32.mrb[0].mxu0
    %v9191 = vpop.f32.mrb[0].mxu0
    %v9192 = vadd.f32 %v8903, %v9191
    %v9193 = vpop.f32.mrb[0].mxu0
    %9194 = vmatprep.mubr.bf16.mxu0 %v8013
    %9195 = vmatmul.mubr.bf16.gmra.mrb[0].mxu0 %v8012
    %v9196 = vpop.f32.mrb[0].mxu0
    %v9197 = vadd.f32 %v8908, %v9196
    %v9198 = vpop.f32.mrb[0].mxu0
    %v9199 = vpop.f32.mrb[0].mxu0
    %v9200 = vadd.f32 %v8911, %v9199
    %v9201 = vpop.f32.mrb[0].mxu0
    %9202 = vmatprep.mubr.bf16.mxu0 %v8022
    %9203 = vmatmul.mubr.bf16.gmra.mrb[0].mxu0 %v8021
    %v9204 = vpop.f32.mrb[0].mxu0
    %v9205 = vadd.f32 %v8916, %v9204
    %v9206 = vpop.f32.mrb[0].mxu0
    %v9207 = vpop.f32.mrb[0].mxu0
    %v9208 = vadd.f32 %v8919, %v9207
    %v9209 = vpop.f32.mrb[0].mxu0
    %9210 = vmatprep.mubr.bf16.mxu0 %v8031
    %9211 = vmatmul.mubr.bf16.gmra.mrb[0].mxu0 %v8030
    %v9212 = vpop.f32.mrb[0].mxu0
    %v9213 = vadd.f32 %v8924, %v9212
    %v9214 = vpop.f32.mrb[0].mxu0
    %v9215 = vpop.f32.mrb[0].mxu0
    %v9216 = vadd.f32 %v8927, %v9215
    %v9217 = vpop.f32.mrb[0].mxu0
    %9218 = vmatprep.mubr.bf16.mxu0 %v8040
    %9219 = vmatmul.mubr.bf16.gmra.mrb[0].mxu0 %v8039
    %v9220 = vpop.f32.mrb[0].mxu0
    %v9221 = vadd.f32 %v8932, %v9220
    %v9222 = vpop.f32.mrb[0].mxu0
    %v9223 = vpop.f32.mrb[0].mxu0
    %v9224 = vadd.f32 %v8935, %v9223
    %v9225 = vpop.f32.mrb[0].mxu0
    %9226 = vmatprep.mubr.bf16.mxu0 %v8049
    %9227 = vmatmul.mubr.bf16.gmra.mrb[0].mxu0 %v8048
    %v9228 = vpop.f32.mrb[0].mxu0
    %v9229 = vadd.f32 %v8940, %v9228
    %v9230 = vpop.f32.mrb[0].mxu0
    %v9231 = vpop.f32.mrb[0].mxu0
    %v9232 = vadd.f32 %v8943, %v9231
    %v9233 = vpop.f32.mrb[0].mxu0
    %9234 = vmatprep.mubr.bf16.mxu0 %v8058
    %9235 = vmatmul.mubr.bf16.gmra.mrb[0].mxu0 %v8057
    %v9236 = vpop.f32.mrb[0].mxu0
    %v9237 = vadd.f32 %v8948, %v9236
    %v9238 = vpop.f32.mrb[0].mxu0
    %v9239 = vpop.f32.mrb[0].mxu0
    %v9240 = vadd.f32 %v8951, %v9239
    %v9241 = vpop.f32.mrb[0].mxu0
    %9242 = vmatprep.mubr.bf16.mxu0 %v8067
    %9243 = vmatmul.mubr.bf16.gmra.mrb[0].mxu0 %v8066
    %v9244 = vpop.f32.mrb[0].mxu0
    %v9245 = vadd.f32 %v8956, %v9244
    %v9246 = vpop.f32.mrb[0].mxu0
    %v9247 = vpop.f32.mrb[0].mxu0
    %v9248 = vadd.f32 %v8959, %v9247
    %v9249 = vpop.f32.mrb[0].mxu0
    %9250 = vmatprep.mubr.bf16.mxu0 %v8076
    %9251 = vmatmul.mubr.bf16.gmra.mrb[0].mxu0 %v8075
    %v9252 = vpop.f32.mrb[0].mxu0
    %v9253 = vadd.f32 %v8964, %v9252
    %v9254 = vpop.f32.mrb[0].mxu0
    %v9255 = vpop.f32.mrb[0].mxu0
    %v9256 = vadd.f32 %v8967, %v9255
    %v9257 = vpop.f32.mrb[0].mxu0
    %9258 = vmatprep.mubr.bf16.mxu0 %v8085
    %9259 = vmatmul.mubr.bf16.gmra.mrb[0].mxu0 %v8084
    %v9260 = vpop.f32.mrb[0].mxu0
    %v9261 = vadd.f32 %v8972, %v9260
    %v9262 = vpop.f32.mrb[0].mxu0
    %v9263 = vpop.f32.mrb[0].mxu0
    %v9264 = vadd.f32 %v8975, %v9263
    %v9265 = vpop.f32.mrb[0].mxu0
    %9266 = vmatprep.mubr.bf16.mxu0 %v8094
    %9267 = vmatmul.mubr.bf16.gmra.mrb[0].mxu0 %v8093
    %v9268 = vpop.f32.mrb[0].mxu0
    %v9269 = vadd.f32 %v8980, %v9268
    %v9270 = vpop.f32.mrb[0].mxu0
    %v9271 = vpop.f32.mrb[0].mxu0
    %v9272 = vadd.f32 %v8983, %v9271
    %v9273 = vpop.f32.mrb[0].mxu0
    %9274 = vmatprep.mubr.bf16.mxu0 %v8103
    %9275 = vmatmul.mubr.bf16.gmra.mrb[0].mxu0 %v8102
    %v9276 = vpop.f32.mrb[0].mxu0
    %v9277 = vadd.f32 %v8988, %v9276
    %v9278 = vpop.f32.mrb[0].mxu0
    %v9279 = vpop.f32.mrb[0].mxu0
    %v9280 = vadd.f32 %v8991, %v9279
    %v9281 = vpop.f32.mrb[0].mxu0
    %9282 = vmatprep.mubr.bf16.mxu0 %v8112
    %9283 = vmatmul.mubr.bf16.gmra.mrb[0].mxu0 %v8111
    %v9284 = vpop.f32.mrb[0].mxu0
    %v9285 = vadd.f32 %v8996, %v9284
    %v9286 = vpop.f32.mrb[0].mxu0
    %v9287 = vpop.f32.mrb[0].mxu0
    %v9288 = vadd.f32 %v8999, %v9287
    %v9289 = vpop.f32.mrb[0].mxu0
    %9290 = vmatprep.mubr.bf16.mxu0 %v8121
    %9291 = vmatmul.mubr.bf16.gmra.mrb[0].mxu0 %v8120
    %v9292 = vpop.f32.mrb[0].mxu0
    %v9293 = vadd.f32 %v9004, %v9292
    %v9294 = vpop.f32.mrb[0].mxu0
    %v9295 = vpop.f32.mrb[0].mxu0
    %v9296 = vadd.f32 %v9007, %v9295
    %v9297 = vpop.f32.mrb[0].mxu0
    %9298 = vmatprep.mubr.bf16.mxu0 %v8130
    %9299 = vmatmul.mubr.bf16.gmra.mrb[0].mxu0 %v8129
    %v9300 = vpop.f32.mrb[0].mxu0
    %v9301 = vadd.f32 %v9012, %v9300
    %v9302 = vpop.f32.mrb[0].mxu0
    %v9303 = vpop.f32.mrb[0].mxu0
    %v9304 = vadd.f32 %v9015, %v9303
    %v9305 = vpop.f32.mrb[0].mxu0
    %9306 = vmatprep.mubr.bf16.mxu0 %v8139
    %9307 = vmatmul.mubr.bf16.gmra.mrb[0].mxu0 %v8138
    %v9308 = vpop.f32.mrb[0].mxu0
    %v9309 = vadd.f32 %v9020, %v9308
    %v9310 = vpop.f32.mrb[0].mxu0
    %v9311 = vpop.f32.mrb[0].mxu0
    %v9312 = vadd.f32 %v9023, %v9311
    %v9313 = vpop.f32.mrb[0].mxu0
    %9314 = vmatprep.mubr.bf16.mxu0 %v8148
    %9315 = vmatmul.mubr.bf16.gmra.mrb[0].mxu0 %v8147
    %v9316 = vpop.f32.mrb[0].mxu0
    %v9317 = vadd.f32 %v9028, %v9316
    %v9318 = vpop.f32.mrb[0].mxu0
    %v9319 = vpop.f32.mrb[0].mxu0
    %v9320 = vadd.f32 %v9031, %v9319
    %v9321 = vpop.f32.mrb[0].mxu0
    %9322 = vmatprep.mubr.bf16.mxu0 %v8157
    %9323 = vmatmul.mubr.bf16.gmra.mrb[0].mxu0 %v8156
    %v9324 = vpop.f32.mrb[0].mxu0
    %v9325 = vadd.f32 %v9036, %v9324
    %v9326 = vpop.f32.mrb[0].mxu0
    %v9327 = vpop.f32.mrb[0].mxu0
    %v9328 = vadd.f32 %v9039, %v9327
    %v9329 = vpop.f32.mrb[0].mxu0
    %9330 = vmatprep.mubr.bf16.mxu0 %v8166
    %9331 = vmatmul.mubr.bf16.gmra.mrb[0].mxu0 %v8165
    %v9332 = vpop.f32.mrb[0].mxu0
    %v9333 = vadd.f32 %v9044, %v9332
    %v9334 = vpop.f32.mrb[0].mxu0
    %v9335 = vpop.f32.mrb[0].mxu0
    %v9336 = vadd.f32 %v9047, %v9335
    %v9337 = vpop.f32.mrb[0].mxu0
    %9338 = vmatprep.mubr.bf16.mxu0 %v8175
    %9339 = vmatmul.mubr.bf16.gmra.mrb[0].mxu0 %v8174
    %v9340 = vpop.f32.mrb[0].mxu0
    %v9341 = vadd.f32 %v9052, %v9340
    %v9342 = vpop.f32.mrb[0].mxu0
    %v9343 = vpop.f32.mrb[0].mxu0
    %v9344 = vadd.f32 %v9055, %v9343
    %v9345 = vpop.f32.mrb[0].mxu0
    %9346 = vmatprep.mubr.bf16.mxu0 %v8184
    %9347 = vmatmul.mubr.bf16.gmra.mrb[0].mxu0 %v8183
    %v9348 = vpop.f32.mrb[0].mxu0
    %v9349 = vadd.f32 %v9060, %v9348
    %v9350 = vpop.f32.mrb[0].mxu0
    %v9351 = vpop.f32.mrb[0].mxu0
    %v9352 = vadd.f32 %v9063, %v9351
    %v9353 = vpop.f32.mrb[0].mxu0
    %9354 = vmatprep.mubr.bf16.mxu0 %v8193
    %9355 = vmatmul.mubr.bf16.gmra.mrb[0].mxu0 %v8192
    %v9356 = vpop.f32.mrb[0].mxu0
    %v9357 = vadd.f32 %v9068, %v9356
    %v9358 = vpop.f32.mrb[0].mxu0
    %v9359 = vpop.f32.mrb[0].mxu0
    %v9360 = vadd.f32 %v9071, %v9359
    %v9361 = vpop.f32.mrb[0].mxu0
    %9362 = vmatprep.mubr.bf16.mxu0 %v8202
    %9363 = vmatmul.mubr.bf16.gmra.mrb[0].mxu0 %v8201
    %v9364 = vpop.f32.mrb[0].mxu0
    %v9365 = vadd.f32 %v9076, %v9364
    %v9366 = vpop.f32.mrb[0].mxu0
    %v9367 = vpop.f32.mrb[0].mxu0
    %v9368 = vadd.f32 %v9079, %v9367
    %v9369 = vpop.f32.mrb[0].mxu0
    %9370 = vmatprep.mubr.bf16.mxu0 %v8211
    %9371 = vmatmul.mubr.bf16.gmra.mrb[0].mxu0 %v8210
    %v9372 = vpop.f32.mrb[0].mxu0
    %v9373 = vadd.f32 %v9084, %v9372
    %v9374 = vpop.f32.mrb[0].mxu0
    %v9375 = vpop.f32.mrb[0].mxu0
    %v9376 = vadd.f32 %v9087, %v9375
    %v9377 = vpop.f32.mrb[0].mxu0
    %9378 = vmatprep.mubr.bf16.mxu0 %v8220
    %9379 = vmatmul.mubr.bf16.gmra.mrb[0].mxu0 %v8219
    %v9380 = vpop.f32.mrb[0].mxu0
    %v9381 = vadd.f32 %v9092, %v9380
    %v9382 = vpop.f32.mrb[0].mxu0
    %v9383 = vpop.f32.mrb[0].mxu0
    %v9384 = vadd.f32 %v9095, %v9383
    %v9385 = vpop.f32.mrb[0].mxu0
    %9386 = vmatprep.mubr.bf16.mxu0 %v8229
    %9387 = vmatmul.mubr.bf16.gmra.mrb[0].mxu0 %v8228
    %v9388 = vpop.f32.mrb[0].mxu0
    %v9389 = vadd.f32 %v9100, %v9388
    %v9390 = vpop.f32.mrb[0].mxu0
    %v9391 = vpop.f32.mrb[0].mxu0
    %v9392 = vadd.f32 %v9103, %v9391
    %v9393 = vpop.f32.mrb[0].mxu0
    %9394 = vmatprep.mubr.bf16.mxu0 %v8238
    %9395 = vmatmul.mubr.bf16.gmra.mrb[0].mxu0 %v8237
    %v9396 = vpop.f32.mrb[0].mxu0
    %v9397 = vadd.f32 %v9108, %v9396
    %v9398 = vpop.f32.mrb[0].mxu0
    %v9399 = vpop.f32.mrb[0].mxu0
    %v9400 = vadd.f32 %v9111, %v9399
    %v9401 = vpop.f32.mrb[0].mxu0
    %9402 = vmatprep.mubr.bf16.mxu0 %v8247
    %9403 = vmatmul.mubr.bf16.gmra.mrb[0].mxu0 %v8246
    %v9404 = vpop.f32.mrb[0].mxu0
    %v9405 = vadd.f32 %v9116, %v9404
    %v9406 = vpop.f32.mrb[0].mxu0
    %v9407 = vpop.f32.mrb[0].mxu0
    %v9408 = vadd.f32 %v9119, %v9407
    %v9409 = vpop.f32.mrb[0].mxu0
    %9410 = vmatprep.mubr.bf16.mxu0 %v8256
    %9411 = vmatmul.mubr.bf16.gmra.mrb[0].mxu0 %v8255
    %v9412 = vpop.f32.mrb[0].mxu0
    %v9413 = vadd.f32 %v9124, %v9412
    %v9414 = vpop.f32.mrb[0].mxu0
    %v9415 = vpop.f32.mrb[0].mxu0
    %v9416 = vadd.f32 %v9127, %v9415
    %v9417 = vpop.f32.mrb[0].mxu0
    %9418 = vmatprep.mubr.bf16.mxu0 %v8265
    %9419 = vmatmul.mubr.bf16.gmra.mrb[0].mxu0 %v8264
    %v9420 = vpop.f32.mrb[0].mxu0
    %v9421 = vadd.f32 %v9132, %v9420
    %v9422 = vpop.f32.mrb[0].mxu0
    %v9423 = vpop.f32.mrb[0].mxu0
    %v9424 = vadd.f32 %v9135, %v9423
    %v9425 = vpop.f32.mrb[0].mxu0
    %9426 = vmatprep.mubr.bf16.mxu0 %v8274
    %9427 = vmatmul.mubr.bf16.gmra.mrb[0].mxu0 %v8273
    %v9428 = vpop.f32.mrb[0].mxu0
    %v9429 = vadd.f32 %v9140, %v9428
    %v9430 = vpop.f32.mrb[0].mxu0
    %v9431 = vpop.f32.mrb[0].mxu0
    %v9432 = vadd.f32 %v9143, %v9431
    %v9433 = vpop.f32.mrb[0].mxu0
    %9434 = vmatprep.mubr.bf16.mxu0 %v8283
    %9435 = vmatmul.mubr.bf16.gmra.mrb[0].mxu0 %v8282
    %v9436 = vpop.f32.mrb[0].mxu0
    %v9437 = vadd.f32 %v9148, %v9436
    %v9438 = vpop.f32.mrb[0].mxu0
    %v9439 = vpop.f32.mrb[0].mxu0
    %v9440 = vadd.f32 %v9151, %v9439
    %v9441 = vpop.f32.mrb[0].mxu0
    %9442 = vdwg.mxu0
    %9443 = vmatprep.subr.bf16.mxu0 0
    %9444 = vmatpush1.bf16.msra.mxu0 %v8753
    %9445 = vmatprep.subr.bf16.mxu0 0
    %9446 = vmatpush1.bf16.msra.mxu0 %v8754
    %9447 = vmatprep.subr.bf16.mxu0 0
    %9448 = vmatpush1.bf16.msra.mxu0 %v8755
    %9449 = vmatprep.subr.bf16.mxu0 0
    %9450 = vmatpush1.bf16.msra.mxu0 %v8756
    %9451 = vmatprep.subr.bf16.mxu0 0
    %9452 = vmatpush1.bf16.msra.mxu0 %v8757
    %9453 = vmatprep.subr.bf16.mxu0 0
    %9454 = vmatpush1.bf16.msra.mxu0 %v8758
    %9455 = vmatprep.subr.bf16.mxu0 0
    %9456 = vmatpush1.bf16.msra.mxu0 %v8759
    %9457 = vmatprep.subr.bf16.mxu0 0
    %9458 = vmatpush1.bf16.msra.mxu0 %v8760
    %9459 = vmatprep.subr.bf16.mxu0 0
    %9460 = vmatpush1.bf16.msra.mxu0 %v8761
    %9461 = vmatprep.subr.bf16.mxu0 0
    %9462 = vmatpush1.bf16.msra.mxu0 %v8762
    %9463 = vmatprep.subr.bf16.mxu0 0
    %9464 = vmatpush1.bf16.msra.mxu0 %v8763
    %9465 = vmatprep.subr.bf16.mxu0 0
    %9466 = vmatpush1.bf16.msra.mxu0 %v8764
    %9467 = vmatprep.subr.bf16.mxu0 0
    %9468 = vmatpush1.bf16.msra.mxu0 %v8765
    %9469 = vmatprep.subr.bf16.mxu0 0
    %9470 = vmatpush1.bf16.msra.mxu0 %v8766
    %9471 = vmatprep.subr.bf16.mxu0 0
    %9472 = vmatpush1.bf16.msra.mxu0 %v8767
    %9473 = vmatprep.subr.bf16.mxu0 0
    %9474 = vmatpush1.bf16.msra.mxu0 %v8768
    %9475 = vmatprep.mubr.bf16.mxu0 %v8006
    %9476 = vmatmul.mubr.bf16.gmra.mrb[0].mxu0 %v8005
    %v9477 = vpop.f32.mrb[0].mxu0
    %v9478 = vadd.f32 %v9189, %v9477
    %v9479 = vpop.f32.mrb[0].mxu0
    %v9480 = vpop.f32.mrb[0].mxu0
    %v9481 = vadd.f32 %v9192, %v9480
    %v9482 = vpop.f32.mrb[0].mxu0
    %9483 = vmatprep.mubr.bf16.mxu0 %v8015
    %9484 = vmatmul.mubr.bf16.gmra.mrb[0].mxu0 %v8014
    %v9485 = vpop.f32.mrb[0].mxu0
    %v9486 = vadd.f32 %v9197, %v9485
    %v9487 = vpop.f32.mrb[0].mxu0
    %v9488 = vpop.f32.mrb[0].mxu0
    %v9489 = vadd.f32 %v9200, %v9488
    %v9490 = vpop.f32.mrb[0].mxu0
    %9491 = vmatprep.mubr.bf16.mxu0 %v8024
    %9492 = vmatmul.mubr.bf16.gmra.mrb[0].mxu0 %v8023
    %v9493 = vpop.f32.mrb[0].mxu0
    %v9494 = vadd.f32 %v9205, %v9493
    %v9495 = vpop.f32.mrb[0].mxu0
    %v9496 = vpop.f32.mrb[0].mxu0
    %v9497 = vadd.f32 %v9208, %v9496
    %v9498 = vpop.f32.mrb[0].mxu0
    %9499 = vmatprep.mubr.bf16.mxu0 %v8033
    %9500 = vmatmul.mubr.bf16.gmra.mrb[0].mxu0 %v8032
    %v9501 = vpop.f32.mrb[0].mxu0
    %v9502 = vadd.f32 %v9213, %v9501
    %v9503 = vpop.f32.mrb[0].mxu0
    %v9504 = vpop.f32.mrb[0].mxu0
    %v9505 = vadd.f32 %v9216, %v9504
    %v9506 = vpop.f32.mrb[0].mxu0
    %9507 = vmatprep.mubr.bf16.mxu0 %v8042
    %9508 = vmatmul.mubr.bf16.gmra.mrb[0].mxu0 %v8041
    %v9509 = vpop.f32.mrb[0].mxu0
    %v9510 = vadd.f32 %v9221, %v9509
    %v9511 = vpop.f32.mrb[0].mxu0
    %v9512 = vpop.f32.mrb[0].mxu0
    %v9513 = vadd.f32 %v9224, %v9512
    %v9514 = vpop.f32.mrb[0].mxu0
    %9515 = vmatprep.mubr.bf16.mxu0 %v8051
    %9516 = vmatmul.mubr.bf16.gmra.mrb[0].mxu0 %v8050
    %v9517 = vpop.f32.mrb[0].mxu0
    %v9518 = vadd.f32 %v9229, %v9517
    %v9519 = vpop.f32.mrb[0].mxu0
    %v9520 = vpop.f32.mrb[0].mxu0
    %v9521 = vadd.f32 %v9232, %v9520
    %v9522 = vpop.f32.mrb[0].mxu0
    %9523 = vmatprep.mubr.bf16.mxu0 %v8060
    %9524 = vmatmul.mubr.bf16.gmra.mrb[0].mxu0 %v8059
    %v9525 = vpop.f32.mrb[0].mxu0
    %v9526 = vadd.f32 %v9237, %v9525
    %v9527 = vpop.f32.mrb[0].mxu0
    %v9528 = vpop.f32.mrb[0].mxu0
    %v9529 = vadd.f32 %v9240, %v9528
    %v9530 = vpop.f32.mrb[0].mxu0
    %9531 = vmatprep.mubr.bf16.mxu0 %v8069
    %9532 = vmatmul.mubr.bf16.gmra.mrb[0].mxu0 %v8068
    %v9533 = vpop.f32.mrb[0].mxu0
    %v9534 = vadd.f32 %v9245, %v9533
    %v9535 = vpop.f32.mrb[0].mxu0
    %v9536 = vpop.f32.mrb[0].mxu0
    %v9537 = vadd.f32 %v9248, %v9536
    %v9538 = vpop.f32.mrb[0].mxu0
    %9539 = vmatprep.mubr.bf16.mxu0 %v8078
    %9540 = vmatmul.mubr.bf16.gmra.mrb[0].mxu0 %v8077
    %v9541 = vpop.f32.mrb[0].mxu0
    %v9542 = vadd.f32 %v9253, %v9541
    %v9543 = vpop.f32.mrb[0].mxu0
    %v9544 = vpop.f32.mrb[0].mxu0
    %v9545 = vadd.f32 %v9256, %v9544
    %v9546 = vpop.f32.mrb[0].mxu0
    %9547 = vmatprep.mubr.bf16.mxu0 %v8087
    %9548 = vmatmul.mubr.bf16.gmra.mrb[0].mxu0 %v8086
    %v9549 = vpop.f32.mrb[0].mxu0
    %v9550 = vadd.f32 %v9261, %v9549
    %v9551 = vpop.f32.mrb[0].mxu0
    %v9552 = vpop.f32.mrb[0].mxu0
    %v9553 = vadd.f32 %v9264, %v9552
    %v9554 = vpop.f32.mrb[0].mxu0
    %9555 = vmatprep.mubr.bf16.mxu0 %v8096
    %9556 = vmatmul.mubr.bf16.gmra.mrb[0].mxu0 %v8095
    %v9557 = vpop.f32.mrb[0].mxu0
    %v9558 = vadd.f32 %v9269, %v9557
    %v9559 = vpop.f32.mrb[0].mxu0
    %v9560 = vpop.f32.mrb[0].mxu0
    %v9561 = vadd.f32 %v9272, %v9560
    %v9562 = vpop.f32.mrb[0].mxu0
    %9563 = vmatprep.mubr.bf16.mxu0 %v8105
    %9564 = vmatmul.mubr.bf16.gmra.mrb[0].mxu0 %v8104
    %v9565 = vpop.f32.mrb[0].mxu0
    %v9566 = vadd.f32 %v9277, %v9565
    %v9567 = vpop.f32.mrb[0].mxu0
    %v9568 = vpop.f32.mrb[0].mxu0
    %v9569 = vadd.f32 %v9280, %v9568
    %v9570 = vpop.f32.mrb[0].mxu0
    %9571 = vmatprep.mubr.bf16.mxu0 %v8114
    %9572 = vmatmul.mubr.bf16.gmra.mrb[0].mxu0 %v8113
    %v9573 = vpop.f32.mrb[0].mxu0
    %v9574 = vadd.f32 %v9285, %v9573
    %v9575 = vpop.f32.mrb[0].mxu0
    %v9576 = vpop.f32.mrb[0].mxu0
    %v9577 = vadd.f32 %v9288, %v9576
    %v9578 = vpop.f32.mrb[0].mxu0
    %9579 = vmatprep.mubr.bf16.mxu0 %v8123
    %9580 = vmatmul.mubr.bf16.gmra.mrb[0].mxu0 %v8122
    %v9581 = vpop.f32.mrb[0].mxu0
    %v9582 = vadd.f32 %v9293, %v9581
    %v9583 = vpop.f32.mrb[0].mxu0
    %v9584 = vpop.f32.mrb[0].mxu0
    %v9585 = vadd.f32 %v9296, %v9584
    %v9586 = vpop.f32.mrb[0].mxu0
    %9587 = vmatprep.mubr.bf16.mxu0 %v8132
    %9588 = vmatmul.mubr.bf16.gmra.mrb[0].mxu0 %v8131
    %v9589 = vpop.f32.mrb[0].mxu0
    %v9590 = vadd.f32 %v9301, %v9589
    %v9591 = vpop.f32.mrb[0].mxu0
    %v9592 = vpop.f32.mrb[0].mxu0
    %v9593 = vadd.f32 %v9304, %v9592
    %v9594 = vpop.f32.mrb[0].mxu0
    %9595 = vmatprep.mubr.bf16.mxu0 %v8141
    %9596 = vmatmul.mubr.bf16.gmra.mrb[0].mxu0 %v8140
    %v9597 = vpop.f32.mrb[0].mxu0
    %v9598 = vadd.f32 %v9309, %v9597
    %v9599 = vpop.f32.mrb[0].mxu0
    %v9600 = vpop.f32.mrb[0].mxu0
    %v9601 = vadd.f32 %v9312, %v9600
    %v9602 = vpop.f32.mrb[0].mxu0
    %9603 = vmatprep.mubr.bf16.mxu0 %v8150
    %9604 = vmatmul.mubr.bf16.gmra.mrb[0].mxu0 %v8149
    %v9605 = vpop.f32.mrb[0].mxu0
    %v9606 = vadd.f32 %v9317, %v9605
    %v9607 = vpop.f32.mrb[0].mxu0
    %v9608 = vpop.f32.mrb[0].mxu0
    %v9609 = vadd.f32 %v9320, %v9608
    %v9610 = vpop.f32.mrb[0].mxu0
    %9611 = vmatprep.mubr.bf16.mxu0 %v8159
    %9612 = vmatmul.mubr.bf16.gmra.mrb[0].mxu0 %v8158
    %v9613 = vpop.f32.mrb[0].mxu0
    %v9614 = vadd.f32 %v9325, %v9613
    %v9615 = vpop.f32.mrb[0].mxu0
    %v9616 = vpop.f32.mrb[0].mxu0
    %v9617 = vadd.f32 %v9328, %v9616
    %v9618 = vpop.f32.mrb[0].mxu0
    %9619 = vmatprep.mubr.bf16.mxu0 %v8168
    %9620 = vmatmul.mubr.bf16.gmra.mrb[0].mxu0 %v8167
    %v9621 = vpop.f32.mrb[0].mxu0
    %v9622 = vadd.f32 %v9333, %v9621
    %v9623 = vpop.f32.mrb[0].mxu0
    %v9624 = vpop.f32.mrb[0].mxu0
    %v9625 = vadd.f32 %v9336, %v9624
    %v9626 = vpop.f32.mrb[0].mxu0
    %9627 = vmatprep.mubr.bf16.mxu0 %v8177
    %9628 = vmatmul.mubr.bf16.gmra.mrb[0].mxu0 %v8176
    %v9629 = vpop.f32.mrb[0].mxu0
    %v9630 = vadd.f32 %v9341, %v9629
    %v9631 = vpop.f32.mrb[0].mxu0
    %v9632 = vpop.f32.mrb[0].mxu0
    %v9633 = vadd.f32 %v9344, %v9632
    %v9634 = vpop.f32.mrb[0].mxu0
    %9635 = vmatprep.mubr.bf16.mxu0 %v8186
    %9636 = vmatmul.mubr.bf16.gmra.mrb[0].mxu0 %v8185
    %v9637 = vpop.f32.mrb[0].mxu0
    %v9638 = vadd.f32 %v9349, %v9637
    %v9639 = vpop.f32.mrb[0].mxu0
    %v9640 = vpop.f32.mrb[0].mxu0
    %v9641 = vadd.f32 %v9352, %v9640
    %v9642 = vpop.f32.mrb[0].mxu0
    %9643 = vmatprep.mubr.bf16.mxu0 %v8195
    %9644 = vmatmul.mubr.bf16.gmra.mrb[0].mxu0 %v8194
    %v9645 = vpop.f32.mrb[0].mxu0
    %v9646 = vadd.f32 %v9357, %v9645
    %v9647 = vpop.f32.mrb[0].mxu0
    %v9648 = vpop.f32.mrb[0].mxu0
    %v9649 = vadd.f32 %v9360, %v9648
    %v9650 = vpop.f32.mrb[0].mxu0
    %9651 = vmatprep.mubr.bf16.mxu0 %v8204
    %9652 = vmatmul.mubr.bf16.gmra.mrb[0].mxu0 %v8203
    %v9653 = vpop.f32.mrb[0].mxu0
    %v9654 = vadd.f32 %v9365, %v9653
    %v9655 = vpop.f32.mrb[0].mxu0
    %v9656 = vpop.f32.mrb[0].mxu0
    %v9657 = vadd.f32 %v9368, %v9656
    %v9658 = vpop.f32.mrb[0].mxu0
    %9659 = vmatprep.mubr.bf16.mxu0 %v8213
    %9660 = vmatmul.mubr.bf16.gmra.mrb[0].mxu0 %v8212
    %v9661 = vpop.f32.mrb[0].mxu0
    %v9662 = vadd.f32 %v9373, %v9661
    %v9663 = vpop.f32.mrb[0].mxu0
    %v9664 = vpop.f32.mrb[0].mxu0
    %v9665 = vadd.f32 %v9376, %v9664
    %v9666 = vpop.f32.mrb[0].mxu0
    %9667 = vmatprep.mubr.bf16.mxu0 %v8222
    %9668 = vmatmul.mubr.bf16.gmra.mrb[0].mxu0 %v8221
    %v9669 = vpop.f32.mrb[0].mxu0
    %v9670 = vadd.f32 %v9381, %v9669
    %v9671 = vpop.f32.mrb[0].mxu0
    %v9672 = vpop.f32.mrb[0].mxu0
    %v9673 = vadd.f32 %v9384, %v9672
    %v9674 = vpop.f32.mrb[0].mxu0
    %9675 = vmatprep.mubr.bf16.mxu0 %v8231
    %9676 = vmatmul.mubr.bf16.gmra.mrb[0].mxu0 %v8230
    %v9677 = vpop.f32.mrb[0].mxu0
    %v9678 = vadd.f32 %v9389, %v9677
    %v9679 = vpop.f32.mrb[0].mxu0
    %v9680 = vpop.f32.mrb[0].mxu0
    %v9681 = vadd.f32 %v9392, %v9680
    %v9682 = vpop.f32.mrb[0].mxu0
    %9683 = vmatprep.mubr.bf16.mxu0 %v8240
    %9684 = vmatmul.mubr.bf16.gmra.mrb[0].mxu0 %v8239
    %v9685 = vpop.f32.mrb[0].mxu0
    %v9686 = vadd.f32 %v9397, %v9685
    %v9687 = vpop.f32.mrb[0].mxu0
    %v9688 = vpop.f32.mrb[0].mxu0
    %v9689 = vadd.f32 %v9400, %v9688
    %v9690 = vpop.f32.mrb[0].mxu0
    %9691 = vmatprep.mubr.bf16.mxu0 %v8249
    %9692 = vmatmul.mubr.bf16.gmra.mrb[0].mxu0 %v8248
    %v9693 = vpop.f32.mrb[0].mxu0
    %v9694 = vadd.f32 %v9405, %v9693
    %v9695 = vpop.f32.mrb[0].mxu0
    %v9696 = vpop.f32.mrb[0].mxu0
    %v9697 = vadd.f32 %v9408, %v9696
    %v9698 = vpop.f32.mrb[0].mxu0
    %9699 = vmatprep.mubr.bf16.mxu0 %v8258
    %9700 = vmatmul.mubr.bf16.gmra.mrb[0].mxu0 %v8257
    %v9701 = vpop.f32.mrb[0].mxu0
    %v9702 = vadd.f32 %v9413, %v9701
    %v9703 = vpop.f32.mrb[0].mxu0
    %v9704 = vpop.f32.mrb[0].mxu0
    %v9705 = vadd.f32 %v9416, %v9704
    %v9706 = vpop.f32.mrb[0].mxu0
    %9707 = vmatprep.mubr.bf16.mxu0 %v8267
    %9708 = vmatmul.mubr.bf16.gmra.mrb[0].mxu0 %v8266
    %v9709 = vpop.f32.mrb[0].mxu0
    %v9710 = vadd.f32 %v9421, %v9709
    %v9711 = vpop.f32.mrb[0].mxu0
    %v9712 = vpop.f32.mrb[0].mxu0
    %v9713 = vadd.f32 %v9424, %v9712
    %v9714 = vpop.f32.mrb[0].mxu0
    %9715 = vmatprep.mubr.bf16.mxu0 %v8276
    %9716 = vmatmul.mubr.bf16.gmra.mrb[0].mxu0 %v8275
    %v9717 = vpop.f32.mrb[0].mxu0
    %v9718 = vadd.f32 %v9429, %v9717
    %v9719 = vpop.f32.mrb[0].mxu0
    %v9720 = vpop.f32.mrb[0].mxu0
    %v9721 = vadd.f32 %v9432, %v9720
    %v9722 = vpop.f32.mrb[0].mxu0
    %9723 = vmatprep.mubr.bf16.mxu0 %v8285
    %9724 = vmatmul.mubr.bf16.gmra.mrb[0].mxu0 %v8284
    %v9725 = vpop.f32.mrb[0].mxu0
    %v9726 = vadd.f32 %v9437, %v9725
    %v9727 = vpop.f32.mrb[0].mxu0
    %v9728 = vpop.f32.mrb[0].mxu0
    %v9729 = vadd.f32 %v9440, %v9728
    %v9730 = vpop.f32.mrb[0].mxu0
    %9731 = vdwg.mxu0
    %9732 = vmatprep.subr.bf16.mxu0 0
    %9733 = vmatpush1.bf16.msra.mxu0 %v8769
    %9734 = vmatprep.subr.bf16.mxu0 0
    %9735 = vmatpush1.bf16.msra.mxu0 %v8770
    %9736 = vmatprep.subr.bf16.mxu0 0
    %9737 = vmatpush1.bf16.msra.mxu0 %v8771
    %9738 = vmatprep.subr.bf16.mxu0 0
    %9739 = vmatpush1.bf16.msra.mxu0 %v8772
    %9740 = vmatprep.subr.bf16.mxu0 0
    %9741 = vmatpush1.bf16.msra.mxu0 %v8773
    %9742 = vmatprep.subr.bf16.mxu0 0
    %9743 = vmatpush1.bf16.msra.mxu0 %v8774
    %9744 = vmatprep.subr.bf16.mxu0 0
    %9745 = vmatpush1.bf16.msra.mxu0 %v8775
    %9746 = vmatprep.subr.bf16.mxu0 0
    %9747 = vmatpush1.bf16.msra.mxu0 %v8776
    %9748 = vmatprep.subr.bf16.mxu0 0
    %9749 = vmatpush1.bf16.msra.mxu0 %v8777
    %9750 = vmatprep.subr.bf16.mxu0 0
    %9751 = vmatpush1.bf16.msra.mxu0 %v8778
    %9752 = vmatprep.subr.bf16.mxu0 0
    %9753 = vmatpush1.bf16.msra.mxu0 %v8779
    %9754 = vmatprep.subr.bf16.mxu0 0
    %9755 = vmatpush1.bf16.msra.mxu0 %v8780
    %9756 = vmatprep.subr.bf16.mxu0 0
    %9757 = vmatpush1.bf16.msra.mxu0 %v8781
    %9758 = vmatprep.subr.bf16.mxu0 0
    %9759 = vmatpush1.bf16.msra.mxu0 %v8782
    %9760 = vmatprep.subr.bf16.mxu0 0
    %9761 = vmatpush1.bf16.msra.mxu0 %v8783
    %9762 = vmatprep.subr.bf16.mxu0 0
    %9763 = vmatpush1.bf16.msra.mxu0 %v8784
    %9764 = vmatprep.mubr.bf16.mxu0 %v8008
    %9765 = vmatmul.mubr.bf16.gmra.mrb[0].mxu0 %v8007
    %v9766 = vpop.f32.mrb[0].mxu0
    %v9767 = vadd.f32 %v9478, %v9766
    %v9768 = vpop.f32.mrb[0].mxu0
    %v9769 = vpop.f32.mrb[0].mxu0
    %v9770 = vadd.f32 %v9481, %v9769
    %v9771 = vpop.f32.mrb[0].mxu0
    %9772 = vmatprep.mubr.bf16.mxu0 %v8017
    %9773 = vmatmul.mubr.bf16.gmra.mrb[0].mxu0 %v8016
    %v9774 = vpop.f32.mrb[0].mxu0
    %v9775 = vadd.f32 %v9486, %v9774
    %v9776 = vpop.f32.mrb[0].mxu0
    %v9777 = vpop.f32.mrb[0].mxu0
    %v9778 = vadd.f32 %v9489, %v9777
    %v9779 = vpop.f32.mrb[0].mxu0
    %9780 = vmatprep.mubr.bf16.mxu0 %v8026
    %9781 = vmatmul.mubr.bf16.gmra.mrb[0].mxu0 %v8025
    %v9782 = vpop.f32.mrb[0].mxu0
    %v9783 = vadd.f32 %v9494, %v9782
    %v9784 = vpop.f32.mrb[0].mxu0
    %v9785 = vpop.f32.mrb[0].mxu0
    %v9786 = vadd.f32 %v9497, %v9785
    %v9787 = vpop.f32.mrb[0].mxu0
    %9788 = vmatprep.mubr.bf16.mxu0 %v8035
    %9789 = vmatmul.mubr.bf16.gmra.mrb[0].mxu0 %v8034
    %v9790 = vpop.f32.mrb[0].mxu0
    %v9791 = vadd.f32 %v9502, %v9790
    %v9792 = vpop.f32.mrb[0].mxu0
    %v9793 = vpop.f32.mrb[0].mxu0
    %v9794 = vadd.f32 %v9505, %v9793
    %v9795 = vpop.f32.mrb[0].mxu0
    %9796 = vmatprep.mubr.bf16.mxu0 %v8044
    %9797 = vmatmul.mubr.bf16.gmra.mrb[0].mxu0 %v8043
    %v9798 = vpop.f32.mrb[0].mxu0
    %v9799 = vadd.f32 %v9510, %v9798
    %v9800 = vpop.f32.mrb[0].mxu0
    %v9801 = vpop.f32.mrb[0].mxu0
    %v9802 = vadd.f32 %v9513, %v9801
    %v9803 = vpop.f32.mrb[0].mxu0
    %9804 = vmatprep.mubr.bf16.mxu0 %v8053
    %9805 = vmatmul.mubr.bf16.gmra.mrb[0].mxu0 %v8052
    %v9806 = vpop.f32.mrb[0].mxu0
    %v9807 = vadd.f32 %v9518, %v9806
    %v9808 = vpop.f32.mrb[0].mxu0
    %v9809 = vpop.f32.mrb[0].mxu0
    %v9810 = vadd.f32 %v9521, %v9809
    %v9811 = vpop.f32.mrb[0].mxu0
    %9812 = vmatprep.mubr.bf16.mxu0 %v8062
    %9813 = vmatmul.mubr.bf16.gmra.mrb[0].mxu0 %v8061
    %v9814 = vpop.f32.mrb[0].mxu0
    %v9815 = vadd.f32 %v9526, %v9814
    %v9816 = vpop.f32.mrb[0].mxu0
    %v9817 = vpop.f32.mrb[0].mxu0
    %v9818 = vadd.f32 %v9529, %v9817
    %v9819 = vpop.f32.mrb[0].mxu0
    %9820 = vmatprep.mubr.bf16.mxu0 %v8071
    %9821 = vmatmul.mubr.bf16.gmra.mrb[0].mxu0 %v8070
    %v9822 = vpop.f32.mrb[0].mxu0
    %v9823 = vadd.f32 %v9534, %v9822
    %v9824 = vpop.f32.mrb[0].mxu0
    %v9825 = vpop.f32.mrb[0].mxu0
    %v9826 = vadd.f32 %v9537, %v9825
    %v9827 = vpop.f32.mrb[0].mxu0
    %9828 = vmatprep.mubr.bf16.mxu0 %v8080
    %9829 = vmatmul.mubr.bf16.gmra.mrb[0].mxu0 %v8079
    %v9830 = vpop.f32.mrb[0].mxu0
    %v9831 = vadd.f32 %v9542, %v9830
    %v9832 = vpop.f32.mrb[0].mxu0
    %v9833 = vpop.f32.mrb[0].mxu0
    %v9834 = vadd.f32 %v9545, %v9833
    %v9835 = vpop.f32.mrb[0].mxu0
    %9836 = vmatprep.mubr.bf16.mxu0 %v8089
    %9837 = vmatmul.mubr.bf16.gmra.mrb[0].mxu0 %v8088
    %v9838 = vpop.f32.mrb[0].mxu0
    %v9839 = vadd.f32 %v9550, %v9838
    %v9840 = vpop.f32.mrb[0].mxu0
    %v9841 = vpop.f32.mrb[0].mxu0
    %v9842 = vadd.f32 %v9553, %v9841
    %v9843 = vpop.f32.mrb[0].mxu0
    %9844 = vmatprep.mubr.bf16.mxu0 %v8098
    %9845 = vmatmul.mubr.bf16.gmra.mrb[0].mxu0 %v8097
    %v9846 = vpop.f32.mrb[0].mxu0
    %v9847 = vadd.f32 %v9558, %v9846
    %v9848 = vpop.f32.mrb[0].mxu0
    %v9849 = vpop.f32.mrb[0].mxu0
    %v9850 = vadd.f32 %v9561, %v9849
    %v9851 = vpop.f32.mrb[0].mxu0
    %9852 = vmatprep.mubr.bf16.mxu0 %v8107
    %9853 = vmatmul.mubr.bf16.gmra.mrb[0].mxu0 %v8106
    %v9854 = vpop.f32.mrb[0].mxu0
    %v9855 = vadd.f32 %v9566, %v9854
    %v9856 = vpop.f32.mrb[0].mxu0
    %v9857 = vpop.f32.mrb[0].mxu0
    %v9858 = vadd.f32 %v9569, %v9857
    %v9859 = vpop.f32.mrb[0].mxu0
    %9860 = vmatprep.mubr.bf16.mxu0 %v8116
    %9861 = vmatmul.mubr.bf16.gmra.mrb[0].mxu0 %v8115
    %v9862 = vpop.f32.mrb[0].mxu0
    %v9863 = vadd.f32 %v9574, %v9862
    %v9864 = vpop.f32.mrb[0].mxu0
    %v9865 = vpop.f32.mrb[0].mxu0
    %v9866 = vadd.f32 %v9577, %v9865
    %v9867 = vpop.f32.mrb[0].mxu0
    %9868 = vmatprep.mubr.bf16.mxu0 %v8125
    %9869 = vmatmul.mubr.bf16.gmra.mrb[0].mxu0 %v8124
    %v9870 = vpop.f32.mrb[0].mxu0
    %v9871 = vadd.f32 %v9582, %v9870
    %v9872 = vpop.f32.mrb[0].mxu0
    %v9873 = vpop.f32.mrb[0].mxu0
    %v9874 = vadd.f32 %v9585, %v9873
    %v9875 = vpop.f32.mrb[0].mxu0
    %9876 = vmatprep.mubr.bf16.mxu0 %v8134
    %9877 = vmatmul.mubr.bf16.gmra.mrb[0].mxu0 %v8133
    %v9878 = vpop.f32.mrb[0].mxu0
    %v9879 = vadd.f32 %v9590, %v9878
    %v9880 = vpop.f32.mrb[0].mxu0
    %v9881 = vpop.f32.mrb[0].mxu0
    %v9882 = vadd.f32 %v9593, %v9881
    %v9883 = vpop.f32.mrb[0].mxu0
    %9884 = vmatprep.mubr.bf16.mxu0 %v8143
    %9885 = vmatmul.mubr.bf16.gmra.mrb[0].mxu0 %v8142
    %v9886 = vpop.f32.mrb[0].mxu0
    %v9887 = vadd.f32 %v9598, %v9886
    %v9888 = vpop.f32.mrb[0].mxu0
    %v9889 = vpop.f32.mrb[0].mxu0
    %v9890 = vadd.f32 %v9601, %v9889
    %v9891 = vpop.f32.mrb[0].mxu0
    %9892 = vmatprep.mubr.bf16.mxu0 %v8152
    %9893 = vmatmul.mubr.bf16.gmra.mrb[0].mxu0 %v8151
    %v9894 = vpop.f32.mrb[0].mxu0
    %v9895 = vadd.f32 %v9606, %v9894
    %v9896 = vpop.f32.mrb[0].mxu0
    %v9897 = vpop.f32.mrb[0].mxu0
    %v9898 = vadd.f32 %v9609, %v9897
    %v9899 = vpop.f32.mrb[0].mxu0
    %9900 = vmatprep.mubr.bf16.mxu0 %v8161
    %9901 = vmatmul.mubr.bf16.gmra.mrb[0].mxu0 %v8160
    %v9902 = vpop.f32.mrb[0].mxu0
    %v9903 = vadd.f32 %v9614, %v9902
    %v9904 = vpop.f32.mrb[0].mxu0
    %v9905 = vpop.f32.mrb[0].mxu0
    %v9906 = vadd.f32 %v9617, %v9905
    %v9907 = vpop.f32.mrb[0].mxu0
    %9908 = vmatprep.mubr.bf16.mxu0 %v8170
    %9909 = vmatmul.mubr.bf16.gmra.mrb[0].mxu0 %v8169
    %v9910 = vpop.f32.mrb[0].mxu0
    %v9911 = vadd.f32 %v9622, %v9910
    %v9912 = vpop.f32.mrb[0].mxu0
    %v9913 = vpop.f32.mrb[0].mxu0
    %v9914 = vadd.f32 %v9625, %v9913
    %v9915 = vpop.f32.mrb[0].mxu0
    %9916 = vmatprep.mubr.bf16.mxu0 %v8179
    %9917 = vmatmul.mubr.bf16.gmra.mrb[0].mxu0 %v8178
    %v9918 = vpop.f32.mrb[0].mxu0
    %v9919 = vadd.f32 %v9630, %v9918
    %v9920 = vpop.f32.mrb[0].mxu0
    %v9921 = vpop.f32.mrb[0].mxu0
    %v9922 = vadd.f32 %v9633, %v9921
    %v9923 = vpop.f32.mrb[0].mxu0
    %9924 = vmatprep.mubr.bf16.mxu0 %v8188
    %9925 = vmatmul.mubr.bf16.gmra.mrb[0].mxu0 %v8187
    %v9926 = vpop.f32.mrb[0].mxu0
    %v9927 = vadd.f32 %v9638, %v9926
    %v9928 = vpop.f32.mrb[0].mxu0
    %v9929 = vpop.f32.mrb[0].mxu0
    %v9930 = vadd.f32 %v9641, %v9929
    %v9931 = vpop.f32.mrb[0].mxu0
    %9932 = vmatprep.mubr.bf16.mxu0 %v8197
    %9933 = vmatmul.mubr.bf16.gmra.mrb[0].mxu0 %v8196
    %v9934 = vpop.f32.mrb[0].mxu0
    %v9935 = vadd.f32 %v9646, %v9934
    %v9936 = vpop.f32.mrb[0].mxu0
    %v9937 = vpop.f32.mrb[0].mxu0
    %v9938 = vadd.f32 %v9649, %v9937
    %v9939 = vpop.f32.mrb[0].mxu0
    %9940 = vmatprep.mubr.bf16.mxu0 %v8206
    %9941 = vmatmul.mubr.bf16.gmra.mrb[0].mxu0 %v8205
    %v9942 = vpop.f32.mrb[0].mxu0
    %v9943 = vadd.f32 %v9654, %v9942
    %v9944 = vpop.f32.mrb[0].mxu0
    %v9945 = vpop.f32.mrb[0].mxu0
    %v9946 = vadd.f32 %v9657, %v9945
    %v9947 = vpop.f32.mrb[0].mxu0
    %9948 = vmatprep.mubr.bf16.mxu0 %v8215
    %9949 = vmatmul.mubr.bf16.gmra.mrb[0].mxu0 %v8214
    %v9950 = vpop.f32.mrb[0].mxu0
    %v9951 = vadd.f32 %v9662, %v9950
    %v9952 = vpop.f32.mrb[0].mxu0
    %v9953 = vpop.f32.mrb[0].mxu0
    %v9954 = vadd.f32 %v9665, %v9953
    %v9955 = vpop.f32.mrb[0].mxu0
    %9956 = vmatprep.mubr.bf16.mxu0 %v8224
    %9957 = vmatmul.mubr.bf16.gmra.mrb[0].mxu0 %v8223
    %v9958 = vpop.f32.mrb[0].mxu0
    %v9959 = vadd.f32 %v9670, %v9958
    %v9960 = vpop.f32.mrb[0].mxu0
    %v9961 = vpop.f32.mrb[0].mxu0
    %v9962 = vadd.f32 %v9673, %v9961
    %v9963 = vpop.f32.mrb[0].mxu0
    %9964 = vmatprep.mubr.bf16.mxu0 %v8233
    %9965 = vmatmul.mubr.bf16.gmra.mrb[0].mxu0 %v8232
    %v9966 = vpop.f32.mrb[0].mxu0
    %v9967 = vadd.f32 %v9678, %v9966
    %v9968 = vpop.f32.mrb[0].mxu0
    %v9969 = vpop.f32.mrb[0].mxu0
    %v9970 = vadd.f32 %v9681, %v9969
    %v9971 = vpop.f32.mrb[0].mxu0
    %9972 = vmatprep.mubr.bf16.mxu0 %v8242
    %9973 = vmatmul.mubr.bf16.gmra.mrb[0].mxu0 %v8241
    %v9974 = vpop.f32.mrb[0].mxu0
    %v9975 = vadd.f32 %v9686, %v9974
    %v9976 = vpop.f32.mrb[0].mxu0
    %v9977 = vpop.f32.mrb[0].mxu0
    %v9978 = vadd.f32 %v9689, %v9977
    %v9979 = vpop.f32.mrb[0].mxu0
    %9980 = vmatprep.mubr.bf16.mxu0 %v8251
    %9981 = vmatmul.mubr.bf16.gmra.mrb[0].mxu0 %v8250
    %v9982 = vpop.f32.mrb[0].mxu0
    %v9983 = vadd.f32 %v9694, %v9982
    %v9984 = vpop.f32.mrb[0].mxu0
    %v9985 = vpop.f32.mrb[0].mxu0
    %v9986 = vadd.f32 %v9697, %v9985
    %v9987 = vpop.f32.mrb[0].mxu0
    %9988 = vmatprep.mubr.bf16.mxu0 %v8260
    %9989 = vmatmul.mubr.bf16.gmra.mrb[0].mxu0 %v8259
    %v9990 = vpop.f32.mrb[0].mxu0
    %v9991 = vadd.f32 %v9702, %v9990
    %v9992 = vpop.f32.mrb[0].mxu0
    %v9993 = vpop.f32.mrb[0].mxu0
    %v9994 = vadd.f32 %v9705, %v9993
    %v9995 = vpop.f32.mrb[0].mxu0
    %9996 = vmatprep.mubr.bf16.mxu0 %v8269
    %9997 = vmatmul.mubr.bf16.gmra.mrb[0].mxu0 %v8268
    %v9998 = vpop.f32.mrb[0].mxu0
    %v9999 = vadd.f32 %v9710, %v9998
    %v10000 = vpop.f32.mrb[0].mxu0
    %v10001 = vpop.f32.mrb[0].mxu0
    %v10002 = vadd.f32 %v9713, %v10001
    %v10003 = vpop.f32.mrb[0].mxu0
    %10004 = vmatprep.mubr.bf16.mxu0 %v8278
    %10005 = vmatmul.mubr.bf16.gmra.mrb[0].mxu0 %v8277
    %v10006 = vpop.f32.mrb[0].mxu0
    %v10007 = vadd.f32 %v9718, %v10006
    %v10008 = vpop.f32.mrb[0].mxu0
    %v10009 = vpop.f32.mrb[0].mxu0
    %v10010 = vadd.f32 %v9721, %v10009
    %v10011 = vpop.f32.mrb[0].mxu0
    %10012 = vmatprep.mubr.bf16.mxu0 %v8287
    %10013 = vmatmul.mubr.bf16.gmra.mrb[0].mxu0 %v8286
    %v10014 = vpop.f32.mrb[0].mxu0
    %v10015 = vadd.f32 %v9726, %v10014
    %v10016 = vpop.f32.mrb[0].mxu0
    %v10017 = vpop.f32.mrb[0].mxu0
    %v10018 = vadd.f32 %v9729, %v10017
    %v10019 = vpop.f32.mrb[0].mxu0
    %10020 = vdwg.mxu0
    %10021 = vmatprep.subr.bf16.mxu0 0
    %10022 = vmatpush1.bf16.msra.mxu0 %v8785
    %10023 = vmatprep.subr.bf16.mxu0 0
    %10024 = vmatpush1.bf16.msra.mxu0 %v8786
    %10025 = vmatprep.subr.bf16.mxu0 0
    %10026 = vmatpush1.bf16.msra.mxu0 %v8787
    %10027 = vmatprep.subr.bf16.mxu0 0
    %10028 = vmatpush1.bf16.msra.mxu0 %v8788
    %10029 = vmatprep.subr.bf16.mxu0 0
    %10030 = vmatpush1.bf16.msra.mxu0 %v8789
    %10031 = vmatprep.subr.bf16.mxu0 0
    %10032 = vmatpush1.bf16.msra.mxu0 %v8790
    %10033 = vmatprep.subr.bf16.mxu0 0
    %10034 = vmatpush1.bf16.msra.mxu0 %v8791
    %10035 = vmatprep.subr.bf16.mxu0 0
    %10036 = vmatpush1.bf16.msra.mxu0 %v8792
    %10037 = vmatprep.subr.bf16.mxu0 0
    %10038 = vmatpush1.bf16.msra.mxu0 0
    %10039 = vmatprep.subr.bf16.mxu0 0
    %10040 = vmatpush1.bf16.msra.mxu0 0
    %10041 = vmatprep.subr.bf16.mxu0 0
    %10042 = vmatpush1.bf16.msra.mxu0 0
    %10043 = vmatprep.subr.bf16.mxu0 0
    %10044 = vmatpush1.bf16.msra.mxu0 0
    %10045 = vmatprep.subr.bf16.mxu0 0
    %10046 = vmatpush1.bf16.msra.mxu0 0
    %10047 = vmatprep.subr.bf16.mxu0 0
    %10048 = vmatpush1.bf16.msra.mxu0 0
    %10049 = vmatprep.subr.bf16.mxu0 0
    %10050 = vmatpush1.bf16.msra.mxu0 0
    %10051 = vmatprep.subr.bf16.mxu0 0
    %10052 = vmatpush1.bf16.msra.mxu0 0
    %10053 = vmatprep.mubr.bf16.mxu0 0
    %10054 = vmatmul.mubr.bf16.gmra.mrb[0].mxu0 %v8009
    %v10055 = vpop.f32.mrb[0].mxu0
    %v10056 = vadd.f32 %v9767, %v10055
    %v10057 = vpop.f32.mrb[0].mxu0
    %v10058 = vpop.f32.mrb[0].mxu0
    %v10059 = vadd.f32 %v9770, %v10058
    %v10060 = vpop.f32.mrb[0].mxu0
    %10061 = vmatprep.mubr.bf16.mxu0 0
    %10062 = vmatmul.mubr.bf16.gmra.mrb[0].mxu0 %v8018
    %v10063 = vpop.f32.mrb[0].mxu0
    %v10064 = vadd.f32 %v9775, %v10063
    %v10065 = vpop.f32.mrb[0].mxu0
    %v10066 = vpop.f32.mrb[0].mxu0
    %v10067 = vadd.f32 %v9778, %v10066
    %v10068 = vpop.f32.mrb[0].mxu0
    %10069 = vmatprep.mubr.bf16.mxu0 0
    %10070 = vmatmul.mubr.bf16.gmra.mrb[0].mxu0 %v8027
    %v10071 = vpop.f32.mrb[0].mxu0
    %v10072 = vadd.f32 %v9783, %v10071
    %v10073 = vpop.f32.mrb[0].mxu0
    %v10074 = vpop.f32.mrb[0].mxu0
    %v10075 = vadd.f32 %v9786, %v10074
    %v10076 = vpop.f32.mrb[0].mxu0
    %10077 = vmatprep.mubr.bf16.mxu0 0
    %10078 = vmatmul.mubr.bf16.gmra.mrb[0].mxu0 %v8036
    %v10079 = vpop.f32.mrb[0].mxu0
    %v10080 = vadd.f32 %v9791, %v10079
    %v10081 = vpop.f32.mrb[0].mxu0
    %v10082 = vpop.f32.mrb[0].mxu0
    %v10083 = vadd.f32 %v9794, %v10082
    %v10084 = vpop.f32.mrb[0].mxu0
    %10085 = vmatprep.mubr.bf16.mxu0 0
    %10086 = vmatmul.mubr.bf16.gmra.mrb[0].mxu0 %v8045
    %v10087 = vpop.f32.mrb[0].mxu0
    %v10088 = vadd.f32 %v9799, %v10087
    %v10089 = vpop.f32.mrb[0].mxu0
    %v10090 = vpop.f32.mrb[0].mxu0
    %v10091 = vadd.f32 %v9802, %v10090
    %v10092 = vpop.f32.mrb[0].mxu0
    %10093 = vmatprep.mubr.bf16.mxu0 0
    %10094 = vmatmul.mubr.bf16.gmra.mrb[0].mxu0 %v8054
    %v10095 = vpop.f32.mrb[0].mxu0
    %v10096 = vadd.f32 %v9807, %v10095
    %v10097 = vpop.f32.mrb[0].mxu0
    %v10098 = vpop.f32.mrb[0].mxu0
    %v10099 = vadd.f32 %v9810, %v10098
    %v10100 = vpop.f32.mrb[0].mxu0
    %10101 = vmatprep.mubr.bf16.mxu0 0
    %10102 = vmatmul.mubr.bf16.gmra.mrb[0].mxu0 %v8063
    %v10103 = vpop.f32.mrb[0].mxu0
    %v10104 = vadd.f32 %v9815, %v10103
    %v10105 = vpop.f32.mrb[0].mxu0
    %v10106 = vpop.f32.mrb[0].mxu0
    %v10107 = vadd.f32 %v9818, %v10106
    %v10108 = vpop.f32.mrb[0].mxu0
    %10109 = vmatprep.mubr.bf16.mxu0 0
    %10110 = vmatmul.mubr.bf16.gmra.mrb[0].mxu0 %v8072
    %v10111 = vpop.f32.mrb[0].mxu0
    %v10112 = vadd.f32 %v9823, %v10111
    %v10113 = vpop.f32.mrb[0].mxu0
    %v10114 = vpop.f32.mrb[0].mxu0
    %v10115 = vadd.f32 %v9826, %v10114
    %v10116 = vpop.f32.mrb[0].mxu0
    %10117 = vmatprep.mubr.bf16.mxu0 0
    %10118 = vmatmul.mubr.bf16.gmra.mrb[0].mxu0 %v8081
    %v10119 = vpop.f32.mrb[0].mxu0
    %v10120 = vadd.f32 %v9831, %v10119
    %v10121 = vpop.f32.mrb[0].mxu0
    %v10122 = vpop.f32.mrb[0].mxu0
    %v10123 = vadd.f32 %v9834, %v10122
    %v10124 = vpop.f32.mrb[0].mxu0
    %10125 = vmatprep.mubr.bf16.mxu0 0
    %10126 = vmatmul.mubr.bf16.gmra.mrb[0].mxu0 %v8090
    %v10127 = vpop.f32.mrb[0].mxu0
    %v10128 = vadd.f32 %v9839, %v10127
    %v10129 = vpop.f32.mrb[0].mxu0
    %v10130 = vpop.f32.mrb[0].mxu0
    %v10131 = vadd.f32 %v9842, %v10130
    %v10132 = vpop.f32.mrb[0].mxu0
    %10133 = vmatprep.mubr.bf16.mxu0 0
    %10134 = vmatmul.mubr.bf16.gmra.mrb[0].mxu0 %v8099
    %v10135 = vpop.f32.mrb[0].mxu0
    %v10136 = vadd.f32 %v9847, %v10135
    %v10137 = vpop.f32.mrb[0].mxu0
    %v10138 = vpop.f32.mrb[0].mxu0
    %v10139 = vadd.f32 %v9850, %v10138
    %v10140 = vpop.f32.mrb[0].mxu0
    %10141 = vmatprep.mubr.bf16.mxu0 0
    %10142 = vmatmul.mubr.bf16.gmra.mrb[0].mxu0 %v8108
    %v10143 = vpop.f32.mrb[0].mxu0
    %v10144 = vadd.f32 %v9855, %v10143
    %v10145 = vpop.f32.mrb[0].mxu0
    %v10146 = vpop.f32.mrb[0].mxu0
    %v10147 = vadd.f32 %v9858, %v10146
    %v10148 = vpop.f32.mrb[0].mxu0
    %10149 = vmatprep.mubr.bf16.mxu0 0
    %10150 = vmatmul.mubr.bf16.gmra.mrb[0].mxu0 %v8117
    %v10151 = vpop.f32.mrb[0].mxu0
    %v10152 = vadd.f32 %v9863, %v10151
    %v10153 = vpop.f32.mrb[0].mxu0
    %v10154 = vpop.f32.mrb[0].mxu0
    %v10155 = vadd.f32 %v9866, %v10154
    %v10156 = vpop.f32.mrb[0].mxu0
    %10157 = vmatprep.mubr.bf16.mxu0 0
    %10158 = vmatmul.mubr.bf16.gmra.mrb[0].mxu0 %v8126
    %v10159 = vpop.f32.mrb[0].mxu0
    %v10160 = vadd.f32 %v9871, %v10159
    %v10161 = vpop.f32.mrb[0].mxu0
    %v10162 = vpop.f32.mrb[0].mxu0
    %v10163 = vadd.f32 %v9874, %v10162
    %v10164 = vpop.f32.mrb[0].mxu0
    %10165 = vmatprep.mubr.bf16.mxu0 0
    %10166 = vmatmul.mubr.bf16.gmra.mrb[0].mxu0 %v8135
    %v10167 = vpop.f32.mrb[0].mxu0
    %v10168 = vadd.f32 %v9879, %v10167
    %v10169 = vpop.f32.mrb[0].mxu0
    %v10170 = vpop.f32.mrb[0].mxu0
    %v10171 = vadd.f32 %v9882, %v10170
    %v10172 = vpop.f32.mrb[0].mxu0
    %10173 = vmatprep.mubr.bf16.mxu0 0
    %10174 = vmatmul.mubr.bf16.gmra.mrb[0].mxu0 %v8144
    %v10175 = vpop.f32.mrb[0].mxu0
    %v10176 = vadd.f32 %v9887, %v10175
    %v10177 = vpop.f32.mrb[0].mxu0
    %v10178 = vpop.f32.mrb[0].mxu0
    %v10179 = vadd.f32 %v9890, %v10178
    %v10180 = vpop.f32.mrb[0].mxu0
    %10181 = vmatprep.mubr.bf16.mxu0 0
    %10182 = vmatmul.mubr.bf16.gmra.mrb[0].mxu0 %v8153
    %v10183 = vpop.f32.mrb[0].mxu0
    %v10184 = vadd.f32 %v9895, %v10183
    %v10185 = vpop.f32.mrb[0].mxu0
    %v10186 = vpop.f32.mrb[0].mxu0
    %v10187 = vadd.f32 %v9898, %v10186
    %v10188 = vpop.f32.mrb[0].mxu0
    %10189 = vmatprep.mubr.bf16.mxu0 0
    %10190 = vmatmul.mubr.bf16.gmra.mrb[0].mxu0 %v8162
    %v10191 = vpop.f32.mrb[0].mxu0
    %v10192 = vadd.f32 %v9903, %v10191
    %v10193 = vpop.f32.mrb[0].mxu0
    %v10194 = vpop.f32.mrb[0].mxu0
    %v10195 = vadd.f32 %v9906, %v10194
    %v10196 = vpop.f32.mrb[0].mxu0
    %10197 = vmatprep.mubr.bf16.mxu0 0
    %10198 = vmatmul.mubr.bf16.gmra.mrb[0].mxu0 %v8171
    %v10199 = vpop.f32.mrb[0].mxu0
    %v10200 = vadd.f32 %v9911, %v10199
    %v10201 = vpop.f32.mrb[0].mxu0
    %v10202 = vpop.f32.mrb[0].mxu0
    %v10203 = vadd.f32 %v9914, %v10202
    %v10204 = vpop.f32.mrb[0].mxu0
    %10205 = vmatprep.mubr.bf16.mxu0 0
    %10206 = vmatmul.mubr.bf16.gmra.mrb[0].mxu0 %v8180
    %v10207 = vpop.f32.mrb[0].mxu0
    %v10208 = vadd.f32 %v9919, %v10207
    %v10209 = vpop.f32.mrb[0].mxu0
    %v10210 = vpop.f32.mrb[0].mxu0
    %v10211 = vadd.f32 %v9922, %v10210
    %v10212 = vpop.f32.mrb[0].mxu0
    %10213 = vmatprep.mubr.bf16.mxu0 0
    %10214 = vmatmul.mubr.bf16.gmra.mrb[0].mxu0 %v8189
    %v10215 = vpop.f32.mrb[0].mxu0
    %v10216 = vadd.f32 %v9927, %v10215
    %v10217 = vpop.f32.mrb[0].mxu0
    %v10218 = vpop.f32.mrb[0].mxu0
    %v10219 = vadd.f32 %v9930, %v10218
    %v10220 = vpop.f32.mrb[0].mxu0
    %10221 = vmatprep.mubr.bf16.mxu0 0
    %10222 = vmatmul.mubr.bf16.gmra.mrb[0].mxu0 %v8198
    %v10223 = vpop.f32.mrb[0].mxu0
    %v10224 = vadd.f32 %v9935, %v10223
    %v10225 = vpop.f32.mrb[0].mxu0
    %v10226 = vpop.f32.mrb[0].mxu0
    %v10227 = vadd.f32 %v9938, %v10226
    %v10228 = vpop.f32.mrb[0].mxu0
    %10229 = vmatprep.mubr.bf16.mxu0 0
    %10230 = vmatmul.mubr.bf16.gmra.mrb[0].mxu0 %v8207
    %v10231 = vpop.f32.mrb[0].mxu0
    %v10232 = vadd.f32 %v9943, %v10231
    %v10233 = vpop.f32.mrb[0].mxu0
    %v10234 = vpop.f32.mrb[0].mxu0
    %v10235 = vadd.f32 %v9946, %v10234
    %v10236 = vpop.f32.mrb[0].mxu0
    %10237 = vmatprep.mubr.bf16.mxu0 0
    %10238 = vmatmul.mubr.bf16.gmra.mrb[0].mxu0 %v8216
    %v10239 = vpop.f32.mrb[0].mxu0
    %v10240 = vadd.f32 %v9951, %v10239
    %v10241 = vpop.f32.mrb[0].mxu0
    %v10242 = vpop.f32.mrb[0].mxu0
    %v10243 = vadd.f32 %v9954, %v10242
    %v10244 = vpop.f32.mrb[0].mxu0
    %10245 = vmatprep.mubr.bf16.mxu0 0
    %10246 = vmatmul.mubr.bf16.gmra.mrb[0].mxu0 %v8225
    %v10247 = vpop.f32.mrb[0].mxu0
    %v10248 = vadd.f32 %v9959, %v10247
    %v10249 = vpop.f32.mrb[0].mxu0
    %v10250 = vpop.f32.mrb[0].mxu0
    %v10251 = vadd.f32 %v9962, %v10250
    %v10252 = vpop.f32.mrb[0].mxu0
    %10253 = vmatprep.mubr.bf16.mxu0 0
    %10254 = vmatmul.mubr.bf16.gmra.mrb[0].mxu0 %v8234
    %v10255 = vpop.f32.mrb[0].mxu0
    %v10256 = vadd.f32 %v9967, %v10255
    %v10257 = vpop.f32.mrb[0].mxu0
    %v10258 = vpop.f32.mrb[0].mxu0
    %v10259 = vadd.f32 %v9970, %v10258
    %v10260 = vpop.f32.mrb[0].mxu0
    %10261 = vmatprep.mubr.bf16.mxu0 0
    %10262 = vmatmul.mubr.bf16.gmra.mrb[0].mxu0 %v8243
    %v10263 = vpop.f32.mrb[0].mxu0
    %v10264 = vadd.f32 %v9975, %v10263
    %v10265 = vpop.f32.mrb[0].mxu0
    %v10266 = vpop.f32.mrb[0].mxu0
    %v10267 = vadd.f32 %v9978, %v10266
    %v10268 = vpop.f32.mrb[0].mxu0
    %10269 = vmatprep.mubr.bf16.mxu0 0
    %10270 = vmatmul.mubr.bf16.gmra.mrb[0].mxu0 %v8252
    %v10271 = vpop.f32.mrb[0].mxu0
    %v10272 = vadd.f32 %v9983, %v10271
    %v10273 = vpop.f32.mrb[0].mxu0
    %v10274 = vpop.f32.mrb[0].mxu0
    %v10275 = vadd.f32 %v9986, %v10274
    %v10276 = vpop.f32.mrb[0].mxu0
    %10277 = vmatprep.mubr.bf16.mxu0 0
    %10278 = vmatmul.mubr.bf16.gmra.mrb[0].mxu0 %v8261
    %v10279 = vpop.f32.mrb[0].mxu0
    %v10280 = vadd.f32 %v9991, %v10279
    %v10281 = vpop.f32.mrb[0].mxu0
    %v10282 = vpop.f32.mrb[0].mxu0
    %v10283 = vadd.f32 %v9994, %v10282
    %v10284 = vpop.f32.mrb[0].mxu0
    %10285 = vmatprep.mubr.bf16.mxu0 0
    %10286 = vmatmul.mubr.bf16.gmra.mrb[0].mxu0 %v8270
    %v10287 = vpop.f32.mrb[0].mxu0
    %v10288 = vadd.f32 %v9999, %v10287
    %v10289 = vpop.f32.mrb[0].mxu0
    %v10290 = vpop.f32.mrb[0].mxu0
    %v10291 = vadd.f32 %v10002, %v10290
    %v10292 = vpop.f32.mrb[0].mxu0
    %10293 = vmatprep.mubr.bf16.mxu0 0
    %10294 = vmatmul.mubr.bf16.gmra.mrb[0].mxu0 %v8279
    %v10295 = vpop.f32.mrb[0].mxu0
    %v10296 = vadd.f32 %v10007, %v10295
    %v10297 = vpop.f32.mrb[0].mxu0
    %v10298 = vpop.f32.mrb[0].mxu0
    %v10299 = vadd.f32 %v10010, %v10298
    %v10300 = vpop.f32.mrb[0].mxu0
    %10301 = vmatprep.mubr.bf16.mxu0 0
    %10302 = vmatmul.mubr.bf16.gmra.mrb[0].mxu0 %v8288
    %v10303 = vpop.f32.mrb[0].mxu0
    %v10304 = vadd.f32 %v10015, %v10303
    %v10305 = vpop.f32.mrb[0].mxu0
    %v10306 = vpop.f32.mrb[0].mxu0
    %v10307 = vadd.f32 %v10018, %v10306
    %v10308 = vpop.f32.mrb[0].mxu0
    %10309 = vdwg.mxu0
    %v10310 = vadd.f32 %v10056, %v10059
    %v10311 = vadd.f32 %v10310, %v10064
    %v10312 = vadd.f32 %v10311, %v10067
    %v10313 = vadd.f32 %v10312, %v10072
    %v10314 = vadd.f32 %v10313, %v10075
    %v10315 = vadd.f32 %v10314, %v10080
    %v10316 = vadd.f32 %v10315, %v10083
    %v10317 = vadd.f32 %v10316, %v10088
    %v10318 = vadd.f32 %v10317, %v10091
    %v10319 = vadd.f32 %v10318, %v10096
    %v10320 = vadd.f32 %v10319, %v10099
    %v10321 = vadd.f32 %v10320, %v10104
    %v10322 = vadd.f32 %v10321, %v10107
    %v10323 = vadd.f32 %v10322, %v10112
    %v10324 = vadd.f32 %v10323, %v10115
    %v10325 = vadd.f32 %v10324, %v10120
    %v10326 = vadd.f32 %v10325, %v10123
    %v10327 = vadd.f32 %v10326, %v10128
    %v10328 = vadd.f32 %v10327, %v10131
    %v10329 = vadd.f32 %v10328, %v10136
    %v10330 = vadd.f32 %v10329, %v10139
    %v10331 = vadd.f32 %v10330, %v10144
    %v10332 = vadd.f32 %v10331, %v10147
    %v10333 = vadd.f32 %v10332, %v10152
    %v10334 = vadd.f32 %v10333, %v10155
    %v10335 = vadd.f32 %v10334, %v10160
    %v10336 = vadd.f32 %v10335, %v10163
    %v10337 = vadd.f32 %v10336, %v10168
    %v10338 = vadd.f32 %v10337, %v10171
    %v10339 = vadd.f32 %v10338, %v10176
    %v10340 = vadd.f32 %v10339, %v10179
    %v10341 = vadd.f32 %v10340, %v10184
    %v10342 = vadd.f32 %v10341, %v10187
    %v10343 = vadd.f32 %v10342, %v10192
    %v10344 = vadd.f32 %v10343, %v10195
    %v10345 = vadd.f32 %v10344, %v10200
    %v10346 = vadd.f32 %v10345, %v10203
    %v10347 = vadd.f32 %v10346, %v10208
    %v10348 = vadd.f32 %v10347, %v10211
    %v10349 = vadd.f32 %v10348, %v10216
    %v10350 = vadd.f32 %v10349, %v10219
    %v10351 = vadd.f32 %v10350, %v10224
    %v10352 = vadd.f32 %v10351, %v10227
    %v10353 = vadd.f32 %v10352, %v10232
    %v10354 = vadd.f32 %v10353, %v10235
    %v10355 = vadd.f32 %v10354, %v10240
    %v10356 = vadd.f32 %v10355, %v10243
    %v10357 = vadd.f32 %v10356, %v10248
    %v10358 = vadd.f32 %v10357, %v10251
    %v10359 = vadd.f32 %v10358, %v10256
    %v10360 = vadd.f32 %v10359, %v10259
    %v10361 = vadd.f32 %v10360, %v10264
    %v10362 = vadd.f32 %v10361, %v10267
    %v10363 = vadd.f32 %v10362, %v10272
    %v10364 = vadd.f32 %v10363, %v10275
    %v10365 = vadd.f32 %v10364, %v10280
    %v10366 = vadd.f32 %v10365, %v10283
    %v10367 = vadd.f32 %v10366, %v10288
    %v10368 = vadd.f32 %v10367, %v10291
    %v10369 = vadd.f32 %v10368, %v10296
    %v10370 = vadd.f32 %v10369, %v10299
    %v10371 = vadd.f32 %v10370, %v10304
    %v10372 = vadd.f32 %v10371, %v10307
    %v10373 = vrot.slane %v10372, 4
    %v10374 = vadd.f32 %v10372, %v10373
    %v10375 = vrot.slane %v10374, 2
    %v10376 = vadd.f32 %v10374, %v10375
    %v10377 = vrot.slane %v10376, 1
    %v10378 = vadd.f32 %v10376, %v10377
    %v10379 = vmul.f32 %v10056, %v10056
    %v10380 = vmul.f32 %v10059, %v10059
    %v10381 = vmul.f32 %v10064, %v10064
    %v10382 = vmul.f32 %v10067, %v10067
    %v10383 = vmul.f32 %v10072, %v10072
    %v10384 = vmul.f32 %v10075, %v10075
    %v10385 = vmul.f32 %v10080, %v10080
    %v10386 = vmul.f32 %v10083, %v10083
    %v10387 = vmul.f32 %v10088, %v10088
    %v10388 = vmul.f32 %v10091, %v10091
    %v10389 = vmul.f32 %v10096, %v10096
    %v10390 = vmul.f32 %v10099, %v10099
    %v10391 = vmul.f32 %v10104, %v10104
    %v10392 = vmul.f32 %v10107, %v10107
    %v10393 = vmul.f32 %v10112, %v10112
    %v10394 = vmul.f32 %v10115, %v10115
    %v10395 = vmul.f32 %v10120, %v10120
    %v10396 = vmul.f32 %v10123, %v10123
    %v10397 = vmul.f32 %v10128, %v10128
    %v10398 = vmul.f32 %v10131, %v10131
    %v10399 = vmul.f32 %v10136, %v10136
    %v10400 = vmul.f32 %v10139, %v10139
    %v10401 = vmul.f32 %v10144, %v10144
    %v10402 = vmul.f32 %v10147, %v10147
    %v10403 = vmul.f32 %v10152, %v10152
    %v10404 = vmul.f32 %v10155, %v10155
    %v10405 = vmul.f32 %v10160, %v10160
    %v10406 = vmul.f32 %v10163, %v10163
    %v10407 = vmul.f32 %v10168, %v10168
    %v10408 = vmul.f32 %v10171, %v10171
    %v10409 = vmul.f32 %v10176, %v10176
    %v10410 = vmul.f32 %v10179, %v10179
    %v10411 = vmul.f32 %v10184, %v10184
    %v10412 = vmul.f32 %v10187, %v10187
    %v10413 = vmul.f32 %v10192, %v10192
    %v10414 = vmul.f32 %v10195, %v10195
    %v10415 = vmul.f32 %v10200, %v10200
    %v10416 = vmul.f32 %v10203, %v10203
    %v10417 = vmul.f32 %v10208, %v10208
    %v10418 = vmul.f32 %v10211, %v10211
    %v10419 = vmul.f32 %v10216, %v10216
    %v10420 = vmul.f32 %v10219, %v10219
    %v10421 = vmul.f32 %v10224, %v10224
    %v10422 = vmul.f32 %v10227, %v10227
    %v10423 = vmul.f32 %v10232, %v10232
    %v10424 = vmul.f32 %v10235, %v10235
    %v10425 = vmul.f32 %v10240, %v10240
    %v10426 = vmul.f32 %v10243, %v10243
    %v10427 = vmul.f32 %v10248, %v10248
    %v10428 = vmul.f32 %v10251, %v10251
    %v10429 = vmul.f32 %v10256, %v10256
    %v10430 = vmul.f32 %v10259, %v10259
    %v10431 = vmul.f32 %v10264, %v10264
    %v10432 = vmul.f32 %v10267, %v10267
    %v10433 = vmul.f32 %v10272, %v10272
    %v10434 = vmul.f32 %v10275, %v10275
    %v10435 = vmul.f32 %v10280, %v10280
    %v10436 = vmul.f32 %v10283, %v10283
    %v10437 = vmul.f32 %v10288, %v10288
    %v10438 = vmul.f32 %v10291, %v10291
    %v10439 = vmul.f32 %v10296, %v10296
    %v10440 = vmul.f32 %v10299, %v10299
    %v10441 = vmul.f32 %v10304, %v10304
    %v10442 = vmul.f32 %v10307, %v10307
    %v10443 = vadd.f32 %v10379, %v10380
    %v10444 = vadd.f32 %v10443, %v10381
    %v10445 = vadd.f32 %v10444, %v10382
    %v10446 = vadd.f32 %v10445, %v10383
    %v10447 = vadd.f32 %v10446, %v10384
    %v10448 = vadd.f32 %v10447, %v10385
    %v10449 = vadd.f32 %v10448, %v10386
    %v10450 = vadd.f32 %v10449, %v10387
    %v10451 = vadd.f32 %v10450, %v10388
    %v10452 = vadd.f32 %v10451, %v10389
    %v10453 = vadd.f32 %v10452, %v10390
    %v10454 = vadd.f32 %v10453, %v10391
    %v10455 = vadd.f32 %v10454, %v10392
    %v10456 = vadd.f32 %v10455, %v10393
    %v10457 = vadd.f32 %v10456, %v10394
    %v10458 = vadd.f32 %v10457, %v10395
    %v10459 = vadd.f32 %v10458, %v10396
    %v10460 = vadd.f32 %v10459, %v10397
    %v10461 = vadd.f32 %v10460, %v10398
    %v10462 = vadd.f32 %v10461, %v10399
    %v10463 = vadd.f32 %v10462, %v10400
    %v10464 = vadd.f32 %v10463, %v10401
    %v10465 = vadd.f32 %v10464, %v10402
    %v10466 = vadd.f32 %v10465, %v10403
    %v10467 = vadd.f32 %v10466, %v10404
    %v10468 = vadd.f32 %v10467, %v10405
    %v10469 = vadd.f32 %v10468, %v10406
    %v10470 = vadd.f32 %v10469, %v10407
    %v10471 = vadd.f32 %v10470, %v10408
    %v10472 = vadd.f32 %v10471, %v10409
    %v10473 = vadd.f32 %v10472, %v10410
    %v10474 = vadd.f32 %v10473, %v10411
    %v10475 = vadd.f32 %v10474, %v10412
    %v10476 = vadd.f32 %v10475, %v10413
    %v10477 = vadd.f32 %v10476, %v10414
    %v10478 = vadd.f32 %v10477, %v10415
    %v10479 = vadd.f32 %v10478, %v10416
    %v10480 = vadd.f32 %v10479, %v10417
    %v10481 = vadd.f32 %v10480, %v10418
    %v10482 = vadd.f32 %v10481, %v10419
    %v10483 = vadd.f32 %v10482, %v10420
    %v10484 = vadd.f32 %v10483, %v10421
    %v10485 = vadd.f32 %v10484, %v10422
    %v10486 = vadd.f32 %v10485, %v10423
    %v10487 = vadd.f32 %v10486, %v10424
    %v10488 = vadd.f32 %v10487, %v10425
    %v10489 = vadd.f32 %v10488, %v10426
    %v10490 = vadd.f32 %v10489, %v10427
    %v10491 = vadd.f32 %v10490, %v10428
    %v10492 = vadd.f32 %v10491, %v10429
    %v10493 = vadd.f32 %v10492, %v10430
    %v10494 = vadd.f32 %v10493, %v10431
    %v10495 = vadd.f32 %v10494, %v10432
    %v10496 = vadd.f32 %v10495, %v10433
    %v10497 = vadd.f32 %v10496, %v10434
    %v10498 = vadd.f32 %v10497, %v10435
    %v10499 = vadd.f32 %v10498, %v10436
    %v10500 = vadd.f32 %v10499, %v10437
    %v10501 = vadd.f32 %v10500, %v10438
    %v10502 = vadd.f32 %v10501, %v10439
    %v10503 = vadd.f32 %v10502, %v10440
    %v10504 = vadd.f32 %v10503, %v10441
    %v10505 = vadd.f32 %v10504, %v10442
    %v10506 = vrot.slane %v10505, 4
    %v10507 = vadd.f32 %v10505, %v10506
    %v10508 = vrot.slane %v10507, 2
    %v10509 = vadd.f32 %v10507, %v10508
    %v10510 = vrot.slane %v10509, 1
    %v10511 = vadd.f32 %v10509, %v10510
    %v10512 = vmul.f32 %v10378, 0.001953125
    %v10513 = vmul.f32 %v10511, 0.001953125
    %v10514 = vmul.f32 %v10512, %v10512
    %v10515 = vsub.f32 %v10513, %v10514
    %v10516 = vmax.f32 %v10515, 0.0
    %v10517 = vld [vmem:[#allocation13] sm:$0x1]
    %v10518 = vadd.f32 %v10516, 1e-05
    %v10519 = vrsqrt.pop %v10518
    %v10520 = vmul.f32 %v10517, %v10519
    %v10521 = vld [vmem:[#allocation15] sm:$0x1]
    %v10522 = vmul.f32 %v10512, %v10520
    %v10523 = vsub.f32 %v10521, %v10522
    %v10525 = vlaneseq
    %v10526 = vshrl.u32 %v10525, 7
    %v10527 = vsub.s32 0, %v10526
    %v10528 = vrot.slane %v10520, %v10527
    %v10530 = vmul.f32 %v10056, %v10528
    %v10531 = vmul.f32 %v10059, %v10528
    %v10532 = vmul.f32 %v10064, %v10528
    %v10533 = vmul.f32 %v10067, %v10528
    %v10534 = vmul.f32 %v10072, %v10528
    %v10535 = vmul.f32 %v10075, %v10528
    %v10536 = vmul.f32 %v10080, %v10528
    %v10537 = vmul.f32 %v10083, %v10528
    %v10538 = vmul.f32 %v10088, %v10528
    %v10539 = vmul.f32 %v10091, %v10528
    %v10540 = vmul.f32 %v10096, %v10528
    %v10541 = vmul.f32 %v10099, %v10528
    %v10542 = vmul.f32 %v10104, %v10528
    %v10543 = vmul.f32 %v10107, %v10528
    %v10544 = vmul.f32 %v10112, %v10528
    %v10545 = vmul.f32 %v10115, %v10528
    %v10546 = vmul.f32 %v10120, %v10528
    %v10547 = vmul.f32 %v10123, %v10528
    %v10548 = vmul.f32 %v10128, %v10528
    %v10549 = vmul.f32 %v10131, %v10528
    %v10550 = vmul.f32 %v10136, %v10528
    %v10551 = vmul.f32 %v10139, %v10528
    %v10552 = vmul.f32 %v10144, %v10528
    %v10553 = vmul.f32 %v10147, %v10528
    %v10554 = vmul.f32 %v10152, %v10528
    %v10555 = vmul.f32 %v10155, %v10528
    %v10556 = vmul.f32 %v10160, %v10528
    %v10557 = vmul.f32 %v10163, %v10528
    %v10558 = vmul.f32 %v10168, %v10528
    %v10559 = vmul.f32 %v10171, %v10528
    %v10560 = vmul.f32 %v10176, %v10528
    %v10561 = vmul.f32 %v10179, %v10528
    %v10562 = vmul.f32 %v10184, %v10528
    %v10563 = vmul.f32 %v10187, %v10528
    %v10564 = vmul.f32 %v10192, %v10528
    %v10565 = vmul.f32 %v10195, %v10528
    %v10566 = vmul.f32 %v10200, %v10528
    %v10567 = vmul.f32 %v10203, %v10528
    %v10568 = vmul.f32 %v10208, %v10528
    %v10569 = vmul.f32 %v10211, %v10528
    %v10570 = vmul.f32 %v10216, %v10528
    %v10571 = vmul.f32 %v10219, %v10528
    %v10572 = vmul.f32 %v10224, %v10528
    %v10573 = vmul.f32 %v10227, %v10528
    %v10574 = vmul.f32 %v10232, %v10528
    %v10575 = vmul.f32 %v10235, %v10528
    %v10576 = vmul.f32 %v10240, %v10528
    %v10577 = vmul.f32 %v10243, %v10528
    %v10578 = vmul.f32 %v10248, %v10528
    %v10579 = vmul.f32 %v10251, %v10528
    %v10580 = vmul.f32 %v10256, %v10528
    %v10581 = vmul.f32 %v10259, %v10528
    %v10582 = vmul.f32 %v10264, %v10528
    %v10583 = vmul.f32 %v10267, %v10528
    %v10584 = vmul.f32 %v10272, %v10528
    %v10585 = vmul.f32 %v10275, %v10528
    %v10586 = vmul.f32 %v10280, %v10528
    %v10587 = vmul.f32 %v10283, %v10528
    %v10588 = vmul.f32 %v10288, %v10528
    %v10589 = vmul.f32 %v10291, %v10528
    %v10590 = vmul.f32 %v10296, %v10528
    %v10591 = vmul.f32 %v10299, %v10528
    %v10592 = vmul.f32 %v10304, %v10528
    %v10593 = vmul.f32 %v10307, %v10528
    %v10595 = vlaneseq
    %v10596 = vshrl.u32 %v10595, 7
    %v10597 = vsub.s32 0, %v10596
    %v10598 = vrot.slane %v10523, %v10597
    %v10600 = vadd.f32 %v10530, %v10598
    %v10601 = vadd.f32 %v10531, %v10598
    %v10602 = vadd.f32 %v10532, %v10598
    %v10603 = vadd.f32 %v10533, %v10598
    %v10604 = vadd.f32 %v10534, %v10598
    %v10605 = vadd.f32 %v10535, %v10598
    %v10606 = vadd.f32 %v10536, %v10598
    %v10607 = vadd.f32 %v10537, %v10598
    %v10608 = vadd.f32 %v10538, %v10598
    %v10609 = vadd.f32 %v10539, %v10598
    %v10610 = vadd.f32 %v10540, %v10598
    %v10611 = vadd.f32 %v10541, %v10598
    %v10612 = vadd.f32 %v10542, %v10598
    %v10613 = vadd.f32 %v10543, %v10598
    %v10614 = vadd.f32 %v10544, %v10598
    %v10615 = vadd.f32 %v10545, %v10598
    %v10616 = vadd.f32 %v10546, %v10598
    %v10617 = vadd.f32 %v10547, %v10598
    %v10618 = vadd.f32 %v10548, %v10598
    %v10619 = vadd.f32 %v10549, %v10598
    %v10620 = vadd.f32 %v10550, %v10598
    %v10621 = vadd.f32 %v10551, %v10598
    %v10622 = vadd.f32 %v10552, %v10598
    %v10623 = vadd.f32 %v10553, %v10598
    %v10624 = vadd.f32 %v10554, %v10598
    %v10625 = vadd.f32 %v10555, %v10598
    %v10626 = vadd.f32 %v10556, %v10598
    %v10627 = vadd.f32 %v10557, %v10598
    %v10628 = vadd.f32 %v10558, %v10598
    %v10629 = vadd.f32 %v10559, %v10598
    %v10630 = vadd.f32 %v10560, %v10598
    %v10631 = vadd.f32 %v10561, %v10598
    %v10632 = vadd.f32 %v10562, %v10598
    %v10633 = vadd.f32 %v10563, %v10598
    %v10634 = vadd.f32 %v10564, %v10598
    %v10635 = vadd.f32 %v10565, %v10598
    %v10636 = vadd.f32 %v10566, %v10598
    %v10637 = vadd.f32 %v10567, %v10598
    %v10638 = vadd.f32 %v10568, %v10598
    %v10639 = vadd.f32 %v10569, %v10598
    %v10640 = vadd.f32 %v10570, %v10598
    %v10641 = vadd.f32 %v10571, %v10598
    %v10642 = vadd.f32 %v10572, %v10598
    %v10643 = vadd.f32 %v10573, %v10598
    %v10644 = vadd.f32 %v10574, %v10598
    %v10645 = vadd.f32 %v10575, %v10598
    %v10646 = vadd.f32 %v10576, %v10598
    %v10647 = vadd.f32 %v10577, %v10598
    %v10648 = vadd.f32 %v10578, %v10598
    %v10649 = vadd.f32 %v10579, %v10598
    %v10650 = vadd.f32 %v10580, %v10598
    %v10651 = vadd.f32 %v10581, %v10598
    %v10652 = vadd.f32 %v10582, %v10598
    %v10653 = vadd.f32 %v10583, %v10598
    %v10654 = vadd.f32 %v10584, %v10598
    %v10655 = vadd.f32 %v10585, %v10598
    %v10656 = vadd.f32 %v10586, %v10598
    %v10657 = vadd.f32 %v10587, %v10598
    %v10658 = vadd.f32 %v10588, %v10598
    %v10659 = vadd.f32 %v10589, %v10598
    %v10660 = vadd.f32 %v10590, %v10598
    %v10661 = vadd.f32 %v10591, %v10598
    %v10662 = vadd.f32 %v10592, %v10598
    %v10663 = vadd.f32 %v10593, %v10598
    %v10664 = vmax.f32 %v10600, 0.0
    %v10665 = vmax.f32 %v10601, 0.0
    %v10666 = vmax.f32 %v10602, 0.0
    %v10667 = vmax.f32 %v10603, 0.0
    %v10668 = vmax.f32 %v10604, 0.0
    %v10669 = vmax.f32 %v10605, 0.0
    %v10670 = vmax.f32 %v10606, 0.0
    %v10671 = vmax.f32 %v10607, 0.0
    %v10672 = vmax.f32 %v10608, 0.0
    %v10673 = vmax.f32 %v10609, 0.0
    %v10674 = vmax.f32 %v10610, 0.0
    %v10675 = vmax.f32 %v10611, 0.0
    %v10676 = vmax.f32 %v10612, 0.0
    %v10677 = vmax.f32 %v10613, 0.0
    %v10678 = vmax.f32 %v10614, 0.0
    %v10679 = vmax.f32 %v10615, 0.0
    %v10680 = vmax.f32 %v10616, 0.0
    %v10681 = vmax.f32 %v10617, 0.0
    %v10682 = vmax.f32 %v10618, 0.0
    %v10683 = vmax.f32 %v10619, 0.0
    %v10684 = vmax.f32 %v10620, 0.0
    %v10685 = vmax.f32 %v10621, 0.0
    %v10686 = vmax.f32 %v10622, 0.0
    %v10687 = vmax.f32 %v10623, 0.0
    %v10688 = vmax.f32 %v10624, 0.0
    %v10689 = vmax.f32 %v10625, 0.0
    %v10690 = vmax.f32 %v10626, 0.0
    %v10691 = vmax.f32 %v10627, 0.0
    %v10692 = vmax.f32 %v10628, 0.0
    %v10693 = vmax.f32 %v10629, 0.0
    %v10694 = vmax.f32 %v10630, 0.0
    %v10695 = vmax.f32 %v10631, 0.0
    %v10696 = vmax.f32 %v10632, 0.0
    %v10697 = vmax.f32 %v10633, 0.0
    %v10698 = vmax.f32 %v10634, 0.0
    %v10699 = vmax.f32 %v10635, 0.0
    %v10700 = vmax.f32 %v10636, 0.0
    %v10701 = vmax.f32 %v10637, 0.0
    %v10702 = vmax.f32 %v10638, 0.0
    %v10703 = vmax.f32 %v10639, 0.0
    %v10704 = vmax.f32 %v10640, 0.0
    %v10705 = vmax.f32 %v10641, 0.0
    %v10706 = vmax.f32 %v10642, 0.0
    %v10707 = vmax.f32 %v10643, 0.0
    %v10708 = vmax.f32 %v10644, 0.0
    %v10709 = vmax.f32 %v10645, 0.0
    %v10710 = vmax.f32 %v10646, 0.0
    %v10711 = vmax.f32 %v10647, 0.0
    %v10712 = vmax.f32 %v10648, 0.0
    %v10713 = vmax.f32 %v10649, 0.0
    %v10714 = vmax.f32 %v10650, 0.0
    %v10715 = vmax.f32 %v10651, 0.0
    %v10716 = vmax.f32 %v10652, 0.0
    %v10717 = vmax.f32 %v10653, 0.0
    %v10718 = vmax.f32 %v10654, 0.0
    %v10719 = vmax.f32 %v10655, 0.0
    %v10720 = vmax.f32 %v10656, 0.0
    %v10721 = vmax.f32 %v10657, 0.0
    %v10722 = vmax.f32 %v10658, 0.0
    %v10723 = vmax.f32 %v10659, 0.0
    %v10724 = vmax.f32 %v10660, 0.0
    %v10725 = vmax.f32 %v10661, 0.0
    %v10726 = vmax.f32 %v10662, 0.0
    %v10727 = vmax.f32 %v10663, 0.0
    %v10728 = vpack.c.bf16 %v10665, %v10664
    %v10729 = vpack.c.bf16 %v10667, %v10666
    %v10730 = vpack.c.bf16 %v10669, %v10668
    %v10731 = vpack.c.bf16 %v10671, %v10670
    %v10732 = vpack.c.bf16 %v10673, %v10672
    %v10733 = vpack.c.bf16 %v10675, %v10674
    %v10734 = vpack.c.bf16 %v10677, %v10676
    %v10735 = vpack.c.bf16 %v10679, %v10678
    %v10736 = vpack.c.bf16 %v10681, %v10680
    %v10737 = vpack.c.bf16 %v10683, %v10682
    %v10738 = vpack.c.bf16 %v10685, %v10684
    %v10739 = vpack.c.bf16 %v10687, %v10686
    %v10740 = vpack.c.bf16 %v10689, %v10688
    %v10741 = vpack.c.bf16 %v10691, %v10690
    %v10742 = vpack.c.bf16 %v10693, %v10692
    %v10743 = vpack.c.bf16 %v10695, %v10694
    %v10744 = vpack.c.bf16 %v10697, %v10696
    %v10745 = vpack.c.bf16 %v10699, %v10698
    %v10746 = vpack.c.bf16 %v10701, %v10700
    %v10747 = vpack.c.bf16 %v10703, %v10702
    %v10748 = vpack.c.bf16 %v10705, %v10704
    %v10749 = vpack.c.bf16 %v10707, %v10706
    %v10750 = vpack.c.bf16 %v10709, %v10708
    %v10751 = vpack.c.bf16 %v10711, %v10710
    %v10752 = vpack.c.bf16 %v10713, %v10712
    %v10753 = vpack.c.bf16 %v10715, %v10714
    %v10754 = vpack.c.bf16 %v10717, %v10716
    %v10755 = vpack.c.bf16 %v10719, %v10718
    %v10756 = vpack.c.bf16 %v10721, %v10720
    %v10757 = vpack.c.bf16 %v10723, %v10722
    %v10758 = vpack.c.bf16 %v10725, %v10724
    %v10759 = vpack.c.bf16 %v10727, %v10726
    %v10760 = vld [vmem:[#allocation16] sm:$0xf]
    %v10761 = vld [vmem:[#allocation16 + $0x4] sm:$0xf]
    %v10762 = vld [vmem:[#allocation16 + $0x8] sm:$0xf]
    %v10763 = vld [vmem:[#allocation16 + $0xc] sm:$0xf]
    %v10764 = vld [vmem:[#allocation16 + $0x10] sm:$0xf]
    %v10765 = vld [vmem:[#allocation16 + $0x14] sm:$0xf]
    %v10766 = vld [vmem:[#allocation16 + $0x18] sm:$0xf]
    %v10767 = vld [vmem:[#allocation16 + $0x1c] sm:$0xf]
    %v10768 = vld [vmem:[#allocation16 + $0x20] sm:$0xf]
    %v10769 = vld [vmem:[#allocation16 + $0x24] sm:$0xf]
    %v10770 = vld [vmem:[#allocation16 + $0x28] sm:$0xf]
    %v10771 = vld [vmem:[#allocation16 + $0x2c] sm:$0xf]
    %v10772 = vld [vmem:[#allocation16 + $0x30] sm:$0xf]
    %v10773 = vld [vmem:[#allocation16 + $0x34] sm:$0xf]
    %v10774 = vld [vmem:[#allocation16 + $0x38] sm:$0xf]
    %v10775 = vld [vmem:[#allocation16 + $0x3c] sm:$0xf]
    %v10792 = vunpack.c.l.b16 %v10760
    %v10793 = vunpack.c.l.b16 %v10761
    %v10794 = vunpack.c.l.b16 %v10762
    %v10795 = vunpack.c.l.b16 %v10763
    %v10796 = vunpack.c.l.b16 %v10764
    %v10797 = vunpack.c.l.b16 %v10765
    %v10798 = vunpack.c.l.b16 %v10766
    %v10799 = vunpack.c.l.b16 %v10767
    %v10800 = vunpack.c.l.b16 %v10768
    %v10801 = vunpack.c.l.b16 %v10769
    %v10802 = vunpack.c.l.b16 %v10770
    %v10803 = vunpack.c.l.b16 %v10771
    %v10804 = vunpack.c.l.b16 %v10772
    %v10805 = vunpack.c.l.b16 %v10773
    %v10806 = vunpack.c.l.b16 %v10774
    %v10807 = vunpack.c.l.b16 %v10775
    %v10808 = vpack.c.b16 %v10793, %v10792
    %v10809 = vpack.c.b16 %v10795, %v10794
    %v10810 = vpack.c.b16 %v10797, %v10796
    %v10811 = vpack.c.b16 %v10799, %v10798
    %v10812 = vpack.c.b16 %v10801, %v10800
    %v10813 = vpack.c.b16 %v10803, %v10802
    %v10814 = vpack.c.b16 %v10805, %v10804
    %v10815 = vpack.c.b16 %v10807, %v10806
    %10824 = vmatprep.subr.bf16.mxu0 0
    %10825 = vmatpush1.bf16.msra.mxu0 %v10808
    %10826 = vmatprep.subr.bf16.mxu0 0
    %10827 = vmatpush1.bf16.msra.mxu0 %v10809
    %10828 = vmatprep.subr.bf16.mxu0 0
    %10829 = vmatpush1.bf16.msra.mxu0 %v10810
    %10830 = vmatprep.subr.bf16.mxu0 0
    %10831 = vmatpush1.bf16.msra.mxu0 %v10811
    %10832 = vmatprep.subr.bf16.mxu0 0
    %10833 = vmatpush1.bf16.msra.mxu0 %v10812
    %10834 = vmatprep.subr.bf16.mxu0 0
    %10835 = vmatpush1.bf16.msra.mxu0 %v10813
    %10836 = vmatprep.subr.bf16.mxu0 0
    %10837 = vmatpush1.bf16.msra.mxu0 %v10814
    %10838 = vmatprep.subr.bf16.mxu0 0
    %10839 = vmatpush1.bf16.msra.mxu0 %v10815
    %10840 = vmatprep.subr.bf16.mxu0 0
    %10841 = vmatpush1.bf16.msra.mxu0 0
    %10842 = vmatprep.subr.bf16.mxu0 0
    %10843 = vmatpush1.bf16.msra.mxu0 0
    %10844 = vmatprep.subr.bf16.mxu0 0
    %10845 = vmatpush1.bf16.msra.mxu0 0
    %10846 = vmatprep.subr.bf16.mxu0 0
    %10847 = vmatpush1.bf16.msra.mxu0 0
    %10848 = vmatprep.subr.bf16.mxu0 0
    %10849 = vmatpush1.bf16.msra.mxu0 0
    %10850 = vmatprep.subr.bf16.mxu0 0
    %10851 = vmatpush1.bf16.msra.mxu0 0
    %10852 = vmatprep.subr.bf16.mxu0 0
    %10853 = vmatpush1.bf16.msra.mxu0 0
    %10854 = vmatprep.subr.bf16.mxu0 0
    %10855 = vmatpush1.bf16.msra.mxu0 0
    %10856 = vmatprep.mubr.bf16.mxu0 0
    %10857 = vmatmul.mubr.bf16.gmra.mrb[0].mxu0 %v10728
    %v10858 = vpop.f32.mrb[0].mxu0
    %v10859 = vadd.f32 0.0, %v10858
    %v10860 = vpop.f32.mrb[0].mxu0
    %v10861 = vpop.f32.mrb[0].mxu0
    %v10862 = vadd.f32 0.0, %v10861
    %v10863 = vpop.f32.mrb[0].mxu0
    %10864 = vmatprep.mubr.bf16.mxu0 0
    %10865 = vmatmul.mubr.bf16.gmra.mrb[0].mxu0 %v10729
    %v10866 = vpop.f32.mrb[0].mxu0
    %v10867 = vadd.f32 0.0, %v10866
    %v10868 = vpop.f32.mrb[0].mxu0
    %v10869 = vpop.f32.mrb[0].mxu0
    %v10870 = vadd.f32 0.0, %v10869
    %v10871 = vpop.f32.mrb[0].mxu0
    %10872 = vmatprep.mubr.bf16.mxu0 0
    %10873 = vmatmul.mubr.bf16.gmra.mrb[0].mxu0 %v10730
    %v10874 = vpop.f32.mrb[0].mxu0
    %v10875 = vadd.f32 0.0, %v10874
    %v10876 = vpop.f32.mrb[0].mxu0
    %v10877 = vpop.f32.mrb[0].mxu0
    %v10878 = vadd.f32 0.0, %v10877
    %v10879 = vpop.f32.mrb[0].mxu0
    %10880 = vmatprep.mubr.bf16.mxu0 0
    %10881 = vmatmul.mubr.bf16.gmra.mrb[0].mxu0 %v10731
    %v10882 = vpop.f32.mrb[0].mxu0
    %v10883 = vadd.f32 0.0, %v10882
    %v10884 = vpop.f32.mrb[0].mxu0
    %v10885 = vpop.f32.mrb[0].mxu0
    %v10886 = vadd.f32 0.0, %v10885
    %v10887 = vpop.f32.mrb[0].mxu0
    %10888 = vmatprep.mubr.bf16.mxu0 0
    %10889 = vmatmul.mubr.bf16.gmra.mrb[0].mxu0 %v10732
    %v10890 = vpop.f32.mrb[0].mxu0
    %v10891 = vadd.f32 0.0, %v10890
    %v10892 = vpop.f32.mrb[0].mxu0
    %v10893 = vpop.f32.mrb[0].mxu0
    %v10894 = vadd.f32 0.0, %v10893
    %v10895 = vpop.f32.mrb[0].mxu0
    %10896 = vmatprep.mubr.bf16.mxu0 0
    %10897 = vmatmul.mubr.bf16.gmra.mrb[0].mxu0 %v10733
    %v10898 = vpop.f32.mrb[0].mxu0
    %v10899 = vadd.f32 0.0, %v10898
    %v10900 = vpop.f32.mrb[0].mxu0
    %v10901 = vpop.f32.mrb[0].mxu0
    %v10902 = vadd.f32 0.0, %v10901
    %v10903 = vpop.f32.mrb[0].mxu0
    %10904 = vmatprep.mubr.bf16.mxu0 0
    %10905 = vmatmul.mubr.bf16.gmra.mrb[0].mxu0 %v10734
    %v10906 = vpop.f32.mrb[0].mxu0
    %v10907 = vadd.f32 0.0, %v10906
    %v10908 = vpop.f32.mrb[0].mxu0
    %v10909 = vpop.f32.mrb[0].mxu0
    %v10910 = vadd.f32 0.0, %v10909
    %v10911 = vpop.f32.mrb[0].mxu0
    %10912 = vmatprep.mubr.bf16.mxu0 0
    %10913 = vmatmul.mubr.bf16.gmra.mrb[0].mxu0 %v10735
    %v10914 = vpop.f32.mrb[0].mxu0
    %v10915 = vadd.f32 0.0, %v10914
    %v10916 = vpop.f32.mrb[0].mxu0
    %v10917 = vpop.f32.mrb[0].mxu0
    %v10918 = vadd.f32 0.0, %v10917
    %v10919 = vpop.f32.mrb[0].mxu0
    %10920 = vmatprep.mubr.bf16.mxu0 0
    %10921 = vmatmul.mubr.bf16.gmra.mrb[0].mxu0 %v10736
    %v10922 = vpop.f32.mrb[0].mxu0
    %v10923 = vadd.f32 0.0, %v10922
    %v10924 = vpop.f32.mrb[0].mxu0
    %v10925 = vpop.f32.mrb[0].mxu0
    %v10926 = vadd.f32 0.0, %v10925
    %v10927 = vpop.f32.mrb[0].mxu0
    %10928 = vmatprep.mubr.bf16.mxu0 0
    %10929 = vmatmul.mubr.bf16.gmra.mrb[0].mxu0 %v10737
    %v10930 = vpop.f32.mrb[0].mxu0
    %v10931 = vadd.f32 0.0, %v10930
    %v10932 = vpop.f32.mrb[0].mxu0
    %v10933 = vpop.f32.mrb[0].mxu0
    %v10934 = vadd.f32 0.0, %v10933
    %v10935 = vpop.f32.mrb[0].mxu0
    %10936 = vmatprep.mubr.bf16.mxu0 0
    %10937 = vmatmul.mubr.bf16.gmra.mrb[0].mxu0 %v10738
    %v10938 = vpop.f32.mrb[0].mxu0
    %v10939 = vadd.f32 0.0, %v10938
    %v10940 = vpop.f32.mrb[0].mxu0
    %v10941 = vpop.f32.mrb[0].mxu0
    %v10942 = vadd.f32 0.0, %v10941
    %v10943 = vpop.f32.mrb[0].mxu0
    %10944 = vmatprep.mubr.bf16.mxu0 0
    %10945 = vmatmul.mubr.bf16.gmra.mrb[0].mxu0 %v10739
    %v10946 = vpop.f32.mrb[0].mxu0
    %v10947 = vadd.f32 0.0, %v10946
    %v10948 = vpop.f32.mrb[0].mxu0
    %v10949 = vpop.f32.mrb[0].mxu0
    %v10950 = vadd.f32 0.0, %v10949
    %v10951 = vpop.f32.mrb[0].mxu0
    %10952 = vmatprep.mubr.bf16.mxu0 0
    %10953 = vmatmul.mubr.bf16.gmra.mrb[0].mxu0 %v10740
    %v10954 = vpop.f32.mrb[0].mxu0
    %v10955 = vadd.f32 0.0, %v10954
    %v10956 = vpop.f32.mrb[0].mxu0
    %v10957 = vpop.f32.mrb[0].mxu0
    %v10958 = vadd.f32 0.0, %v10957
    %v10959 = vpop.f32.mrb[0].mxu0
    %10960 = vmatprep.mubr.bf16.mxu0 0
    %10961 = vmatmul.mubr.bf16.gmra.mrb[0].mxu0 %v10741
    %v10962 = vpop.f32.mrb[0].mxu0
    %v10963 = vadd.f32 0.0, %v10962
    %v10964 = vpop.f32.mrb[0].mxu0
    %v10965 = vpop.f32.mrb[0].mxu0
    %v10966 = vadd.f32 0.0, %v10965
    %v10967 = vpop.f32.mrb[0].mxu0
    %10968 = vmatprep.mubr.bf16.mxu0 0
    %10969 = vmatmul.mubr.bf16.gmra.mrb[0].mxu0 %v10742
    %v10970 = vpop.f32.mrb[0].mxu0
    %v10971 = vadd.f32 0.0, %v10970
    %v10972 = vpop.f32.mrb[0].mxu0
    %v10973 = vpop.f32.mrb[0].mxu0
    %v10974 = vadd.f32 0.0, %v10973
    %v10975 = vpop.f32.mrb[0].mxu0
    %10976 = vmatprep.mubr.bf16.mxu0 0
    %10977 = vmatmul.mubr.bf16.gmra.mrb[0].mxu0 %v10743
    %v10978 = vpop.f32.mrb[0].mxu0
    %v10979 = vadd.f32 0.0, %v10978
    %v10980 = vpop.f32.mrb[0].mxu0
    %v10981 = vpop.f32.mrb[0].mxu0
    %v10982 = vadd.f32 0.0, %v10981
    %v10983 = vpop.f32.mrb[0].mxu0
    %10984 = vmatprep.mubr.bf16.mxu0 0
    %10985 = vmatmul.mubr.bf16.gmra.mrb[0].mxu0 %v10744
    %v10986 = vpop.f32.mrb[0].mxu0
    %v10987 = vadd.f32 0.0, %v10986
    %v10988 = vpop.f32.mrb[0].mxu0
    %v10989 = vpop.f32.mrb[0].mxu0
    %v10990 = vadd.f32 0.0, %v10989
    %v10991 = vpop.f32.mrb[0].mxu0
    %10992 = vmatprep.mubr.bf16.mxu0 0
    %10993 = vmatmul.mubr.bf16.gmra.mrb[0].mxu0 %v10745
    %v10994 = vpop.f32.mrb[0].mxu0
    %v10995 = vadd.f32 0.0, %v10994
    %v10996 = vpop.f32.mrb[0].mxu0
    %v10997 = vpop.f32.mrb[0].mxu0
    %v10998 = vadd.f32 0.0, %v10997
    %v10999 = vpop.f32.mrb[0].mxu0
    %11000 = vmatprep.mubr.bf16.mxu0 0
    %11001 = vmatmul.mubr.bf16.gmra.mrb[0].mxu0 %v10746
    %v11002 = vpop.f32.mrb[0].mxu0
    %v11003 = vadd.f32 0.0, %v11002
    %v11004 = vpop.f32.mrb[0].mxu0
    %v11005 = vpop.f32.mrb[0].mxu0
    %v11006 = vadd.f32 0.0, %v11005
    %v11007 = vpop.f32.mrb[0].mxu0
    %11008 = vmatprep.mubr.bf16.mxu0 0
    %11009 = vmatmul.mubr.bf16.gmra.mrb[0].mxu0 %v10747
    %v11010 = vpop.f32.mrb[0].mxu0
    %v11011 = vadd.f32 0.0, %v11010
    %v11012 = vpop.f32.mrb[0].mxu0
    %v11013 = vpop.f32.mrb[0].mxu0
    %v11014 = vadd.f32 0.0, %v11013
    %v11015 = vpop.f32.mrb[0].mxu0
    %11016 = vmatprep.mubr.bf16.mxu0 0
    %11017 = vmatmul.mubr.bf16.gmra.mrb[0].mxu0 %v10748
    %v11018 = vpop.f32.mrb[0].mxu0
    %v11019 = vadd.f32 0.0, %v11018
    %v11020 = vpop.f32.mrb[0].mxu0
    %v11021 = vpop.f32.mrb[0].mxu0
    %v11022 = vadd.f32 0.0, %v11021
    %v11023 = vpop.f32.mrb[0].mxu0
    %11024 = vmatprep.mubr.bf16.mxu0 0
    %11025 = vmatmul.mubr.bf16.gmra.mrb[0].mxu0 %v10749
    %v11026 = vpop.f32.mrb[0].mxu0
    %v11027 = vadd.f32 0.0, %v11026
    %v11028 = vpop.f32.mrb[0].mxu0
    %v11029 = vpop.f32.mrb[0].mxu0
    %v11030 = vadd.f32 0.0, %v11029
    %v11031 = vpop.f32.mrb[0].mxu0
    %11032 = vmatprep.mubr.bf16.mxu0 0
    %11033 = vmatmul.mubr.bf16.gmra.mrb[0].mxu0 %v10750
    %v11034 = vpop.f32.mrb[0].mxu0
    %v11035 = vadd.f32 0.0, %v11034
    %v11036 = vpop.f32.mrb[0].mxu0
    %v11037 = vpop.f32.mrb[0].mxu0
    %v11038 = vadd.f32 0.0, %v11037
    %v11039 = vpop.f32.mrb[0].mxu0
    %11040 = vmatprep.mubr.bf16.mxu0 0
    %11041 = vmatmul.mubr.bf16.gmra.mrb[0].mxu0 %v10751
    %v11042 = vpop.f32.mrb[0].mxu0
    %v11043 = vadd.f32 0.0, %v11042
    %v11044 = vpop.f32.mrb[0].mxu0
    %v11045 = vpop.f32.mrb[0].mxu0
    %v11046 = vadd.f32 0.0, %v11045
    %v11047 = vpop.f32.mrb[0].mxu0
    %11048 = vmatprep.mubr.bf16.mxu0 0
    %11049 = vmatmul.mubr.bf16.gmra.mrb[0].mxu0 %v10752
    %v11050 = vpop.f32.mrb[0].mxu0
    %v11051 = vadd.f32 0.0, %v11050
    %v11052 = vpop.f32.mrb[0].mxu0
    %v11053 = vpop.f32.mrb[0].mxu0
    %v11054 = vadd.f32 0.0, %v11053
    %v11055 = vpop.f32.mrb[0].mxu0
    %11056 = vmatprep.mubr.bf16.mxu0 0
    %11057 = vmatmul.mubr.bf16.gmra.mrb[0].mxu0 %v10753
    %v11058 = vpop.f32.mrb[0].mxu0
    %v11059 = vadd.f32 0.0, %v11058
    %v11060 = vpop.f32.mrb[0].mxu0
    %v11061 = vpop.f32.mrb[0].mxu0
    %v11062 = vadd.f32 0.0, %v11061
    %v11063 = vpop.f32.mrb[0].mxu0
    %11064 = vmatprep.mubr.bf16.mxu0 0
    %11065 = vmatmul.mubr.bf16.gmra.mrb[0].mxu0 %v10754
    %v11066 = vpop.f32.mrb[0].mxu0
    %v11067 = vadd.f32 0.0, %v11066
    %v11068 = vpop.f32.mrb[0].mxu0
    %v11069 = vpop.f32.mrb[0].mxu0
    %v11070 = vadd.f32 0.0, %v11069
    %v11071 = vpop.f32.mrb[0].mxu0
    %11072 = vmatprep.mubr.bf16.mxu0 0
    %11073 = vmatmul.mubr.bf16.gmra.mrb[0].mxu0 %v10755
    %v11074 = vpop.f32.mrb[0].mxu0
    %v11075 = vadd.f32 0.0, %v11074
    %v11076 = vpop.f32.mrb[0].mxu0
    %v11077 = vpop.f32.mrb[0].mxu0
    %v11078 = vadd.f32 0.0, %v11077
    %v11079 = vpop.f32.mrb[0].mxu0
    %11080 = vmatprep.mubr.bf16.mxu0 0
    %11081 = vmatmul.mubr.bf16.gmra.mrb[0].mxu0 %v10756
    %v11082 = vpop.f32.mrb[0].mxu0
    %v11083 = vadd.f32 0.0, %v11082
    %v11084 = vpop.f32.mrb[0].mxu0
    %v11085 = vpop.f32.mrb[0].mxu0
    %v11086 = vadd.f32 0.0, %v11085
    %v11087 = vpop.f32.mrb[0].mxu0
    %11088 = vmatprep.mubr.bf16.mxu0 0
    %11089 = vmatmul.mubr.bf16.gmra.mrb[0].mxu0 %v10757
    %v11090 = vpop.f32.mrb[0].mxu0
    %v11091 = vadd.f32 0.0, %v11090
    %v11092 = vpop.f32.mrb[0].mxu0
    %v11093 = vpop.f32.mrb[0].mxu0
    %v11094 = vadd.f32 0.0, %v11093
    %v11095 = vpop.f32.mrb[0].mxu0
    %11096 = vmatprep.mubr.bf16.mxu0 0
    %11097 = vmatmul.mubr.bf16.gmra.mrb[0].mxu0 %v10758
    %v11098 = vpop.f32.mrb[0].mxu0
    %v11099 = vadd.f32 0.0, %v11098
    %v11100 = vpop.f32.mrb[0].mxu0
    %v11101 = vpop.f32.mrb[0].mxu0
    %v11102 = vadd.f32 0.0, %v11101
    %v11103 = vpop.f32.mrb[0].mxu0
    %11104 = vmatprep.mubr.bf16.mxu0 0
    %11105 = vmatmul.mubr.bf16.gmra.mrb[0].mxu0 %v10759
    %v11106 = vpop.f32.mrb[0].mxu0
    %v11107 = vadd.f32 0.0, %v11106
    %v11108 = vpop.f32.mrb[0].mxu0
    %v11109 = vpop.f32.mrb[0].mxu0
    %v11110 = vadd.f32 0.0, %v11109
    %v11111 = vpop.f32.mrb[0].mxu0
    %11112 = vdwg.mxu0
    %v11113 = vadd.f32 %v10859, %v10862
    %v11114 = vadd.f32 %v11113, %v10867
    %v11115 = vadd.f32 %v11114, %v10870
    %v11116 = vadd.f32 %v11115, %v10875
    %v11117 = vadd.f32 %v11116, %v10878
    %v11118 = vadd.f32 %v11117, %v10883
    %v11119 = vadd.f32 %v11118, %v10886
    %v11120 = vadd.f32 %v11119, %v10891
    %v11121 = vadd.f32 %v11120, %v10894
    %v11122 = vadd.f32 %v11121, %v10899
    %v11123 = vadd.f32 %v11122, %v10902
    %v11124 = vadd.f32 %v11123, %v10907
    %v11125 = vadd.f32 %v11124, %v10910
    %v11126 = vadd.f32 %v11125, %v10915
    %v11127 = vadd.f32 %v11126, %v10918
    %v11128 = vadd.f32 %v11127, %v10923
    %v11129 = vadd.f32 %v11128, %v10926
    %v11130 = vadd.f32 %v11129, %v10931
    %v11131 = vadd.f32 %v11130, %v10934
    %v11132 = vadd.f32 %v11131, %v10939
    %v11133 = vadd.f32 %v11132, %v10942
    %v11134 = vadd.f32 %v11133, %v10947
    %v11135 = vadd.f32 %v11134, %v10950
    %v11136 = vadd.f32 %v11135, %v10955
    %v11137 = vadd.f32 %v11136, %v10958
    %v11138 = vadd.f32 %v11137, %v10963
    %v11139 = vadd.f32 %v11138, %v10966
    %v11140 = vadd.f32 %v11139, %v10971
    %v11141 = vadd.f32 %v11140, %v10974
    %v11142 = vadd.f32 %v11141, %v10979
    %v11143 = vadd.f32 %v11142, %v10982
    %v11144 = vadd.f32 %v11143, %v10987
    %v11145 = vadd.f32 %v11144, %v10990
    %v11146 = vadd.f32 %v11145, %v10995
    %v11147 = vadd.f32 %v11146, %v10998
    %v11148 = vadd.f32 %v11147, %v11003
    %v11149 = vadd.f32 %v11148, %v11006
    %v11150 = vadd.f32 %v11149, %v11011
    %v11151 = vadd.f32 %v11150, %v11014
    %v11152 = vadd.f32 %v11151, %v11019
    %v11153 = vadd.f32 %v11152, %v11022
    %v11154 = vadd.f32 %v11153, %v11027
    %v11155 = vadd.f32 %v11154, %v11030
    %v11156 = vadd.f32 %v11155, %v11035
    %v11157 = vadd.f32 %v11156, %v11038
    %v11158 = vadd.f32 %v11157, %v11043
    %v11159 = vadd.f32 %v11158, %v11046
    %v11160 = vadd.f32 %v11159, %v11051
    %v11161 = vadd.f32 %v11160, %v11054
    %v11162 = vadd.f32 %v11161, %v11059
    %v11163 = vadd.f32 %v11162, %v11062
    %v11164 = vadd.f32 %v11163, %v11067
    %v11165 = vadd.f32 %v11164, %v11070
    %v11166 = vadd.f32 %v11165, %v11075
    %v11167 = vadd.f32 %v11166, %v11078
    %v11168 = vadd.f32 %v11167, %v11083
    %v11169 = vadd.f32 %v11168, %v11086
    %v11170 = vadd.f32 %v11169, %v11091
    %v11171 = vadd.f32 %v11170, %v11094
    %v11172 = vadd.f32 %v11171, %v11099
    %v11173 = vadd.f32 %v11172, %v11102
    %v11174 = vadd.f32 %v11173, %v11107
    %v11175 = vadd.f32 %v11174, %v11110
    %v11176 = vrot.slane %v11175, 4
    %v11177 = vadd.f32 %v11175, %v11176
    %v11178 = vrot.slane %v11177, 2
    %v11179 = vadd.f32 %v11177, %v11178
    %v11180 = vrot.slane %v11179, 1
    %v11181 = vadd.f32 %v11179, %v11180
    %v11182 = vmul.f32 %v10859, %v10859
    %v11183 = vmul.f32 %v10862, %v10862
    %v11184 = vmul.f32 %v10867, %v10867
    %v11185 = vmul.f32 %v10870, %v10870
    %v11186 = vmul.f32 %v10875, %v10875
    %v11187 = vmul.f32 %v10878, %v10878
    %v11188 = vmul.f32 %v10883, %v10883
    %v11189 = vmul.f32 %v10886, %v10886
    %v11190 = vmul.f32 %v10891, %v10891
    %v11191 = vmul.f32 %v10894, %v10894
    %v11192 = vmul.f32 %v10899, %v10899
    %v11193 = vmul.f32 %v10902, %v10902
    %v11194 = vmul.f32 %v10907, %v10907
    %v11195 = vmul.f32 %v10910, %v10910
    %v11196 = vmul.f32 %v10915, %v10915
    %v11197 = vmul.f32 %v10918, %v10918
    %v11198 = vmul.f32 %v10923, %v10923
    %v11199 = vmul.f32 %v10926, %v10926
    %v11200 = vmul.f32 %v10931, %v10931
    %v11201 = vmul.f32 %v10934, %v10934
    %v11202 = vmul.f32 %v10939, %v10939
    %v11203 = vmul.f32 %v10942, %v10942
    %v11204 = vmul.f32 %v10947, %v10947
    %v11205 = vmul.f32 %v10950, %v10950
    %v11206 = vmul.f32 %v10955, %v10955
    %v11207 = vmul.f32 %v10958, %v10958
    %v11208 = vmul.f32 %v10963, %v10963
    %v11209 = vmul.f32 %v10966, %v10966
    %v11210 = vmul.f32 %v10971, %v10971
    %v11211 = vmul.f32 %v10974, %v10974
    %v11212 = vmul.f32 %v10979, %v10979
    %v11213 = vmul.f32 %v10982, %v10982
    %v11214 = vmul.f32 %v10987, %v10987
    %v11215 = vmul.f32 %v10990, %v10990
    %v11216 = vmul.f32 %v10995, %v10995
    %v11217 = vmul.f32 %v10998, %v10998
    %v11218 = vmul.f32 %v11003, %v11003
    %v11219 = vmul.f32 %v11006, %v11006
    %v11220 = vmul.f32 %v11011, %v11011
    %v11221 = vmul.f32 %v11014, %v11014
    %v11222 = vmul.f32 %v11019, %v11019
    %v11223 = vmul.f32 %v11022, %v11022
    %v11224 = vmul.f32 %v11027, %v11027
    %v11225 = vmul.f32 %v11030, %v11030
    %v11226 = vmul.f32 %v11035, %v11035
    %v11227 = vmul.f32 %v11038, %v11038
    %v11228 = vmul.f32 %v11043, %v11043
    %v11229 = vmul.f32 %v11046, %v11046
    %v11230 = vmul.f32 %v11051, %v11051
    %v11231 = vmul.f32 %v11054, %v11054
    %v11232 = vmul.f32 %v11059, %v11059
    %v11233 = vmul.f32 %v11062, %v11062
    %v11234 = vmul.f32 %v11067, %v11067
    %v11235 = vmul.f32 %v11070, %v11070
    %v11236 = vmul.f32 %v11075, %v11075
    %v11237 = vmul.f32 %v11078, %v11078
    %v11238 = vmul.f32 %v11083, %v11083
    %v11239 = vmul.f32 %v11086, %v11086
    %v11240 = vmul.f32 %v11091, %v11091
    %v11241 = vmul.f32 %v11094, %v11094
    %v11242 = vmul.f32 %v11099, %v11099
    %v11243 = vmul.f32 %v11102, %v11102
    %v11244 = vmul.f32 %v11107, %v11107
    %v11245 = vmul.f32 %v11110, %v11110
    %v11246 = vadd.f32 %v11182, %v11183
    %v11247 = vadd.f32 %v11246, %v11184
    %v11248 = vadd.f32 %v11247, %v11185
    %v11249 = vadd.f32 %v11248, %v11186
    %v11250 = vadd.f32 %v11249, %v11187
    %v11251 = vadd.f32 %v11250, %v11188
    %v11252 = vadd.f32 %v11251, %v11189
    %v11253 = vadd.f32 %v11252, %v11190
    %v11254 = vadd.f32 %v11253, %v11191
    %v11255 = vadd.f32 %v11254, %v11192
    %v11256 = vadd.f32 %v11255, %v11193
    %v11257 = vadd.f32 %v11256, %v11194
    %v11258 = vadd.f32 %v11257, %v11195
    %v11259 = vadd.f32 %v11258, %v11196
    %v11260 = vadd.f32 %v11259, %v11197
    %v11261 = vadd.f32 %v11260, %v11198
    %v11262 = vadd.f32 %v11261, %v11199
    %v11263 = vadd.f32 %v11262, %v11200
    %v11264 = vadd.f32 %v11263, %v11201
    %v11265 = vadd.f32 %v11264, %v11202
    %v11266 = vadd.f32 %v11265, %v11203
    %v11267 = vadd.f32 %v11266, %v11204
    %v11268 = vadd.f32 %v11267, %v11205
    %v11269 = vadd.f32 %v11268, %v11206
    %v11270 = vadd.f32 %v11269, %v11207
    %v11271 = vadd.f32 %v11270, %v11208
    %v11272 = vadd.f32 %v11271, %v11209
    %v11273 = vadd.f32 %v11272, %v11210
    %v11274 = vadd.f32 %v11273, %v11211
    %v11275 = vadd.f32 %v11274, %v11212
    %v11276 = vadd.f32 %v11275, %v11213
    %v11277 = vadd.f32 %v11276, %v11214
    %v11278 = vadd.f32 %v11277, %v11215
    %v11279 = vadd.f32 %v11278, %v11216
    %v11280 = vadd.f32 %v11279, %v11217
    %v11281 = vadd.f32 %v11280, %v11218
    %v11282 = vadd.f32 %v11281, %v11219
    %v11283 = vadd.f32 %v11282, %v11220
    %v11284 = vadd.f32 %v11283, %v11221
    %v11285 = vadd.f32 %v11284, %v11222
    %v11286 = vadd.f32 %v11285, %v11223
    %v11287 = vadd.f32 %v11286, %v11224
    %v11288 = vadd.f32 %v11287, %v11225
    %v11289 = vadd.f32 %v11288, %v11226
    %v11290 = vadd.f32 %v11289, %v11227
    %v11291 = vadd.f32 %v11290, %v11228
    %v11292 = vadd.f32 %v11291, %v11229
    %v11293 = vadd.f32 %v11292, %v11230
    %v11294 = vadd.f32 %v11293, %v11231
    %v11295 = vadd.f32 %v11294, %v11232
    %v11296 = vadd.f32 %v11295, %v11233
    %v11297 = vadd.f32 %v11296, %v11234
    %v11298 = vadd.f32 %v11297, %v11235
    %v11299 = vadd.f32 %v11298, %v11236
    %v11300 = vadd.f32 %v11299, %v11237
    %v11301 = vadd.f32 %v11300, %v11238
    %v11302 = vadd.f32 %v11301, %v11239
    %v11303 = vadd.f32 %v11302, %v11240
    %v11304 = vadd.f32 %v11303, %v11241
    %v11305 = vadd.f32 %v11304, %v11242
    %v11306 = vadd.f32 %v11305, %v11243
    %v11307 = vadd.f32 %v11306, %v11244
    %v11308 = vadd.f32 %v11307, %v11245
    %v11309 = vrot.slane %v11308, 4
    %v11310 = vadd.f32 %v11308, %v11309
    %v11311 = vrot.slane %v11310, 2
    %v11312 = vadd.f32 %v11310, %v11311
    %v11313 = vrot.slane %v11312, 1
    %v11314 = vadd.f32 %v11312, %v11313
    %v11315 = vmul.f32 %v11181, 0.001953125
    %v11316 = vmul.f32 %v11314, 0.001953125
    %v11317 = vmul.f32 %v11315, %v11315
    %v11318 = vsub.f32 %v11316, %v11317
    %v11319 = vmax.f32 %v11318, 0.0
    %v11320 = vld [vmem:[#allocation18] sm:$0x1]
    %v11321 = vadd.f32 %v11319, 1e-05
    %v11322 = vrsqrt.pop %v11321
    %v11323 = vmul.f32 %v11320, %v11322
    %v11324 = vld [vmem:[#allocation19] sm:$0x1]
    %v11325 = vmul.f32 %v11315, %v11323
    %v11326 = vsub.f32 %v11324, %v11325
    %v11328 = vlaneseq
    %v11329 = vshrl.u32 %v11328, 7
    %v11330 = vsub.s32 0, %v11329
    %v11331 = vrot.slane %v11323, %v11330
    %v11333 = vmul.f32 %v10859, %v11331
    %v11334 = vmul.f32 %v10862, %v11331
    %v11335 = vmul.f32 %v10867, %v11331
    %v11336 = vmul.f32 %v10870, %v11331
    %v11337 = vmul.f32 %v10875, %v11331
    %v11338 = vmul.f32 %v10878, %v11331
    %v11339 = vmul.f32 %v10883, %v11331
    %v11340 = vmul.f32 %v10886, %v11331
    %v11341 = vmul.f32 %v10891, %v11331
    %v11342 = vmul.f32 %v10894, %v11331
    %v11343 = vmul.f32 %v10899, %v11331
    %v11344 = vmul.f32 %v10902, %v11331
    %v11345 = vmul.f32 %v10907, %v11331
    %v11346 = vmul.f32 %v10910, %v11331
    %v11347 = vmul.f32 %v10915, %v11331
    %v11348 = vmul.f32 %v10918, %v11331
    %v11349 = vmul.f32 %v10923, %v11331
    %v11350 = vmul.f32 %v10926, %v11331
    %v11351 = vmul.f32 %v10931, %v11331
    %v11352 = vmul.f32 %v10934, %v11331
    %v11353 = vmul.f32 %v10939, %v11331
    %v11354 = vmul.f32 %v10942, %v11331
    %v11355 = vmul.f32 %v10947, %v11331
    %v11356 = vmul.f32 %v10950, %v11331
    %v11357 = vmul.f32 %v10955, %v11331
    %v11358 = vmul.f32 %v10958, %v11331
    %v11359 = vmul.f32 %v10963, %v11331
    %v11360 = vmul.f32 %v10966, %v11331
    %v11361 = vmul.f32 %v10971, %v11331
    %v11362 = vmul.f32 %v10974, %v11331
    %v11363 = vmul.f32 %v10979, %v11331
    %v11364 = vmul.f32 %v10982, %v11331
    %v11365 = vmul.f32 %v10987, %v11331
    %v11366 = vmul.f32 %v10990, %v11331
    %v11367 = vmul.f32 %v10995, %v11331
    %v11368 = vmul.f32 %v10998, %v11331
    %v11369 = vmul.f32 %v11003, %v11331
    %v11370 = vmul.f32 %v11006, %v11331
    %v11371 = vmul.f32 %v11011, %v11331
    %v11372 = vmul.f32 %v11014, %v11331
    %v11373 = vmul.f32 %v11019, %v11331
    %v11374 = vmul.f32 %v11022, %v11331
    %v11375 = vmul.f32 %v11027, %v11331
    %v11376 = vmul.f32 %v11030, %v11331
    %v11377 = vmul.f32 %v11035, %v11331
    %v11378 = vmul.f32 %v11038, %v11331
    %v11379 = vmul.f32 %v11043, %v11331
    %v11380 = vmul.f32 %v11046, %v11331
    %v11381 = vmul.f32 %v11051, %v11331
    %v11382 = vmul.f32 %v11054, %v11331
    %v11383 = vmul.f32 %v11059, %v11331
    %v11384 = vmul.f32 %v11062, %v11331
    %v11385 = vmul.f32 %v11067, %v11331
    %v11386 = vmul.f32 %v11070, %v11331
    %v11387 = vmul.f32 %v11075, %v11331
    %v11388 = vmul.f32 %v11078, %v11331
    %v11389 = vmul.f32 %v11083, %v11331
    %v11390 = vmul.f32 %v11086, %v11331
    %v11391 = vmul.f32 %v11091, %v11331
    %v11392 = vmul.f32 %v11094, %v11331
    %v11393 = vmul.f32 %v11099, %v11331
    %v11394 = vmul.f32 %v11102, %v11331
    %v11395 = vmul.f32 %v11107, %v11331
    %v11396 = vmul.f32 %v11110, %v11331
    %v11398 = vlaneseq
    %v11399 = vshrl.u32 %v11398, 7
    %v11400 = vsub.s32 0, %v11399
    %v11401 = vrot.slane %v11326, %v11400
    %v11403 = vadd.f32 %v11333, %v11401
    %v11404 = vadd.f32 %v11334, %v11401
    %v11405 = vadd.f32 %v11335, %v11401
    %v11406 = vadd.f32 %v11336, %v11401
    %v11407 = vadd.f32 %v11337, %v11401
    %v11408 = vadd.f32 %v11338, %v11401
    %v11409 = vadd.f32 %v11339, %v11401
    %v11410 = vadd.f32 %v11340, %v11401
    %v11411 = vadd.f32 %v11341, %v11401
    %v11412 = vadd.f32 %v11342, %v11401
    %v11413 = vadd.f32 %v11343, %v11401
    %v11414 = vadd.f32 %v11344, %v11401
    %v11415 = vadd.f32 %v11345, %v11401
    %v11416 = vadd.f32 %v11346, %v11401
    %v11417 = vadd.f32 %v11347, %v11401
    %v11418 = vadd.f32 %v11348, %v11401
    %v11419 = vadd.f32 %v11349, %v11401
    %v11420 = vadd.f32 %v11350, %v11401
    %v11421 = vadd.f32 %v11351, %v11401
    %v11422 = vadd.f32 %v11352, %v11401
    %v11423 = vadd.f32 %v11353, %v11401
    %v11424 = vadd.f32 %v11354, %v11401
    %v11425 = vadd.f32 %v11355, %v11401
    %v11426 = vadd.f32 %v11356, %v11401
    %v11427 = vadd.f32 %v11357, %v11401
    %v11428 = vadd.f32 %v11358, %v11401
    %v11429 = vadd.f32 %v11359, %v11401
    %v11430 = vadd.f32 %v11360, %v11401
    %v11431 = vadd.f32 %v11361, %v11401
    %v11432 = vadd.f32 %v11362, %v11401
    %v11433 = vadd.f32 %v11363, %v11401
    %v11434 = vadd.f32 %v11364, %v11401
    %v11435 = vadd.f32 %v11365, %v11401
    %v11436 = vadd.f32 %v11366, %v11401
    %v11437 = vadd.f32 %v11367, %v11401
    %v11438 = vadd.f32 %v11368, %v11401
    %v11439 = vadd.f32 %v11369, %v11401
    %v11440 = vadd.f32 %v11370, %v11401
    %v11441 = vadd.f32 %v11371, %v11401
    %v11442 = vadd.f32 %v11372, %v11401
    %v11443 = vadd.f32 %v11373, %v11401
    %v11444 = vadd.f32 %v11374, %v11401
    %v11445 = vadd.f32 %v11375, %v11401
    %v11446 = vadd.f32 %v11376, %v11401
    %v11447 = vadd.f32 %v11377, %v11401
    %v11448 = vadd.f32 %v11378, %v11401
    %v11449 = vadd.f32 %v11379, %v11401
    %v11450 = vadd.f32 %v11380, %v11401
    %v11451 = vadd.f32 %v11381, %v11401
    %v11452 = vadd.f32 %v11382, %v11401
    %v11453 = vadd.f32 %v11383, %v11401
    %v11454 = vadd.f32 %v11384, %v11401
    %v11455 = vadd.f32 %v11385, %v11401
    %v11456 = vadd.f32 %v11386, %v11401
    %v11457 = vadd.f32 %v11387, %v11401
    %v11458 = vadd.f32 %v11388, %v11401
    %v11459 = vadd.f32 %v11389, %v11401
    %v11460 = vadd.f32 %v11390, %v11401
    %v11461 = vadd.f32 %v11391, %v11401
    %v11462 = vadd.f32 %v11392, %v11401
    %v11463 = vadd.f32 %v11393, %v11401
    %v11464 = vadd.f32 %v11394, %v11401
    %v11465 = vadd.f32 %v11395, %v11401
    %v11466 = vadd.f32 %v11396, %v11401
    %v11467 = vld [vmem:[#allocation4] sm:$0xff]
    %v11468 = vld [vmem:[#allocation4 + $0x8] sm:$0xff]
    %v11469 = vld [vmem:[#allocation4 + $0x10] sm:$0xff]
    %v11470 = vld [vmem:[#allocation4 + $0x18] sm:$0xff]
    %v11471 = vld [vmem:[#allocation4 + $0x20] sm:$0xff]
    %v11472 = vld [vmem:[#allocation4 + $0x28] sm:$0xff]
    %v11473 = vld [vmem:[#allocation4 + $0x30] sm:$0xff]
    %v11474 = vld [vmem:[#allocation4 + $0x38] sm:$0xff]
    %v11475 = vld [vmem:[#allocation4 + $0x40] sm:$0xff]
    %v11476 = vld [vmem:[#allocation4 + $0x48] sm:$0xff]
    %v11477 = vld [vmem:[#allocation4 + $0x50] sm:$0xff]
    %v11478 = vld [vmem:[#allocation4 + $0x58] sm:$0xff]
    %v11479 = vld [vmem:[#allocation4 + $0x60] sm:$0xff]
    %v11480 = vld [vmem:[#allocation4 + $0x68] sm:$0xff]
    %v11481 = vld [vmem:[#allocation4 + $0x70] sm:$0xff]
    %v11482 = vld [vmem:[#allocation4 + $0x78] sm:$0xff]
    %v11483 = vld [vmem:[#allocation4 + $0x80] sm:$0xff]
    %v11484 = vld [vmem:[#allocation4 + $0x88] sm:$0xff]
    %v11485 = vld [vmem:[#allocation4 + $0x90] sm:$0xff]
    %v11486 = vld [vmem:[#allocation4 + $0x98] sm:$0xff]
    %v11487 = vld [vmem:[#allocation4 + $0xa0] sm:$0xff]
    %v11488 = vld [vmem:[#allocation4 + $0xa8] sm:$0xff]
    %v11489 = vld [vmem:[#allocation4 + $0xb0] sm:$0xff]
    %v11490 = vld [vmem:[#allocation4 + $0xb8] sm:$0xff]
    %v11491 = vld [vmem:[#allocation4 + $0xc0] sm:$0xff]
    %v11492 = vld [vmem:[#allocation4 + $0xc8] sm:$0xff]
    %v11493 = vld [vmem:[#allocation4 + $0xd0] sm:$0xff]
    %v11494 = vld [vmem:[#allocation4 + $0xd8] sm:$0xff]
    %v11495 = vld [vmem:[#allocation4 + $0xe0] sm:$0xff]
    %v11496 = vld [vmem:[#allocation4 + $0xe8] sm:$0xff]
    %v11497 = vld [vmem:[#allocation4 + $0xf0] sm:$0xff]
    %v11498 = vld [vmem:[#allocation4 + $0xf8] sm:$0xff]
    %v11499 = vld [vmem:[#allocation4 + $0x100] sm:$0xff]
    %v11500 = vld [vmem:[#allocation4 + $0x108] sm:$0xff]
    %v11501 = vld [vmem:[#allocation4 + $0x110] sm:$0xff]
    %v11502 = vld [vmem:[#allocation4 + $0x118] sm:$0xff]
    %v11503 = vld [vmem:[#allocation4 + $0x120] sm:$0xff]
    %v11504 = vld [vmem:[#allocation4 + $0x128] sm:$0xff]
    %v11505 = vld [vmem:[#allocation4 + $0x130] sm:$0xff]
    %v11506 = vld [vmem:[#allocation4 + $0x138] sm:$0xff]
    %v11507 = vld [vmem:[#allocation4 + $0x140] sm:$0xff]
    %v11508 = vld [vmem:[#allocation4 + $0x148] sm:$0xff]
    %v11509 = vld [vmem:[#allocation4 + $0x150] sm:$0xff]
    %v11510 = vld [vmem:[#allocation4 + $0x158] sm:$0xff]
    %v11511 = vld [vmem:[#allocation4 + $0x160] sm:$0xff]
    %v11512 = vld [vmem:[#allocation4 + $0x168] sm:$0xff]
    %v11513 = vld [vmem:[#allocation4 + $0x170] sm:$0xff]
    %v11514 = vld [vmem:[#allocation4 + $0x178] sm:$0xff]
    %v11515 = vld [vmem:[#allocation4 + $0x180] sm:$0xff]
    %v11516 = vld [vmem:[#allocation4 + $0x188] sm:$0xff]
    %v11517 = vld [vmem:[#allocation4 + $0x190] sm:$0xff]
    %v11518 = vld [vmem:[#allocation4 + $0x198] sm:$0xff]
    %v11519 = vld [vmem:[#allocation4 + $0x1a0] sm:$0xff]
    %v11520 = vld [vmem:[#allocation4 + $0x1a8] sm:$0xff]
    %v11521 = vld [vmem:[#allocation4 + $0x1b0] sm:$0xff]
    %v11522 = vld [vmem:[#allocation4 + $0x1b8] sm:$0xff]
    %v11523 = vld [vmem:[#allocation4 + $0x1c0] sm:$0xff]
    %v11524 = vld [vmem:[#allocation4 + $0x1c8] sm:$0xff]
    %v11525 = vld [vmem:[#allocation4 + $0x1d0] sm:$0xff]
    %v11526 = vld [vmem:[#allocation4 + $0x1d8] sm:$0xff]
    %v11527 = vld [vmem:[#allocation4 + $0x1e0] sm:$0xff]
    %v11528 = vld [vmem:[#allocation4 + $0x1e8] sm:$0xff]
    %v11529 = vld [vmem:[#allocation4 + $0x1f0] sm:$0xff]
    %v11530 = vld [vmem:[#allocation4 + $0x1f8] sm:$0xff]
    %v11531 = vadd.f32 %v11403, %v11467
    %v11532 = vadd.f32 %v11404, %v11468
    %v11533 = vadd.f32 %v11405, %v11469
    %v11534 = vadd.f32 %v11406, %v11470
    %v11535 = vadd.f32 %v11407, %v11471
    %v11536 = vadd.f32 %v11408, %v11472
    %v11537 = vadd.f32 %v11409, %v11473
    %v11538 = vadd.f32 %v11410, %v11474
    %v11539 = vadd.f32 %v11411, %v11475
    %v11540 = vadd.f32 %v11412, %v11476
    %v11541 = vadd.f32 %v11413, %v11477
    %v11542 = vadd.f32 %v11414, %v11478
    %v11543 = vadd.f32 %v11415, %v11479
    %v11544 = vadd.f32 %v11416, %v11480
    %v11545 = vadd.f32 %v11417, %v11481
    %v11546 = vadd.f32 %v11418, %v11482
    %v11547 = vadd.f32 %v11419, %v11483
    %v11548 = vadd.f32 %v11420, %v11484
    %v11549 = vadd.f32 %v11421, %v11485
    %v11550 = vadd.f32 %v11422, %v11486
    %v11551 = vadd.f32 %v11423, %v11487
    %v11552 = vadd.f32 %v11424, %v11488
    %v11553 = vadd.f32 %v11425, %v11489
    %v11554 = vadd.f32 %v11426, %v11490
    %v11555 = vadd.f32 %v11427, %v11491
    %v11556 = vadd.f32 %v11428, %v11492
    %v11557 = vadd.f32 %v11429, %v11493
    %v11558 = vadd.f32 %v11430, %v11494
    %v11559 = vadd.f32 %v11431, %v11495
    %v11560 = vadd.f32 %v11432, %v11496
    %v11561 = vadd.f32 %v11433, %v11497
    %v11562 = vadd.f32 %v11434, %v11498
    %v11563 = vadd.f32 %v11435, %v11499
    %v11564 = vadd.f32 %v11436, %v11500
    %v11565 = vadd.f32 %v11437, %v11501
    %v11566 = vadd.f32 %v11438, %v11502
    %v11567 = vadd.f32 %v11439, %v11503
    %v11568 = vadd.f32 %v11440, %v11504
    %v11569 = vadd.f32 %v11441, %v11505
    %v11570 = vadd.f32 %v11442, %v11506
    %v11571 = vadd.f32 %v11443, %v11507
    %v11572 = vadd.f32 %v11444, %v11508
    %v11573 = vadd.f32 %v11445, %v11509
    %v11574 = vadd.f32 %v11446, %v11510
    %v11575 = vadd.f32 %v11447, %v11511
    %v11576 = vadd.f32 %v11448, %v11512
    %v11577 = vadd.f32 %v11449, %v11513
    %v11578 = vadd.f32 %v11450, %v11514
    %v11579 = vadd.f32 %v11451, %v11515
    %v11580 = vadd.f32 %v11452, %v11516
    %v11581 = vadd.f32 %v11453, %v11517
    %v11582 = vadd.f32 %v11454, %v11518
    %v11583 = vadd.f32 %v11455, %v11519
    %v11584 = vadd.f32 %v11456, %v11520
    %v11585 = vadd.f32 %v11457, %v11521
    %v11586 = vadd.f32 %v11458, %v11522
    %v11587 = vadd.f32 %v11459, %v11523
    %v11588 = vadd.f32 %v11460, %v11524
    %v11589 = vadd.f32 %v11461, %v11525
    %v11590 = vadd.f32 %v11462, %v11526
    %v11591 = vadd.f32 %v11463, %v11527
    %v11592 = vadd.f32 %v11464, %v11528
    %v11593 = vadd.f32 %v11465, %v11529
    %v11594 = vadd.f32 %v11466, %v11530
    %v11595 = vmax.f32 %v11531, 0.0
    %v11596 = vmax.f32 %v11532, 0.0
    %v11597 = vmax.f32 %v11533, 0.0
    %v11598 = vmax.f32 %v11534, 0.0
    %v11599 = vmax.f32 %v11535, 0.0
    %v11600 = vmax.f32 %v11536, 0.0
    %v11601 = vmax.f32 %v11537, 0.0
    %v11602 = vmax.f32 %v11538, 0.0
    %v11603 = vmax.f32 %v11539, 0.0
    %v11604 = vmax.f32 %v11540, 0.0
    %v11605 = vmax.f32 %v11541, 0.0
    %v11606 = vmax.f32 %v11542, 0.0
    %v11607 = vmax.f32 %v11543, 0.0
    %v11608 = vmax.f32 %v11544, 0.0
    %v11609 = vmax.f32 %v11545, 0.0
    %v11610 = vmax.f32 %v11546, 0.0
    %v11611 = vmax.f32 %v11547, 0.0
    %v11612 = vmax.f32 %v11548, 0.0
    %v11613 = vmax.f32 %v11549, 0.0
    %v11614 = vmax.f32 %v11550, 0.0
    %v11615 = vmax.f32 %v11551, 0.0
    %v11616 = vmax.f32 %v11552, 0.0
    %v11617 = vmax.f32 %v11553, 0.0
    %v11618 = vmax.f32 %v11554, 0.0
    %v11619 = vmax.f32 %v11555, 0.0
    %v11620 = vmax.f32 %v11556, 0.0
    %v11621 = vmax.f32 %v11557, 0.0
    %v11622 = vmax.f32 %v11558, 0.0
    %v11623 = vmax.f32 %v11559, 0.0
    %v11624 = vmax.f32 %v11560, 0.0
    %v11625 = vmax.f32 %v11561, 0.0
    %v11626 = vmax.f32 %v11562, 0.0
    %v11627 = vmax.f32 %v11563, 0.0
    %v11628 = vmax.f32 %v11564, 0.0
    %v11629 = vmax.f32 %v11565, 0.0
    %v11630 = vmax.f32 %v11566, 0.0
    %v11631 = vmax.f32 %v11567, 0.0
    %v11632 = vmax.f32 %v11568, 0.0
    %v11633 = vmax.f32 %v11569, 0.0
    %v11634 = vmax.f32 %v11570, 0.0
    %v11635 = vmax.f32 %v11571, 0.0
    %v11636 = vmax.f32 %v11572, 0.0
    %v11637 = vmax.f32 %v11573, 0.0
    %v11638 = vmax.f32 %v11574, 0.0
    %v11639 = vmax.f32 %v11575, 0.0
    %v11640 = vmax.f32 %v11576, 0.0
    %v11641 = vmax.f32 %v11577, 0.0
    %v11642 = vmax.f32 %v11578, 0.0
    %v11643 = vmax.f32 %v11579, 0.0
    %v11644 = vmax.f32 %v11580, 0.0
    %v11645 = vmax.f32 %v11581, 0.0
    %v11646 = vmax.f32 %v11582, 0.0
    %v11647 = vmax.f32 %v11583, 0.0
    %v11648 = vmax.f32 %v11584, 0.0
    %v11649 = vmax.f32 %v11585, 0.0
    %v11650 = vmax.f32 %v11586, 0.0
    %v11651 = vmax.f32 %v11587, 0.0
    %v11652 = vmax.f32 %v11588, 0.0
    %v11653 = vmax.f32 %v11589, 0.0
    %v11654 = vmax.f32 %v11590, 0.0
    %v11655 = vmax.f32 %v11591, 0.0
    %v11656 = vmax.f32 %v11592, 0.0
    %v11657 = vmax.f32 %v11593, 0.0
    %v11658 = vmax.f32 %v11594, 0.0
    %v11659 = vadd.f32 %v11595, %v11596
    %v11660 = vadd.f32 %v11659, %v11597
    %v11661 = vadd.f32 %v11660, %v11598
    %v11662 = vadd.f32 %v11661, %v11599
    %v11663 = vadd.f32 %v11662, %v11600
    %v11664 = vadd.f32 %v11663, %v11601
    %v11665 = vadd.f32 %v11664, %v11602
    %v11666 = vadd.f32 %v11665, %v11603
    %v11667 = vadd.f32 %v11666, %v11604
    %v11668 = vadd.f32 %v11667, %v11605
    %v11669 = vadd.f32 %v11668, %v11606
    %v11670 = vadd.f32 %v11669, %v11607
    %v11671 = vadd.f32 %v11670, %v11608
    %v11672 = vadd.f32 %v11671, %v11609
    %v11673 = vadd.f32 %v11672, %v11610
    %v11674 = vadd.f32 %v11673, %v11611
    %v11675 = vadd.f32 %v11674, %v11612
    %v11676 = vadd.f32 %v11675, %v11613
    %v11677 = vadd.f32 %v11676, %v11614
    %v11678 = vadd.f32 %v11677, %v11615
    %v11679 = vadd.f32 %v11678, %v11616
    %v11680 = vadd.f32 %v11679, %v11617
    %v11681 = vadd.f32 %v11680, %v11618
    %v11682 = vadd.f32 %v11681, %v11619
    %v11683 = vadd.f32 %v11682, %v11620
    %v11684 = vadd.f32 %v11683, %v11621
    %v11685 = vadd.f32 %v11684, %v11622
    %v11686 = vadd.f32 %v11685, %v11623
    %v11687 = vadd.f32 %v11686, %v11624
    %v11688 = vadd.f32 %v11687, %v11625
    %v11689 = vadd.f32 %v11688, %v11626
    %v11690 = vrot.slane %v11689, 4
    %v11691 = vadd.f32 %v11689, %v11690
    %v11692 = vrot.slane %v11691, 2
    %v11693 = vadd.f32 %v11691, %v11692
    %v11694 = vrot.slane %v11693, 1
    %v11695 = vadd.f32 %v11693, %v11694
    %v11696 = vadd.f32 %v11627, %v11628
    %v11697 = vadd.f32 %v11696, %v11629
    %v11698 = vadd.f32 %v11697, %v11630
    %v11699 = vadd.f32 %v11698, %v11631
    %v11700 = vadd.f32 %v11699, %v11632
    %v11701 = vadd.f32 %v11700, %v11633
    %v11702 = vadd.f32 %v11701, %v11634
    %v11703 = vadd.f32 %v11702, %v11635
    %v11704 = vadd.f32 %v11703, %v11636
    %v11705 = vadd.f32 %v11704, %v11637
    %v11706 = vadd.f32 %v11705, %v11638
    %v11707 = vadd.f32 %v11706, %v11639
    %v11708 = vadd.f32 %v11707, %v11640
    %v11709 = vadd.f32 %v11708, %v11641
    %v11710 = vadd.f32 %v11709, %v11642
    %v11711 = vadd.f32 %v11710, %v11643
    %v11712 = vadd.f32 %v11711, %v11644
    %v11713 = vadd.f32 %v11712, %v11645
    %v11714 = vadd.f32 %v11713, %v11646
    %v11715 = vadd.f32 %v11714, %v11647
    %v11716 = vadd.f32 %v11715, %v11648
    %v11717 = vadd.f32 %v11716, %v11649
    %v11718 = vadd.f32 %v11717, %v11650
    %v11719 = vadd.f32 %v11718, %v11651
    %v11720 = vadd.f32 %v11719, %v11652
    %v11721 = vadd.f32 %v11720, %v11653
    %v11722 = vadd.f32 %v11721, %v11654
    %v11723 = vadd.f32 %v11722, %v11655
    %v11724 = vadd.f32 %v11723, %v11656
    %v11725 = vadd.f32 %v11724, %v11657
    %v11726 = vadd.f32 %v11725, %v11658
    %v11727 = vrot.slane %v11726, 4
    %v11728 = vadd.f32 %v11726, %v11727
    %v11729 = vrot.slane %v11728, 2
    %v11730 = vadd.f32 %v11728, %v11729
    %v11731 = vrot.slane %v11730, 1
    %v11732 = vadd.f32 %v11730, %v11731
    %v11733 = vrcp.pop 256.0
    %v11734 = vmul.f32 %v11695, %v11733
    %v11735 = vmul.f32 %v11732, %v11733
    %v11736 = vpack.c.bf16 %v11734, %v11734
    %v11737 = vpack.c.bf16 %v11735, %v11735
    %v11738 = vld [vmem:[#allocation21] sm:$0xf]
    %v11739 = vld [vmem:[#allocation21 + $0x4] sm:$0xf]
    %v11740 = vld [vmem:[#allocation21 + $0x8] sm:$0xf]
    %v11741 = vld [vmem:[#allocation21 + $0xc] sm:$0xf]
    %v11742 = vld [vmem:[#allocation21 + $0x10] sm:$0xf]
    %v11743 = vld [vmem:[#allocation21 + $0x14] sm:$0xf]
    %v11744 = vld [vmem:[#allocation21 + $0x18] sm:$0xf]
    %v11745 = vld [vmem:[#allocation21 + $0x1c] sm:$0xf]
    %v11746 = vld [vmem:[#allocation21 + $0x20] sm:$0xf]
    %v11747 = vld [vmem:[#allocation21 + $0x24] sm:$0xf]
    %v11748 = vld [vmem:[#allocation21 + $0x28] sm:$0xf]
    %v11749 = vld [vmem:[#allocation21 + $0x2c] sm:$0xf]
    %v11750 = vld [vmem:[#allocation21 + $0x30] sm:$0xf]
    %v11751 = vld [vmem:[#allocation21 + $0x34] sm:$0xf]
    %v11752 = vld [vmem:[#allocation21 + $0x38] sm:$0xf]
    %v11753 = vld [vmem:[#allocation21 + $0x3c] sm:$0xf]
    %v11756 = vunpack.c.l.b16 %v11736
    %v11757 = vunpack.c.l.b16 %v11737
    %vm11758 = vcmask 1041409
    %v11759 = vsel %vm11758, %v11757, %v11756
    %v11760 = vpack.c.b16 %v11759, %v11759
    %v11778 = vunpack.c.l.b16 %v11738
    %v11779 = vunpack.c.l.b16 %v11739
    %v11780 = vunpack.c.l.b16 %v11740
    %v11781 = vunpack.c.l.b16 %v11741
    %v11782 = vunpack.c.l.b16 %v11742
    %v11783 = vunpack.c.l.b16 %v11743
    %v11784 = vunpack.c.l.b16 %v11744
    %v11785 = vunpack.c.l.b16 %v11745
    %v11786 = vunpack.c.l.b16 %v11746
    %v11787 = vunpack.c.l.b16 %v11747
    %v11788 = vunpack.c.l.b16 %v11748
    %v11789 = vunpack.c.l.b16 %v11749
    %v11790 = vunpack.c.l.b16 %v11750
    %v11791 = vunpack.c.l.b16 %v11751
    %v11792 = vunpack.c.l.b16 %v11752
    %v11793 = vunpack.c.l.b16 %v11753
    %v11794 = vpack.c.b16 %v11779, %v11778
    %v11795 = vpack.c.b16 %v11781, %v11780
    %v11796 = vpack.c.b16 %v11783, %v11782
    %v11797 = vpack.c.b16 %v11785, %v11784
    %v11798 = vpack.c.b16 %v11787, %v11786
    %v11799 = vpack.c.b16 %v11789, %v11788
    %v11800 = vpack.c.b16 %v11791, %v11790
    %v11801 = vpack.c.b16 %v11793, %v11792
    %11810 = vmatprep.subr.bf16.mxu0 0
    %11811 = vmatpush1.bf16.msra.mxu0 %v11794
    %11812 = vmatprep.subr.bf16.mxu0 0
    %11813 = vmatpush1.bf16.msra.mxu0 %v11795
    %11814 = vmatprep.subr.bf16.mxu0 0
    %11815 = vmatpush1.bf16.msra.mxu0 %v11796
    %11816 = vmatprep.subr.bf16.mxu0 0
    %11817 = vmatpush1.bf16.msra.mxu0 %v11797
    %11818 = vmatprep.subr.bf16.mxu0 0
    %11819 = vmatpush1.bf16.msra.mxu0 %v11798
    %11820 = vmatprep.subr.bf16.mxu0 0
    %11821 = vmatpush1.bf16.msra.mxu0 %v11799
    %11822 = vmatprep.subr.bf16.mxu0 0
    %11823 = vmatpush1.bf16.msra.mxu0 %v11800
    %11824 = vmatprep.subr.bf16.mxu0 0
    %11825 = vmatpush1.bf16.msra.mxu0 %v11801
    %11826 = vmatprep.subr.bf16.mxu0 0
    %11827 = vmatpush1.bf16.msra.mxu0 0
    %11828 = vmatprep.subr.bf16.mxu0 0
    %11829 = vmatpush1.bf16.msra.mxu0 0
    %11830 = vmatprep.subr.bf16.mxu0 0
    %11831 = vmatpush1.bf16.msra.mxu0 0
    %11832 = vmatprep.subr.bf16.mxu0 0
    %11833 = vmatpush1.bf16.msra.mxu0 0
    %11834 = vmatprep.subr.bf16.mxu0 0
    %11835 = vmatpush1.bf16.msra.mxu0 0
    %11836 = vmatprep.subr.bf16.mxu0 0
    %11837 = vmatpush1.bf16.msra.mxu0 0
    %11838 = vmatprep.subr.bf16.mxu0 0
    %11839 = vmatpush1.bf16.msra.mxu0 0
    %11840 = vmatprep.subr.bf16.mxu0 0
    %11841 = vmatpush1.bf16.msra.mxu0 0
    %11842 = vmatprep.mubr.bf16.mxu0 0
    %11843 = vmatmul.mubr.bf16.gmra.mrb[0].mxu0 %v11760
    %v11844 = vpop.f32.mrb[0].mxu0
    %v11845 = vadd.f32 0.0, %v11844
    %v11846 = vpop.f32.mrb[0].mxu0
    %v11847 = vpop.f32.mrb[0].mxu0
    %v11848 = vpop.f32.mrb[0].mxu0
    %11849 = vdwg.mxu0
    %v11850 = vmax.f32 %v11845, 0.0
    %v11851 = vpack.c.bf16 %v11850, %v11850
    %v11852 = vld [vmem:[#allocation22] sm:$0x3]
    %vm11853 = vcmask 31744
    %v11855 = vsel %vm11853, %v11851, 0
    %vm11857 = vcmask 1041408
    %v11859 = vsel %vm11857, %v11852, 0
    %11861 = vmatprep.subr.bf16.mxu0 0
    %11862 = vmatpush1.bf16.msra.mxu0 %v11859
    %11863 = vmatprep.subr.bf16.mxu0 0
    %11864 = vmatpush1.bf16.msra.mxu0 0
    %11865 = vmatprep.subr.bf16.mxu0 0
    %11866 = vmatpush1.bf16.msra.mxu0 0
    %11867 = vmatprep.subr.bf16.mxu0 0
    %11868 = vmatpush1.bf16.msra.mxu0 0
    %11869 = vmatprep.subr.bf16.mxu0 0
    %11870 = vmatpush1.bf16.msra.mxu0 0
    %11871 = vmatprep.subr.bf16.mxu0 0
    %11872 = vmatpush1.bf16.msra.mxu0 0
    %11873 = vmatprep.subr.bf16.mxu0 0
    %11874 = vmatpush1.bf16.msra.mxu0 0
    %11875 = vmatprep.subr.bf16.mxu0 0
    %11876 = vmatpush1.bf16.msra.mxu0 0
    %11877 = vmatprep.subr.bf16.mxu0 0
    %11878 = vmatpush1.bf16.msra.mxu0 0
    %11879 = vmatprep.subr.bf16.mxu0 0
    %11880 = vmatpush1.bf16.msra.mxu0 0
    %11881 = vmatprep.subr.bf16.mxu0 0
    %11882 = vmatpush1.bf16.msra.mxu0 0
    %11883 = vmatprep.subr.bf16.mxu0 0
    %11884 = vmatpush1.bf16.msra.mxu0 0
    %11885 = vmatprep.subr.bf16.mxu0 0
    %11886 = vmatpush1.bf16.msra.mxu0 0
    %11887 = vmatprep.subr.bf16.mxu0 0
    %11888 = vmatpush1.bf16.msra.mxu0 0
    %11889 = vmatprep.subr.bf16.mxu0 0
    %11890 = vmatpush1.bf16.msra.mxu0 0
    %11891 = vmatprep.subr.bf16.mxu0 0
    %11892 = vmatpush1.bf16.msra.mxu0 0
    %11893 = vmatprep.mubr.bf16.mxu0 0
    %11894 = vmatmul.mubr.bf16.gmra.mrb[0].mxu0 %v11855
    %v11895 = vpop.f32.mrb[0].mxu0
    %v11896 = vadd.f32 0.0, %v11895
    %v11897 = vpop.f32.mrb[0].mxu0
    %v11898 = vpop.f32.mrb[0].mxu0
    %v11899 = vpop.f32.mrb[0].mxu0
    %11900 = vdwg.mxu0
    %v11901 = vxor.u32 %v11896, 2147483648
    %v11902 = vmul.f32 %v11901, 1.442695
    %v11903 = vpow.pop %v11902
    %v11904 = vadd.f32 %v11903, 1.0
    %v11905 = vrcp.pop %v11904
    %v11906 = vmul.f32 1.0, %v11905
    %v11909 = vunpack.c.l.s4 1966171168
    %v11910 = vunpack.c.0.s8 %v11909
    %v11911 = vlaneseq
    %v11912 = vshrl.u32 %v11911, 7
    %v11913 = vsub.s32 %v11910, %v11912
    %v11914 = vrot.slane %v11906, %v11913
    %v11915 = vcombine.high %v11914, %v11914
    %v11917 = vunpack.c.l.s4 1966171168
    %v11918 = vunpack.c.0.s8 %v11917
    %v11919 = vlaneseq
    %v11920 = vshrl.u32 %v11919, 7
    %v11921 = vsub.s32 %v11918, %v11920
    %v11922 = vrot.slane %v11914, %v11921
    %v11924 = vunpack.c.l.s4 1966171168
    %v11925 = vunpack.c.0.s8 %v11924
    %v11926 = vlaneseq
    %v11927 = vshrl.u32 %v11926, 7
    %v11928 = vsub.s32 %v11925, %v11927
    %v11929 = vrot.slane %v11915, %v11928
    %v11930 = vlaneseq
    %v11931 = vshrl.u32 %v11930, 7
    %v11932 = vsub.s32 0, %v11931
    %v11933 = vrot.slane %v11922, %v11932
    %v11934 = vlaneseq
    %v11935 = vshrl.u32 %v11934, 7
    %v11936 = vsub.s32 0, %v11935
    %v11937 = vrot.slane %v11929, %v11936
    %v11940 = vmul.f32 %v11595, %v11933
    %v11941 = vmul.f32 %v11596, %v11933
    %v11942 = vmul.f32 %v11597, %v11933
    %v11943 = vmul.f32 %v11598, %v11933
    %v11944 = vmul.f32 %v11599, %v11933
    %v11945 = vmul.f32 %v11600, %v11933
    %v11946 = vmul.f32 %v11601, %v11933
    %v11947 = vmul.f32 %v11602, %v11933
    %v11948 = vmul.f32 %v11603, %v11933
    %v11949 = vmul.f32 %v11604, %v11933
    %v11950 = vmul.f32 %v11605, %v11933
    %v11951 = vmul.f32 %v11606, %v11933
    %v11952 = vmul.f32 %v11607, %v11933
    %v11953 = vmul.f32 %v11608, %v11933
    %v11954 = vmul.f32 %v11609, %v11933
    %v11955 = vmul.f32 %v11610, %v11933
    %v11956 = vmul.f32 %v11611, %v11933
    %v11957 = vmul.f32 %v11612, %v11933
    %v11958 = vmul.f32 %v11613, %v11933
    %v11959 = vmul.f32 %v11614, %v11933
    %v11960 = vmul.f32 %v11615, %v11933
    %v11961 = vmul.f32 %v11616, %v11933
    %v11962 = vmul.f32 %v11617, %v11933
    %v11963 = vmul.f32 %v11618, %v11933
    %v11964 = vmul.f32 %v11619, %v11933
    %v11965 = vmul.f32 %v11620, %v11933
    %v11966 = vmul.f32 %v11621, %v11933
    %v11967 = vmul.f32 %v11622, %v11933
    %v11968 = vmul.f32 %v11623, %v11933
    %v11969 = vmul.f32 %v11624, %v11933
    %v11970 = vmul.f32 %v11625, %v11933
    %v11971 = vmul.f32 %v11626, %v11933
    %v11972 = vmul.f32 %v11627, %v11937
    %v11973 = vmul.f32 %v11628, %v11937
    %v11974 = vmul.f32 %v11629, %v11937
    %v11975 = vmul.f32 %v11630, %v11937
    %v11976 = vmul.f32 %v11631, %v11937
    %v11977 = vmul.f32 %v11632, %v11937
    %v11978 = vmul.f32 %v11633, %v11937
    %v11979 = vmul.f32 %v11634, %v11937
    %v11980 = vmul.f32 %v11635, %v11937
    %v11981 = vmul.f32 %v11636, %v11937
    %v11982 = vmul.f32 %v11637, %v11937
    %v11983 = vmul.f32 %v11638, %v11937
    %v11984 = vmul.f32 %v11639, %v11937
    %v11985 = vmul.f32 %v11640, %v11937
    %v11986 = vmul.f32 %v11641, %v11937
    %v11987 = vmul.f32 %v11642, %v11937
    %v11988 = vmul.f32 %v11643, %v11937
    %v11989 = vmul.f32 %v11644, %v11937
    %v11990 = vmul.f32 %v11645, %v11937
    %v11991 = vmul.f32 %v11646, %v11937
    %v11992 = vmul.f32 %v11647, %v11937
    %v11993 = vmul.f32 %v11648, %v11937
    %v11994 = vmul.f32 %v11649, %v11937
    %v11995 = vmul.f32 %v11650, %v11937
    %v11996 = vmul.f32 %v11651, %v11937
    %v11997 = vmul.f32 %v11652, %v11937
    %v11998 = vmul.f32 %v11653, %v11937
    %v11999 = vmul.f32 %v11654, %v11937
    %v12000 = vmul.f32 %v11655, %v11937
    %v12001 = vmul.f32 %v11656, %v11937
    %v12002 = vmul.f32 %v11657, %v11937
    %v12003 = vmul.f32 %v11658, %v11937
    %12004 = vst [vmem:[#allocation24] sm:$0xff] %v11940
    %12005 = vst [vmem:[#allocation24 + $0x8] sm:$0xff] %v11941
    %12006 = vst [vmem:[#allocation24 + $0x10] sm:$0xff] %v11942
    %12007 = vst [vmem:[#allocation24 + $0x18] sm:$0xff] %v11943
    %12008 = vst [vmem:[#allocation24 + $0x20] sm:$0xff] %v11944
    %12009 = vst [vmem:[#allocation24 + $0x28] sm:$0xff] %v11945
    %12010 = vst [vmem:[#allocation24 + $0x30] sm:$0xff] %v11946
    %12011 = vst [vmem:[#allocation24 + $0x38] sm:$0xff] %v11947
    %12012 = vst [vmem:[#allocation24 + $0x40] sm:$0xff] %v11948
    %12013 = vst [vmem:[#allocation24 + $0x48] sm:$0xff] %v11949
    %12014 = vst [vmem:[#allocation24 + $0x50] sm:$0xff] %v11950
    %12015 = vst [vmem:[#allocation24 + $0x58] sm:$0xff] %v11951
    %12016 = vst [vmem:[#allocation24 + $0x60] sm:$0xff] %v11952
    %12017 = vst [vmem:[#allocation24 + $0x68] sm:$0xff] %v11953
    %12018 = vst [vmem:[#allocation24 + $0x70] sm:$0xff] %v11954
    %12019 = vst [vmem:[#allocation24 + $0x78] sm:$0xff] %v11955
    %12020 = vst [vmem:[#allocation24 + $0x80] sm:$0xff] %v11956
    %12021 = vst [vmem:[#allocation24 + $0x88] sm:$0xff] %v11957
    %12022 = vst [vmem:[#allocation24 + $0x90] sm:$0xff] %v11958
    %12023 = vst [vmem:[#allocation24 + $0x98] sm:$0xff] %v11959
    %12024 = vst [vmem:[#allocation24 + $0xa0] sm:$0xff] %v11960
    %12025 = vst [vmem:[#allocation24 + $0xa8] sm:$0xff] %v11961
    %12026 = vst [vmem:[#allocation24 + $0xb0] sm:$0xff] %v11962
    %12027 = vst [vmem:[#allocation24 + $0xb8] sm:$0xff] %v11963
    %12028 = vst [vmem:[#allocation24 + $0xc0] sm:$0xff] %v11964
    %12029 = vst [vmem:[#allocation24 + $0xc8] sm:$0xff] %v11965
    %12030 = vst [vmem:[#allocation24 + $0xd0] sm:$0xff] %v11966
    %12031 = vst [vmem:[#allocation24 + $0xd8] sm:$0xff] %v11967
    %12032 = vst [vmem:[#allocation24 + $0xe0] sm:$0xff] %v11968
    %12033 = vst [vmem:[#allocation24 + $0xe8] sm:$0xff] %v11969
    %12034 = vst [vmem:[#allocation24 + $0xf0] sm:$0xff] %v11970
    %12035 = vst [vmem:[#allocation24 + $0xf8] sm:$0xff] %v11971
    %12036 = vst [vmem:[#allocation24 + $0x100] sm:$0xff] %v11972
    %12037 = vst [vmem:[#allocation24 + $0x108] sm:$0xff] %v11973
    %12038 = vst [vmem:[#allocation24 + $0x110] sm:$0xff] %v11974
    %12039 = vst [vmem:[#allocation24 + $0x118] sm:$0xff] %v11975
    %12040 = vst [vmem:[#allocation24 + $0x120] sm:$0xff] %v11976
    %12041 = vst [vmem:[#allocation24 + $0x128] sm:$0xff] %v11977
    %12042 = vst [vmem:[#allocation24 + $0x130] sm:$0xff] %v11978
    %12043 = vst [vmem:[#allocation24 + $0x138] sm:$0xff] %v11979
    %12044 = vst [vmem:[#allocation24 + $0x140] sm:$0xff] %v11980
    %12045 = vst [vmem:[#allocation24 + $0x148] sm:$0xff] %v11981
    %12046 = vst [vmem:[#allocation24 + $0x150] sm:$0xff] %v11982
    %12047 = vst [vmem:[#allocation24 + $0x158] sm:$0xff] %v11983
    %12048 = vst [vmem:[#allocation24 + $0x160] sm:$0xff] %v11984
    %12049 = vst [vmem:[#allocation24 + $0x168] sm:$0xff] %v11985
    %12050 = vst [vmem:[#allocation24 + $0x170] sm:$0xff] %v11986
    %12051 = vst [vmem:[#allocation24 + $0x178] sm:$0xff] %v11987
    %12052 = vst [vmem:[#allocation24 + $0x180] sm:$0xff] %v11988
    %12053 = vst [vmem:[#allocation24 + $0x188] sm:$0xff] %v11989
    %12054 = vst [vmem:[#allocation24 + $0x190] sm:$0xff] %v11990
    %12055 = vst [vmem:[#allocation24 + $0x198] sm:$0xff] %v11991
    %12056 = vst [vmem:[#allocation24 + $0x1a0] sm:$0xff] %v11992
    %12057 = vst [vmem:[#allocation24 + $0x1a8] sm:$0xff] %v11993
    %12058 = vst [vmem:[#allocation24 + $0x1b0] sm:$0xff] %v11994
    %12059 = vst [vmem:[#allocation24 + $0x1b8] sm:$0xff] %v11995
    %12060 = vst [vmem:[#allocation24 + $0x1c0] sm:$0xff] %v11996
    %12061 = vst [vmem:[#allocation24 + $0x1c8] sm:$0xff] %v11997
    %12062 = vst [vmem:[#allocation24 + $0x1d0] sm:$0xff] %v11998
    %12063 = vst [vmem:[#allocation24 + $0x1d8] sm:$0xff] %v11999
    %12064 = vst [vmem:[#allocation24 + $0x1e0] sm:$0xff] %v12000
    %12065 = vst [vmem:[#allocation24 + $0x1e8] sm:$0xff] %v12001
    %12066 = vst [vmem:[#allocation24 + $0x1f0] sm:$0xff] %v12002
    %12067 = vst [vmem:[#allocation24 + $0x1f8] sm:$0xff] %v12003
    // Predicated region
    $region98: #{tpu_custom_call.1} parent=1 // pred_check
      _
    $region99: #{tpu_custom_call.1} parent=1 // pred_check_branch
      %12069 = sbr.rel (0) target = $region101
    $region100: #{tpu_custom_call.1} parent=1 // pred_region
      %s12071 = ssub.s32 8192, 8192
      %12072 = vsyncadd [#allocation6], %s12071
      %s12073 = sshll.u32 [#allocation24], 4
      %s12074 = int_to_ptr.vmem [resolvable:$true] %s12073
      %12079 = dma.vmem_to_hbm [thread:$0]  %s12074, 8192, %s12, [#allocation6], 128, 128, 8
    $region101: #{tpu_custom_call.1} parent=1 // pred_fallthru
      _
    // Predicated region
    $region102: #{tpu_custom_call.1} parent=1 // pred_check
      _
    $region103: #{tpu_custom_call.1} parent=1 // pred_check_branch
      %12081 = sbr.rel (0) target = $region105
    $region104: #{tpu_custom_call.1} parent=1 // pred_region
      %12082 = dma.done [#allocation6], 8192
    $region105: #{tpu_custom_call.1} parent=1 // pred_fallthru
      _
    %12083 = vsyncpa [#allocation5], 1
    %12084 = vsyncpa [#allocation8], 1
    %12085 = vsyncpa [#allocation11], 1
    %12086 = vsyncpa [#allocation14], 1
    %12087 = vsyncpa [#allocation17], 1
    %12088 = vsyncpa [#allocation20], 1
    %12089 = vsyncpa [#allocation23], 1
    %12090 = vsyncpa [#allocation6], 1

</llo_original>
